<compile_context>
chip_gen: v7x
topology: tpu7x:2x2x1
jax: 0.10.0
libtpu: 0.0.40
codegen_flags: <defaults>
</compile_context>

<pallas_src>
import functools

import jax
import jax.numpy as jnp
from jax.experimental import pallas as pl
from jax.experimental.pallas import tpu as pltpu


def _conv_rowblock_kernel(*refs, n_rows_in, kh, kw, tr, wout, stride):
    """One grid step: TR output rows for one batch image.

    refs[:n_rows_in]  : (1, 1, Cin, Wp)    padded input rows; operand r holds
                                           input row  hb*TR*stride + r
    refs[n_rows_in]   : (kh, kw, Cout, Cin) weight, VMEM-resident
    refs[n_rows_in+1] : (Cout, 1)           bias (f32)
    refs[n_rows_in+2] : (1, TR, Cout, Wout) output row block
    """
    x_refs = refs[:n_rows_in]
    w_ref = refs[n_rows_in]
    b_ref = refs[n_rows_in + 1]
    o_ref = refs[n_rows_in + 2]

    bias = b_ref[...]                                  # (Cout, 1), hoisted

    for t in range(tr):                                # output rows (unrolled)
        acc = None
        for di in range(kh):                           # vertical taps
            x_row = x_refs[t * stride + di][0, 0]      # (Cin, Wp)
            cin = x_row.shape[0]
            for dj in range(kw):                       # horizontal taps
                if stride == 1:
                    x_shift = x_row[:, dj:dj + wout]                # (Cin, Wout)
                else:
                    # TODO(synk): strided lane slice path is kept for stride>1
                    # configs but is not exercised by the default module config.
                    x_shift = jax.lax.slice(
                        x_row, (0, dj),
                        (cin, dj + (wout - 1) * stride + 1), (1, stride))
                contrib = jnp.dot(w_ref[di, dj], x_shift,
                                  preferred_element_type=jnp.float32)
                acc = contrib if acc is None else acc + contrib
        out = jnp.maximum(acc + bias, 0.0)             # fused bias + ReLU
        o_ref[0, t] = out.astype(o_ref.dtype)


def conv2d_block_forward(x, weight, bias, *, stride=1, padding=0,
                         row_block=8, compute_dtype=jnp.bfloat16):
    """Forward of Conv2dBlock(norm='none', activation='relu', pad_type='zero').

    x      : (N, Cin, H, W)        float32, NCHW
    weight : (Cout, Cin, kh, kw)   float32  (PyTorch conv weight layout)
    bias   : (Cout,)               float32
    returns: (N, Cout, Hout, Wout) float32
    """
    N, Cin, H, W = x.shape
    Cout, _, kh, kw = weight.shape
    Hp, Wp = H + 2 * padding, W + 2 * padding
    Hout = (Hp - kh) // stride + 1
    Wout = (Wp - kw) // stride + 1

    # Row-block size and derived padding so every grid step is full.
    tr = max(1, min(row_block, Hout))
    n_blocks = pl.cdiv(Hout, tr)
    hout_pad = n_blocks * tr
    n_rows_in = kh + (tr - 1) * stride          # input rows per row block
    hp_need = (hout_pad - 1) * stride + kh      # input rows the grid will touch
    extra_h = max(0, hp_need - Hp)

    # --- glue: NCHW -> (N, Hp+extra, Cin, Wp) zero-padded, so each input row
    #     slab is a clean (Cin, Wp) tile (Cin on sublanes, W on lanes).
    xt = jnp.transpose(x, (0, 2, 1, 3))                       # (N, H, Cin, W)
    xp = jnp.pad(xt, ((0, 0), (padding, padding + extra_h),
                      (0, 0), (padding, padding)))
    xp = xp.astype(compute_dtype)

    wk = jnp.transpose(weight, (2, 3, 0, 1)).astype(compute_dtype)  # (kh,kw,Cout,Cin)
    b2 = bias.reshape(Cout, 1).astype(jnp.float32)

    flops = 2 * N * Hout * Wout * Cout * Cin * kh * kw
    bytes_accessed = (N * n_blocks * n_rows_in * Cin * Wp * xp.dtype.itemsize
                      + kh * kw * Cout * Cin * wk.dtype.itemsize
                      + Cout * 4
                      + N * hout_pad * Cout * Wout * 4)

    kernel = functools.partial(_conv_rowblock_kernel, n_rows_in=n_rows_in,
                               kh=kh, kw=kw, tr=tr, wout=Wout, stride=stride)

    # One input operand per needed row offset r; operand r at grid point
    # (n, hb) maps to padded input row  hb*tr*stride + r  (block size 1 in H,
    # so the block index equals the element row index).
    in_specs = [
        pl.BlockSpec((1, 1, Cin, Wp),
                     (lambda n, hb, r=r: (n, hb * tr * stride + r, 0, 0)))
        for r in range(n_rows_in)
    ] + [
        # full weight, grid-invariant -> fetched once, VMEM-resident
        pl.BlockSpec((kh, kw, Cout, Cin), lambda n, hb: (0, 0, 0, 0)),
        # bias, grid-invariant
        pl.BlockSpec((Cout, 1), lambda n, hb: (0, 0)),
    ]

    out_nhcw = pl.pallas_call(
        kernel,
        out_shape=jax.ShapeDtypeStruct((N, hout_pad, Cout, Wout), jnp.float32),
        grid_spec=pltpu.PrefetchScalarGridSpec(
            num_scalar_prefetch=0,
            grid=(N, n_blocks),
            in_specs=in_specs,
            out_specs=pl.BlockSpec((1, tr, Cout, Wout),
                                   lambda n, hb: (n, hb, 0, 0)),
        ),
        compiler_params=pltpu.CompilerParams(
            dimension_semantics=("parallel", "parallel")),
        cost_estimate=pl.CostEstimate(
            flops=flops, transcendentals=0, bytes_accessed=bytes_accessed),
    )(*([xp] * n_rows_in), wk, b2)

    # --- glue: drop padded rows, (N, Hout, Cout, Wout) -> NCHW
    out_nhcw = out_nhcw[:, :Hout]
    return jnp.transpose(out_nhcw, (0, 2, 1, 3))


if __name__ == "__main__":
    # Conv2dBlock(input_dim=4, output_dim=8, kernel_size=3, stride=1, padding=1)
    N, Cin, H, W = 2, 4, 16, 16
    Cout, ksz, stride, padding = 8, 3, 1, 1

    key = jax.random.PRNGKey(0)
    kx, kwgt, kb = jax.random.split(key, 3)
    x = jax.random.normal(kx, (N, Cin, H, W), dtype=jnp.float32)
    weight = jax.random.normal(kwgt, (Cout, Cin, ksz, ksz), dtype=jnp.float32) * 0.1
    bias = jax.random.normal(kb, (Cout,), dtype=jnp.float32) * 0.1

    # reference: plain JAX conv (f32) + bias + relu
    ref = jax.lax.conv_general_dilated(
        x, weight, window_strides=(stride, stride),
        padding=[(padding, padding), (padding, padding)],
        dimension_numbers=("NCHW", "OIHW", "NCHW"),
    ) + bias.reshape(1, Cout, 1, 1)
    ref = jnp.maximum(ref, 0.0)

    # f32 operands: exact-path check
    fwd_f32 = jax.jit(functools.partial(
        conv2d_block_forward, stride=stride, padding=padding,
        compute_dtype=jnp.float32))
    out_f32 = fwd_f32(x, weight, bias)
    jax.block_until_ready(out_f32)
    assert out_f32.shape == (N, Cout, H, W)
    assert jnp.allclose(out_f32, ref, atol=1e-4, rtol=1e-4)

    # f32 operands, row_block that does NOT divide Hout (exercises the
    # pad-and-slice path for the output row blocks)
    fwd_f32_rb5 = jax.jit(functools.partial(
        conv2d_block_forward, stride=stride, padding=padding,
        row_block=5, compute_dtype=jnp.float32))
    out_rb5 = fwd_f32_rb5(x, weight, bias)
    jax.block_until_ready(out_rb5)
    assert out_rb5.shape == (N, Cout, H, W)
    assert jnp.allclose(out_rb5, ref, atol=1e-4, rtol=1e-4)

    # bf16 operands (MXU-native on v6e/v7x), f32 accumulation: looser tolerance
    fwd_bf16 = jax.jit(functools.partial(
        conv2d_block_forward, stride=stride, padding=padding,
        compute_dtype=jnp.bfloat16))
    out_bf16 = fwd_bf16(x, weight, bias)
    jax.block_until_ready(out_bf16)
    assert out_bf16.shape == (N, Cout, H, W)
    assert jnp.allclose(out_bf16, ref, atol=5e-2, rtol=5e-2)

    print("KERNEL_OK")
</pallas_src>

<mosaic_0001>
module attributes {stable_mosaic.version = 11 : i64} {
  func.func @_conv_rowblock_kernel(%arg0: i32, %arg1: i32, %arg2: memref<1x1x4x18xf32, #tpu.memory_space<vmem>>, %arg3: memref<1x1x4x18xf32, #tpu.memory_space<vmem>>, %arg4: memref<1x1x4x18xf32, #tpu.memory_space<vmem>>, %arg5: memref<1x1x4x18xf32, #tpu.memory_space<vmem>>, %arg6: memref<1x1x4x18xf32, #tpu.memory_space<vmem>>, %arg7: memref<1x1x4x18xf32, #tpu.memory_space<vmem>>, %arg8: memref<1x1x4x18xf32, #tpu.memory_space<vmem>>, %arg9: memref<1x1x4x18xf32, #tpu.memory_space<vmem>>, %arg10: memref<1x1x4x18xf32, #tpu.memory_space<vmem>>, %arg11: memref<1x1x4x18xf32, #tpu.memory_space<vmem>>, %arg12: memref<3x3x8x4xf32, #tpu.memory_space<vmem>>, %arg13: memref<8x1xf32, #tpu.memory_space<vmem>>, %arg14: memref<1x8x8x16xf32, #tpu.memory_space<vmem>>) attributes {dimension_semantics = [#tpu.dimension_semantics<parallel>, #tpu.dimension_semantics<parallel>], iteration_bounds = array<i64: 2, 2>, scalar_prefetch = 0 : i64, scratch_operands = 0 : i64, tpu.core_type = #tpu.core_type<tc>, window_params = [{transform_indices = @transform_0, window_bounds = array<i64: 1, 1, 4, 18>}, {transform_indices = @transform_1, window_bounds = array<i64: 1, 1, 4, 18>}, {transform_indices = @transform_2, window_bounds = array<i64: 1, 1, 4, 18>}, {transform_indices = @transform_3, window_bounds = array<i64: 1, 1, 4, 18>}, {transform_indices = @transform_4, window_bounds = array<i64: 1, 1, 4, 18>}, {transform_indices = @transform_5, window_bounds = array<i64: 1, 1, 4, 18>}, {transform_indices = @transform_6, window_bounds = array<i64: 1, 1, 4, 18>}, {transform_indices = @transform_7, window_bounds = array<i64: 1, 1, 4, 18>}, {transform_indices = @transform_8, window_bounds = array<i64: 1, 1, 4, 18>}, {transform_indices = @transform_9, window_bounds = array<i64: 1, 1, 4, 18>}, {pipeline_mode = #tpu.pipeline_mode<synchronous>, transform_indices = @transform_10, window_bounds = array<i64: 3, 3, 8, 4>}, {pipeline_mode = #tpu.pipeline_mode<synchronous>, transform_indices = @transform_11, window_bounds = array<i64: 8, 1>}, {transform_indices = @transform_12, window_bounds = array<i64: 1, 8, 8, 16>}]} {
    %c0 = arith.constant 0 : index
    %c0_0 = arith.constant 0 : index
    %0 = vector.load %arg13[%c0, %c0_0] : memref<8x1xf32, #tpu.memory_space<vmem>>, vector<8x1xf32>
    %c0_1 = arith.constant 0 : index
    %c0_2 = arith.constant 0 : index
    %c0_3 = arith.constant 0 : index
    %c0_4 = arith.constant 0 : index
    %1 = vector.load %arg2[%c0_1, %c0_2, %c0_3, %c0_4] : memref<1x1x4x18xf32, #tpu.memory_space<vmem>>, vector<1x1x4x18xf32>
    %2 = vector.shape_cast %1 : vector<1x1x4x18xf32> to vector<4x18xf32>
    %3 = vector.extract_strided_slice %2 {offsets = [0, 0], sizes = [4, 16], strides = [1, 1]} : vector<4x18xf32> to vector<4x16xf32>
    %c0_5 = arith.constant 0 : index
    %c0_6 = arith.constant 0 : index
    %c0_7 = arith.constant 0 : index
    %c0_8 = arith.constant 0 : index
    %4 = vector.load %arg12[%c0_5, %c0_6, %c0_7, %c0_8] : memref<3x3x8x4xf32, #tpu.memory_space<vmem>>, vector<1x1x8x4xf32>
    %5 = vector.shape_cast %4 : vector<1x1x8x4xf32> to vector<8x4xf32>
    %cst = arith.constant dense<0.000000e+00> : vector<8x16xf32>
    %6 = tpu.matmul %5, %3, %cst {dimension_numbers = #tpu.dot_dimension_numbers<[1], [0], [0], [1], [0, 0, 1, 1], [], []>} : vector<8x4xf32>, vector<4x16xf32>, vector<8x16xf32> -> vector<8x16xf32>
    %7 = vector.extract_strided_slice %2 {offsets = [0, 1], sizes = [4, 16], strides = [1, 1]} : vector<4x18xf32> to vector<4x16xf32>
    %c0_9 = arith.constant 0 : index
    %c1 = arith.constant 1 : index
    %c0_10 = arith.constant 0 : index
    %c0_11 = arith.constant 0 : index
    %8 = vector.load %arg12[%c0_9, %c1, %c0_10, %c0_11] : memref<3x3x8x4xf32, #tpu.memory_space<vmem>>, vector<1x1x8x4xf32>
    %9 = vector.shape_cast %8 : vector<1x1x8x4xf32> to vector<8x4xf32>
    %cst_12 = arith.constant dense<0.000000e+00> : vector<8x16xf32>
    %10 = tpu.matmul %9, %7, %cst_12 {dimension_numbers = #tpu.dot_dimension_numbers<[1], [0], [0], [1], [0, 0, 1, 1], [], []>} : vector<8x4xf32>, vector<4x16xf32>, vector<8x16xf32> -> vector<8x16xf32>
    %11 = arith.addf %6, %10 : vector<8x16xf32>
    %12 = vector.extract_strided_slice %2 {offsets = [0, 2], sizes = [4, 16], strides = [1, 1]} : vector<4x18xf32> to vector<4x16xf32>
    %c0_13 = arith.constant 0 : index
    %c2 = arith.constant 2 : index
    %c0_14 = arith.constant 0 : index
    %c0_15 = arith.constant 0 : index
    %13 = vector.load %arg12[%c0_13, %c2, %c0_14, %c0_15] : memref<3x3x8x4xf32, #tpu.memory_space<vmem>>, vector<1x1x8x4xf32>
    %14 = vector.shape_cast %13 : vector<1x1x8x4xf32> to vector<8x4xf32>
    %cst_16 = arith.constant dense<0.000000e+00> : vector<8x16xf32>
    %15 = tpu.matmul %14, %12, %cst_16 {dimension_numbers = #tpu.dot_dimension_numbers<[1], [0], [0], [1], [0, 0, 1, 1], [], []>} : vector<8x4xf32>, vector<4x16xf32>, vector<8x16xf32> -> vector<8x16xf32>
    %16 = arith.addf %11, %15 : vector<8x16xf32>
    %c0_17 = arith.constant 0 : index
    %c0_18 = arith.constant 0 : index
    %c0_19 = arith.constant 0 : index
    %c0_20 = arith.constant 0 : index
    %17 = vector.load %arg3[%c0_17, %c0_18, %c0_19, %c0_20] : memref<1x1x4x18xf32, #tpu.memory_space<vmem>>, vector<1x1x4x18xf32>
    %18 = vector.shape_cast %17 : vector<1x1x4x18xf32> to vector<4x18xf32>
    %19 = vector.extract_strided_slice %18 {offsets = [0, 0], sizes = [4, 16], strides = [1, 1]} : vector<4x18xf32> to vector<4x16xf32>
    %c1_21 = arith.constant 1 : index
    %c0_22 = arith.constant 0 : index
    %c0_23 = arith.constant 0 : index
    %c0_24 = arith.constant 0 : index
    %20 = vector.load %arg12[%c1_21, %c0_22, %c0_23, %c0_24] : memref<3x3x8x4xf32, #tpu.memory_space<vmem>>, vector<1x1x8x4xf32>
    %21 = vector.shape_cast %20 : vector<1x1x8x4xf32> to vector<8x4xf32>
    %cst_25 = arith.constant dense<0.000000e+00> : vector<8x16xf32>
    %22 = tpu.matmul %21, %19, %cst_25 {dimension_numbers = #tpu.dot_dimension_numbers<[1], [0], [0], [1], [0, 0, 1, 1], [], []>} : vector<8x4xf32>, vector<4x16xf32>, vector<8x16xf32> -> vector<8x16xf32>
    %23 = arith.addf %16, %22 : vector<8x16xf32>
    %24 = vector.extract_strided_slice %18 {offsets = [0, 1], sizes = [4, 16], strides = [1, 1]} : vector<4x18xf32> to vector<4x16xf32>
    %c1_26 = arith.constant 1 : index
    %c1_27 = arith.constant 1 : index
    %c0_28 = arith.constant 0 : index
    %c0_29 = arith.constant 0 : index
    %25 = vector.load %arg12[%c1_26, %c1_27, %c0_28, %c0_29] : memref<3x3x8x4xf32, #tpu.memory_space<vmem>>, vector<1x1x8x4xf32>
    %26 = vector.shape_cast %25 : vector<1x1x8x4xf32> to vector<8x4xf32>
    %cst_30 = arith.constant dense<0.000000e+00> : vector<8x16xf32>
    %27 = tpu.matmul %26, %24, %cst_30 {dimension_numbers = #tpu.dot_dimension_numbers<[1], [0], [0], [1], [0, 0, 1, 1], [], []>} : vector<8x4xf32>, vector<4x16xf32>, vector<8x16xf32> -> vector<8x16xf32>
    %28 = arith.addf %23, %27 : vector<8x16xf32>
    %29 = vector.extract_strided_slice %18 {offsets = [0, 2], sizes = [4, 16], strides = [1, 1]} : vector<4x18xf32> to vector<4x16xf32>
    %c1_31 = arith.constant 1 : index
    %c2_32 = arith.constant 2 : index
    %c0_33 = arith.constant 0 : index
    %c0_34 = arith.constant 0 : index
    %30 = vector.load %arg12[%c1_31, %c2_32, %c0_33, %c0_34] : memref<3x3x8x4xf32, #tpu.memory_space<vmem>>, vector<1x1x8x4xf32>
    %31 = vector.shape_cast %30 : vector<1x1x8x4xf32> to vector<8x4xf32>
    %cst_35 = arith.constant dense<0.000000e+00> : vector<8x16xf32>
    %32 = tpu.matmul %31, %29, %cst_35 {dimension_numbers = #tpu.dot_dimension_numbers<[1], [0], [0], [1], [0, 0, 1, 1], [], []>} : vector<8x4xf32>, vector<4x16xf32>, vector<8x16xf32> -> vector<8x16xf32>
    %33 = arith.addf %28, %32 : vector<8x16xf32>
    %c0_36 = arith.constant 0 : index
    %c0_37 = arith.constant 0 : index
    %c0_38 = arith.constant 0 : index
    %c0_39 = arith.constant 0 : index
    %34 = vector.load %arg4[%c0_36, %c0_37, %c0_38, %c0_39] : memref<1x1x4x18xf32, #tpu.memory_space<vmem>>, vector<1x1x4x18xf32>
    %35 = vector.shape_cast %34 : vector<1x1x4x18xf32> to vector<4x18xf32>
    %36 = vector.extract_strided_slice %35 {offsets = [0, 0], sizes = [4, 16], strides = [1, 1]} : vector<4x18xf32> to vector<4x16xf32>
    %c2_40 = arith.constant 2 : index
    %c0_41 = arith.constant 0 : index
    %c0_42 = arith.constant 0 : index
    %c0_43 = arith.constant 0 : index
    %37 = vector.load %arg12[%c2_40, %c0_41, %c0_42, %c0_43] : memref<3x3x8x4xf32, #tpu.memory_space<vmem>>, vector<1x1x8x4xf32>
    %38 = vector.shape_cast %37 : vector<1x1x8x4xf32> to vector<8x4xf32>
    %cst_44 = arith.constant dense<0.000000e+00> : vector<8x16xf32>
    %39 = tpu.matmul %38, %36, %cst_44 {dimension_numbers = #tpu.dot_dimension_numbers<[1], [0], [0], [1], [0, 0, 1, 1], [], []>} : vector<8x4xf32>, vector<4x16xf32>, vector<8x16xf32> -> vector<8x16xf32>
    %40 = arith.addf %33, %39 : vector<8x16xf32>
    %41 = vector.extract_strided_slice %35 {offsets = [0, 1], sizes = [4, 16], strides = [1, 1]} : vector<4x18xf32> to vector<4x16xf32>
    %c2_45 = arith.constant 2 : index
    %c1_46 = arith.constant 1 : index
    %c0_47 = arith.constant 0 : index
    %c0_48 = arith.constant 0 : index
    %42 = vector.load %arg12[%c2_45, %c1_46, %c0_47, %c0_48] : memref<3x3x8x4xf32, #tpu.memory_space<vmem>>, vector<1x1x8x4xf32>
    %43 = vector.shape_cast %42 : vector<1x1x8x4xf32> to vector<8x4xf32>
    %cst_49 = arith.constant dense<0.000000e+00> : vector<8x16xf32>
    %44 = tpu.matmul %43, %41, %cst_49 {dimension_numbers = #tpu.dot_dimension_numbers<[1], [0], [0], [1], [0, 0, 1, 1], [], []>} : vector<8x4xf32>, vector<4x16xf32>, vector<8x16xf32> -> vector<8x16xf32>
    %45 = arith.addf %40, %44 : vector<8x16xf32>
    %46 = vector.extract_strided_slice %35 {offsets = [0, 2], sizes = [4, 16], strides = [1, 1]} : vector<4x18xf32> to vector<4x16xf32>
    %c2_50 = arith.constant 2 : index
    %c2_51 = arith.constant 2 : index
    %c0_52 = arith.constant 0 : index
    %c0_53 = arith.constant 0 : index
    %47 = vector.load %arg12[%c2_50, %c2_51, %c0_52, %c0_53] : memref<3x3x8x4xf32, #tpu.memory_space<vmem>>, vector<1x1x8x4xf32>
    %48 = vector.shape_cast %47 : vector<1x1x8x4xf32> to vector<8x4xf32>
    %cst_54 = arith.constant dense<0.000000e+00> : vector<8x16xf32>
    %49 = tpu.matmul %48, %46, %cst_54 {dimension_numbers = #tpu.dot_dimension_numbers<[1], [0], [0], [1], [0, 0, 1, 1], [], []>} : vector<8x4xf32>, vector<4x16xf32>, vector<8x16xf32> -> vector<8x16xf32>
    %50 = arith.addf %45, %49 : vector<8x16xf32>
    %51 = vector.broadcast %0 : vector<8x1xf32> to vector<8x16xf32>
    %52 = arith.addf %50, %51 : vector<8x16xf32>
    %cst_55 = arith.constant 0.000000e+00 : f32
    %53 = vector.broadcast %cst_55 : f32 to vector<8x16xf32>
    %54 = arith.maximumf %52, %53 : vector<8x16xf32>
    %c0_56 = arith.constant 0 : index
    %c0_57 = arith.constant 0 : index
    %c0_58 = arith.constant 0 : index
    %c0_59 = arith.constant 0 : index
    %55 = vector.load %arg14[%c0_56, %c0_57, %c0_58, %c0_59] : memref<1x8x8x16xf32, #tpu.memory_space<vmem>>, vector<1x1x8x16xf32>
    %56 = vector.shape_cast %55 : vector<1x1x8x16xf32> to vector<8x16xf32>
    %57 = vector.shape_cast %54 : vector<8x16xf32> to vector<1x1x8x16xf32>
    tpu.vector_store %arg14[%c0_56, %c0_57, %c0_58, %c0_59], %57 {strides = array<i32>} : memref<1x8x8x16xf32, #tpu.memory_space<vmem>>, vector<1x1x8x16xf32>,
    %c0_60 = arith.constant 0 : index
    %c0_61 = arith.constant 0 : index
    %c0_62 = arith.constant 0 : index
    %c0_63 = arith.constant 0 : index
    %58 = vector.load %arg3[%c0_60, %c0_61, %c0_62, %c0_63] : memref<1x1x4x18xf32, #tpu.memory_space<vmem>>, vector<1x1x4x18xf32>
    %59 = vector.shape_cast %58 : vector<1x1x4x18xf32> to vector<4x18xf32>
    %60 = vector.extract_strided_slice %59 {offsets = [0, 0], sizes = [4, 16], strides = [1, 1]} : vector<4x18xf32> to vector<4x16xf32>
    %c0_64 = arith.constant 0 : index
    %c0_65 = arith.constant 0 : index
    %c0_66 = arith.constant 0 : index
    %c0_67 = arith.constant 0 : index
    %61 = vector.load %arg12[%c0_64, %c0_65, %c0_66, %c0_67] : memref<3x3x8x4xf32, #tpu.memory_space<vmem>>, vector<1x1x8x4xf32>
    %62 = vector.shape_cast %61 : vector<1x1x8x4xf32> to vector<8x4xf32>
    %cst_68 = arith.constant dense<0.000000e+00> : vector<8x16xf32>
    %63 = tpu.matmul %62, %60, %cst_68 {dimension_numbers = #tpu.dot_dimension_numbers<[1], [0], [0], [1], [0, 0, 1, 1], [], []>} : vector<8x4xf32>, vector<4x16xf32>, vector<8x16xf32> -> vector<8x16xf32>
    %64 = vector.extract_strided_slice %59 {offsets = [0, 1], sizes = [4, 16], strides = [1, 1]} : vector<4x18xf32> to vector<4x16xf32>
    %c0_69 = arith.constant 0 : index
    %c1_70 = arith.constant 1 : index
    %c0_71 = arith.constant 0 : index
    %c0_72 = arith.constant 0 : index
    %65 = vector.load %arg12[%c0_69, %c1_70, %c0_71, %c0_72] : memref<3x3x8x4xf32, #tpu.memory_space<vmem>>, vector<1x1x8x4xf32>
    %66 = vector.shape_cast %65 : vector<1x1x8x4xf32> to vector<8x4xf32>
    %cst_73 = arith.constant dense<0.000000e+00> : vector<8x16xf32>
    %67 = tpu.matmul %66, %64, %cst_73 {dimension_numbers = #tpu.dot_dimension_numbers<[1], [0], [0], [1], [0, 0, 1, 1], [], []>} : vector<8x4xf32>, vector<4x16xf32>, vector<8x16xf32> -> vector<8x16xf32>
    %68 = arith.addf %63, %67 : vector<8x16xf32>
    %69 = vector.extract_strided_slice %59 {offsets = [0, 2], sizes = [4, 16], strides = [1, 1]} : vector<4x18xf32> to vector<4x16xf32>
    %c0_74 = arith.constant 0 : index
    %c2_75 = arith.constant 2 : index
    %c0_76 = arith.constant 0 : index
    %c0_77 = arith.constant 0 : index
    %70 = vector.load %arg12[%c0_74, %c2_75, %c0_76, %c0_77] : memref<3x3x8x4xf32, #tpu.memory_space<vmem>>, vector<1x1x8x4xf32>
    %71 = vector.shape_cast %70 : vector<1x1x8x4xf32> to vector<8x4xf32>
    %cst_78 = arith.constant dense<0.000000e+00> : vector<8x16xf32>
    %72 = tpu.matmul %71, %69, %cst_78 {dimension_numbers = #tpu.dot_dimension_numbers<[1], [0], [0], [1], [0, 0, 1, 1], [], []>} : vector<8x4xf32>, vector<4x16xf32>, vector<8x16xf32> -> vector<8x16xf32>
    %73 = arith.addf %68, %72 : vector<8x16xf32>
    %c0_79 = arith.constant 0 : index
    %c0_80 = arith.constant 0 : index
    %c0_81 = arith.constant 0 : index
    %c0_82 = arith.constant 0 : index
    %74 = vector.load %arg4[%c0_79, %c0_80, %c0_81, %c0_82] : memref<1x1x4x18xf32, #tpu.memory_space<vmem>>, vector<1x1x4x18xf32>
    %75 = vector.shape_cast %74 : vector<1x1x4x18xf32> to vector<4x18xf32>
    %76 = vector.extract_strided_slice %75 {offsets = [0, 0], sizes = [4, 16], strides = [1, 1]} : vector<4x18xf32> to vector<4x16xf32>
    %c1_83 = arith.constant 1 : index
    %c0_84 = arith.constant 0 : index
    %c0_85 = arith.constant 0 : index
    %c0_86 = arith.constant 0 : index
    %77 = vector.load %arg12[%c1_83, %c0_84, %c0_85, %c0_86] : memref<3x3x8x4xf32, #tpu.memory_space<vmem>>, vector<1x1x8x4xf32>
    %78 = vector.shape_cast %77 : vector<1x1x8x4xf32> to vector<8x4xf32>
    %cst_87 = arith.constant dense<0.000000e+00> : vector<8x16xf32>
    %79 = tpu.matmul %78, %76, %cst_87 {dimension_numbers = #tpu.dot_dimension_numbers<[1], [0], [0], [1], [0, 0, 1, 1], [], []>} : vector<8x4xf32>, vector<4x16xf32>, vector<8x16xf32> -> vector<8x16xf32>
    %80 = arith.addf %73, %79 : vector<8x16xf32>
    %81 = vector.extract_strided_slice %75 {offsets = [0, 1], sizes = [4, 16], strides = [1, 1]} : vector<4x18xf32> to vector<4x16xf32>
    %c1_88 = arith.constant 1 : index
    %c1_89 = arith.constant 1 : index
    %c0_90 = arith.constant 0 : index
    %c0_91 = arith.constant 0 : index
    %82 = vector.load %arg12[%c1_88, %c1_89, %c0_90, %c0_91] : memref<3x3x8x4xf32, #tpu.memory_space<vmem>>, vector<1x1x8x4xf32>
    %83 = vector.shape_cast %82 : vector<1x1x8x4xf32> to vector<8x4xf32>
    %cst_92 = arith.constant dense<0.000000e+00> : vector<8x16xf32>
    %84 = tpu.matmul %83, %81, %cst_92 {dimension_numbers = #tpu.dot_dimension_numbers<[1], [0], [0], [1], [0, 0, 1, 1], [], []>} : vector<8x4xf32>, vector<4x16xf32>, vector<8x16xf32> -> vector<8x16xf32>
    %85 = arith.addf %80, %84 : vector<8x16xf32>
    %86 = vector.extract_strided_slice %75 {offsets = [0, 2], sizes = [4, 16], strides = [1, 1]} : vector<4x18xf32> to vector<4x16xf32>
    %c1_93 = arith.constant 1 : index
    %c2_94 = arith.constant 2 : index
    %c0_95 = arith.constant 0 : index
    %c0_96 = arith.constant 0 : index
    %87 = vector.load %arg12[%c1_93, %c2_94, %c0_95, %c0_96] : memref<3x3x8x4xf32, #tpu.memory_space<vmem>>, vector<1x1x8x4xf32>
    %88 = vector.shape_cast %87 : vector<1x1x8x4xf32> to vector<8x4xf32>
    %cst_97 = arith.constant dense<0.000000e+00> : vector<8x16xf32>
    %89 = tpu.matmul %88, %86, %cst_97 {dimension_numbers = #tpu.dot_dimension_numbers<[1], [0], [0], [1], [0, 0, 1, 1], [], []>} : vector<8x4xf32>, vector<4x16xf32>, vector<8x16xf32> -> vector<8x16xf32>
    %90 = arith.addf %85, %89 : vector<8x16xf32>
    %c0_98 = arith.constant 0 : index
    %c0_99 = arith.constant 0 : index
    %c0_100 = arith.constant 0 : index
    %c0_101 = arith.constant 0 : index
    %91 = vector.load %arg5[%c0_98, %c0_99, %c0_100, %c0_101] : memref<1x1x4x18xf32, #tpu.memory_space<vmem>>, vector<1x1x4x18xf32>
    %92 = vector.shape_cast %91 : vector<1x1x4x18xf32> to vector<4x18xf32>
    %93 = vector.extract_strided_slice %92 {offsets = [0, 0], sizes = [4, 16], strides = [1, 1]} : vector<4x18xf32> to vector<4x16xf32>
    %c2_102 = arith.constant 2 : index
    %c0_103 = arith.constant 0 : index
    %c0_104 = arith.constant 0 : index
    %c0_105 = arith.constant 0 : index
    %94 = vector.load %arg12[%c2_102, %c0_103, %c0_104, %c0_105] : memref<3x3x8x4xf32, #tpu.memory_space<vmem>>, vector<1x1x8x4xf32>
    %95 = vector.shape_cast %94 : vector<1x1x8x4xf32> to vector<8x4xf32>
    %cst_106 = arith.constant dense<0.000000e+00> : vector<8x16xf32>
    %96 = tpu.matmul %95, %93, %cst_106 {dimension_numbers = #tpu.dot_dimension_numbers<[1], [0], [0], [1], [0, 0, 1, 1], [], []>} : vector<8x4xf32>, vector<4x16xf32>, vector<8x16xf32> -> vector<8x16xf32>
    %97 = arith.addf %90, %96 : vector<8x16xf32>
    %98 = vector.extract_strided_slice %92 {offsets = [0, 1], sizes = [4, 16], strides = [1, 1]} : vector<4x18xf32> to vector<4x16xf32>
    %c2_107 = arith.constant 2 : index
    %c1_108 = arith.constant 1 : index
    %c0_109 = arith.constant 0 : index
    %c0_110 = arith.constant 0 : index
    %99 = vector.load %arg12[%c2_107, %c1_108, %c0_109, %c0_110] : memref<3x3x8x4xf32, #tpu.memory_space<vmem>>, vector<1x1x8x4xf32>
    %100 = vector.shape_cast %99 : vector<1x1x8x4xf32> to vector<8x4xf32>
    %cst_111 = arith.constant dense<0.000000e+00> : vector<8x16xf32>
    %101 = tpu.matmul %100, %98, %cst_111 {dimension_numbers = #tpu.dot_dimension_numbers<[1], [0], [0], [1], [0, 0, 1, 1], [], []>} : vector<8x4xf32>, vector<4x16xf32>, vector<8x16xf32> -> vector<8x16xf32>
    %102 = arith.addf %97, %101 : vector<8x16xf32>
    %103 = vector.extract_strided_slice %92 {offsets = [0, 2], sizes = [4, 16], strides = [1, 1]} : vector<4x18xf32> to vector<4x16xf32>
    %c2_112 = arith.constant 2 : index
    %c2_113 = arith.constant 2 : index
    %c0_114 = arith.constant 0 : index
    %c0_115 = arith.constant 0 : index
    %104 = vector.load %arg12[%c2_112, %c2_113, %c0_114, %c0_115] : memref<3x3x8x4xf32, #tpu.memory_space<vmem>>, vector<1x1x8x4xf32>
    %105 = vector.shape_cast %104 : vector<1x1x8x4xf32> to vector<8x4xf32>
    %cst_116 = arith.constant dense<0.000000e+00> : vector<8x16xf32>
    %106 = tpu.matmul %105, %103, %cst_116 {dimension_numbers = #tpu.dot_dimension_numbers<[1], [0], [0], [1], [0, 0, 1, 1], [], []>} : vector<8x4xf32>, vector<4x16xf32>, vector<8x16xf32> -> vector<8x16xf32>
    %107 = arith.addf %102, %106 : vector<8x16xf32>
    %108 = vector.broadcast %0 : vector<8x1xf32> to vector<8x16xf32>
    %109 = arith.addf %107, %108 : vector<8x16xf32>
    %cst_117 = arith.constant 0.000000e+00 : f32
    %110 = vector.broadcast %cst_117 : f32 to vector<8x16xf32>
    %111 = arith.maximumf %109, %110 : vector<8x16xf32>
    %c0_118 = arith.constant 0 : index
    %c1_119 = arith.constant 1 : index
    %c0_120 = arith.constant 0 : index
    %c0_121 = arith.constant 0 : index
    %112 = vector.load %arg14[%c0_118, %c1_119, %c0_120, %c0_121] : memref<1x8x8x16xf32, #tpu.memory_space<vmem>>, vector<1x1x8x16xf32>
    %113 = vector.shape_cast %112 : vector<1x1x8x16xf32> to vector<8x16xf32>
    %114 = vector.shape_cast %111 : vector<8x16xf32> to vector<1x1x8x16xf32>
    tpu.vector_store %arg14[%c0_118, %c1_119, %c0_120, %c0_121], %114 {strides = array<i32>} : memref<1x8x8x16xf32, #tpu.memory_space<vmem>>, vector<1x1x8x16xf32>,
    %c0_122 = arith.constant 0 : index
    %c0_123 = arith.constant 0 : index
    %c0_124 = arith.constant 0 : index
    %c0_125 = arith.constant 0 : index
    %115 = vector.load %arg4[%c0_122, %c0_123, %c0_124, %c0_125] : memref<1x1x4x18xf32, #tpu.memory_space<vmem>>, vector<1x1x4x18xf32>
    %116 = vector.shape_cast %115 : vector<1x1x4x18xf32> to vector<4x18xf32>
    %117 = vector.extract_strided_slice %116 {offsets = [0, 0], sizes = [4, 16], strides = [1, 1]} : vector<4x18xf32> to vector<4x16xf32>
    %c0_126 = arith.constant 0 : index
    %c0_127 = arith.constant 0 : index
    %c0_128 = arith.constant 0 : index
    %c0_129 = arith.constant 0 : index
    %118 = vector.load %arg12[%c0_126, %c0_127, %c0_128, %c0_129] : memref<3x3x8x4xf32, #tpu.memory_space<vmem>>, vector<1x1x8x4xf32>
    %119 = vector.shape_cast %118 : vector<1x1x8x4xf32> to vector<8x4xf32>
    %cst_130 = arith.constant dense<0.000000e+00> : vector<8x16xf32>
    %120 = tpu.matmul %119, %117, %cst_130 {dimension_numbers = #tpu.dot_dimension_numbers<[1], [0], [0], [1], [0, 0, 1, 1], [], []>} : vector<8x4xf32>, vector<4x16xf32>, vector<8x16xf32> -> vector<8x16xf32>
    %121 = vector.extract_strided_slice %116 {offsets = [0, 1], sizes = [4, 16], strides = [1, 1]} : vector<4x18xf32> to vector<4x16xf32>
    %c0_131 = arith.constant 0 : index
    %c1_132 = arith.constant 1 : index
    %c0_133 = arith.constant 0 : index
    %c0_134 = arith.constant 0 : index
    %122 = vector.load %arg12[%c0_131, %c1_132, %c0_133, %c0_134] : memref<3x3x8x4xf32, #tpu.memory_space<vmem>>, vector<1x1x8x4xf32>
    %123 = vector.shape_cast %122 : vector<1x1x8x4xf32> to vector<8x4xf32>
    %cst_135 = arith.constant dense<0.000000e+00> : vector<8x16xf32>
    %124 = tpu.matmul %123, %121, %cst_135 {dimension_numbers = #tpu.dot_dimension_numbers<[1], [0], [0], [1], [0, 0, 1, 1], [], []>} : vector<8x4xf32>, vector<4x16xf32>, vector<8x16xf32> -> vector<8x16xf32>
    %125 = arith.addf %120, %124 : vector<8x16xf32>
    %126 = vector.extract_strided_slice %116 {offsets = [0, 2], sizes = [4, 16], strides = [1, 1]} : vector<4x18xf32> to vector<4x16xf32>
    %c0_136 = arith.constant 0 : index
    %c2_137 = arith.constant 2 : index
    %c0_138 = arith.constant 0 : index
    %c0_139 = arith.constant 0 : index
    %127 = vector.load %arg12[%c0_136, %c2_137, %c0_138, %c0_139] : memref<3x3x8x4xf32, #tpu.memory_space<vmem>>, vector<1x1x8x4xf32>
    %128 = vector.shape_cast %127 : vector<1x1x8x4xf32> to vector<8x4xf32>
    %cst_140 = arith.constant dense<0.000000e+00> : vector<8x16xf32>
    %129 = tpu.matmul %128, %126, %cst_140 {dimension_numbers = #tpu.dot_dimension_numbers<[1], [0], [0], [1], [0, 0, 1, 1], [], []>} : vector<8x4xf32>, vector<4x16xf32>, vector<8x16xf32> -> vector<8x16xf32>
    %130 = arith.addf %125, %129 : vector<8x16xf32>
    %c0_141 = arith.constant 0 : index
    %c0_142 = arith.constant 0 : index
    %c0_143 = arith.constant 0 : index
    %c0_144 = arith.constant 0 : index
    %131 = vector.load %arg5[%c0_141, %c0_142, %c0_143, %c0_144] : memref<1x1x4x18xf32, #tpu.memory_space<vmem>>, vector<1x1x4x18xf32>
    %132 = vector.shape_cast %131 : vector<1x1x4x18xf32> to vector<4x18xf32>
    %133 = vector.extract_strided_slice %132 {offsets = [0, 0], sizes = [4, 16], strides = [1, 1]} : vector<4x18xf32> to vector<4x16xf32>
    %c1_145 = arith.constant 1 : index
    %c0_146 = arith.constant 0 : index
    %c0_147 = arith.constant 0 : index
    %c0_148 = arith.constant 0 : index
    %134 = vector.load %arg12[%c1_145, %c0_146, %c0_147, %c0_148] : memref<3x3x8x4xf32, #tpu.memory_space<vmem>>, vector<1x1x8x4xf32>
    %135 = vector.shape_cast %134 : vector<1x1x8x4xf32> to vector<8x4xf32>
    %cst_149 = arith.constant dense<0.000000e+00> : vector<8x16xf32>
    %136 = tpu.matmul %135, %133, %cst_149 {dimension_numbers = #tpu.dot_dimension_numbers<[1], [0], [0], [1], [0, 0, 1, 1], [], []>} : vector<8x4xf32>, vector<4x16xf32>, vector<8x16xf32> -> vector<8x16xf32>
    %137 = arith.addf %130, %136 : vector<8x16xf32>
    %138 = vector.extract_strided_slice %132 {offsets = [0, 1], sizes = [4, 16], strides = [1, 1]} : vector<4x18xf32> to vector<4x16xf32>
    %c1_150 = arith.constant 1 : index
    %c1_151 = arith.constant 1 : index
    %c0_152 = arith.constant 0 : index
    %c0_153 = arith.constant 0 : index
    %139 = vector.load %arg12[%c1_150, %c1_151, %c0_152, %c0_153] : memref<3x3x8x4xf32, #tpu.memory_space<vmem>>, vector<1x1x8x4xf32>
    %140 = vector.shape_cast %139 : vector<1x1x8x4xf32> to vector<8x4xf32>
    %cst_154 = arith.constant dense<0.000000e+00> : vector<8x16xf32>
    %141 = tpu.matmul %140, %138, %cst_154 {dimension_numbers = #tpu.dot_dimension_numbers<[1], [0], [0], [1], [0, 0, 1, 1], [], []>} : vector<8x4xf32>, vector<4x16xf32>, vector<8x16xf32> -> vector<8x16xf32>
    %142 = arith.addf %137, %141 : vector<8x16xf32>
    %143 = vector.extract_strided_slice %132 {offsets = [0, 2], sizes = [4, 16], strides = [1, 1]} : vector<4x18xf32> to vector<4x16xf32>
    %c1_155 = arith.constant 1 : index
    %c2_156 = arith.constant 2 : index
    %c0_157 = arith.constant 0 : index
    %c0_158 = arith.constant 0 : index
    %144 = vector.load %arg12[%c1_155, %c2_156, %c0_157, %c0_158] : memref<3x3x8x4xf32, #tpu.memory_space<vmem>>, vector<1x1x8x4xf32>
    %145 = vector.shape_cast %144 : vector<1x1x8x4xf32> to vector<8x4xf32>
    %cst_159 = arith.constant dense<0.000000e+00> : vector<8x16xf32>
    %146 = tpu.matmul %145, %143, %cst_159 {dimension_numbers = #tpu.dot_dimension_numbers<[1], [0], [0], [1], [0, 0, 1, 1], [], []>} : vector<8x4xf32>, vector<4x16xf32>, vector<8x16xf32> -> vector<8x16xf32>
    %147 = arith.addf %142, %146 : vector<8x16xf32>
    %c0_160 = arith.constant 0 : index
    %c0_161 = arith.constant 0 : index
    %c0_162 = arith.constant 0 : index
    %c0_163 = arith.constant 0 : index
    %148 = vector.load %arg6[%c0_160, %c0_161, %c0_162, %c0_163] : memref<1x1x4x18xf32, #tpu.memory_space<vmem>>, vector<1x1x4x18xf32>
    %149 = vector.shape_cast %148 : vector<1x1x4x18xf32> to vector<4x18xf32>
    %150 = vector.extract_strided_slice %149 {offsets = [0, 0], sizes = [4, 16], strides = [1, 1]} : vector<4x18xf32> to vector<4x16xf32>
    %c2_164 = arith.constant 2 : index
    %c0_165 = arith.constant 0 : index
    %c0_166 = arith.constant 0 : index
    %c0_167 = arith.constant 0 : index
    %151 = vector.load %arg12[%c2_164, %c0_165, %c0_166, %c0_167] : memref<3x3x8x4xf32, #tpu.memory_space<vmem>>, vector<1x1x8x4xf32>
    %152 = vector.shape_cast %151 : vector<1x1x8x4xf32> to vector<8x4xf32>
    %cst_168 = arith.constant dense<0.000000e+00> : vector<8x16xf32>
    %153 = tpu.matmul %152, %150, %cst_168 {dimension_numbers = #tpu.dot_dimension_numbers<[1], [0], [0], [1], [0, 0, 1, 1], [], []>} : vector<8x4xf32>, vector<4x16xf32>, vector<8x16xf32> -> vector<8x16xf32>
    %154 = arith.addf %147, %153 : vector<8x16xf32>
    %155 = vector.extract_strided_slice %149 {offsets = [0, 1], sizes = [4, 16], strides = [1, 1]} : vector<4x18xf32> to vector<4x16xf32>
    %c2_169 = arith.constant 2 : index
    %c1_170 = arith.constant 1 : index
    %c0_171 = arith.constant 0 : index
    %c0_172 = arith.constant 0 : index
    %156 = vector.load %arg12[%c2_169, %c1_170, %c0_171, %c0_172] : memref<3x3x8x4xf32, #tpu.memory_space<vmem>>, vector<1x1x8x4xf32>
    %157 = vector.shape_cast %156 : vector<1x1x8x4xf32> to vector<8x4xf32>
    %cst_173 = arith.constant dense<0.000000e+00> : vector<8x16xf32>
    %158 = tpu.matmul %157, %155, %cst_173 {dimension_numbers = #tpu.dot_dimension_numbers<[1], [0], [0], [1], [0, 0, 1, 1], [], []>} : vector<8x4xf32>, vector<4x16xf32>, vector<8x16xf32> -> vector<8x16xf32>
    %159 = arith.addf %154, %158 : vector<8x16xf32>
    %160 = vector.extract_strided_slice %149 {offsets = [0, 2], sizes = [4, 16], strides = [1, 1]} : vector<4x18xf32> to vector<4x16xf32>
    %c2_174 = arith.constant 2 : index
    %c2_175 = arith.constant 2 : index
    %c0_176 = arith.constant 0 : index
    %c0_177 = arith.constant 0 : index
    %161 = vector.load %arg12[%c2_174, %c2_175, %c0_176, %c0_177] : memref<3x3x8x4xf32, #tpu.memory_space<vmem>>, vector<1x1x8x4xf32>
    %162 = vector.shape_cast %161 : vector<1x1x8x4xf32> to vector<8x4xf32>
    %cst_178 = arith.constant dense<0.000000e+00> : vector<8x16xf32>
    %163 = tpu.matmul %162, %160, %cst_178 {dimension_numbers = #tpu.dot_dimension_numbers<[1], [0], [0], [1], [0, 0, 1, 1], [], []>} : vector<8x4xf32>, vector<4x16xf32>, vector<8x16xf32> -> vector<8x16xf32>
    %164 = arith.addf %159, %163 : vector<8x16xf32>
    %165 = vector.broadcast %0 : vector<8x1xf32> to vector<8x16xf32>
    %166 = arith.addf %164, %165 : vector<8x16xf32>
    %cst_179 = arith.constant 0.000000e+00 : f32
    %167 = vector.broadcast %cst_179 : f32 to vector<8x16xf32>
    %168 = arith.maximumf %166, %167 : vector<8x16xf32>
    %c0_180 = arith.constant 0 : index
    %c2_181 = arith.constant 2 : index
    %c0_182 = arith.constant 0 : index
    %c0_183 = arith.constant 0 : index
    %169 = vector.load %arg14[%c0_180, %c2_181, %c0_182, %c0_183] : memref<1x8x8x16xf32, #tpu.memory_space<vmem>>, vector<1x1x8x16xf32>
    %170 = vector.shape_cast %169 : vector<1x1x8x16xf32> to vector<8x16xf32>
    %171 = vector.shape_cast %168 : vector<8x16xf32> to vector<1x1x8x16xf32>
    tpu.vector_store %arg14[%c0_180, %c2_181, %c0_182, %c0_183], %171 {strides = array<i32>} : memref<1x8x8x16xf32, #tpu.memory_space<vmem>>, vector<1x1x8x16xf32>,
    %c0_184 = arith.constant 0 : index
    %c0_185 = arith.constant 0 : index
    %c0_186 = arith.constant 0 : index
    %c0_187 = arith.constant 0 : index
    %172 = vector.load %arg5[%c0_184, %c0_185, %c0_186, %c0_187] : memref<1x1x4x18xf32, #tpu.memory_space<vmem>>, vector<1x1x4x18xf32>
    %173 = vector.shape_cast %172 : vector<1x1x4x18xf32> to vector<4x18xf32>
    %174 = vector.extract_strided_slice %173 {offsets = [0, 0], sizes = [4, 16], strides = [1, 1]} : vector<4x18xf32> to vector<4x16xf32>
    %c0_188 = arith.constant 0 : index
    %c0_189 = arith.constant 0 : index
    %c0_190 = arith.constant 0 : index
    %c0_191 = arith.constant 0 : index
    %175 = vector.load %arg12[%c0_188, %c0_189, %c0_190, %c0_191] : memref<3x3x8x4xf32, #tpu.memory_space<vmem>>, vector<1x1x8x4xf32>
    %176 = vector.shape_cast %175 : vector<1x1x8x4xf32> to vector<8x4xf32>
    %cst_192 = arith.constant dense<0.000000e+00> : vector<8x16xf32>
    %177 = tpu.matmul %176, %174, %cst_192 {dimension_numbers = #tpu.dot_dimension_numbers<[1], [0], [0], [1], [0, 0, 1, 1], [], []>} : vector<8x4xf32>, vector<4x16xf32>, vector<8x16xf32> -> vector<8x16xf32>
    %178 = vector.extract_strided_slice %173 {offsets = [0, 1], sizes = [4, 16], strides = [1, 1]} : vector<4x18xf32> to vector<4x16xf32>
    %c0_193 = arith.constant 0 : index
    %c1_194 = arith.constant 1 : index
    %c0_195 = arith.constant 0 : index
    %c0_196 = arith.constant 0 : index
    %179 = vector.load %arg12[%c0_193, %c1_194, %c0_195, %c0_196] : memref<3x3x8x4xf32, #tpu.memory_space<vmem>>, vector<1x1x8x4xf32>
    %180 = vector.shape_cast %179 : vector<1x1x8x4xf32> to vector<8x4xf32>
    %cst_197 = arith.constant dense<0.000000e+00> : vector<8x16xf32>
    %181 = tpu.matmul %180, %178, %cst_197 {dimension_numbers = #tpu.dot_dimension_numbers<[1], [0], [0], [1], [0, 0, 1, 1], [], []>} : vector<8x4xf32>, vector<4x16xf32>, vector<8x16xf32> -> vector<8x16xf32>
    %182 = arith.addf %177, %181 : vector<8x16xf32>
    %183 = vector.extract_strided_slice %173 {offsets = [0, 2], sizes = [4, 16], strides = [1, 1]} : vector<4x18xf32> to vector<4x16xf32>
    %c0_198 = arith.constant 0 : index
    %c2_199 = arith.constant 2 : index
    %c0_200 = arith.constant 0 : index
    %c0_201 = arith.constant 0 : index
    %184 = vector.load %arg12[%c0_198, %c2_199, %c0_200, %c0_201] : memref<3x3x8x4xf32, #tpu.memory_space<vmem>>, vector<1x1x8x4xf32>
    %185 = vector.shape_cast %184 : vector<1x1x8x4xf32> to vector<8x4xf32>
    %cst_202 = arith.constant dense<0.000000e+00> : vector<8x16xf32>
    %186 = tpu.matmul %185, %183, %cst_202 {dimension_numbers = #tpu.dot_dimension_numbers<[1], [0], [0], [1], [0, 0, 1, 1], [], []>} : vector<8x4xf32>, vector<4x16xf32>, vector<8x16xf32> -> vector<8x16xf32>
    %187 = arith.addf %182, %186 : vector<8x16xf32>
    %c0_203 = arith.constant 0 : index
    %c0_204 = arith.constant 0 : index
    %c0_205 = arith.constant 0 : index
    %c0_206 = arith.constant 0 : index
    %188 = vector.load %arg6[%c0_203, %c0_204, %c0_205, %c0_206] : memref<1x1x4x18xf32, #tpu.memory_space<vmem>>, vector<1x1x4x18xf32>
    %189 = vector.shape_cast %188 : vector<1x1x4x18xf32> to vector<4x18xf32>
    %190 = vector.extract_strided_slice %189 {offsets = [0, 0], sizes = [4, 16], strides = [1, 1]} : vector<4x18xf32> to vector<4x16xf32>
    %c1_207 = arith.constant 1 : index
    %c0_208 = arith.constant 0 : index
    %c0_209 = arith.constant 0 : index
    %c0_210 = arith.constant 0 : index
    %191 = vector.load %arg12[%c1_207, %c0_208, %c0_209, %c0_210] : memref<3x3x8x4xf32, #tpu.memory_space<vmem>>, vector<1x1x8x4xf32>
    %192 = vector.shape_cast %191 : vector<1x1x8x4xf32> to vector<8x4xf32>
    %cst_211 = arith.constant dense<0.000000e+00> : vector<8x16xf32>
    %193 = tpu.matmul %192, %190, %cst_211 {dimension_numbers = #tpu.dot_dimension_numbers<[1], [0], [0], [1], [0, 0, 1, 1], [], []>} : vector<8x4xf32>, vector<4x16xf32>, vector<8x16xf32> -> vector<8x16xf32>
    %194 = arith.addf %187, %193 : vector<8x16xf32>
    %195 = vector.extract_strided_slice %189 {offsets = [0, 1], sizes = [4, 16], strides = [1, 1]} : vector<4x18xf32> to vector<4x16xf32>
    %c1_212 = arith.constant 1 : index
    %c1_213 = arith.constant 1 : index
    %c0_214 = arith.constant 0 : index
    %c0_215 = arith.constant 0 : index
    %196 = vector.load %arg12[%c1_212, %c1_213, %c0_214, %c0_215] : memref<3x3x8x4xf32, #tpu.memory_space<vmem>>, vector<1x1x8x4xf32>
    %197 = vector.shape_cast %196 : vector<1x1x8x4xf32> to vector<8x4xf32>
    %cst_216 = arith.constant dense<0.000000e+00> : vector<8x16xf32>
    %198 = tpu.matmul %197, %195, %cst_216 {dimension_numbers = #tpu.dot_dimension_numbers<[1], [0], [0], [1], [0, 0, 1, 1], [], []>} : vector<8x4xf32>, vector<4x16xf32>, vector<8x16xf32> -> vector<8x16xf32>
    %199 = arith.addf %194, %198 : vector<8x16xf32>
    %200 = vector.extract_strided_slice %189 {offsets = [0, 2], sizes = [4, 16], strides = [1, 1]} : vector<4x18xf32> to vector<4x16xf32>
    %c1_217 = arith.constant 1 : index
    %c2_218 = arith.constant 2 : index
    %c0_219 = arith.constant 0 : index
    %c0_220 = arith.constant 0 : index
    %201 = vector.load %arg12[%c1_217, %c2_218, %c0_219, %c0_220] : memref<3x3x8x4xf32, #tpu.memory_space<vmem>>, vector<1x1x8x4xf32>
    %202 = vector.shape_cast %201 : vector<1x1x8x4xf32> to vector<8x4xf32>
    %cst_221 = arith.constant dense<0.000000e+00> : vector<8x16xf32>
    %203 = tpu.matmul %202, %200, %cst_221 {dimension_numbers = #tpu.dot_dimension_numbers<[1], [0], [0], [1], [0, 0, 1, 1], [], []>} : vector<8x4xf32>, vector<4x16xf32>, vector<8x16xf32> -> vector<8x16xf32>
    %204 = arith.addf %199, %203 : vector<8x16xf32>
    %c0_222 = arith.constant 0 : index
    %c0_223 = arith.constant 0 : index
    %c0_224 = arith.constant 0 : index
    %c0_225 = arith.constant 0 : index
    %205 = vector.load %arg7[%c0_222, %c0_223, %c0_224, %c0_225] : memref<1x1x4x18xf32, #tpu.memory_space<vmem>>, vector<1x1x4x18xf32>
    %206 = vector.shape_cast %205 : vector<1x1x4x18xf32> to vector<4x18xf32>
    %207 = vector.extract_strided_slice %206 {offsets = [0, 0], sizes = [4, 16], strides = [1, 1]} : vector<4x18xf32> to vector<4x16xf32>
    %c2_226 = arith.constant 2 : index
    %c0_227 = arith.constant 0 : index
    %c0_228 = arith.constant 0 : index
    %c0_229 = arith.constant 0 : index
    %208 = vector.load %arg12[%c2_226, %c0_227, %c0_228, %c0_229] : memref<3x3x8x4xf32, #tpu.memory_space<vmem>>, vector<1x1x8x4xf32>
    %209 = vector.shape_cast %208 : vector<1x1x8x4xf32> to vector<8x4xf32>
    %cst_230 = arith.constant dense<0.000000e+00> : vector<8x16xf32>
    %210 = tpu.matmul %209, %207, %cst_230 {dimension_numbers = #tpu.dot_dimension_numbers<[1], [0], [0], [1], [0, 0, 1, 1], [], []>} : vector<8x4xf32>, vector<4x16xf32>, vector<8x16xf32> -> vector<8x16xf32>
    %211 = arith.addf %204, %210 : vector<8x16xf32>
    %212 = vector.extract_strided_slice %206 {offsets = [0, 1], sizes = [4, 16], strides = [1, 1]} : vector<4x18xf32> to vector<4x16xf32>
    %c2_231 = arith.constant 2 : index
    %c1_232 = arith.constant 1 : index
    %c0_233 = arith.constant 0 : index
    %c0_234 = arith.constant 0 : index
    %213 = vector.load %arg12[%c2_231, %c1_232, %c0_233, %c0_234] : memref<3x3x8x4xf32, #tpu.memory_space<vmem>>, vector<1x1x8x4xf32>
    %214 = vector.shape_cast %213 : vector<1x1x8x4xf32> to vector<8x4xf32>
    %cst_235 = arith.constant dense<0.000000e+00> : vector<8x16xf32>
    %215 = tpu.matmul %214, %212, %cst_235 {dimension_numbers = #tpu.dot_dimension_numbers<[1], [0], [0], [1], [0, 0, 1, 1], [], []>} : vector<8x4xf32>, vector<4x16xf32>, vector<8x16xf32> -> vector<8x16xf32>
    %216 = arith.addf %211, %215 : vector<8x16xf32>
    %217 = vector.extract_strided_slice %206 {offsets = [0, 2], sizes = [4, 16], strides = [1, 1]} : vector<4x18xf32> to vector<4x16xf32>
    %c2_236 = arith.constant 2 : index
    %c2_237 = arith.constant 2 : index
    %c0_238 = arith.constant 0 : index
    %c0_239 = arith.constant 0 : index
    %218 = vector.load %arg12[%c2_236, %c2_237, %c0_238, %c0_239] : memref<3x3x8x4xf32, #tpu.memory_space<vmem>>, vector<1x1x8x4xf32>
    %219 = vector.shape_cast %218 : vector<1x1x8x4xf32> to vector<8x4xf32>
    %cst_240 = arith.constant dense<0.000000e+00> : vector<8x16xf32>
    %220 = tpu.matmul %219, %217, %cst_240 {dimension_numbers = #tpu.dot_dimension_numbers<[1], [0], [0], [1], [0, 0, 1, 1], [], []>} : vector<8x4xf32>, vector<4x16xf32>, vector<8x16xf32> -> vector<8x16xf32>
    %221 = arith.addf %216, %220 : vector<8x16xf32>
    %222 = vector.broadcast %0 : vector<8x1xf32> to vector<8x16xf32>
    %223 = arith.addf %221, %222 : vector<8x16xf32>
    %cst_241 = arith.constant 0.000000e+00 : f32
    %224 = vector.broadcast %cst_241 : f32 to vector<8x16xf32>
    %225 = arith.maximumf %223, %224 : vector<8x16xf32>
    %c0_242 = arith.constant 0 : index
    %c3 = arith.constant 3 : index
    %c0_243 = arith.constant 0 : index
    %c0_244 = arith.constant 0 : index
    %226 = vector.load %arg14[%c0_242, %c3, %c0_243, %c0_244] : memref<1x8x8x16xf32, #tpu.memory_space<vmem>>, vector<1x1x8x16xf32>
    %227 = vector.shape_cast %226 : vector<1x1x8x16xf32> to vector<8x16xf32>
    %228 = vector.shape_cast %225 : vector<8x16xf32> to vector<1x1x8x16xf32>
    tpu.vector_store %arg14[%c0_242, %c3, %c0_243, %c0_244], %228 {strides = array<i32>} : memref<1x8x8x16xf32, #tpu.memory_space<vmem>>, vector<1x1x8x16xf32>,
    %c0_245 = arith.constant 0 : index
    %c0_246 = arith.constant 0 : index
    %c0_247 = arith.constant 0 : index
    %c0_248 = arith.constant 0 : index
    %229 = vector.load %arg6[%c0_245, %c0_246, %c0_247, %c0_248] : memref<1x1x4x18xf32, #tpu.memory_space<vmem>>, vector<1x1x4x18xf32>
    %230 = vector.shape_cast %229 : vector<1x1x4x18xf32> to vector<4x18xf32>
    %231 = vector.extract_strided_slice %230 {offsets = [0, 0], sizes = [4, 16], strides = [1, 1]} : vector<4x18xf32> to vector<4x16xf32>
    %c0_249 = arith.constant 0 : index
    %c0_250 = arith.constant 0 : index
    %c0_251 = arith.constant 0 : index
    %c0_252 = arith.constant 0 : index
    %232 = vector.load %arg12[%c0_249, %c0_250, %c0_251, %c0_252] : memref<3x3x8x4xf32, #tpu.memory_space<vmem>>, vector<1x1x8x4xf32>
    %233 = vector.shape_cast %232 : vector<1x1x8x4xf32> to vector<8x4xf32>
    %cst_253 = arith.constant dense<0.000000e+00> : vector<8x16xf32>
    %234 = tpu.matmul %233, %231, %cst_253 {dimension_numbers = #tpu.dot_dimension_numbers<[1], [0], [0], [1], [0, 0, 1, 1], [], []>} : vector<8x4xf32>, vector<4x16xf32>, vector<8x16xf32> -> vector<8x16xf32>
    %235 = vector.extract_strided_slice %230 {offsets = [0, 1], sizes = [4, 16], strides = [1, 1]} : vector<4x18xf32> to vector<4x16xf32>
    %c0_254 = arith.constant 0 : index
    %c1_255 = arith.constant 1 : index
    %c0_256 = arith.constant 0 : index
    %c0_257 = arith.constant 0 : index
    %236 = vector.load %arg12[%c0_254, %c1_255, %c0_256, %c0_257] : memref<3x3x8x4xf32, #tpu.memory_space<vmem>>, vector<1x1x8x4xf32>
    %237 = vector.shape_cast %236 : vector<1x1x8x4xf32> to vector<8x4xf32>
    %cst_258 = arith.constant dense<0.000000e+00> : vector<8x16xf32>
    %238 = tpu.matmul %237, %235, %cst_258 {dimension_numbers = #tpu.dot_dimension_numbers<[1], [0], [0], [1], [0, 0, 1, 1], [], []>} : vector<8x4xf32>, vector<4x16xf32>, vector<8x16xf32> -> vector<8x16xf32>
    %239 = arith.addf %234, %238 : vector<8x16xf32>
    %240 = vector.extract_strided_slice %230 {offsets = [0, 2], sizes = [4, 16], strides = [1, 1]} : vector<4x18xf32> to vector<4x16xf32>
    %c0_259 = arith.constant 0 : index
    %c2_260 = arith.constant 2 : index
    %c0_261 = arith.constant 0 : index
    %c0_262 = arith.constant 0 : index
    %241 = vector.load %arg12[%c0_259, %c2_260, %c0_261, %c0_262] : memref<3x3x8x4xf32, #tpu.memory_space<vmem>>, vector<1x1x8x4xf32>
    %242 = vector.shape_cast %241 : vector<1x1x8x4xf32> to vector<8x4xf32>
    %cst_263 = arith.constant dense<0.000000e+00> : vector<8x16xf32>
    %243 = tpu.matmul %242, %240, %cst_263 {dimension_numbers = #tpu.dot_dimension_numbers<[1], [0], [0], [1], [0, 0, 1, 1], [], []>} : vector<8x4xf32>, vector<4x16xf32>, vector<8x16xf32> -> vector<8x16xf32>
    %244 = arith.addf %239, %243 : vector<8x16xf32>
    %c0_264 = arith.constant 0 : index
    %c0_265 = arith.constant 0 : index
    %c0_266 = arith.constant 0 : index
    %c0_267 = arith.constant 0 : index
    %245 = vector.load %arg7[%c0_264, %c0_265, %c0_266, %c0_267] : memref<1x1x4x18xf32, #tpu.memory_space<vmem>>, vector<1x1x4x18xf32>
    %246 = vector.shape_cast %245 : vector<1x1x4x18xf32> to vector<4x18xf32>
    %247 = vector.extract_strided_slice %246 {offsets = [0, 0], sizes = [4, 16], strides = [1, 1]} : vector<4x18xf32> to vector<4x16xf32>
    %c1_268 = arith.constant 1 : index
    %c0_269 = arith.constant 0 : index
    %c0_270 = arith.constant 0 : index
    %c0_271 = arith.constant 0 : index
    %248 = vector.load %arg12[%c1_268, %c0_269, %c0_270, %c0_271] : memref<3x3x8x4xf32, #tpu.memory_space<vmem>>, vector<1x1x8x4xf32>
    %249 = vector.shape_cast %248 : vector<1x1x8x4xf32> to vector<8x4xf32>
    %cst_272 = arith.constant dense<0.000000e+00> : vector<8x16xf32>
    %250 = tpu.matmul %249, %247, %cst_272 {dimension_numbers = #tpu.dot_dimension_numbers<[1], [0], [0], [1], [0, 0, 1, 1], [], []>} : vector<8x4xf32>, vector<4x16xf32>, vector<8x16xf32> -> vector<8x16xf32>
    %251 = arith.addf %244, %250 : vector<8x16xf32>
    %252 = vector.extract_strided_slice %246 {offsets = [0, 1], sizes = [4, 16], strides = [1, 1]} : vector<4x18xf32> to vector<4x16xf32>
    %c1_273 = arith.constant 1 : index
    %c1_274 = arith.constant 1 : index
    %c0_275 = arith.constant 0 : index
    %c0_276 = arith.constant 0 : index
    %253 = vector.load %arg12[%c1_273, %c1_274, %c0_275, %c0_276] : memref<3x3x8x4xf32, #tpu.memory_space<vmem>>, vector<1x1x8x4xf32>
    %254 = vector.shape_cast %253 : vector<1x1x8x4xf32> to vector<8x4xf32>
    %cst_277 = arith.constant dense<0.000000e+00> : vector<8x16xf32>
    %255 = tpu.matmul %254, %252, %cst_277 {dimension_numbers = #tpu.dot_dimension_numbers<[1], [0], [0], [1], [0, 0, 1, 1], [], []>} : vector<8x4xf32>, vector<4x16xf32>, vector<8x16xf32> -> vector<8x16xf32>
    %256 = arith.addf %251, %255 : vector<8x16xf32>
    %257 = vector.extract_strided_slice %246 {offsets = [0, 2], sizes = [4, 16], strides = [1, 1]} : vector<4x18xf32> to vector<4x16xf32>
    %c1_278 = arith.constant 1 : index
    %c2_279 = arith.constant 2 : index
    %c0_280 = arith.constant 0 : index
    %c0_281 = arith.constant 0 : index
    %258 = vector.load %arg12[%c1_278, %c2_279, %c0_280, %c0_281] : memref<3x3x8x4xf32, #tpu.memory_space<vmem>>, vector<1x1x8x4xf32>
    %259 = vector.shape_cast %258 : vector<1x1x8x4xf32> to vector<8x4xf32>
    %cst_282 = arith.constant dense<0.000000e+00> : vector<8x16xf32>
    %260 = tpu.matmul %259, %257, %cst_282 {dimension_numbers = #tpu.dot_dimension_numbers<[1], [0], [0], [1], [0, 0, 1, 1], [], []>} : vector<8x4xf32>, vector<4x16xf32>, vector<8x16xf32> -> vector<8x16xf32>
    %261 = arith.addf %256, %260 : vector<8x16xf32>
    %c0_283 = arith.constant 0 : index
    %c0_284 = arith.constant 0 : index
    %c0_285 = arith.constant 0 : index
    %c0_286 = arith.constant 0 : index
    %262 = vector.load %arg8[%c0_283, %c0_284, %c0_285, %c0_286] : memref<1x1x4x18xf32, #tpu.memory_space<vmem>>, vector<1x1x4x18xf32>
    %263 = vector.shape_cast %262 : vector<1x1x4x18xf32> to vector<4x18xf32>
    %264 = vector.extract_strided_slice %263 {offsets = [0, 0], sizes = [4, 16], strides = [1, 1]} : vector<4x18xf32> to vector<4x16xf32>
    %c2_287 = arith.constant 2 : index
    %c0_288 = arith.constant 0 : index
    %c0_289 = arith.constant 0 : index
    %c0_290 = arith.constant 0 : index
    %265 = vector.load %arg12[%c2_287, %c0_288, %c0_289, %c0_290] : memref<3x3x8x4xf32, #tpu.memory_space<vmem>>, vector<1x1x8x4xf32>
    %266 = vector.shape_cast %265 : vector<1x1x8x4xf32> to vector<8x4xf32>
    %cst_291 = arith.constant dense<0.000000e+00> : vector<8x16xf32>
    %267 = tpu.matmul %266, %264, %cst_291 {dimension_numbers = #tpu.dot_dimension_numbers<[1], [0], [0], [1], [0, 0, 1, 1], [], []>} : vector<8x4xf32>, vector<4x16xf32>, vector<8x16xf32> -> vector<8x16xf32>
    %268 = arith.addf %261, %267 : vector<8x16xf32>
    %269 = vector.extract_strided_slice %263 {offsets = [0, 1], sizes = [4, 16], strides = [1, 1]} : vector<4x18xf32> to vector<4x16xf32>
    %c2_292 = arith.constant 2 : index
    %c1_293 = arith.constant 1 : index
    %c0_294 = arith.constant 0 : index
    %c0_295 = arith.constant 0 : index
    %270 = vector.load %arg12[%c2_292, %c1_293, %c0_294, %c0_295] : memref<3x3x8x4xf32, #tpu.memory_space<vmem>>, vector<1x1x8x4xf32>
    %271 = vector.shape_cast %270 : vector<1x1x8x4xf32> to vector<8x4xf32>
    %cst_296 = arith.constant dense<0.000000e+00> : vector<8x16xf32>
    %272 = tpu.matmul %271, %269, %cst_296 {dimension_numbers = #tpu.dot_dimension_numbers<[1], [0], [0], [1], [0, 0, 1, 1], [], []>} : vector<8x4xf32>, vector<4x16xf32>, vector<8x16xf32> -> vector<8x16xf32>
    %273 = arith.addf %268, %272 : vector<8x16xf32>
    %274 = vector.extract_strided_slice %263 {offsets = [0, 2], sizes = [4, 16], strides = [1, 1]} : vector<4x18xf32> to vector<4x16xf32>
    %c2_297 = arith.constant 2 : index
    %c2_298 = arith.constant 2 : index
    %c0_299 = arith.constant 0 : index
    %c0_300 = arith.constant 0 : index
    %275 = vector.load %arg12[%c2_297, %c2_298, %c0_299, %c0_300] : memref<3x3x8x4xf32, #tpu.memory_space<vmem>>, vector<1x1x8x4xf32>
    %276 = vector.shape_cast %275 : vector<1x1x8x4xf32> to vector<8x4xf32>
    %cst_301 = arith.constant dense<0.000000e+00> : vector<8x16xf32>
    %277 = tpu.matmul %276, %274, %cst_301 {dimension_numbers = #tpu.dot_dimension_numbers<[1], [0], [0], [1], [0, 0, 1, 1], [], []>} : vector<8x4xf32>, vector<4x16xf32>, vector<8x16xf32> -> vector<8x16xf32>
    %278 = arith.addf %273, %277 : vector<8x16xf32>
    %279 = vector.broadcast %0 : vector<8x1xf32> to vector<8x16xf32>
    %280 = arith.addf %278, %279 : vector<8x16xf32>
    %cst_302 = arith.constant 0.000000e+00 : f32
    %281 = vector.broadcast %cst_302 : f32 to vector<8x16xf32>
    %282 = arith.maximumf %280, %281 : vector<8x16xf32>
    %c0_303 = arith.constant 0 : index
    %c4 = arith.constant 4 : index
    %c0_304 = arith.constant 0 : index
    %c0_305 = arith.constant 0 : index
    %283 = vector.load %arg14[%c0_303, %c4, %c0_304, %c0_305] : memref<1x8x8x16xf32, #tpu.memory_space<vmem>>, vector<1x1x8x16xf32>
    %284 = vector.shape_cast %283 : vector<1x1x8x16xf32> to vector<8x16xf32>
    %285 = vector.shape_cast %282 : vector<8x16xf32> to vector<1x1x8x16xf32>
    tpu.vector_store %arg14[%c0_303, %c4, %c0_304, %c0_305], %285 {strides = array<i32>} : memref<1x8x8x16xf32, #tpu.memory_space<vmem>>, vector<1x1x8x16xf32>,
    %c0_306 = arith.constant 0 : index
    %c0_307 = arith.constant 0 : index
    %c0_308 = arith.constant 0 : index
    %c0_309 = arith.constant 0 : index
    %286 = vector.load %arg7[%c0_306, %c0_307, %c0_308, %c0_309] : memref<1x1x4x18xf32, #tpu.memory_space<vmem>>, vector<1x1x4x18xf32>
    %287 = vector.shape_cast %286 : vector<1x1x4x18xf32> to vector<4x18xf32>
    %288 = vector.extract_strided_slice %287 {offsets = [0, 0], sizes = [4, 16], strides = [1, 1]} : vector<4x18xf32> to vector<4x16xf32>
    %c0_310 = arith.constant 0 : index
    %c0_311 = arith.constant 0 : index
    %c0_312 = arith.constant 0 : index
    %c0_313 = arith.constant 0 : index
    %289 = vector.load %arg12[%c0_310, %c0_311, %c0_312, %c0_313] : memref<3x3x8x4xf32, #tpu.memory_space<vmem>>, vector<1x1x8x4xf32>
    %290 = vector.shape_cast %289 : vector<1x1x8x4xf32> to vector<8x4xf32>
    %cst_314 = arith.constant dense<0.000000e+00> : vector<8x16xf32>
    %291 = tpu.matmul %290, %288, %cst_314 {dimension_numbers = #tpu.dot_dimension_numbers<[1], [0], [0], [1], [0, 0, 1, 1], [], []>} : vector<8x4xf32>, vector<4x16xf32>, vector<8x16xf32> -> vector<8x16xf32>
    %292 = vector.extract_strided_slice %287 {offsets = [0, 1], sizes = [4, 16], strides = [1, 1]} : vector<4x18xf32> to vector<4x16xf32>
    %c0_315 = arith.constant 0 : index
    %c1_316 = arith.constant 1 : index
    %c0_317 = arith.constant 0 : index
    %c0_318 = arith.constant 0 : index
    %293 = vector.load %arg12[%c0_315, %c1_316, %c0_317, %c0_318] : memref<3x3x8x4xf32, #tpu.memory_space<vmem>>, vector<1x1x8x4xf32>
    %294 = vector.shape_cast %293 : vector<1x1x8x4xf32> to vector<8x4xf32>
    %cst_319 = arith.constant dense<0.000000e+00> : vector<8x16xf32>
    %295 = tpu.matmul %294, %292, %cst_319 {dimension_numbers = #tpu.dot_dimension_numbers<[1], [0], [0], [1], [0, 0, 1, 1], [], []>} : vector<8x4xf32>, vector<4x16xf32>, vector<8x16xf32> -> vector<8x16xf32>
    %296 = arith.addf %291, %295 : vector<8x16xf32>
    %297 = vector.extract_strided_slice %287 {offsets = [0, 2], sizes = [4, 16], strides = [1, 1]} : vector<4x18xf32> to vector<4x16xf32>
    %c0_320 = arith.constant 0 : index
    %c2_321 = arith.constant 2 : index
    %c0_322 = arith.constant 0 : index
    %c0_323 = arith.constant 0 : index
    %298 = vector.load %arg12[%c0_320, %c2_321, %c0_322, %c0_323] : memref<3x3x8x4xf32, #tpu.memory_space<vmem>>, vector<1x1x8x4xf32>
    %299 = vector.shape_cast %298 : vector<1x1x8x4xf32> to vector<8x4xf32>
    %cst_324 = arith.constant dense<0.000000e+00> : vector<8x16xf32>
    %300 = tpu.matmul %299, %297, %cst_324 {dimension_numbers = #tpu.dot_dimension_numbers<[1], [0], [0], [1], [0, 0, 1, 1], [], []>} : vector<8x4xf32>, vector<4x16xf32>, vector<8x16xf32> -> vector<8x16xf32>
    %301 = arith.addf %296, %300 : vector<8x16xf32>
    %c0_325 = arith.constant 0 : index
    %c0_326 = arith.constant 0 : index
    %c0_327 = arith.constant 0 : index
    %c0_328 = arith.constant 0 : index
    %302 = vector.load %arg8[%c0_325, %c0_326, %c0_327, %c0_328] : memref<1x1x4x18xf32, #tpu.memory_space<vmem>>, vector<1x1x4x18xf32>
    %303 = vector.shape_cast %302 : vector<1x1x4x18xf32> to vector<4x18xf32>
    %304 = vector.extract_strided_slice %303 {offsets = [0, 0], sizes = [4, 16], strides = [1, 1]} : vector<4x18xf32> to vector<4x16xf32>
    %c1_329 = arith.constant 1 : index
    %c0_330 = arith.constant 0 : index
    %c0_331 = arith.constant 0 : index
    %c0_332 = arith.constant 0 : index
    %305 = vector.load %arg12[%c1_329, %c0_330, %c0_331, %c0_332] : memref<3x3x8x4xf32, #tpu.memory_space<vmem>>, vector<1x1x8x4xf32>
    %306 = vector.shape_cast %305 : vector<1x1x8x4xf32> to vector<8x4xf32>
    %cst_333 = arith.constant dense<0.000000e+00> : vector<8x16xf32>
    %307 = tpu.matmul %306, %304, %cst_333 {dimension_numbers = #tpu.dot_dimension_numbers<[1], [0], [0], [1], [0, 0, 1, 1], [], []>} : vector<8x4xf32>, vector<4x16xf32>, vector<8x16xf32> -> vector<8x16xf32>
    %308 = arith.addf %301, %307 : vector<8x16xf32>
    %309 = vector.extract_strided_slice %303 {offsets = [0, 1], sizes = [4, 16], strides = [1, 1]} : vector<4x18xf32> to vector<4x16xf32>
    %c1_334 = arith.constant 1 : index
    %c1_335 = arith.constant 1 : index
    %c0_336 = arith.constant 0 : index
    %c0_337 = arith.constant 0 : index
    %310 = vector.load %arg12[%c1_334, %c1_335, %c0_336, %c0_337] : memref<3x3x8x4xf32, #tpu.memory_space<vmem>>, vector<1x1x8x4xf32>
    %311 = vector.shape_cast %310 : vector<1x1x8x4xf32> to vector<8x4xf32>
    %cst_338 = arith.constant dense<0.000000e+00> : vector<8x16xf32>
    %312 = tpu.matmul %311, %309, %cst_338 {dimension_numbers = #tpu.dot_dimension_numbers<[1], [0], [0], [1], [0, 0, 1, 1], [], []>} : vector<8x4xf32>, vector<4x16xf32>, vector<8x16xf32> -> vector<8x16xf32>
    %313 = arith.addf %308, %312 : vector<8x16xf32>
    %314 = vector.extract_strided_slice %303 {offsets = [0, 2], sizes = [4, 16], strides = [1, 1]} : vector<4x18xf32> to vector<4x16xf32>
    %c1_339 = arith.constant 1 : index
    %c2_340 = arith.constant 2 : index
    %c0_341 = arith.constant 0 : index
    %c0_342 = arith.constant 0 : index
    %315 = vector.load %arg12[%c1_339, %c2_340, %c0_341, %c0_342] : memref<3x3x8x4xf32, #tpu.memory_space<vmem>>, vector<1x1x8x4xf32>
    %316 = vector.shape_cast %315 : vector<1x1x8x4xf32> to vector<8x4xf32>
    %cst_343 = arith.constant dense<0.000000e+00> : vector<8x16xf32>
    %317 = tpu.matmul %316, %314, %cst_343 {dimension_numbers = #tpu.dot_dimension_numbers<[1], [0], [0], [1], [0, 0, 1, 1], [], []>} : vector<8x4xf32>, vector<4x16xf32>, vector<8x16xf32> -> vector<8x16xf32>
    %318 = arith.addf %313, %317 : vector<8x16xf32>
    %c0_344 = arith.constant 0 : index
    %c0_345 = arith.constant 0 : index
    %c0_346 = arith.constant 0 : index
    %c0_347 = arith.constant 0 : index
    %319 = vector.load %arg9[%c0_344, %c0_345, %c0_346, %c0_347] : memref<1x1x4x18xf32, #tpu.memory_space<vmem>>, vector<1x1x4x18xf32>
    %320 = vector.shape_cast %319 : vector<1x1x4x18xf32> to vector<4x18xf32>
    %321 = vector.extract_strided_slice %320 {offsets = [0, 0], sizes = [4, 16], strides = [1, 1]} : vector<4x18xf32> to vector<4x16xf32>
    %c2_348 = arith.constant 2 : index
    %c0_349 = arith.constant 0 : index
    %c0_350 = arith.constant 0 : index
    %c0_351 = arith.constant 0 : index
    %322 = vector.load %arg12[%c2_348, %c0_349, %c0_350, %c0_351] : memref<3x3x8x4xf32, #tpu.memory_space<vmem>>, vector<1x1x8x4xf32>
    %323 = vector.shape_cast %322 : vector<1x1x8x4xf32> to vector<8x4xf32>
    %cst_352 = arith.constant dense<0.000000e+00> : vector<8x16xf32>
    %324 = tpu.matmul %323, %321, %cst_352 {dimension_numbers = #tpu.dot_dimension_numbers<[1], [0], [0], [1], [0, 0, 1, 1], [], []>} : vector<8x4xf32>, vector<4x16xf32>, vector<8x16xf32> -> vector<8x16xf32>
    %325 = arith.addf %318, %324 : vector<8x16xf32>
    %326 = vector.extract_strided_slice %320 {offsets = [0, 1], sizes = [4, 16], strides = [1, 1]} : vector<4x18xf32> to vector<4x16xf32>
    %c2_353 = arith.constant 2 : index
    %c1_354 = arith.constant 1 : index
    %c0_355 = arith.constant 0 : index
    %c0_356 = arith.constant 0 : index
    %327 = vector.load %arg12[%c2_353, %c1_354, %c0_355, %c0_356] : memref<3x3x8x4xf32, #tpu.memory_space<vmem>>, vector<1x1x8x4xf32>
    %328 = vector.shape_cast %327 : vector<1x1x8x4xf32> to vector<8x4xf32>
    %cst_357 = arith.constant dense<0.000000e+00> : vector<8x16xf32>
    %329 = tpu.matmul %328, %326, %cst_357 {dimension_numbers = #tpu.dot_dimension_numbers<[1], [0], [0], [1], [0, 0, 1, 1], [], []>} : vector<8x4xf32>, vector<4x16xf32>, vector<8x16xf32> -> vector<8x16xf32>
    %330 = arith.addf %325, %329 : vector<8x16xf32>
    %331 = vector.extract_strided_slice %320 {offsets = [0, 2], sizes = [4, 16], strides = [1, 1]} : vector<4x18xf32> to vector<4x16xf32>
    %c2_358 = arith.constant 2 : index
    %c2_359 = arith.constant 2 : index
    %c0_360 = arith.constant 0 : index
    %c0_361 = arith.constant 0 : index
    %332 = vector.load %arg12[%c2_358, %c2_359, %c0_360, %c0_361] : memref<3x3x8x4xf32, #tpu.memory_space<vmem>>, vector<1x1x8x4xf32>
    %333 = vector.shape_cast %332 : vector<1x1x8x4xf32> to vector<8x4xf32>
    %cst_362 = arith.constant dense<0.000000e+00> : vector<8x16xf32>
    %334 = tpu.matmul %333, %331, %cst_362 {dimension_numbers = #tpu.dot_dimension_numbers<[1], [0], [0], [1], [0, 0, 1, 1], [], []>} : vector<8x4xf32>, vector<4x16xf32>, vector<8x16xf32> -> vector<8x16xf32>
    %335 = arith.addf %330, %334 : vector<8x16xf32>
    %336 = vector.broadcast %0 : vector<8x1xf32> to vector<8x16xf32>
    %337 = arith.addf %335, %336 : vector<8x16xf32>
    %cst_363 = arith.constant 0.000000e+00 : f32
    %338 = vector.broadcast %cst_363 : f32 to vector<8x16xf32>
    %339 = arith.maximumf %337, %338 : vector<8x16xf32>
    %c0_364 = arith.constant 0 : index
    %c5 = arith.constant 5 : index
    %c0_365 = arith.constant 0 : index
    %c0_366 = arith.constant 0 : index
    %340 = vector.load %arg14[%c0_364, %c5, %c0_365, %c0_366] : memref<1x8x8x16xf32, #tpu.memory_space<vmem>>, vector<1x1x8x16xf32>
    %341 = vector.shape_cast %340 : vector<1x1x8x16xf32> to vector<8x16xf32>
    %342 = vector.shape_cast %339 : vector<8x16xf32> to vector<1x1x8x16xf32>
    tpu.vector_store %arg14[%c0_364, %c5, %c0_365, %c0_366], %342 {strides = array<i32>} : memref<1x8x8x16xf32, #tpu.memory_space<vmem>>, vector<1x1x8x16xf32>,
    %c0_367 = arith.constant 0 : index
    %c0_368 = arith.constant 0 : index
    %c0_369 = arith.constant 0 : index
    %c0_370 = arith.constant 0 : index
    %343 = vector.load %arg8[%c0_367, %c0_368, %c0_369, %c0_370] : memref<1x1x4x18xf32, #tpu.memory_space<vmem>>, vector<1x1x4x18xf32>
    %344 = vector.shape_cast %343 : vector<1x1x4x18xf32> to vector<4x18xf32>
    %345 = vector.extract_strided_slice %344 {offsets = [0, 0], sizes = [4, 16], strides = [1, 1]} : vector<4x18xf32> to vector<4x16xf32>
    %c0_371 = arith.constant 0 : index
    %c0_372 = arith.constant 0 : index
    %c0_373 = arith.constant 0 : index
    %c0_374 = arith.constant 0 : index
    %346 = vector.load %arg12[%c0_371, %c0_372, %c0_373, %c0_374] : memref<3x3x8x4xf32, #tpu.memory_space<vmem>>, vector<1x1x8x4xf32>
    %347 = vector.shape_cast %346 : vector<1x1x8x4xf32> to vector<8x4xf32>
    %cst_375 = arith.constant dense<0.000000e+00> : vector<8x16xf32>
    %348 = tpu.matmul %347, %345, %cst_375 {dimension_numbers = #tpu.dot_dimension_numbers<[1], [0], [0], [1], [0, 0, 1, 1], [], []>} : vector<8x4xf32>, vector<4x16xf32>, vector<8x16xf32> -> vector<8x16xf32>
    %349 = vector.extract_strided_slice %344 {offsets = [0, 1], sizes = [4, 16], strides = [1, 1]} : vector<4x18xf32> to vector<4x16xf32>
    %c0_376 = arith.constant 0 : index
    %c1_377 = arith.constant 1 : index
    %c0_378 = arith.constant 0 : index
    %c0_379 = arith.constant 0 : index
    %350 = vector.load %arg12[%c0_376, %c1_377, %c0_378, %c0_379] : memref<3x3x8x4xf32, #tpu.memory_space<vmem>>, vector<1x1x8x4xf32>
    %351 = vector.shape_cast %350 : vector<1x1x8x4xf32> to vector<8x4xf32>
    %cst_380 = arith.constant dense<0.000000e+00> : vector<8x16xf32>
    %352 = tpu.matmul %351, %349, %cst_380 {dimension_numbers = #tpu.dot_dimension_numbers<[1], [0], [0], [1], [0, 0, 1, 1], [], []>} : vector<8x4xf32>, vector<4x16xf32>, vector<8x16xf32> -> vector<8x16xf32>
    %353 = arith.addf %348, %352 : vector<8x16xf32>
    %354 = vector.extract_strided_slice %344 {offsets = [0, 2], sizes = [4, 16], strides = [1, 1]} : vector<4x18xf32> to vector<4x16xf32>
    %c0_381 = arith.constant 0 : index
    %c2_382 = arith.constant 2 : index
    %c0_383 = arith.constant 0 : index
    %c0_384 = arith.constant 0 : index
    %355 = vector.load %arg12[%c0_381, %c2_382, %c0_383, %c0_384] : memref<3x3x8x4xf32, #tpu.memory_space<vmem>>, vector<1x1x8x4xf32>
    %356 = vector.shape_cast %355 : vector<1x1x8x4xf32> to vector<8x4xf32>
    %cst_385 = arith.constant dense<0.000000e+00> : vector<8x16xf32>
    %357 = tpu.matmul %356, %354, %cst_385 {dimension_numbers = #tpu.dot_dimension_numbers<[1], [0], [0], [1], [0, 0, 1, 1], [], []>} : vector<8x4xf32>, vector<4x16xf32>, vector<8x16xf32> -> vector<8x16xf32>
    %358 = arith.addf %353, %357 : vector<8x16xf32>
    %c0_386 = arith.constant 0 : index
    %c0_387 = arith.constant 0 : index
    %c0_388 = arith.constant 0 : index
    %c0_389 = arith.constant 0 : index
    %359 = vector.load %arg9[%c0_386, %c0_387, %c0_388, %c0_389] : memref<1x1x4x18xf32, #tpu.memory_space<vmem>>, vector<1x1x4x18xf32>
    %360 = vector.shape_cast %359 : vector<1x1x4x18xf32> to vector<4x18xf32>
    %361 = vector.extract_strided_slice %360 {offsets = [0, 0], sizes = [4, 16], strides = [1, 1]} : vector<4x18xf32> to vector<4x16xf32>
    %c1_390 = arith.constant 1 : index
    %c0_391 = arith.constant 0 : index
    %c0_392 = arith.constant 0 : index
    %c0_393 = arith.constant 0 : index
    %362 = vector.load %arg12[%c1_390, %c0_391, %c0_392, %c0_393] : memref<3x3x8x4xf32, #tpu.memory_space<vmem>>, vector<1x1x8x4xf32>
    %363 = vector.shape_cast %362 : vector<1x1x8x4xf32> to vector<8x4xf32>
    %cst_394 = arith.constant dense<0.000000e+00> : vector<8x16xf32>
    %364 = tpu.matmul %363, %361, %cst_394 {dimension_numbers = #tpu.dot_dimension_numbers<[1], [0], [0], [1], [0, 0, 1, 1], [], []>} : vector<8x4xf32>, vector<4x16xf32>, vector<8x16xf32> -> vector<8x16xf32>
    %365 = arith.addf %358, %364 : vector<8x16xf32>
    %366 = vector.extract_strided_slice %360 {offsets = [0, 1], sizes = [4, 16], strides = [1, 1]} : vector<4x18xf32> to vector<4x16xf32>
    %c1_395 = arith.constant 1 : index
    %c1_396 = arith.constant 1 : index
    %c0_397 = arith.constant 0 : index
    %c0_398 = arith.constant 0 : index
    %367 = vector.load %arg12[%c1_395, %c1_396, %c0_397, %c0_398] : memref<3x3x8x4xf32, #tpu.memory_space<vmem>>, vector<1x1x8x4xf32>
    %368 = vector.shape_cast %367 : vector<1x1x8x4xf32> to vector<8x4xf32>
    %cst_399 = arith.constant dense<0.000000e+00> : vector<8x16xf32>
    %369 = tpu.matmul %368, %366, %cst_399 {dimension_numbers = #tpu.dot_dimension_numbers<[1], [0], [0], [1], [0, 0, 1, 1], [], []>} : vector<8x4xf32>, vector<4x16xf32>, vector<8x16xf32> -> vector<8x16xf32>
    %370 = arith.addf %365, %369 : vector<8x16xf32>
    %371 = vector.extract_strided_slice %360 {offsets = [0, 2], sizes = [4, 16], strides = [1, 1]} : vector<4x18xf32> to vector<4x16xf32>
    %c1_400 = arith.constant 1 : index
    %c2_401 = arith.constant 2 : index
    %c0_402 = arith.constant 0 : index
    %c0_403 = arith.constant 0 : index
    %372 = vector.load %arg12[%c1_400, %c2_401, %c0_402, %c0_403] : memref<3x3x8x4xf32, #tpu.memory_space<vmem>>, vector<1x1x8x4xf32>
    %373 = vector.shape_cast %372 : vector<1x1x8x4xf32> to vector<8x4xf32>
    %cst_404 = arith.constant dense<0.000000e+00> : vector<8x16xf32>
    %374 = tpu.matmul %373, %371, %cst_404 {dimension_numbers = #tpu.dot_dimension_numbers<[1], [0], [0], [1], [0, 0, 1, 1], [], []>} : vector<8x4xf32>, vector<4x16xf32>, vector<8x16xf32> -> vector<8x16xf32>
    %375 = arith.addf %370, %374 : vector<8x16xf32>
    %c0_405 = arith.constant 0 : index
    %c0_406 = arith.constant 0 : index
    %c0_407 = arith.constant 0 : index
    %c0_408 = arith.constant 0 : index
    %376 = vector.load %arg10[%c0_405, %c0_406, %c0_407, %c0_408] : memref<1x1x4x18xf32, #tpu.memory_space<vmem>>, vector<1x1x4x18xf32>
    %377 = vector.shape_cast %376 : vector<1x1x4x18xf32> to vector<4x18xf32>
    %378 = vector.extract_strided_slice %377 {offsets = [0, 0], sizes = [4, 16], strides = [1, 1]} : vector<4x18xf32> to vector<4x16xf32>
    %c2_409 = arith.constant 2 : index
    %c0_410 = arith.constant 0 : index
    %c0_411 = arith.constant 0 : index
    %c0_412 = arith.constant 0 : index
    %379 = vector.load %arg12[%c2_409, %c0_410, %c0_411, %c0_412] : memref<3x3x8x4xf32, #tpu.memory_space<vmem>>, vector<1x1x8x4xf32>
    %380 = vector.shape_cast %379 : vector<1x1x8x4xf32> to vector<8x4xf32>
    %cst_413 = arith.constant dense<0.000000e+00> : vector<8x16xf32>
    %381 = tpu.matmul %380, %378, %cst_413 {dimension_numbers = #tpu.dot_dimension_numbers<[1], [0], [0], [1], [0, 0, 1, 1], [], []>} : vector<8x4xf32>, vector<4x16xf32>, vector<8x16xf32> -> vector<8x16xf32>
    %382 = arith.addf %375, %381 : vector<8x16xf32>
    %383 = vector.extract_strided_slice %377 {offsets = [0, 1], sizes = [4, 16], strides = [1, 1]} : vector<4x18xf32> to vector<4x16xf32>
    %c2_414 = arith.constant 2 : index
    %c1_415 = arith.constant 1 : index
    %c0_416 = arith.constant 0 : index
    %c0_417 = arith.constant 0 : index
    %384 = vector.load %arg12[%c2_414, %c1_415, %c0_416, %c0_417] : memref<3x3x8x4xf32, #tpu.memory_space<vmem>>, vector<1x1x8x4xf32>
    %385 = vector.shape_cast %384 : vector<1x1x8x4xf32> to vector<8x4xf32>
    %cst_418 = arith.constant dense<0.000000e+00> : vector<8x16xf32>
    %386 = tpu.matmul %385, %383, %cst_418 {dimension_numbers = #tpu.dot_dimension_numbers<[1], [0], [0], [1], [0, 0, 1, 1], [], []>} : vector<8x4xf32>, vector<4x16xf32>, vector<8x16xf32> -> vector<8x16xf32>
    %387 = arith.addf %382, %386 : vector<8x16xf32>
    %388 = vector.extract_strided_slice %377 {offsets = [0, 2], sizes = [4, 16], strides = [1, 1]} : vector<4x18xf32> to vector<4x16xf32>
    %c2_419 = arith.constant 2 : index
    %c2_420 = arith.constant 2 : index
    %c0_421 = arith.constant 0 : index
    %c0_422 = arith.constant 0 : index
    %389 = vector.load %arg12[%c2_419, %c2_420, %c0_421, %c0_422] : memref<3x3x8x4xf32, #tpu.memory_space<vmem>>, vector<1x1x8x4xf32>
    %390 = vector.shape_cast %389 : vector<1x1x8x4xf32> to vector<8x4xf32>
    %cst_423 = arith.constant dense<0.000000e+00> : vector<8x16xf32>
    %391 = tpu.matmul %390, %388, %cst_423 {dimension_numbers = #tpu.dot_dimension_numbers<[1], [0], [0], [1], [0, 0, 1, 1], [], []>} : vector<8x4xf32>, vector<4x16xf32>, vector<8x16xf32> -> vector<8x16xf32>
    %392 = arith.addf %387, %391 : vector<8x16xf32>
    %393 = vector.broadcast %0 : vector<8x1xf32> to vector<8x16xf32>
    %394 = arith.addf %392, %393 : vector<8x16xf32>
    %cst_424 = arith.constant 0.000000e+00 : f32
    %395 = vector.broadcast %cst_424 : f32 to vector<8x16xf32>
    %396 = arith.maximumf %394, %395 : vector<8x16xf32>
    %c0_425 = arith.constant 0 : index
    %c6 = arith.constant 6 : index
    %c0_426 = arith.constant 0 : index
    %c0_427 = arith.constant 0 : index
    %397 = vector.load %arg14[%c0_425, %c6, %c0_426, %c0_427] : memref<1x8x8x16xf32, #tpu.memory_space<vmem>>, vector<1x1x8x16xf32>
    %398 = vector.shape_cast %397 : vector<1x1x8x16xf32> to vector<8x16xf32>
    %399 = vector.shape_cast %396 : vector<8x16xf32> to vector<1x1x8x16xf32>
    tpu.vector_store %arg14[%c0_425, %c6, %c0_426, %c0_427], %399 {strides = array<i32>} : memref<1x8x8x16xf32, #tpu.memory_space<vmem>>, vector<1x1x8x16xf32>,
    %c0_428 = arith.constant 0 : index
    %c0_429 = arith.constant 0 : index
    %c0_430 = arith.constant 0 : index
    %c0_431 = arith.constant 0 : index
    %400 = vector.load %arg9[%c0_428, %c0_429, %c0_430, %c0_431] : memref<1x1x4x18xf32, #tpu.memory_space<vmem>>, vector<1x1x4x18xf32>
    %401 = vector.shape_cast %400 : vector<1x1x4x18xf32> to vector<4x18xf32>
    %402 = vector.extract_strided_slice %401 {offsets = [0, 0], sizes = [4, 16], strides = [1, 1]} : vector<4x18xf32> to vector<4x16xf32>
    %c0_432 = arith.constant 0 : index
    %c0_433 = arith.constant 0 : index
    %c0_434 = arith.constant 0 : index
    %c0_435 = arith.constant 0 : index
    %403 = vector.load %arg12[%c0_432, %c0_433, %c0_434, %c0_435] : memref<3x3x8x4xf32, #tpu.memory_space<vmem>>, vector<1x1x8x4xf32>
    %404 = vector.shape_cast %403 : vector<1x1x8x4xf32> to vector<8x4xf32>
    %cst_436 = arith.constant dense<0.000000e+00> : vector<8x16xf32>
    %405 = tpu.matmul %404, %402, %cst_436 {dimension_numbers = #tpu.dot_dimension_numbers<[1], [0], [0], [1], [0, 0, 1, 1], [], []>} : vector<8x4xf32>, vector<4x16xf32>, vector<8x16xf32> -> vector<8x16xf32>
    %406 = vector.extract_strided_slice %401 {offsets = [0, 1], sizes = [4, 16], strides = [1, 1]} : vector<4x18xf32> to vector<4x16xf32>
    %c0_437 = arith.constant 0 : index
    %c1_438 = arith.constant 1 : index
    %c0_439 = arith.constant 0 : index
    %c0_440 = arith.constant 0 : index
    %407 = vector.load %arg12[%c0_437, %c1_438, %c0_439, %c0_440] : memref<3x3x8x4xf32, #tpu.memory_space<vmem>>, vector<1x1x8x4xf32>
    %408 = vector.shape_cast %407 : vector<1x1x8x4xf32> to vector<8x4xf32>
    %cst_441 = arith.constant dense<0.000000e+00> : vector<8x16xf32>
    %409 = tpu.matmul %408, %406, %cst_441 {dimension_numbers = #tpu.dot_dimension_numbers<[1], [0], [0], [1], [0, 0, 1, 1], [], []>} : vector<8x4xf32>, vector<4x16xf32>, vector<8x16xf32> -> vector<8x16xf32>
    %410 = arith.addf %405, %409 : vector<8x16xf32>
    %411 = vector.extract_strided_slice %401 {offsets = [0, 2], sizes = [4, 16], strides = [1, 1]} : vector<4x18xf32> to vector<4x16xf32>
    %c0_442 = arith.constant 0 : index
    %c2_443 = arith.constant 2 : index
    %c0_444 = arith.constant 0 : index
    %c0_445 = arith.constant 0 : index
    %412 = vector.load %arg12[%c0_442, %c2_443, %c0_444, %c0_445] : memref<3x3x8x4xf32, #tpu.memory_space<vmem>>, vector<1x1x8x4xf32>
    %413 = vector.shape_cast %412 : vector<1x1x8x4xf32> to vector<8x4xf32>
    %cst_446 = arith.constant dense<0.000000e+00> : vector<8x16xf32>
    %414 = tpu.matmul %413, %411, %cst_446 {dimension_numbers = #tpu.dot_dimension_numbers<[1], [0], [0], [1], [0, 0, 1, 1], [], []>} : vector<8x4xf32>, vector<4x16xf32>, vector<8x16xf32> -> vector<8x16xf32>
    %415 = arith.addf %410, %414 : vector<8x16xf32>
    %c0_447 = arith.constant 0 : index
    %c0_448 = arith.constant 0 : index
    %c0_449 = arith.constant 0 : index
    %c0_450 = arith.constant 0 : index
    %416 = vector.load %arg10[%c0_447, %c0_448, %c0_449, %c0_450] : memref<1x1x4x18xf32, #tpu.memory_space<vmem>>, vector<1x1x4x18xf32>
    %417 = vector.shape_cast %416 : vector<1x1x4x18xf32> to vector<4x18xf32>
    %418 = vector.extract_strided_slice %417 {offsets = [0, 0], sizes = [4, 16], strides = [1, 1]} : vector<4x18xf32> to vector<4x16xf32>
    %c1_451 = arith.constant 1 : index
    %c0_452 = arith.constant 0 : index
    %c0_453 = arith.constant 0 : index
    %c0_454 = arith.constant 0 : index
    %419 = vector.load %arg12[%c1_451, %c0_452, %c0_453, %c0_454] : memref<3x3x8x4xf32, #tpu.memory_space<vmem>>, vector<1x1x8x4xf32>
    %420 = vector.shape_cast %419 : vector<1x1x8x4xf32> to vector<8x4xf32>
    %cst_455 = arith.constant dense<0.000000e+00> : vector<8x16xf32>
    %421 = tpu.matmul %420, %418, %cst_455 {dimension_numbers = #tpu.dot_dimension_numbers<[1], [0], [0], [1], [0, 0, 1, 1], [], []>} : vector<8x4xf32>, vector<4x16xf32>, vector<8x16xf32> -> vector<8x16xf32>
    %422 = arith.addf %415, %421 : vector<8x16xf32>
    %423 = vector.extract_strided_slice %417 {offsets = [0, 1], sizes = [4, 16], strides = [1, 1]} : vector<4x18xf32> to vector<4x16xf32>
    %c1_456 = arith.constant 1 : index
    %c1_457 = arith.constant 1 : index
    %c0_458 = arith.constant 0 : index
    %c0_459 = arith.constant 0 : index
    %424 = vector.load %arg12[%c1_456, %c1_457, %c0_458, %c0_459] : memref<3x3x8x4xf32, #tpu.memory_space<vmem>>, vector<1x1x8x4xf32>
    %425 = vector.shape_cast %424 : vector<1x1x8x4xf32> to vector<8x4xf32>
    %cst_460 = arith.constant dense<0.000000e+00> : vector<8x16xf32>
    %426 = tpu.matmul %425, %423, %cst_460 {dimension_numbers = #tpu.dot_dimension_numbers<[1], [0], [0], [1], [0, 0, 1, 1], [], []>} : vector<8x4xf32>, vector<4x16xf32>, vector<8x16xf32> -> vector<8x16xf32>
    %427 = arith.addf %422, %426 : vector<8x16xf32>
    %428 = vector.extract_strided_slice %417 {offsets = [0, 2], sizes = [4, 16], strides = [1, 1]} : vector<4x18xf32> to vector<4x16xf32>
    %c1_461 = arith.constant 1 : index
    %c2_462 = arith.constant 2 : index
    %c0_463 = arith.constant 0 : index
    %c0_464 = arith.constant 0 : index
    %429 = vector.load %arg12[%c1_461, %c2_462, %c0_463, %c0_464] : memref<3x3x8x4xf32, #tpu.memory_space<vmem>>, vector<1x1x8x4xf32>
    %430 = vector.shape_cast %429 : vector<1x1x8x4xf32> to vector<8x4xf32>
    %cst_465 = arith.constant dense<0.000000e+00> : vector<8x16xf32>
    %431 = tpu.matmul %430, %428, %cst_465 {dimension_numbers = #tpu.dot_dimension_numbers<[1], [0], [0], [1], [0, 0, 1, 1], [], []>} : vector<8x4xf32>, vector<4x16xf32>, vector<8x16xf32> -> vector<8x16xf32>
    %432 = arith.addf %427, %431 : vector<8x16xf32>
    %c0_466 = arith.constant 0 : index
    %c0_467 = arith.constant 0 : index
    %c0_468 = arith.constant 0 : index
    %c0_469 = arith.constant 0 : index
    %433 = vector.load %arg11[%c0_466, %c0_467, %c0_468, %c0_469] : memref<1x1x4x18xf32, #tpu.memory_space<vmem>>, vector<1x1x4x18xf32>
    %434 = vector.shape_cast %433 : vector<1x1x4x18xf32> to vector<4x18xf32>
    %435 = vector.extract_strided_slice %434 {offsets = [0, 0], sizes = [4, 16], strides = [1, 1]} : vector<4x18xf32> to vector<4x16xf32>
    %c2_470 = arith.constant 2 : index
    %c0_471 = arith.constant 0 : index
    %c0_472 = arith.constant 0 : index
    %c0_473 = arith.constant 0 : index
    %436 = vector.load %arg12[%c2_470, %c0_471, %c0_472, %c0_473] : memref<3x3x8x4xf32, #tpu.memory_space<vmem>>, vector<1x1x8x4xf32>
    %437 = vector.shape_cast %436 : vector<1x1x8x4xf32> to vector<8x4xf32>
    %cst_474 = arith.constant dense<0.000000e+00> : vector<8x16xf32>
    %438 = tpu.matmul %437, %435, %cst_474 {dimension_numbers = #tpu.dot_dimension_numbers<[1], [0], [0], [1], [0, 0, 1, 1], [], []>} : vector<8x4xf32>, vector<4x16xf32>, vector<8x16xf32> -> vector<8x16xf32>
    %439 = arith.addf %432, %438 : vector<8x16xf32>
    %440 = vector.extract_strided_slice %434 {offsets = [0, 1], sizes = [4, 16], strides = [1, 1]} : vector<4x18xf32> to vector<4x16xf32>
    %c2_475 = arith.constant 2 : index
    %c1_476 = arith.constant 1 : index
    %c0_477 = arith.constant 0 : index
    %c0_478 = arith.constant 0 : index
    %441 = vector.load %arg12[%c2_475, %c1_476, %c0_477, %c0_478] : memref<3x3x8x4xf32, #tpu.memory_space<vmem>>, vector<1x1x8x4xf32>
    %442 = vector.shape_cast %441 : vector<1x1x8x4xf32> to vector<8x4xf32>
    %cst_479 = arith.constant dense<0.000000e+00> : vector<8x16xf32>
    %443 = tpu.matmul %442, %440, %cst_479 {dimension_numbers = #tpu.dot_dimension_numbers<[1], [0], [0], [1], [0, 0, 1, 1], [], []>} : vector<8x4xf32>, vector<4x16xf32>, vector<8x16xf32> -> vector<8x16xf32>
    %444 = arith.addf %439, %443 : vector<8x16xf32>
    %445 = vector.extract_strided_slice %434 {offsets = [0, 2], sizes = [4, 16], strides = [1, 1]} : vector<4x18xf32> to vector<4x16xf32>
    %c2_480 = arith.constant 2 : index
    %c2_481 = arith.constant 2 : index
    %c0_482 = arith.constant 0 : index
    %c0_483 = arith.constant 0 : index
    %446 = vector.load %arg12[%c2_480, %c2_481, %c0_482, %c0_483] : memref<3x3x8x4xf32, #tpu.memory_space<vmem>>, vector<1x1x8x4xf32>
    %447 = vector.shape_cast %446 : vector<1x1x8x4xf32> to vector<8x4xf32>
    %cst_484 = arith.constant dense<0.000000e+00> : vector<8x16xf32>
    %448 = tpu.matmul %447, %445, %cst_484 {dimension_numbers = #tpu.dot_dimension_numbers<[1], [0], [0], [1], [0, 0, 1, 1], [], []>} : vector<8x4xf32>, vector<4x16xf32>, vector<8x16xf32> -> vector<8x16xf32>
    %449 = arith.addf %444, %448 : vector<8x16xf32>
    %450 = vector.broadcast %0 : vector<8x1xf32> to vector<8x16xf32>
    %451 = arith.addf %449, %450 : vector<8x16xf32>
    %cst_485 = arith.constant 0.000000e+00 : f32
    %452 = vector.broadcast %cst_485 : f32 to vector<8x16xf32>
    %453 = arith.maximumf %451, %452 : vector<8x16xf32>
    %c0_486 = arith.constant 0 : index
    %c7 = arith.constant 7 : index
    %c0_487 = arith.constant 0 : index
    %c0_488 = arith.constant 0 : index
    %454 = vector.load %arg14[%c0_486, %c7, %c0_487, %c0_488] : memref<1x8x8x16xf32, #tpu.memory_space<vmem>>, vector<1x1x8x16xf32>
    %455 = vector.shape_cast %454 : vector<1x1x8x16xf32> to vector<8x16xf32>
    %456 = vector.shape_cast %453 : vector<8x16xf32> to vector<1x1x8x16xf32>
    tpu.vector_store %arg14[%c0_486, %c7, %c0_487, %c0_488], %456 {strides = array<i32>} : memref<1x8x8x16xf32, #tpu.memory_space<vmem>>, vector<1x1x8x16xf32>,
    return
  }
  func.func @transform_0(%arg0: i32, %arg1: i32) -> (i32, i32, i32, i32) {
    %c8_i32 = arith.constant 8 : i32
    %0 = arith.muli %arg1, %c8_i32 : i32
    %c1_i32 = arith.constant 1 : i32
    %1 = arith.muli %0, %c1_i32 : i32
    %c0_i32 = arith.constant 0 : i32
    %2 = arith.addi %1, %c0_i32 : i32
    %c0_i32_0 = arith.constant 0 : i32
    %c0_i32_1 = arith.constant 0 : i32
    %c0_i32_2 = arith.constant 0 : i32
    return %arg0, %2, %c0_i32_0, %c0_i32_1 : i32, i32, i32, i32
  }
  func.func @transform_1(%arg0: i32, %arg1: i32) -> (i32, i32, i32, i32) {
    %c8_i32 = arith.constant 8 : i32
    %0 = arith.muli %arg1, %c8_i32 : i32
    %c1_i32 = arith.constant 1 : i32
    %1 = arith.muli %0, %c1_i32 : i32
    %c1_i32_0 = arith.constant 1 : i32
    %2 = arith.addi %1, %c1_i32_0 : i32
    %c0_i32 = arith.constant 0 : i32
    %c0_i32_1 = arith.constant 0 : i32
    %c0_i32_2 = arith.constant 0 : i32
    return %arg0, %2, %c0_i32, %c0_i32_1 : i32, i32, i32, i32
  }
  func.func @transform_2(%arg0: i32, %arg1: i32) -> (i32, i32, i32, i32) {
    %c8_i32 = arith.constant 8 : i32
    %0 = arith.muli %arg1, %c8_i32 : i32
    %c1_i32 = arith.constant 1 : i32
    %1 = arith.muli %0, %c1_i32 : i32
    %c2_i32 = arith.constant 2 : i32
    %2 = arith.addi %1, %c2_i32 : i32
    %c0_i32 = arith.constant 0 : i32
    %c0_i32_0 = arith.constant 0 : i32
    %c0_i32_1 = arith.constant 0 : i32
    return %arg0, %2, %c0_i32, %c0_i32_0 : i32, i32, i32, i32
  }
  func.func @transform_3(%arg0: i32, %arg1: i32) -> (i32, i32, i32, i32) {
    %c8_i32 = arith.constant 8 : i32
    %0 = arith.muli %arg1, %c8_i32 : i32
    %c1_i32 = arith.constant 1 : i32
    %1 = arith.muli %0, %c1_i32 : i32
    %c3_i32 = arith.constant 3 : i32
    %2 = arith.addi %1, %c3_i32 : i32
    %c0_i32 = arith.constant 0 : i32
    %c0_i32_0 = arith.constant 0 : i32
    %c0_i32_1 = arith.constant 0 : i32
    return %arg0, %2, %c0_i32, %c0_i32_0 : i32, i32, i32, i32
  }
  func.func @transform_4(%arg0: i32, %arg1: i32) -> (i32, i32, i32, i32) {
    %c8_i32 = arith.constant 8 : i32
    %0 = arith.muli %arg1, %c8_i32 : i32
    %c1_i32 = arith.constant 1 : i32
    %1 = arith.muli %0, %c1_i32 : i32
    %c4_i32 = arith.constant 4 : i32
    %2 = arith.addi %1, %c4_i32 : i32
    %c0_i32 = arith.constant 0 : i32
    %c0_i32_0 = arith.constant 0 : i32
    %c0_i32_1 = arith.constant 0 : i32
    return %arg0, %2, %c0_i32, %c0_i32_0 : i32, i32, i32, i32
  }
  func.func @transform_5(%arg0: i32, %arg1: i32) -> (i32, i32, i32, i32) {
    %c8_i32 = arith.constant 8 : i32
    %0 = arith.muli %arg1, %c8_i32 : i32
    %c1_i32 = arith.constant 1 : i32
    %1 = arith.muli %0, %c1_i32 : i32
    %c5_i32 = arith.constant 5 : i32
    %2 = arith.addi %1, %c5_i32 : i32
    %c0_i32 = arith.constant 0 : i32
    %c0_i32_0 = arith.constant 0 : i32
    %c0_i32_1 = arith.constant 0 : i32
    return %arg0, %2, %c0_i32, %c0_i32_0 : i32, i32, i32, i32
  }
  func.func @transform_6(%arg0: i32, %arg1: i32) -> (i32, i32, i32, i32) {
    %c8_i32 = arith.constant 8 : i32
    %0 = arith.muli %arg1, %c8_i32 : i32
    %c1_i32 = arith.constant 1 : i32
    %1 = arith.muli %0, %c1_i32 : i32
    %c6_i32 = arith.constant 6 : i32
    %2 = arith.addi %1, %c6_i32 : i32
    %c0_i32 = arith.constant 0 : i32
    %c0_i32_0 = arith.constant 0 : i32
    %c0_i32_1 = arith.constant 0 : i32
    return %arg0, %2, %c0_i32, %c0_i32_0 : i32, i32, i32, i32
  }
  func.func @transform_7(%arg0: i32, %arg1: i32) -> (i32, i32, i32, i32) {
    %c8_i32 = arith.constant 8 : i32
    %0 = arith.muli %arg1, %c8_i32 : i32
    %c1_i32 = arith.constant 1 : i32
    %1 = arith.muli %0, %c1_i32 : i32
    %c7_i32 = arith.constant 7 : i32
    %2 = arith.addi %1, %c7_i32 : i32
    %c0_i32 = arith.constant 0 : i32
    %c0_i32_0 = arith.constant 0 : i32
    %c0_i32_1 = arith.constant 0 : i32
    return %arg0, %2, %c0_i32, %c0_i32_0 : i32, i32, i32, i32
  }
  func.func @transform_8(%arg0: i32, %arg1: i32) -> (i32, i32, i32, i32) {
    %c8_i32 = arith.constant 8 : i32
    %0 = arith.muli %arg1, %c8_i32 : i32
    %c1_i32 = arith.constant 1 : i32
    %1 = arith.muli %0, %c1_i32 : i32
    %c8_i32_0 = arith.constant 8 : i32
    %2 = arith.addi %1, %c8_i32_0 : i32
    %c0_i32 = arith.constant 0 : i32
    %c0_i32_1 = arith.constant 0 : i32
    %c0_i32_2 = arith.constant 0 : i32
    return %arg0, %2, %c0_i32, %c0_i32_1 : i32, i32, i32, i32
  }
  func.func @transform_9(%arg0: i32, %arg1: i32) -> (i32, i32, i32, i32) {
    %c8_i32 = arith.constant 8 : i32
    %0 = arith.muli %arg1, %c8_i32 : i32
    %c1_i32 = arith.constant 1 : i32
    %1 = arith.muli %0, %c1_i32 : i32
    %c9_i32 = arith.constant 9 : i32
    %2 = arith.addi %1, %c9_i32 : i32
    %c0_i32 = arith.constant 0 : i32
    %c0_i32_0 = arith.constant 0 : i32
    %c0_i32_1 = arith.constant 0 : i32
    return %arg0, %2, %c0_i32, %c0_i32_0 : i32, i32, i32, i32
  }
  func.func @transform_10(%arg0: i32, %arg1: i32) -> (i32, i32, i32, i32) {
    %c0_i32 = arith.constant 0 : i32
    %c0_i32_0 = arith.constant 0 : i32
    %c0_i32_1 = arith.constant 0 : i32
    %c0_i32_2 = arith.constant 0 : i32
    %c0_i32_3 = arith.constant 0 : i32
    return %c0_i32, %c0_i32_0, %c0_i32_1, %c0_i32_2 : i32, i32, i32, i32
  }
  func.func @transform_11(%arg0: i32, %arg1: i32) -> (i32, i32) {
    %c0_i32 = arith.constant 0 : i32
    %c0_i32_0 = arith.constant 0 : i32
    %c0_i32_1 = arith.constant 0 : i32
    return %c0_i32, %c0_i32_0 : i32, i32
  }
  func.func @transform_12(%arg0: i32, %arg1: i32) -> (i32, i32, i32, i32) {
    %c0_i32 = arith.constant 0 : i32
    %c0_i32_0 = arith.constant 0 : i32
    %c0_i32_1 = arith.constant 0 : i32
    return %arg0, %arg1, %c0_i32, %c0_i32_0 : i32, i32, i32, i32
  }
}

</mosaic_0001>

<llo_original>
// kernel: conv2d_block_forward.1
$region0: #{conv2d_block_forward.1}
  #allocation0 [shape = 'u32[]', space=smem, size = 0x4, offset = 0x4, fixed_abs, tag = 'smem constant byte address 0x4 - core index']
  #allocation1 [shape = 'u32[144,128]{1,0:T(1,128)}', space=vmem, size = 0x12000, scoped, tag = 'internal scratch']
  %s0 = inlined_call_operand.vmem [shape: f32[2,18,4,18], index: 0, kind: input, shape index: {}, may-alias: {0,1,2,3,4,5,6,7,8,9}]
  %s1 = inlined_call_operand.vmem [shape: f32[2,18,4,18], index: 1, kind: input, shape index: {}, may-alias: {0,1,2,3,4,5,6,7,8,9}]
  %s2 = inlined_call_operand.vmem [shape: f32[2,18,4,18], index: 2, kind: input, shape index: {}, may-alias: {0,1,2,3,4,5,6,7,8,9}]
  %s3 = inlined_call_operand.vmem [shape: f32[2,18,4,18], index: 3, kind: input, shape index: {}, may-alias: {0,1,2,3,4,5,6,7,8,9}]
  %s4 = inlined_call_operand.vmem [shape: f32[2,18,4,18], index: 4, kind: input, shape index: {}, may-alias: {0,1,2,3,4,5,6,7,8,9}]
  %s5 = inlined_call_operand.vmem [shape: f32[2,18,4,18], index: 5, kind: input, shape index: {}, may-alias: {0,1,2,3,4,5,6,7,8,9}]
  %s6 = inlined_call_operand.vmem [shape: f32[2,18,4,18], index: 6, kind: input, shape index: {}, may-alias: {0,1,2,3,4,5,6,7,8,9}]
  %s7 = inlined_call_operand.vmem [shape: f32[2,18,4,18], index: 7, kind: input, shape index: {}, may-alias: {0,1,2,3,4,5,6,7,8,9}]
  %s8 = inlined_call_operand.vmem [shape: f32[2,18,4,18], index: 8, kind: input, shape index: {}, may-alias: {0,1,2,3,4,5,6,7,8,9}]
  %s9 = inlined_call_operand.vmem [shape: f32[2,18,4,18], index: 9, kind: input, shape index: {}, may-alias: {0,1,2,3,4,5,6,7,8,9}]
  %s10 = inlined_call_operand.vmem [shape: f32[3,3,8,4], index: 10, kind: input, shape index: {}]
  %s11 = inlined_call_operand.vmem [shape: f32[8,1], index: 11, kind: input, shape index: {}]
  %s12 = inlined_call_operand.vmem [shape: f32[2,16,8,16], index: 12, kind: output, shape index: {}]
  %s13 = sld [smem:[#allocation0]]
  $region81: #{conv2d_block_forward.1} parent=0
    _
  %s15 = ssub.s32 1, %s13
  %s16 = scalar_select 0, %s15, %s13
  loop: start=0, step=1, limit=6
  $region2: #{conv2d_block_forward.1} parent=0 // loop_pre_header
    _
  $region3: #{conv2d_block_forward.1} parent=0 // loop_header
    %s18 = sphi 0, %s22
    %p19 = scmp.ge.s32.totalorder %s18, 6
    %s25 = sphi 0, %s37
    %s26 = sphi 0, %s33
    %s27 = sphi 0, %s25
    %s28 = sphi 0, %s26
    %s29 = sphi 0, %s27
    %s30 = sphi 0, %s28
    %s44 = sphi 0, %s46
    %s47 = sphi 0, %s44
    %s48 = sphi 0, %s47
    %s64 = sphi 0, %s48
    %s76 = sphi 0, %s78
    %s79 = sphi 0, %s76
    %s80 = sphi 0, %s79
    %s96 = sphi 0, %s80
    %s108 = sphi 0, %s110
    %s111 = sphi 0, %s108
    %s112 = sphi 0, %s111
    %s128 = sphi 0, %s112
    %s140 = sphi 0, %s142
    %s143 = sphi 0, %s140
    %s144 = sphi 0, %s143
    %s160 = sphi 0, %s144
    %s172 = sphi 0, %s174
    %s175 = sphi 0, %s172
    %s176 = sphi 0, %s175
    %s192 = sphi 0, %s176
    %s204 = sphi 0, %s206
    %s207 = sphi 0, %s204
    %s208 = sphi 0, %s207
    %s224 = sphi 0, %s208
    %s236 = sphi 0, %s238
    %s239 = sphi 0, %s236
    %s240 = sphi 0, %s239
    %s256 = sphi 0, %s240
    %s268 = sphi 0, %s270
    %s271 = sphi 0, %s268
    %s272 = sphi 0, %s271
    %s288 = sphi 0, %s272
    %s300 = sphi 0, %s302
    %s303 = sphi 0, %s300
    %s304 = sphi 0, %s303
    %s320 = sphi 0, %s304
    %s332 = sphi 0, %s334
    %s335 = sphi 0, %s332
    %s336 = sphi 0, %s335
    %s352 = sphi 0, %s336
    %s356 = sphi 0, %s356
    %s358 = sphi 0, %s356
    %s359 = sphi 0, %s358
    %s373 = sphi 0, %s359
    %s377 = sphi 0, %s377
    %s379 = sphi 0, %s377
    %s380 = sphi 0, %s379
    %s394 = sphi 0, %s380
    %s402 = sphi 0, %s404
    %s405 = sphi 0, %s402
    %s406 = sphi 0, %s405
    %s422 = sphi 0, %s406
  $region4: #{conv2d_block_forward.1} parent=0 // loop_header_branch
    %21 = sbr.rel (%p19) target = $region8
  $region5: #{conv2d_block_forward.1} parent=0 // loop_body
    %s23 = ssub.s32 %s18, 1
    %s24 = ssub.s32 %s18, 2
    %s31 = sadd.s32 1, %s26
    %p32 = scmp.ge.s32.totalorder %s31, 2
    %s33 = scalar_select %p32, 0, %s31
    %s34 = sadd.s32 1, %s25
    %s35 = scalar_select %p32, %s34, %s25
    %p36 = scmp.ge.s32.totalorder %s35, 2
    %s37 = scalar_select %p36, 0, %s35
    %s38 = smul.u32 %s26, 8
    %s39 = smul.u32 %s33, 8
    %s40 = ssub.s32 %s25, %s37
    %s41 = ssub.s32 %s38, %s39
    %s42 = sor.u32 %s40, %s41
    %p43 = scmp.eq.s32.totalorder %s42, 0
    %s45 = sadd.s32 %s44, 1
    %s46 = scalar_select %p43, %s44, %s45
    %p49 = pneg %p43
    %p50 = scmp.eq.s32.totalorder %s18, 3
    %p51 = por %p49, %p50
    %p52 = scmp.ne.s32.totalorder %s44, %s47
    %p53 = scmp.eq.s32.totalorder %s18, 0
    %p54 = por %p52, %p53
    %p55 = scmp.ne.s32.totalorder %s44, %s47
    %p56 = scmp.eq.s32.totalorder %s23, 3
    %p57 = por %p55, %p56
    %p58 = scmp.ne.s32.totalorder %s47, %s48
    %p59 = scmp.eq.s32.totalorder %s23, 0
    %p60 = por %p58, %p59
    %p61 = scmp.ne.s32.totalorder %s47, %s48
    %p62 = scmp.eq.s32.totalorder %s24, 3
    %p63 = por %p61, %p62
    %p65 = scmp.ne.s32.totalorder %s48, %s64
    %p66 = scmp.eq.s32.totalorder %s24, 0
    %p67 = por %p65, %p66
    %s68 = smul.u32 %s26, 8
    %s69 = sadd.s32 %s68, 1
    %s70 = smul.u32 %s33, 8
    %s71 = sadd.s32 %s70, 1
    %s72 = ssub.s32 %s25, %s37
    %s73 = ssub.s32 %s69, %s71
    %s74 = sor.u32 %s72, %s73
    %p75 = scmp.eq.s32.totalorder %s74, 0
    %s77 = sadd.s32 %s76, 1
    %s78 = scalar_select %p75, %s76, %s77
    %p81 = pneg %p75
    %p82 = scmp.eq.s32.totalorder %s18, 3
    %p83 = por %p81, %p82
    %p84 = scmp.ne.s32.totalorder %s76, %s79
    %p85 = scmp.eq.s32.totalorder %s18, 0
    %p86 = por %p84, %p85
    %p87 = scmp.ne.s32.totalorder %s76, %s79
    %p88 = scmp.eq.s32.totalorder %s23, 3
    %p89 = por %p87, %p88
    %p90 = scmp.ne.s32.totalorder %s79, %s80
    %p91 = scmp.eq.s32.totalorder %s23, 0
    %p92 = por %p90, %p91
    %p93 = scmp.ne.s32.totalorder %s79, %s80
    %p94 = scmp.eq.s32.totalorder %s24, 3
    %p95 = por %p93, %p94
    %p97 = scmp.ne.s32.totalorder %s80, %s96
    %p98 = scmp.eq.s32.totalorder %s24, 0
    %p99 = por %p97, %p98
    %s100 = smul.u32 %s26, 8
    %s101 = sadd.s32 %s100, 2
    %s102 = smul.u32 %s33, 8
    %s103 = sadd.s32 %s102, 2
    %s104 = ssub.s32 %s25, %s37
    %s105 = ssub.s32 %s101, %s103
    %s106 = sor.u32 %s104, %s105
    %p107 = scmp.eq.s32.totalorder %s106, 0
    %s109 = sadd.s32 %s108, 1
    %s110 = scalar_select %p107, %s108, %s109
    %p113 = pneg %p107
    %p114 = scmp.eq.s32.totalorder %s18, 3
    %p115 = por %p113, %p114
    %p116 = scmp.ne.s32.totalorder %s108, %s111
    %p117 = scmp.eq.s32.totalorder %s18, 0
    %p118 = por %p116, %p117
    %p119 = scmp.ne.s32.totalorder %s108, %s111
    %p120 = scmp.eq.s32.totalorder %s23, 3
    %p121 = por %p119, %p120
    %p122 = scmp.ne.s32.totalorder %s111, %s112
    %p123 = scmp.eq.s32.totalorder %s23, 0
    %p124 = por %p122, %p123
    %p125 = scmp.ne.s32.totalorder %s111, %s112
    %p126 = scmp.eq.s32.totalorder %s24, 3
    %p127 = por %p125, %p126
    %p129 = scmp.ne.s32.totalorder %s112, %s128
    %p130 = scmp.eq.s32.totalorder %s24, 0
    %p131 = por %p129, %p130
    %s132 = smul.u32 %s26, 8
    %s133 = sadd.s32 %s132, 3
    %s134 = smul.u32 %s33, 8
    %s135 = sadd.s32 %s134, 3
    %s136 = ssub.s32 %s25, %s37
    %s137 = ssub.s32 %s133, %s135
    %s138 = sor.u32 %s136, %s137
    %p139 = scmp.eq.s32.totalorder %s138, 0
    %s141 = sadd.s32 %s140, 1
    %s142 = scalar_select %p139, %s140, %s141
    %p145 = pneg %p139
    %p146 = scmp.eq.s32.totalorder %s18, 3
    %p147 = por %p145, %p146
    %p148 = scmp.ne.s32.totalorder %s140, %s143
    %p149 = scmp.eq.s32.totalorder %s18, 0
    %p150 = por %p148, %p149
    %p151 = scmp.ne.s32.totalorder %s140, %s143
    %p152 = scmp.eq.s32.totalorder %s23, 3
    %p153 = por %p151, %p152
    %p154 = scmp.ne.s32.totalorder %s143, %s144
    %p155 = scmp.eq.s32.totalorder %s23, 0
    %p156 = por %p154, %p155
    %p157 = scmp.ne.s32.totalorder %s143, %s144
    %p158 = scmp.eq.s32.totalorder %s24, 3
    %p159 = por %p157, %p158
    %p161 = scmp.ne.s32.totalorder %s144, %s160
    %p162 = scmp.eq.s32.totalorder %s24, 0
    %p163 = por %p161, %p162
    %s164 = smul.u32 %s26, 8
    %s165 = sadd.s32 %s164, 4
    %s166 = smul.u32 %s33, 8
    %s167 = sadd.s32 %s166, 4
    %s168 = ssub.s32 %s25, %s37
    %s169 = ssub.s32 %s165, %s167
    %s170 = sor.u32 %s168, %s169
    %p171 = scmp.eq.s32.totalorder %s170, 0
    %s173 = sadd.s32 %s172, 1
    %s174 = scalar_select %p171, %s172, %s173
    %p177 = pneg %p171
    %p178 = scmp.eq.s32.totalorder %s18, 3
    %p179 = por %p177, %p178
    %p180 = scmp.ne.s32.totalorder %s172, %s175
    %p181 = scmp.eq.s32.totalorder %s18, 0
    %p182 = por %p180, %p181
    %p183 = scmp.ne.s32.totalorder %s172, %s175
    %p184 = scmp.eq.s32.totalorder %s23, 3
    %p185 = por %p183, %p184
    %p186 = scmp.ne.s32.totalorder %s175, %s176
    %p187 = scmp.eq.s32.totalorder %s23, 0
    %p188 = por %p186, %p187
    %p189 = scmp.ne.s32.totalorder %s175, %s176
    %p190 = scmp.eq.s32.totalorder %s24, 3
    %p191 = por %p189, %p190
    %p193 = scmp.ne.s32.totalorder %s176, %s192
    %p194 = scmp.eq.s32.totalorder %s24, 0
    %p195 = por %p193, %p194
    %s196 = smul.u32 %s26, 8
    %s197 = sadd.s32 %s196, 5
    %s198 = smul.u32 %s33, 8
    %s199 = sadd.s32 %s198, 5
    %s200 = ssub.s32 %s25, %s37
    %s201 = ssub.s32 %s197, %s199
    %s202 = sor.u32 %s200, %s201
    %p203 = scmp.eq.s32.totalorder %s202, 0
    %s205 = sadd.s32 %s204, 1
    %s206 = scalar_select %p203, %s204, %s205
    %p209 = pneg %p203
    %p210 = scmp.eq.s32.totalorder %s18, 3
    %p211 = por %p209, %p210
    %p212 = scmp.ne.s32.totalorder %s204, %s207
    %p213 = scmp.eq.s32.totalorder %s18, 0
    %p214 = por %p212, %p213
    %p215 = scmp.ne.s32.totalorder %s204, %s207
    %p216 = scmp.eq.s32.totalorder %s23, 3
    %p217 = por %p215, %p216
    %p218 = scmp.ne.s32.totalorder %s207, %s208
    %p219 = scmp.eq.s32.totalorder %s23, 0
    %p220 = por %p218, %p219
    %p221 = scmp.ne.s32.totalorder %s207, %s208
    %p222 = scmp.eq.s32.totalorder %s24, 3
    %p223 = por %p221, %p222
    %p225 = scmp.ne.s32.totalorder %s208, %s224
    %p226 = scmp.eq.s32.totalorder %s24, 0
    %p227 = por %p225, %p226
    %s228 = smul.u32 %s26, 8
    %s229 = sadd.s32 %s228, 6
    %s230 = smul.u32 %s33, 8
    %s231 = sadd.s32 %s230, 6
    %s232 = ssub.s32 %s25, %s37
    %s233 = ssub.s32 %s229, %s231
    %s234 = sor.u32 %s232, %s233
    %p235 = scmp.eq.s32.totalorder %s234, 0
    %s237 = sadd.s32 %s236, 1
    %s238 = scalar_select %p235, %s236, %s237
    %p241 = pneg %p235
    %p242 = scmp.eq.s32.totalorder %s18, 3
    %p243 = por %p241, %p242
    %p244 = scmp.ne.s32.totalorder %s236, %s239
    %p245 = scmp.eq.s32.totalorder %s18, 0
    %p246 = por %p244, %p245
    %p247 = scmp.ne.s32.totalorder %s236, %s239
    %p248 = scmp.eq.s32.totalorder %s23, 3
    %p249 = por %p247, %p248
    %p250 = scmp.ne.s32.totalorder %s239, %s240
    %p251 = scmp.eq.s32.totalorder %s23, 0
    %p252 = por %p250, %p251
    %p253 = scmp.ne.s32.totalorder %s239, %s240
    %p254 = scmp.eq.s32.totalorder %s24, 3
    %p255 = por %p253, %p254
    %p257 = scmp.ne.s32.totalorder %s240, %s256
    %p258 = scmp.eq.s32.totalorder %s24, 0
    %p259 = por %p257, %p258
    %s260 = smul.u32 %s26, 8
    %s261 = sadd.s32 %s260, 7
    %s262 = smul.u32 %s33, 8
    %s263 = sadd.s32 %s262, 7
    %s264 = ssub.s32 %s25, %s37
    %s265 = ssub.s32 %s261, %s263
    %s266 = sor.u32 %s264, %s265
    %p267 = scmp.eq.s32.totalorder %s266, 0
    %s269 = sadd.s32 %s268, 1
    %s270 = scalar_select %p267, %s268, %s269
    %p273 = pneg %p267
    %p274 = scmp.eq.s32.totalorder %s18, 3
    %p275 = por %p273, %p274
    %p276 = scmp.ne.s32.totalorder %s268, %s271
    %p277 = scmp.eq.s32.totalorder %s18, 0
    %p278 = por %p276, %p277
    %p279 = scmp.ne.s32.totalorder %s268, %s271
    %p280 = scmp.eq.s32.totalorder %s23, 3
    %p281 = por %p279, %p280
    %p282 = scmp.ne.s32.totalorder %s271, %s272
    %p283 = scmp.eq.s32.totalorder %s23, 0
    %p284 = por %p282, %p283
    %p285 = scmp.ne.s32.totalorder %s271, %s272
    %p286 = scmp.eq.s32.totalorder %s24, 3
    %p287 = por %p285, %p286
    %p289 = scmp.ne.s32.totalorder %s272, %s288
    %p290 = scmp.eq.s32.totalorder %s24, 0
    %p291 = por %p289, %p290
    %s292 = smul.u32 %s26, 8
    %s293 = sadd.s32 %s292, 8
    %s294 = smul.u32 %s33, 8
    %s295 = sadd.s32 %s294, 8
    %s296 = ssub.s32 %s25, %s37
    %s297 = ssub.s32 %s293, %s295
    %s298 = sor.u32 %s296, %s297
    %p299 = scmp.eq.s32.totalorder %s298, 0
    %s301 = sadd.s32 %s300, 1
    %s302 = scalar_select %p299, %s300, %s301
    %p305 = pneg %p299
    %p306 = scmp.eq.s32.totalorder %s18, 3
    %p307 = por %p305, %p306
    %p308 = scmp.ne.s32.totalorder %s300, %s303
    %p309 = scmp.eq.s32.totalorder %s18, 0
    %p310 = por %p308, %p309
    %p311 = scmp.ne.s32.totalorder %s300, %s303
    %p312 = scmp.eq.s32.totalorder %s23, 3
    %p313 = por %p311, %p312
    %p314 = scmp.ne.s32.totalorder %s303, %s304
    %p315 = scmp.eq.s32.totalorder %s23, 0
    %p316 = por %p314, %p315
    %p317 = scmp.ne.s32.totalorder %s303, %s304
    %p318 = scmp.eq.s32.totalorder %s24, 3
    %p319 = por %p317, %p318
    %p321 = scmp.ne.s32.totalorder %s304, %s320
    %p322 = scmp.eq.s32.totalorder %s24, 0
    %p323 = por %p321, %p322
    %s324 = smul.u32 %s26, 8
    %s325 = sadd.s32 %s324, 9
    %s326 = smul.u32 %s33, 8
    %s327 = sadd.s32 %s326, 9
    %s328 = ssub.s32 %s25, %s37
    %s329 = ssub.s32 %s325, %s327
    %s330 = sor.u32 %s328, %s329
    %p331 = scmp.eq.s32.totalorder %s330, 0
    %s333 = sadd.s32 %s332, 1
    %s334 = scalar_select %p331, %s332, %s333
    %p337 = pneg %p331
    %p338 = scmp.eq.s32.totalorder %s18, 3
    %p339 = por %p337, %p338
    %p340 = scmp.ne.s32.totalorder %s332, %s335
    %p341 = scmp.eq.s32.totalorder %s18, 0
    %p342 = por %p340, %p341
    %p343 = scmp.ne.s32.totalorder %s332, %s335
    %p344 = scmp.eq.s32.totalorder %s23, 3
    %p345 = por %p343, %p344
    %p346 = scmp.ne.s32.totalorder %s335, %s336
    %p347 = scmp.eq.s32.totalorder %s23, 0
    %p348 = por %p346, %p347
    %p349 = scmp.ne.s32.totalorder %s335, %s336
    %p350 = scmp.eq.s32.totalorder %s24, 3
    %p351 = por %p349, %p350
    %p353 = scmp.ne.s32.totalorder %s336, %s352
    %p354 = scmp.eq.s32.totalorder %s24, 0
    %p355 = por %p353, %p354
    %s357 = sadd.s32 %s356, 1
    %p360 = scmp.eq.s32.totalorder %s18, 3
    %p361 = scmp.ne.s32.totalorder %s356, %s358
    %p362 = scmp.eq.s32.totalorder %s18, 0
    %p363 = por %p361, %p362
    %p364 = scmp.ne.s32.totalorder %s356, %s358
    %p365 = scmp.eq.s32.totalorder %s23, 3
    %p366 = por %p364, %p365
    %p367 = scmp.ne.s32.totalorder %s358, %s359
    %p368 = scmp.eq.s32.totalorder %s23, 0
    %p369 = por %p367, %p368
    %p370 = scmp.ne.s32.totalorder %s358, %s359
    %p371 = scmp.eq.s32.totalorder %s24, 3
    %p372 = por %p370, %p371
    %p374 = scmp.ne.s32.totalorder %s359, %s373
    %p375 = scmp.eq.s32.totalorder %s24, 0
    %p376 = por %p374, %p375
    %s378 = sadd.s32 %s377, 1
    %p381 = scmp.eq.s32.totalorder %s18, 3
    %p382 = scmp.ne.s32.totalorder %s377, %s379
    %p383 = scmp.eq.s32.totalorder %s18, 0
    %p384 = por %p382, %p383
    %p385 = scmp.ne.s32.totalorder %s377, %s379
    %p386 = scmp.eq.s32.totalorder %s23, 3
    %p387 = por %p385, %p386
    %p388 = scmp.ne.s32.totalorder %s379, %s380
    %p389 = scmp.eq.s32.totalorder %s23, 0
    %p390 = por %p388, %p389
    %p391 = scmp.ne.s32.totalorder %s379, %s380
    %p392 = scmp.eq.s32.totalorder %s24, 3
    %p393 = por %p391, %p392
    %p395 = scmp.ne.s32.totalorder %s380, %s394
    %p396 = scmp.eq.s32.totalorder %s24, 0
    %p397 = por %p395, %p396
    %s398 = ssub.s32 %s25, %s37
    %s399 = ssub.s32 %s26, %s33
    %s400 = sor.u32 %s398, %s399
    %p401 = scmp.eq.s32.totalorder %s400, 0
    %s403 = sadd.s32 %s402, 1
    %s404 = scalar_select %p401, %s402, %s403
    %p407 = pneg %p401
    %p408 = scmp.eq.s32.totalorder %s18, 3
    %p409 = por %p407, %p408
    %p410 = scmp.ne.s32.totalorder %s402, %s405
    %p411 = scmp.eq.s32.totalorder %s18, 0
    %p412 = por %p410, %p411
    %p413 = scmp.ne.s32.totalorder %s402, %s405
    %p414 = scmp.eq.s32.totalorder %s23, 3
    %p415 = por %p413, %p414
    %p416 = scmp.ne.s32.totalorder %s405, %s406
    %p417 = scmp.eq.s32.totalorder %s23, 0
    %p418 = por %p416, %p417
    %p419 = scmp.ne.s32.totalorder %s405, %s406
    %p420 = scmp.eq.s32.totalorder %s24, 3
    %p421 = por %p419, %p420
    %p423 = scmp.ne.s32.totalorder %s406, %s422
    %p424 = scmp.eq.s32.totalorder %s24, 0
    %p425 = por %p423, %p424
    %p426 = scmp.le.s32.totalorder 1, %s18
    %p427 = scmp.lt.s32.totalorder %s18, 5
    %p428 = pnand %p426, %p427
    %p429 = pneg %p428
    // Predicated region
    $region9: #{conv2d_block_forward.1} parent=5 // pred_check
      _
    $region10: #{conv2d_block_forward.1} parent=5 // pred_check_branch
      %431 = sbr.rel (%p428) target = $region12
    $region11: #{conv2d_block_forward.1} parent=5 // pred_region
      %s432 = ssub.s32 %s18, 1
      // Predicated region
      $region13: #{conv2d_block_forward.1} parent=11 // pred_check
        %p433 = pneg %p369
      $region14: #{conv2d_block_forward.1} parent=11 // pred_check_branch
        %435 = sbr.rel (%p433) target = $region16
      $region15: #{conv2d_block_forward.1} parent=11 // pred_region
        _
      $region16: #{conv2d_block_forward.1} parent=11 // pred_fallthru
        _
      // Predicated region
      $region17: #{conv2d_block_forward.1} parent=11 // pred_check
        %p436 = pneg %p390
      $region18: #{conv2d_block_forward.1} parent=11 // pred_check_branch
        %438 = sbr.rel (%p436) target = $region20
      $region19: #{conv2d_block_forward.1} parent=11 // pred_region
        _
      $region20: #{conv2d_block_forward.1} parent=11 // pred_fallthru
        _
    $region12: #{conv2d_block_forward.1} parent=5 // pred_fallthru
      _
    %p439 = scmp.lt.s32.totalorder %s18, 4
    // Predicated region
    $region21: #{conv2d_block_forward.1} parent=5 // pred_check
      %p440 = pneg %p439
    $region22: #{conv2d_block_forward.1} parent=5 // pred_check_branch
      %442 = sbr.rel (%p440) target = $region24
    $region23: #{conv2d_block_forward.1} parent=5 // pred_region
      // Predicated region
      $region25: #{conv2d_block_forward.1} parent=23 // pred_check
        %p443 = pneg %p54
      $region26: #{conv2d_block_forward.1} parent=23 // pred_check_branch
        %445 = sbr.rel (%p443) target = $region28
      $region27: #{conv2d_block_forward.1} parent=23 // pred_region
        %s446 = smul.u32 %s26, 8
        %p447 = scmp.lt.s32.totalorder %s25, 1
        %s448 = scalar_select %p447, %s25, 1
        %p449 = scmp.lt.s32.totalorder %s446, 17
        %s450 = scalar_select %p449, %s446, 17
        %s451 = smul.addr %s448, 18
        %s452 = sadd.s32 %s450, %s451
        %s453 = smul.addr %s452, 4
        %s454 = scalar_lea.vmem %s0, %s453
        %s455 = smul.u32 %s26, 8
      $region28: #{conv2d_block_forward.1} parent=23 // pred_fallthru
        _
      // Predicated region
      $region29: #{conv2d_block_forward.1} parent=23 // pred_check
        %p456 = pneg %p86
      $region30: #{conv2d_block_forward.1} parent=23 // pred_check_branch
        %458 = sbr.rel (%p456) target = $region32
      $region31: #{conv2d_block_forward.1} parent=23 // pred_region
        %s459 = smul.u32 %s26, 8
        %s460 = sadd.s32 %s459, 1
        %p461 = scmp.lt.s32.totalorder %s25, 1
        %s462 = scalar_select %p461, %s25, 1
        %p463 = scmp.lt.s32.totalorder %s460, 17
        %s464 = scalar_select %p463, %s460, 17
        %s465 = smul.addr %s462, 18
        %s466 = sadd.s32 %s464, %s465
        %s467 = smul.addr %s466, 4
        %s468 = scalar_lea.vmem %s1, %s467
        %s469 = smul.u32 %s26, 8
        %s470 = sadd.s32 %s469, 1
      $region32: #{conv2d_block_forward.1} parent=23 // pred_fallthru
        _
      // Predicated region
      $region33: #{conv2d_block_forward.1} parent=23 // pred_check
        %p471 = pneg %p118
      $region34: #{conv2d_block_forward.1} parent=23 // pred_check_branch
        %473 = sbr.rel (%p471) target = $region36
      $region35: #{conv2d_block_forward.1} parent=23 // pred_region
        %s474 = smul.u32 %s26, 8
        %s475 = sadd.s32 %s474, 2
        %p476 = scmp.lt.s32.totalorder %s25, 1
        %s477 = scalar_select %p476, %s25, 1
        %p478 = scmp.lt.s32.totalorder %s475, 17
        %s479 = scalar_select %p478, %s475, 17
        %s480 = smul.addr %s477, 18
        %s481 = sadd.s32 %s479, %s480
        %s482 = smul.addr %s481, 4
        %s483 = scalar_lea.vmem %s2, %s482
        %s484 = smul.u32 %s26, 8
        %s485 = sadd.s32 %s484, 2
      $region36: #{conv2d_block_forward.1} parent=23 // pred_fallthru
        _
      // Predicated region
      $region37: #{conv2d_block_forward.1} parent=23 // pred_check
        %p486 = pneg %p150
      $region38: #{conv2d_block_forward.1} parent=23 // pred_check_branch
        %488 = sbr.rel (%p486) target = $region40
      $region39: #{conv2d_block_forward.1} parent=23 // pred_region
        %s489 = smul.u32 %s26, 8
        %s490 = sadd.s32 %s489, 3
        %p491 = scmp.lt.s32.totalorder %s25, 1
        %s492 = scalar_select %p491, %s25, 1
        %p493 = scmp.lt.s32.totalorder %s490, 17
        %s494 = scalar_select %p493, %s490, 17
        %s495 = smul.addr %s492, 18
        %s496 = sadd.s32 %s494, %s495
        %s497 = smul.addr %s496, 4
        %s498 = scalar_lea.vmem %s3, %s497
        %s499 = smul.u32 %s26, 8
        %s500 = sadd.s32 %s499, 3
      $region40: #{conv2d_block_forward.1} parent=23 // pred_fallthru
        _
      // Predicated region
      $region41: #{conv2d_block_forward.1} parent=23 // pred_check
        %p501 = pneg %p182
      $region42: #{conv2d_block_forward.1} parent=23 // pred_check_branch
        %503 = sbr.rel (%p501) target = $region44
      $region43: #{conv2d_block_forward.1} parent=23 // pred_region
        %s504 = smul.u32 %s26, 8
        %s505 = sadd.s32 %s504, 4
        %p506 = scmp.lt.s32.totalorder %s25, 1
        %s507 = scalar_select %p506, %s25, 1
        %p508 = scmp.lt.s32.totalorder %s505, 17
        %s509 = scalar_select %p508, %s505, 17
        %s510 = smul.addr %s507, 18
        %s511 = sadd.s32 %s509, %s510
        %s512 = smul.addr %s511, 4
        %s513 = scalar_lea.vmem %s4, %s512
        %s514 = smul.u32 %s26, 8
        %s515 = sadd.s32 %s514, 4
      $region44: #{conv2d_block_forward.1} parent=23 // pred_fallthru
        _
      // Predicated region
      $region45: #{conv2d_block_forward.1} parent=23 // pred_check
        %p516 = pneg %p214
      $region46: #{conv2d_block_forward.1} parent=23 // pred_check_branch
        %518 = sbr.rel (%p516) target = $region48
      $region47: #{conv2d_block_forward.1} parent=23 // pred_region
        %s519 = smul.u32 %s26, 8
        %s520 = sadd.s32 %s519, 5
        %p521 = scmp.lt.s32.totalorder %s25, 1
        %s522 = scalar_select %p521, %s25, 1
        %p523 = scmp.lt.s32.totalorder %s520, 17
        %s524 = scalar_select %p523, %s520, 17
        %s525 = smul.addr %s522, 18
        %s526 = sadd.s32 %s524, %s525
        %s527 = smul.addr %s526, 4
        %s528 = scalar_lea.vmem %s5, %s527
        %s529 = smul.u32 %s26, 8
        %s530 = sadd.s32 %s529, 5
      $region48: #{conv2d_block_forward.1} parent=23 // pred_fallthru
        _
      // Predicated region
      $region49: #{conv2d_block_forward.1} parent=23 // pred_check
        %p531 = pneg %p246
      $region50: #{conv2d_block_forward.1} parent=23 // pred_check_branch
        %533 = sbr.rel (%p531) target = $region52
      $region51: #{conv2d_block_forward.1} parent=23 // pred_region
        %s534 = smul.u32 %s26, 8
        %s535 = sadd.s32 %s534, 6
        %p536 = scmp.lt.s32.totalorder %s25, 1
        %s537 = scalar_select %p536, %s25, 1
        %p538 = scmp.lt.s32.totalorder %s535, 17
        %s539 = scalar_select %p538, %s535, 17
        %s540 = smul.addr %s537, 18
        %s541 = sadd.s32 %s539, %s540
        %s542 = smul.addr %s541, 4
        %s543 = scalar_lea.vmem %s6, %s542
        %s544 = smul.u32 %s26, 8
        %s545 = sadd.s32 %s544, 6
      $region52: #{conv2d_block_forward.1} parent=23 // pred_fallthru
        _
      // Predicated region
      $region53: #{conv2d_block_forward.1} parent=23 // pred_check
        %p546 = pneg %p278
      $region54: #{conv2d_block_forward.1} parent=23 // pred_check_branch
        %548 = sbr.rel (%p546) target = $region56
      $region55: #{conv2d_block_forward.1} parent=23 // pred_region
        %s549 = smul.u32 %s26, 8
        %s550 = sadd.s32 %s549, 7
        %p551 = scmp.lt.s32.totalorder %s25, 1
        %s552 = scalar_select %p551, %s25, 1
        %p553 = scmp.lt.s32.totalorder %s550, 17
        %s554 = scalar_select %p553, %s550, 17
        %s555 = smul.addr %s552, 18
        %s556 = sadd.s32 %s554, %s555
        %s557 = smul.addr %s556, 4
        %s558 = scalar_lea.vmem %s7, %s557
        %s559 = smul.u32 %s26, 8
        %s560 = sadd.s32 %s559, 7
      $region56: #{conv2d_block_forward.1} parent=23 // pred_fallthru
        _
      // Predicated region
      $region57: #{conv2d_block_forward.1} parent=23 // pred_check
        %p561 = pneg %p310
      $region58: #{conv2d_block_forward.1} parent=23 // pred_check_branch
        %563 = sbr.rel (%p561) target = $region60
      $region59: #{conv2d_block_forward.1} parent=23 // pred_region
        %s564 = smul.u32 %s26, 8
        %s565 = sadd.s32 %s564, 8
        %p566 = scmp.lt.s32.totalorder %s25, 1
        %s567 = scalar_select %p566, %s25, 1
        %p568 = scmp.lt.s32.totalorder %s565, 17
        %s569 = scalar_select %p568, %s565, 17
        %s570 = smul.addr %s567, 18
        %s571 = sadd.s32 %s569, %s570
        %s572 = smul.addr %s571, 4
        %s573 = scalar_lea.vmem %s8, %s572
        %s574 = smul.u32 %s26, 8
        %s575 = sadd.s32 %s574, 8
      $region60: #{conv2d_block_forward.1} parent=23 // pred_fallthru
        _
      // Predicated region
      $region61: #{conv2d_block_forward.1} parent=23 // pred_check
        %p576 = pneg %p342
      $region62: #{conv2d_block_forward.1} parent=23 // pred_check_branch
        %578 = sbr.rel (%p576) target = $region64
      $region63: #{conv2d_block_forward.1} parent=23 // pred_region
        %s579 = smul.u32 %s26, 8
        %s580 = sadd.s32 %s579, 9
        %p581 = scmp.lt.s32.totalorder %s25, 1
        %s582 = scalar_select %p581, %s25, 1
        %p583 = scmp.lt.s32.totalorder %s580, 17
        %s584 = scalar_select %p583, %s580, 17
        %s585 = smul.addr %s582, 18
        %s586 = sadd.s32 %s584, %s585
        %s587 = smul.addr %s586, 4
        %s588 = scalar_lea.vmem %s9, %s587
        %s589 = smul.u32 %s26, 8
        %s590 = sadd.s32 %s589, 9
      $region64: #{conv2d_block_forward.1} parent=23 // pred_fallthru
        _
    $region24: #{conv2d_block_forward.1} parent=5 // pred_fallthru
      _
    %p591 = scmp.le.s32.totalorder 1, %s18
    %p592 = scmp.lt.s32.totalorder %s18, 5
    %p593 = pnand %p591, %p592
    %p594 = pneg %p593
    // Predicated region
    $region65: #{conv2d_block_forward.1} parent=5 // pred_check
      _
    $region66: #{conv2d_block_forward.1} parent=5 // pred_check_branch
      %596 = sbr.rel (%p593) target = $region68
    $region67: #{conv2d_block_forward.1} parent=5 // pred_region
      %s597 = ssub.s32 %s18, 1
      %s598 = smul.u32 %s28, 8
      %p599 = scmp.lt.s32.totalorder %s27, 1
      %s600 = scalar_select %p599, %s27, 1
      %p601 = scmp.lt.s32.totalorder %s598, 17
      %s602 = scalar_select %p601, %s598, 17
      %s603 = smul.addr %s600, 18
      %s604 = sadd.s32 %s602, %s603
      %s605 = smul.addr %s604, 4
      %s606 = scalar_lea.vmem %s0, %s605
      %p607 = pneg %p60
      %p608 = pneg %p57
      %s609 = smul.u32 %s28, 8
      %s610 = sadd.s32 %s609, 1
      %p611 = scmp.lt.s32.totalorder %s27, 1
      %s612 = scalar_select %p611, %s27, 1
      %p613 = scmp.lt.s32.totalorder %s610, 17
      %s614 = scalar_select %p613, %s610, 17
      %s615 = smul.addr %s612, 18
      %s616 = sadd.s32 %s614, %s615
      %s617 = smul.addr %s616, 4
      %s618 = scalar_lea.vmem %s1, %s617
      %p619 = pneg %p92
      %p620 = pneg %p89
      %s621 = smul.u32 %s28, 8
      %s622 = sadd.s32 %s621, 2
      %p623 = scmp.lt.s32.totalorder %s27, 1
      %s624 = scalar_select %p623, %s27, 1
      %p625 = scmp.lt.s32.totalorder %s622, 17
      %s626 = scalar_select %p625, %s622, 17
      %s627 = smul.addr %s624, 18
      %s628 = sadd.s32 %s626, %s627
      %s629 = smul.addr %s628, 4
      %s630 = scalar_lea.vmem %s2, %s629
      %p631 = pneg %p124
      %p632 = pneg %p121
      %s633 = smul.u32 %s28, 8
      %s634 = sadd.s32 %s633, 3
      %p635 = scmp.lt.s32.totalorder %s27, 1
      %s636 = scalar_select %p635, %s27, 1
      %p637 = scmp.lt.s32.totalorder %s634, 17
      %s638 = scalar_select %p637, %s634, 17
      %s639 = smul.addr %s636, 18
      %s640 = sadd.s32 %s638, %s639
      %s641 = smul.addr %s640, 4
      %s642 = scalar_lea.vmem %s3, %s641
      %p643 = pneg %p156
      %p644 = pneg %p153
      %s645 = smul.u32 %s28, 8
      %s646 = sadd.s32 %s645, 4
      %p647 = scmp.lt.s32.totalorder %s27, 1
      %s648 = scalar_select %p647, %s27, 1
      %p649 = scmp.lt.s32.totalorder %s646, 17
      %s650 = scalar_select %p649, %s646, 17
      %s651 = smul.addr %s648, 18
      %s652 = sadd.s32 %s650, %s651
      %s653 = smul.addr %s652, 4
      %s654 = scalar_lea.vmem %s4, %s653
      %p655 = pneg %p188
      %p656 = pneg %p185
      %s657 = smul.u32 %s28, 8
      %s658 = sadd.s32 %s657, 5
      %p659 = scmp.lt.s32.totalorder %s27, 1
      %s660 = scalar_select %p659, %s27, 1
      %p661 = scmp.lt.s32.totalorder %s658, 17
      %s662 = scalar_select %p661, %s658, 17
      %s663 = smul.addr %s660, 18
      %s664 = sadd.s32 %s662, %s663
      %s665 = smul.addr %s664, 4
      %s666 = scalar_lea.vmem %s5, %s665
      %p667 = pneg %p220
      %p668 = pneg %p217
      %s669 = smul.u32 %s28, 8
      %s670 = sadd.s32 %s669, 6
      %p671 = scmp.lt.s32.totalorder %s27, 1
      %s672 = scalar_select %p671, %s27, 1
      %p673 = scmp.lt.s32.totalorder %s670, 17
      %s674 = scalar_select %p673, %s670, 17
      %s675 = smul.addr %s672, 18
      %s676 = sadd.s32 %s674, %s675
      %s677 = smul.addr %s676, 4
      %s678 = scalar_lea.vmem %s6, %s677
      %p679 = pneg %p252
      %p680 = pneg %p249
      %s681 = smul.u32 %s28, 8
      %s682 = sadd.s32 %s681, 7
      %p683 = scmp.lt.s32.totalorder %s27, 1
      %s684 = scalar_select %p683, %s27, 1
      %p685 = scmp.lt.s32.totalorder %s682, 17
      %s686 = scalar_select %p685, %s682, 17
      %s687 = smul.addr %s684, 18
      %s688 = sadd.s32 %s686, %s687
      %s689 = smul.addr %s688, 4
      %s690 = scalar_lea.vmem %s7, %s689
      %p691 = pneg %p284
      %p692 = pneg %p281
      %s693 = smul.u32 %s28, 8
      %s694 = sadd.s32 %s693, 8
      %p695 = scmp.lt.s32.totalorder %s27, 1
      %s696 = scalar_select %p695, %s27, 1
      %p697 = scmp.lt.s32.totalorder %s694, 17
      %s698 = scalar_select %p697, %s694, 17
      %s699 = smul.addr %s696, 18
      %s700 = sadd.s32 %s698, %s699
      %s701 = smul.addr %s700, 4
      %s702 = scalar_lea.vmem %s8, %s701
      %p703 = pneg %p316
      %p704 = pneg %p313
      %s705 = smul.u32 %s28, 8
      %s706 = sadd.s32 %s705, 9
      %p707 = scmp.lt.s32.totalorder %s27, 1
      %s708 = scalar_select %p707, %s27, 1
      %p709 = scmp.lt.s32.totalorder %s706, 17
      %s710 = scalar_select %p709, %s706, 17
      %s711 = smul.addr %s708, 18
      %s712 = sadd.s32 %s710, %s711
      %s713 = smul.addr %s712, 4
      %s714 = scalar_lea.vmem %s9, %s713
      %p715 = pneg %p348
      %p716 = pneg %p345
      %p717 = pneg %p369
      %p718 = pneg %p366
      %p719 = pneg %p390
      %p720 = pneg %p387
      %p721 = pneg %p418
      %p722 = pneg %p415
      %s723 = smul.u32 8, %s28
      %p724 = scmp.lt.s32.totalorder %s27, 1
      %s725 = scalar_select %p724, %s27, 1
      %p726 = scmp.lt.s32.totalorder %s723, 15
      %s727 = scalar_select %p726, %s723, 15
      %s728 = smul.addr %s725, 16
      %s729 = sadd.s32 %s727, %s728
      %s730 = smul.addr %s729, 8
      %s731 = scalar_lea.vmem %s12, %s730
      %s732 = smul.u32 %s28, 8
      %p733 = scmp.lt.s32.totalorder %s27, 1
      %s734 = scalar_select %p733, %s27, 1
      %p735 = scmp.lt.s32.totalorder %s732, 17
      %s736 = scalar_select %p735, %s732, 17
      %s737 = smul.addr %s734, 18
      %s738 = sadd.s32 %s736, %s737
      %s739 = smul.addr %s738, 4
      %s740 = scalar_lea.vmem %s0, %s739
      %s741 = smul.u32 %s28, 8
      %s742 = smul.u32 %s28, 8
      %s743 = sadd.s32 %s742, 1
      %p744 = scmp.lt.s32.totalorder %s27, 1
      %s745 = scalar_select %p744, %s27, 1
      %p746 = scmp.lt.s32.totalorder %s743, 17
      %s747 = scalar_select %p746, %s743, 17
      %s748 = smul.addr %s745, 18
      %s749 = sadd.s32 %s747, %s748
      %s750 = smul.addr %s749, 4
      %s751 = scalar_lea.vmem %s1, %s750
      %s752 = smul.u32 %s28, 8
      %s753 = sadd.s32 %s752, 1
      %s754 = smul.u32 %s28, 8
      %s755 = sadd.s32 %s754, 2
      %p756 = scmp.lt.s32.totalorder %s27, 1
      %s757 = scalar_select %p756, %s27, 1
      %p758 = scmp.lt.s32.totalorder %s755, 17
      %s759 = scalar_select %p758, %s755, 17
      %s760 = smul.addr %s757, 18
      %s761 = sadd.s32 %s759, %s760
      %s762 = smul.addr %s761, 4
      %s763 = scalar_lea.vmem %s2, %s762
      %s764 = smul.u32 %s28, 8
      %s765 = sadd.s32 %s764, 2
      %s766 = smul.u32 %s28, 8
      %s767 = sadd.s32 %s766, 3
      %p768 = scmp.lt.s32.totalorder %s27, 1
      %s769 = scalar_select %p768, %s27, 1
      %p770 = scmp.lt.s32.totalorder %s767, 17
      %s771 = scalar_select %p770, %s767, 17
      %s772 = smul.addr %s769, 18
      %s773 = sadd.s32 %s771, %s772
      %s774 = smul.addr %s773, 4
      %s775 = scalar_lea.vmem %s3, %s774
      %s776 = smul.u32 %s28, 8
      %s777 = sadd.s32 %s776, 3
      %s778 = smul.u32 %s28, 8
      %s779 = sadd.s32 %s778, 4
      %p780 = scmp.lt.s32.totalorder %s27, 1
      %s781 = scalar_select %p780, %s27, 1
      %p782 = scmp.lt.s32.totalorder %s779, 17
      %s783 = scalar_select %p782, %s779, 17
      %s784 = smul.addr %s781, 18
      %s785 = sadd.s32 %s783, %s784
      %s786 = smul.addr %s785, 4
      %s787 = scalar_lea.vmem %s4, %s786
      %s788 = smul.u32 %s28, 8
      %s789 = sadd.s32 %s788, 4
      %s790 = smul.u32 %s28, 8
      %s791 = sadd.s32 %s790, 5
      %p792 = scmp.lt.s32.totalorder %s27, 1
      %s793 = scalar_select %p792, %s27, 1
      %p794 = scmp.lt.s32.totalorder %s791, 17
      %s795 = scalar_select %p794, %s791, 17
      %s796 = smul.addr %s793, 18
      %s797 = sadd.s32 %s795, %s796
      %s798 = smul.addr %s797, 4
      %s799 = scalar_lea.vmem %s5, %s798
      %s800 = smul.u32 %s28, 8
      %s801 = sadd.s32 %s800, 5
      %s802 = smul.u32 %s28, 8
      %s803 = sadd.s32 %s802, 6
      %p804 = scmp.lt.s32.totalorder %s27, 1
      %s805 = scalar_select %p804, %s27, 1
      %p806 = scmp.lt.s32.totalorder %s803, 17
      %s807 = scalar_select %p806, %s803, 17
      %s808 = smul.addr %s805, 18
      %s809 = sadd.s32 %s807, %s808
      %s810 = smul.addr %s809, 4
      %s811 = scalar_lea.vmem %s6, %s810
      %s812 = smul.u32 %s28, 8
      %s813 = sadd.s32 %s812, 6
      %s814 = smul.u32 %s28, 8
      %s815 = sadd.s32 %s814, 7
      %p816 = scmp.lt.s32.totalorder %s27, 1
      %s817 = scalar_select %p816, %s27, 1
      %p818 = scmp.lt.s32.totalorder %s815, 17
      %s819 = scalar_select %p818, %s815, 17
      %s820 = smul.addr %s817, 18
      %s821 = sadd.s32 %s819, %s820
      %s822 = smul.addr %s821, 4
      %s823 = scalar_lea.vmem %s7, %s822
      %s824 = smul.u32 %s28, 8
      %s825 = sadd.s32 %s824, 7
      %s826 = smul.u32 %s28, 8
      %s827 = sadd.s32 %s826, 8
      %p828 = scmp.lt.s32.totalorder %s27, 1
      %s829 = scalar_select %p828, %s27, 1
      %p830 = scmp.lt.s32.totalorder %s827, 17
      %s831 = scalar_select %p830, %s827, 17
      %s832 = smul.addr %s829, 18
      %s833 = sadd.s32 %s831, %s832
      %s834 = smul.addr %s833, 4
      %s835 = scalar_lea.vmem %s8, %s834
      %s836 = smul.u32 %s28, 8
      %s837 = sadd.s32 %s836, 8
      %s838 = smul.u32 %s28, 8
      %s839 = sadd.s32 %s838, 9
      %p840 = scmp.lt.s32.totalorder %s27, 1
      %s841 = scalar_select %p840, %s27, 1
      %p842 = scmp.lt.s32.totalorder %s839, 17
      %s843 = scalar_select %p842, %s839, 17
      %s844 = smul.addr %s841, 18
      %s845 = sadd.s32 %s843, %s844
      %s846 = smul.addr %s845, 4
      %s847 = scalar_lea.vmem %s9, %s846
      %s848 = smul.u32 %s28, 8
      %s849 = sadd.s32 %s848, 9
      %s850 = smul.u32 8, %s28
      %p851 = scmp.lt.s32.totalorder %s27, 1
      %s852 = scalar_select %p851, %s27, 1
      %p853 = scmp.lt.s32.totalorder %s850, 15
      %s854 = scalar_select %p853, %s850, 15
      %s855 = smul.addr %s852, 16
      %s856 = sadd.s32 %s854, %s855
      %s857 = smul.addr %s856, 8
      %s858 = scalar_lea.vmem %s12, %s857
      %s859 = smul.u32 8, %s28
      %v860 = vld [vmem:[%s11] sm:$0xff]
      %v861 = vld [vmem:[%s740] sm:$0xf]
      %v862 = vld [vmem:[%s10] sm:$0xff]
      %s863 = scalar_lea.vmem %s10, 8
      %v864 = vld [vmem:[%s863] sm:$0xff]
      %866 = vrot.lane.b32.xlu0 %v861, 127
      %v867 = vpop.permute.xlu0 %866
      %vm868 = vcmask 31744
      %v870 = vsel %vm868, %v864, 0
      %vm872 = vcmask 1043456
      %v873 = vsel %vm872, %v867, 0
      %875 = vmatprep.subr.mxu0 0.0
      %876 = vmatpush1.msra.mxu0 %v873
      %877 = vmatprep.subr.mxu0 0.0
      %878 = vmatpush1.msra.mxu0 0.0
      %879 = vmatprep.subr.mxu0 0.0
      %880 = vmatpush1.msra.mxu0 0.0
      %881 = vmatprep.subr.mxu0 0.0
      %882 = vmatpush1.msra.mxu0 0.0
      %883 = vmatprep.subr.mxu0 0.0
      %884 = vmatpush1.msra.mxu0 0.0
      %885 = vmatprep.subr.mxu0 0.0
      %886 = vmatpush1.msra.mxu0 0.0
      %887 = vmatprep.subr.mxu0 0.0
      %888 = vmatpush1.msra.mxu0 0.0
      %889 = vmatprep.subr.mxu0 0.0
      %890 = vmatpush1.msra.mxu0 0.0
      %891 = vmatprep.subr.mxu0 0.0
      %892 = vmatpush1.msra.mxu0 0.0
      %893 = vmatprep.subr.mxu0 0.0
      %894 = vmatpush1.msra.mxu0 0.0
      %895 = vmatprep.subr.mxu0 0.0
      %896 = vmatpush1.msra.mxu0 0.0
      %897 = vmatprep.subr.mxu0 0.0
      %898 = vmatpush1.msra.mxu0 0.0
      %899 = vmatprep.subr.mxu0 0.0
      %900 = vmatpush1.msra.mxu0 0.0
      %901 = vmatprep.subr.mxu0 0.0
      %902 = vmatpush1.msra.mxu0 0.0
      %903 = vmatprep.subr.mxu0 0.0
      %904 = vmatpush1.msra.mxu0 0.0
      %905 = vmatprep.subr.mxu0 0.0
      %906 = vmatpush1.msra.mxu0 0.0
      %907 = vmatprep.subr.mxu0 0.0
      %908 = vmatpush1.msra.mxu0 0.0
      %909 = vmatprep.subr.mxu0 0.0
      %910 = vmatpush1.msra.mxu0 0.0
      %911 = vmatprep.subr.mxu0 0.0
      %912 = vmatpush1.msra.mxu0 0.0
      %913 = vmatprep.subr.mxu0 0.0
      %914 = vmatpush1.msra.mxu0 0.0
      %915 = vmatprep.subr.mxu0 0.0
      %916 = vmatpush1.msra.mxu0 0.0
      %917 = vmatprep.subr.mxu0 0.0
      %918 = vmatpush1.msra.mxu0 0.0
      %919 = vmatprep.subr.mxu0 0.0
      %920 = vmatpush1.msra.mxu0 0.0
      %921 = vmatprep.subr.mxu0 0.0
      %922 = vmatpush1.msra.mxu0 0.0
      %923 = vmatprep.subr.mxu0 0.0
      %924 = vmatpush1.msra.mxu0 0.0
      %925 = vmatprep.subr.mxu0 0.0
      %926 = vmatpush1.msra.mxu0 0.0
      %927 = vmatprep.subr.mxu0 0.0
      %928 = vmatpush1.msra.mxu0 0.0
      %929 = vmatprep.subr.mxu0 0.0
      %930 = vmatpush1.msra.mxu0 0.0
      %931 = vmatprep.subr.mxu0 0.0
      %932 = vmatpush1.msra.mxu0 0.0
      %933 = vmatprep.subr.mxu0 0.0
      %934 = vmatpush1.msra.mxu0 0.0
      %935 = vmatprep.subr.mxu0 0.0
      %936 = vmatpush1.msra.mxu0 0.0
      %937 = vmatprep.subr.mxu0 0.0
      %938 = vmatpush1.msra.mxu0 0.0
      %939 = vmatprep.mubr.f32.mxu0 0.0
      %940 = vmatmul.mubr.f32.gmra.mrb[0].mxu0 %v870
      %v941 = vpop.f32.mrb[0].mxu0
      %v942 = vadd.f32 0.0, %v941
      %v943 = vpop.f32.mrb[0].mxu0
      %944 = vdwg.mxu0
      %v946 = vsel %vm868, %v862, 0
      %v948 = vsel %vm872, %v861, 0
      %950 = vmatprep.subr.mxu0 0.0
      %951 = vmatpush1.msra.mxu0 %v948
      %952 = vmatprep.subr.mxu0 0.0
      %953 = vmatpush1.msra.mxu0 0.0
      %954 = vmatprep.subr.mxu0 0.0
      %955 = vmatpush1.msra.mxu0 0.0
      %956 = vmatprep.subr.mxu0 0.0
      %957 = vmatpush1.msra.mxu0 0.0
      %958 = vmatprep.subr.mxu0 0.0
      %959 = vmatpush1.msra.mxu0 0.0
      %960 = vmatprep.subr.mxu0 0.0
      %961 = vmatpush1.msra.mxu0 0.0
      %962 = vmatprep.subr.mxu0 0.0
      %963 = vmatpush1.msra.mxu0 0.0
      %964 = vmatprep.subr.mxu0 0.0
      %965 = vmatpush1.msra.mxu0 0.0
      %966 = vmatprep.subr.mxu0 0.0
      %967 = vmatpush1.msra.mxu0 0.0
      %968 = vmatprep.subr.mxu0 0.0
      %969 = vmatpush1.msra.mxu0 0.0
      %970 = vmatprep.subr.mxu0 0.0
      %971 = vmatpush1.msra.mxu0 0.0
      %972 = vmatprep.subr.mxu0 0.0
      %973 = vmatpush1.msra.mxu0 0.0
      %974 = vmatprep.subr.mxu0 0.0
      %975 = vmatpush1.msra.mxu0 0.0
      %976 = vmatprep.subr.mxu0 0.0
      %977 = vmatpush1.msra.mxu0 0.0
      %978 = vmatprep.subr.mxu0 0.0
      %979 = vmatpush1.msra.mxu0 0.0
      %980 = vmatprep.subr.mxu0 0.0
      %981 = vmatpush1.msra.mxu0 0.0
      %982 = vmatprep.subr.mxu0 0.0
      %983 = vmatpush1.msra.mxu0 0.0
      %984 = vmatprep.subr.mxu0 0.0
      %985 = vmatpush1.msra.mxu0 0.0
      %986 = vmatprep.subr.mxu0 0.0
      %987 = vmatpush1.msra.mxu0 0.0
      %988 = vmatprep.subr.mxu0 0.0
      %989 = vmatpush1.msra.mxu0 0.0
      %990 = vmatprep.subr.mxu0 0.0
      %991 = vmatpush1.msra.mxu0 0.0
      %992 = vmatprep.subr.mxu0 0.0
      %993 = vmatpush1.msra.mxu0 0.0
      %994 = vmatprep.subr.mxu0 0.0
      %995 = vmatpush1.msra.mxu0 0.0
      %996 = vmatprep.subr.mxu0 0.0
      %997 = vmatpush1.msra.mxu0 0.0
      %998 = vmatprep.subr.mxu0 0.0
      %999 = vmatpush1.msra.mxu0 0.0
      %1000 = vmatprep.subr.mxu0 0.0
      %1001 = vmatpush1.msra.mxu0 0.0
      %1002 = vmatprep.subr.mxu0 0.0
      %1003 = vmatpush1.msra.mxu0 0.0
      %1004 = vmatprep.subr.mxu0 0.0
      %1005 = vmatpush1.msra.mxu0 0.0
      %1006 = vmatprep.subr.mxu0 0.0
      %1007 = vmatpush1.msra.mxu0 0.0
      %1008 = vmatprep.subr.mxu0 0.0
      %1009 = vmatpush1.msra.mxu0 0.0
      %1010 = vmatprep.subr.mxu0 0.0
      %1011 = vmatpush1.msra.mxu0 0.0
      %1012 = vmatprep.subr.mxu0 0.0
      %1013 = vmatpush1.msra.mxu0 0.0
      %1014 = vmatprep.mubr.f32.mxu0 0.0
      %1015 = vmatmul.mubr.f32.gmra.mrb[0].mxu0 %v946
      %v1016 = vpop.f32.mrb[0].mxu0
      %v1017 = vadd.f32 %v942, %v1016
      %v1018 = vpop.f32.mrb[0].mxu0
      %1019 = vdwg.mxu0
      %s1020 = scalar_lea.vmem %s10, 16
      %v1021 = vld [vmem:[%s1020] sm:$0xff]
      %1022 = vrot.lane.b32.xlu0 %v861, 126
      %v1023 = vpop.permute.xlu0 %1022
      %v1025 = vsel %vm868, %v1021, 0
      %v1027 = vsel %vm872, %v1023, 0
      %1029 = vmatprep.subr.mxu0 0.0
      %1030 = vmatpush1.msra.mxu0 %v1027
      %1031 = vmatprep.subr.mxu0 0.0
      %1032 = vmatpush1.msra.mxu0 0.0
      %1033 = vmatprep.subr.mxu0 0.0
      %1034 = vmatpush1.msra.mxu0 0.0
      %1035 = vmatprep.subr.mxu0 0.0
      %1036 = vmatpush1.msra.mxu0 0.0
      %1037 = vmatprep.subr.mxu0 0.0
      %1038 = vmatpush1.msra.mxu0 0.0
      %1039 = vmatprep.subr.mxu0 0.0
      %1040 = vmatpush1.msra.mxu0 0.0
      %1041 = vmatprep.subr.mxu0 0.0
      %1042 = vmatpush1.msra.mxu0 0.0
      %1043 = vmatprep.subr.mxu0 0.0
      %1044 = vmatpush1.msra.mxu0 0.0
      %1045 = vmatprep.subr.mxu0 0.0
      %1046 = vmatpush1.msra.mxu0 0.0
      %1047 = vmatprep.subr.mxu0 0.0
      %1048 = vmatpush1.msra.mxu0 0.0
      %1049 = vmatprep.subr.mxu0 0.0
      %1050 = vmatpush1.msra.mxu0 0.0
      %1051 = vmatprep.subr.mxu0 0.0
      %1052 = vmatpush1.msra.mxu0 0.0
      %1053 = vmatprep.subr.mxu0 0.0
      %1054 = vmatpush1.msra.mxu0 0.0
      %1055 = vmatprep.subr.mxu0 0.0
      %1056 = vmatpush1.msra.mxu0 0.0
      %1057 = vmatprep.subr.mxu0 0.0
      %1058 = vmatpush1.msra.mxu0 0.0
      %1059 = vmatprep.subr.mxu0 0.0
      %1060 = vmatpush1.msra.mxu0 0.0
      %1061 = vmatprep.subr.mxu0 0.0
      %1062 = vmatpush1.msra.mxu0 0.0
      %1063 = vmatprep.subr.mxu0 0.0
      %1064 = vmatpush1.msra.mxu0 0.0
      %1065 = vmatprep.subr.mxu0 0.0
      %1066 = vmatpush1.msra.mxu0 0.0
      %1067 = vmatprep.subr.mxu0 0.0
      %1068 = vmatpush1.msra.mxu0 0.0
      %1069 = vmatprep.subr.mxu0 0.0
      %1070 = vmatpush1.msra.mxu0 0.0
      %1071 = vmatprep.subr.mxu0 0.0
      %1072 = vmatpush1.msra.mxu0 0.0
      %1073 = vmatprep.subr.mxu0 0.0
      %1074 = vmatpush1.msra.mxu0 0.0
      %1075 = vmatprep.subr.mxu0 0.0
      %1076 = vmatpush1.msra.mxu0 0.0
      %1077 = vmatprep.subr.mxu0 0.0
      %1078 = vmatpush1.msra.mxu0 0.0
      %1079 = vmatprep.subr.mxu0 0.0
      %1080 = vmatpush1.msra.mxu0 0.0
      %1081 = vmatprep.subr.mxu0 0.0
      %1082 = vmatpush1.msra.mxu0 0.0
      %1083 = vmatprep.subr.mxu0 0.0
      %1084 = vmatpush1.msra.mxu0 0.0
      %1085 = vmatprep.subr.mxu0 0.0
      %1086 = vmatpush1.msra.mxu0 0.0
      %1087 = vmatprep.subr.mxu0 0.0
      %1088 = vmatpush1.msra.mxu0 0.0
      %1089 = vmatprep.subr.mxu0 0.0
      %1090 = vmatpush1.msra.mxu0 0.0
      %1091 = vmatprep.subr.mxu0 0.0
      %1092 = vmatpush1.msra.mxu0 0.0
      %1093 = vmatprep.mubr.f32.mxu0 0.0
      %1094 = vmatmul.mubr.f32.gmra.mrb[0].mxu0 %v1025
      %v1095 = vpop.f32.mrb[0].mxu0
      %v1096 = vadd.f32 0.0, %v1095
      %v1097 = vpop.f32.mrb[0].mxu0
      %1098 = vdwg.mxu0
      %v1099 = vadd.f32 %v1017, %v1096
      %v1100 = vld [vmem:[%s751] sm:$0xf]
      %s1101 = scalar_lea.vmem %s10, 24
      %v1102 = vld [vmem:[%s1101] sm:$0xff]
      %v1104 = vsel %vm868, %v1102, 0
      %v1107 = vsel %vm872, %v1100, 0
      %1109 = vmatprep.subr.mxu0 0.0
      %1110 = vmatpush1.msra.mxu0 %v1107
      %1111 = vmatprep.subr.mxu0 0.0
      %1112 = vmatpush1.msra.mxu0 0.0
      %1113 = vmatprep.subr.mxu0 0.0
      %1114 = vmatpush1.msra.mxu0 0.0
      %1115 = vmatprep.subr.mxu0 0.0
      %1116 = vmatpush1.msra.mxu0 0.0
      %1117 = vmatprep.subr.mxu0 0.0
      %1118 = vmatpush1.msra.mxu0 0.0
      %1119 = vmatprep.subr.mxu0 0.0
      %1120 = vmatpush1.msra.mxu0 0.0
      %1121 = vmatprep.subr.mxu0 0.0
      %1122 = vmatpush1.msra.mxu0 0.0
      %1123 = vmatprep.subr.mxu0 0.0
      %1124 = vmatpush1.msra.mxu0 0.0
      %1125 = vmatprep.subr.mxu0 0.0
      %1126 = vmatpush1.msra.mxu0 0.0
      %1127 = vmatprep.subr.mxu0 0.0
      %1128 = vmatpush1.msra.mxu0 0.0
      %1129 = vmatprep.subr.mxu0 0.0
      %1130 = vmatpush1.msra.mxu0 0.0
      %1131 = vmatprep.subr.mxu0 0.0
      %1132 = vmatpush1.msra.mxu0 0.0
      %1133 = vmatprep.subr.mxu0 0.0
      %1134 = vmatpush1.msra.mxu0 0.0
      %1135 = vmatprep.subr.mxu0 0.0
      %1136 = vmatpush1.msra.mxu0 0.0
      %1137 = vmatprep.subr.mxu0 0.0
      %1138 = vmatpush1.msra.mxu0 0.0
      %1139 = vmatprep.subr.mxu0 0.0
      %1140 = vmatpush1.msra.mxu0 0.0
      %1141 = vmatprep.subr.mxu0 0.0
      %1142 = vmatpush1.msra.mxu0 0.0
      %1143 = vmatprep.subr.mxu0 0.0
      %1144 = vmatpush1.msra.mxu0 0.0
      %1145 = vmatprep.subr.mxu0 0.0
      %1146 = vmatpush1.msra.mxu0 0.0
      %1147 = vmatprep.subr.mxu0 0.0
      %1148 = vmatpush1.msra.mxu0 0.0
      %1149 = vmatprep.subr.mxu0 0.0
      %1150 = vmatpush1.msra.mxu0 0.0
      %1151 = vmatprep.subr.mxu0 0.0
      %1152 = vmatpush1.msra.mxu0 0.0
      %1153 = vmatprep.subr.mxu0 0.0
      %1154 = vmatpush1.msra.mxu0 0.0
      %1155 = vmatprep.subr.mxu0 0.0
      %1156 = vmatpush1.msra.mxu0 0.0
      %1157 = vmatprep.subr.mxu0 0.0
      %1158 = vmatpush1.msra.mxu0 0.0
      %1159 = vmatprep.subr.mxu0 0.0
      %1160 = vmatpush1.msra.mxu0 0.0
      %1161 = vmatprep.subr.mxu0 0.0
      %1162 = vmatpush1.msra.mxu0 0.0
      %1163 = vmatprep.subr.mxu0 0.0
      %1164 = vmatpush1.msra.mxu0 0.0
      %1165 = vmatprep.subr.mxu0 0.0
      %1166 = vmatpush1.msra.mxu0 0.0
      %1167 = vmatprep.subr.mxu0 0.0
      %1168 = vmatpush1.msra.mxu0 0.0
      %1169 = vmatprep.subr.mxu0 0.0
      %1170 = vmatpush1.msra.mxu0 0.0
      %1171 = vmatprep.subr.mxu0 0.0
      %1172 = vmatpush1.msra.mxu0 0.0
      %1173 = vmatprep.mubr.f32.mxu0 0.0
      %1174 = vmatmul.mubr.f32.gmra.mrb[0].mxu0 %v1104
      %v1175 = vpop.f32.mrb[0].mxu0
      %v1176 = vadd.f32 0.0, %v1175
      %v1177 = vpop.f32.mrb[0].mxu0
      %1178 = vdwg.mxu0
      %v1179 = vadd.f32 %v1099, %v1176
      %s1180 = scalar_lea.vmem %s10, 32
      %v1181 = vld [vmem:[%s1180] sm:$0xff]
      %1182 = vrot.lane.b32.xlu0 %v1100, 127
      %v1183 = vpop.permute.xlu0 %1182
      %v1185 = vsel %vm868, %v1181, 0
      %v1187 = vsel %vm872, %v1183, 0
      %1189 = vmatprep.subr.mxu0 0.0
      %1190 = vmatpush1.msra.mxu0 %v1187
      %1191 = vmatprep.subr.mxu0 0.0
      %1192 = vmatpush1.msra.mxu0 0.0
      %1193 = vmatprep.subr.mxu0 0.0
      %1194 = vmatpush1.msra.mxu0 0.0
      %1195 = vmatprep.subr.mxu0 0.0
      %1196 = vmatpush1.msra.mxu0 0.0
      %1197 = vmatprep.subr.mxu0 0.0
      %1198 = vmatpush1.msra.mxu0 0.0
      %1199 = vmatprep.subr.mxu0 0.0
      %1200 = vmatpush1.msra.mxu0 0.0
      %1201 = vmatprep.subr.mxu0 0.0
      %1202 = vmatpush1.msra.mxu0 0.0
      %1203 = vmatprep.subr.mxu0 0.0
      %1204 = vmatpush1.msra.mxu0 0.0
      %1205 = vmatprep.subr.mxu0 0.0
      %1206 = vmatpush1.msra.mxu0 0.0
      %1207 = vmatprep.subr.mxu0 0.0
      %1208 = vmatpush1.msra.mxu0 0.0
      %1209 = vmatprep.subr.mxu0 0.0
      %1210 = vmatpush1.msra.mxu0 0.0
      %1211 = vmatprep.subr.mxu0 0.0
      %1212 = vmatpush1.msra.mxu0 0.0
      %1213 = vmatprep.subr.mxu0 0.0
      %1214 = vmatpush1.msra.mxu0 0.0
      %1215 = vmatprep.subr.mxu0 0.0
      %1216 = vmatpush1.msra.mxu0 0.0
      %1217 = vmatprep.subr.mxu0 0.0
      %1218 = vmatpush1.msra.mxu0 0.0
      %1219 = vmatprep.subr.mxu0 0.0
      %1220 = vmatpush1.msra.mxu0 0.0
      %1221 = vmatprep.subr.mxu0 0.0
      %1222 = vmatpush1.msra.mxu0 0.0
      %1223 = vmatprep.subr.mxu0 0.0
      %1224 = vmatpush1.msra.mxu0 0.0
      %1225 = vmatprep.subr.mxu0 0.0
      %1226 = vmatpush1.msra.mxu0 0.0
      %1227 = vmatprep.subr.mxu0 0.0
      %1228 = vmatpush1.msra.mxu0 0.0
      %1229 = vmatprep.subr.mxu0 0.0
      %1230 = vmatpush1.msra.mxu0 0.0
      %1231 = vmatprep.subr.mxu0 0.0
      %1232 = vmatpush1.msra.mxu0 0.0
      %1233 = vmatprep.subr.mxu0 0.0
      %1234 = vmatpush1.msra.mxu0 0.0
      %1235 = vmatprep.subr.mxu0 0.0
      %1236 = vmatpush1.msra.mxu0 0.0
      %1237 = vmatprep.subr.mxu0 0.0
      %1238 = vmatpush1.msra.mxu0 0.0
      %1239 = vmatprep.subr.mxu0 0.0
      %1240 = vmatpush1.msra.mxu0 0.0
      %1241 = vmatprep.subr.mxu0 0.0
      %1242 = vmatpush1.msra.mxu0 0.0
      %1243 = vmatprep.subr.mxu0 0.0
      %1244 = vmatpush1.msra.mxu0 0.0
      %1245 = vmatprep.subr.mxu0 0.0
      %1246 = vmatpush1.msra.mxu0 0.0
      %1247 = vmatprep.subr.mxu0 0.0
      %1248 = vmatpush1.msra.mxu0 0.0
      %1249 = vmatprep.subr.mxu0 0.0
      %1250 = vmatpush1.msra.mxu0 0.0
      %1251 = vmatprep.subr.mxu0 0.0
      %1252 = vmatpush1.msra.mxu0 0.0
      %1253 = vmatprep.mubr.f32.mxu0 0.0
      %1254 = vmatmul.mubr.f32.gmra.mrb[0].mxu0 %v1185
      %v1255 = vpop.f32.mrb[0].mxu0
      %v1256 = vadd.f32 0.0, %v1255
      %v1257 = vpop.f32.mrb[0].mxu0
      %1258 = vdwg.mxu0
      %v1259 = vadd.f32 %v1179, %v1256
      %s1260 = scalar_lea.vmem %s10, 40
      %v1261 = vld [vmem:[%s1260] sm:$0xff]
      %1262 = vrot.lane.b32.xlu0 %v1100, 126
      %v1263 = vpop.permute.xlu0 %1262
      %v1265 = vsel %vm868, %v1261, 0
      %v1267 = vsel %vm872, %v1263, 0
      %1269 = vmatprep.subr.mxu0 0.0
      %1270 = vmatpush1.msra.mxu0 %v1267
      %1271 = vmatprep.subr.mxu0 0.0
      %1272 = vmatpush1.msra.mxu0 0.0
      %1273 = vmatprep.subr.mxu0 0.0
      %1274 = vmatpush1.msra.mxu0 0.0
      %1275 = vmatprep.subr.mxu0 0.0
      %1276 = vmatpush1.msra.mxu0 0.0
      %1277 = vmatprep.subr.mxu0 0.0
      %1278 = vmatpush1.msra.mxu0 0.0
      %1279 = vmatprep.subr.mxu0 0.0
      %1280 = vmatpush1.msra.mxu0 0.0
      %1281 = vmatprep.subr.mxu0 0.0
      %1282 = vmatpush1.msra.mxu0 0.0
      %1283 = vmatprep.subr.mxu0 0.0
      %1284 = vmatpush1.msra.mxu0 0.0
      %1285 = vmatprep.subr.mxu0 0.0
      %1286 = vmatpush1.msra.mxu0 0.0
      %1287 = vmatprep.subr.mxu0 0.0
      %1288 = vmatpush1.msra.mxu0 0.0
      %1289 = vmatprep.subr.mxu0 0.0
      %1290 = vmatpush1.msra.mxu0 0.0
      %1291 = vmatprep.subr.mxu0 0.0
      %1292 = vmatpush1.msra.mxu0 0.0
      %1293 = vmatprep.subr.mxu0 0.0
      %1294 = vmatpush1.msra.mxu0 0.0
      %1295 = vmatprep.subr.mxu0 0.0
      %1296 = vmatpush1.msra.mxu0 0.0
      %1297 = vmatprep.subr.mxu0 0.0
      %1298 = vmatpush1.msra.mxu0 0.0
      %1299 = vmatprep.subr.mxu0 0.0
      %1300 = vmatpush1.msra.mxu0 0.0
      %1301 = vmatprep.subr.mxu0 0.0
      %1302 = vmatpush1.msra.mxu0 0.0
      %1303 = vmatprep.subr.mxu0 0.0
      %1304 = vmatpush1.msra.mxu0 0.0
      %1305 = vmatprep.subr.mxu0 0.0
      %1306 = vmatpush1.msra.mxu0 0.0
      %1307 = vmatprep.subr.mxu0 0.0
      %1308 = vmatpush1.msra.mxu0 0.0
      %1309 = vmatprep.subr.mxu0 0.0
      %1310 = vmatpush1.msra.mxu0 0.0
      %1311 = vmatprep.subr.mxu0 0.0
      %1312 = vmatpush1.msra.mxu0 0.0
      %1313 = vmatprep.subr.mxu0 0.0
      %1314 = vmatpush1.msra.mxu0 0.0
      %1315 = vmatprep.subr.mxu0 0.0
      %1316 = vmatpush1.msra.mxu0 0.0
      %1317 = vmatprep.subr.mxu0 0.0
      %1318 = vmatpush1.msra.mxu0 0.0
      %1319 = vmatprep.subr.mxu0 0.0
      %1320 = vmatpush1.msra.mxu0 0.0
      %1321 = vmatprep.subr.mxu0 0.0
      %1322 = vmatpush1.msra.mxu0 0.0
      %1323 = vmatprep.subr.mxu0 0.0
      %1324 = vmatpush1.msra.mxu0 0.0
      %1325 = vmatprep.subr.mxu0 0.0
      %1326 = vmatpush1.msra.mxu0 0.0
      %1327 = vmatprep.subr.mxu0 0.0
      %1328 = vmatpush1.msra.mxu0 0.0
      %1329 = vmatprep.subr.mxu0 0.0
      %1330 = vmatpush1.msra.mxu0 0.0
      %1331 = vmatprep.subr.mxu0 0.0
      %1332 = vmatpush1.msra.mxu0 0.0
      %1333 = vmatprep.mubr.f32.mxu0 0.0
      %1334 = vmatmul.mubr.f32.gmra.mrb[0].mxu0 %v1265
      %v1335 = vpop.f32.mrb[0].mxu0
      %v1336 = vadd.f32 0.0, %v1335
      %v1337 = vpop.f32.mrb[0].mxu0
      %1338 = vdwg.mxu0
      %v1339 = vadd.f32 %v1259, %v1336
      %v1340 = vld [vmem:[%s763] sm:$0xf]
      %s1341 = scalar_lea.vmem %s10, 48
      %v1342 = vld [vmem:[%s1341] sm:$0xff]
      %v1344 = vsel %vm868, %v1342, 0
      %v1347 = vsel %vm872, %v1340, 0
      %1349 = vmatprep.subr.mxu0 0.0
      %1350 = vmatpush1.msra.mxu0 %v1347
      %1351 = vmatprep.subr.mxu0 0.0
      %1352 = vmatpush1.msra.mxu0 0.0
      %1353 = vmatprep.subr.mxu0 0.0
      %1354 = vmatpush1.msra.mxu0 0.0
      %1355 = vmatprep.subr.mxu0 0.0
      %1356 = vmatpush1.msra.mxu0 0.0
      %1357 = vmatprep.subr.mxu0 0.0
      %1358 = vmatpush1.msra.mxu0 0.0
      %1359 = vmatprep.subr.mxu0 0.0
      %1360 = vmatpush1.msra.mxu0 0.0
      %1361 = vmatprep.subr.mxu0 0.0
      %1362 = vmatpush1.msra.mxu0 0.0
      %1363 = vmatprep.subr.mxu0 0.0
      %1364 = vmatpush1.msra.mxu0 0.0
      %1365 = vmatprep.subr.mxu0 0.0
      %1366 = vmatpush1.msra.mxu0 0.0
      %1367 = vmatprep.subr.mxu0 0.0
      %1368 = vmatpush1.msra.mxu0 0.0
      %1369 = vmatprep.subr.mxu0 0.0
      %1370 = vmatpush1.msra.mxu0 0.0
      %1371 = vmatprep.subr.mxu0 0.0
      %1372 = vmatpush1.msra.mxu0 0.0
      %1373 = vmatprep.subr.mxu0 0.0
      %1374 = vmatpush1.msra.mxu0 0.0
      %1375 = vmatprep.subr.mxu0 0.0
      %1376 = vmatpush1.msra.mxu0 0.0
      %1377 = vmatprep.subr.mxu0 0.0
      %1378 = vmatpush1.msra.mxu0 0.0
      %1379 = vmatprep.subr.mxu0 0.0
      %1380 = vmatpush1.msra.mxu0 0.0
      %1381 = vmatprep.subr.mxu0 0.0
      %1382 = vmatpush1.msra.mxu0 0.0
      %1383 = vmatprep.subr.mxu0 0.0
      %1384 = vmatpush1.msra.mxu0 0.0
      %1385 = vmatprep.subr.mxu0 0.0
      %1386 = vmatpush1.msra.mxu0 0.0
      %1387 = vmatprep.subr.mxu0 0.0
      %1388 = vmatpush1.msra.mxu0 0.0
      %1389 = vmatprep.subr.mxu0 0.0
      %1390 = vmatpush1.msra.mxu0 0.0
      %1391 = vmatprep.subr.mxu0 0.0
      %1392 = vmatpush1.msra.mxu0 0.0
      %1393 = vmatprep.subr.mxu0 0.0
      %1394 = vmatpush1.msra.mxu0 0.0
      %1395 = vmatprep.subr.mxu0 0.0
      %1396 = vmatpush1.msra.mxu0 0.0
      %1397 = vmatprep.subr.mxu0 0.0
      %1398 = vmatpush1.msra.mxu0 0.0
      %1399 = vmatprep.subr.mxu0 0.0
      %1400 = vmatpush1.msra.mxu0 0.0
      %1401 = vmatprep.subr.mxu0 0.0
      %1402 = vmatpush1.msra.mxu0 0.0
      %1403 = vmatprep.subr.mxu0 0.0
      %1404 = vmatpush1.msra.mxu0 0.0
      %1405 = vmatprep.subr.mxu0 0.0
      %1406 = vmatpush1.msra.mxu0 0.0
      %1407 = vmatprep.subr.mxu0 0.0
      %1408 = vmatpush1.msra.mxu0 0.0
      %1409 = vmatprep.subr.mxu0 0.0
      %1410 = vmatpush1.msra.mxu0 0.0
      %1411 = vmatprep.subr.mxu0 0.0
      %1412 = vmatpush1.msra.mxu0 0.0
      %1413 = vmatprep.mubr.f32.mxu0 0.0
      %1414 = vmatmul.mubr.f32.gmra.mrb[0].mxu0 %v1344
      %v1415 = vpop.f32.mrb[0].mxu0
      %v1416 = vadd.f32 0.0, %v1415
      %v1417 = vpop.f32.mrb[0].mxu0
      %1418 = vdwg.mxu0
      %v1419 = vadd.f32 %v1339, %v1416
      %s1420 = scalar_lea.vmem %s10, 56
      %v1421 = vld [vmem:[%s1420] sm:$0xff]
      %1422 = vrot.lane.b32.xlu0 %v1340, 127
      %v1423 = vpop.permute.xlu0 %1422
      %v1425 = vsel %vm868, %v1421, 0
      %v1427 = vsel %vm872, %v1423, 0
      %1429 = vmatprep.subr.mxu0 0.0
      %1430 = vmatpush1.msra.mxu0 %v1427
      %1431 = vmatprep.subr.mxu0 0.0
      %1432 = vmatpush1.msra.mxu0 0.0
      %1433 = vmatprep.subr.mxu0 0.0
      %1434 = vmatpush1.msra.mxu0 0.0
      %1435 = vmatprep.subr.mxu0 0.0
      %1436 = vmatpush1.msra.mxu0 0.0
      %1437 = vmatprep.subr.mxu0 0.0
      %1438 = vmatpush1.msra.mxu0 0.0
      %1439 = vmatprep.subr.mxu0 0.0
      %1440 = vmatpush1.msra.mxu0 0.0
      %1441 = vmatprep.subr.mxu0 0.0
      %1442 = vmatpush1.msra.mxu0 0.0
      %1443 = vmatprep.subr.mxu0 0.0
      %1444 = vmatpush1.msra.mxu0 0.0
      %1445 = vmatprep.subr.mxu0 0.0
      %1446 = vmatpush1.msra.mxu0 0.0
      %1447 = vmatprep.subr.mxu0 0.0
      %1448 = vmatpush1.msra.mxu0 0.0
      %1449 = vmatprep.subr.mxu0 0.0
      %1450 = vmatpush1.msra.mxu0 0.0
      %1451 = vmatprep.subr.mxu0 0.0
      %1452 = vmatpush1.msra.mxu0 0.0
      %1453 = vmatprep.subr.mxu0 0.0
      %1454 = vmatpush1.msra.mxu0 0.0
      %1455 = vmatprep.subr.mxu0 0.0
      %1456 = vmatpush1.msra.mxu0 0.0
      %1457 = vmatprep.subr.mxu0 0.0
      %1458 = vmatpush1.msra.mxu0 0.0
      %1459 = vmatprep.subr.mxu0 0.0
      %1460 = vmatpush1.msra.mxu0 0.0
      %1461 = vmatprep.subr.mxu0 0.0
      %1462 = vmatpush1.msra.mxu0 0.0
      %1463 = vmatprep.subr.mxu0 0.0
      %1464 = vmatpush1.msra.mxu0 0.0
      %1465 = vmatprep.subr.mxu0 0.0
      %1466 = vmatpush1.msra.mxu0 0.0
      %1467 = vmatprep.subr.mxu0 0.0
      %1468 = vmatpush1.msra.mxu0 0.0
      %1469 = vmatprep.subr.mxu0 0.0
      %1470 = vmatpush1.msra.mxu0 0.0
      %1471 = vmatprep.subr.mxu0 0.0
      %1472 = vmatpush1.msra.mxu0 0.0
      %1473 = vmatprep.subr.mxu0 0.0
      %1474 = vmatpush1.msra.mxu0 0.0
      %1475 = vmatprep.subr.mxu0 0.0
      %1476 = vmatpush1.msra.mxu0 0.0
      %1477 = vmatprep.subr.mxu0 0.0
      %1478 = vmatpush1.msra.mxu0 0.0
      %1479 = vmatprep.subr.mxu0 0.0
      %1480 = vmatpush1.msra.mxu0 0.0
      %1481 = vmatprep.subr.mxu0 0.0
      %1482 = vmatpush1.msra.mxu0 0.0
      %1483 = vmatprep.subr.mxu0 0.0
      %1484 = vmatpush1.msra.mxu0 0.0
      %1485 = vmatprep.subr.mxu0 0.0
      %1486 = vmatpush1.msra.mxu0 0.0
      %1487 = vmatprep.subr.mxu0 0.0
      %1488 = vmatpush1.msra.mxu0 0.0
      %1489 = vmatprep.subr.mxu0 0.0
      %1490 = vmatpush1.msra.mxu0 0.0
      %1491 = vmatprep.subr.mxu0 0.0
      %1492 = vmatpush1.msra.mxu0 0.0
      %1493 = vmatprep.mubr.f32.mxu0 0.0
      %1494 = vmatmul.mubr.f32.gmra.mrb[0].mxu0 %v1425
      %v1495 = vpop.f32.mrb[0].mxu0
      %v1496 = vadd.f32 0.0, %v1495
      %v1497 = vpop.f32.mrb[0].mxu0
      %1498 = vdwg.mxu0
      %v1499 = vadd.f32 %v1419, %v1496
      %s1500 = scalar_lea.vmem %s10, 64
      %v1501 = vld [vmem:[%s1500] sm:$0xff]
      %1502 = vrot.lane.b32.xlu0 %v1340, 126
      %v1503 = vpop.permute.xlu0 %1502
      %v1505 = vsel %vm868, %v1501, 0
      %v1507 = vsel %vm872, %v1503, 0
      %1509 = vmatprep.subr.mxu0 0.0
      %1510 = vmatpush1.msra.mxu0 %v1507
      %1511 = vmatprep.subr.mxu0 0.0
      %1512 = vmatpush1.msra.mxu0 0.0
      %1513 = vmatprep.subr.mxu0 0.0
      %1514 = vmatpush1.msra.mxu0 0.0
      %1515 = vmatprep.subr.mxu0 0.0
      %1516 = vmatpush1.msra.mxu0 0.0
      %1517 = vmatprep.subr.mxu0 0.0
      %1518 = vmatpush1.msra.mxu0 0.0
      %1519 = vmatprep.subr.mxu0 0.0
      %1520 = vmatpush1.msra.mxu0 0.0
      %1521 = vmatprep.subr.mxu0 0.0
      %1522 = vmatpush1.msra.mxu0 0.0
      %1523 = vmatprep.subr.mxu0 0.0
      %1524 = vmatpush1.msra.mxu0 0.0
      %1525 = vmatprep.subr.mxu0 0.0
      %1526 = vmatpush1.msra.mxu0 0.0
      %1527 = vmatprep.subr.mxu0 0.0
      %1528 = vmatpush1.msra.mxu0 0.0
      %1529 = vmatprep.subr.mxu0 0.0
      %1530 = vmatpush1.msra.mxu0 0.0
      %1531 = vmatprep.subr.mxu0 0.0
      %1532 = vmatpush1.msra.mxu0 0.0
      %1533 = vmatprep.subr.mxu0 0.0
      %1534 = vmatpush1.msra.mxu0 0.0
      %1535 = vmatprep.subr.mxu0 0.0
      %1536 = vmatpush1.msra.mxu0 0.0
      %1537 = vmatprep.subr.mxu0 0.0
      %1538 = vmatpush1.msra.mxu0 0.0
      %1539 = vmatprep.subr.mxu0 0.0
      %1540 = vmatpush1.msra.mxu0 0.0
      %1541 = vmatprep.subr.mxu0 0.0
      %1542 = vmatpush1.msra.mxu0 0.0
      %1543 = vmatprep.subr.mxu0 0.0
      %1544 = vmatpush1.msra.mxu0 0.0
      %1545 = vmatprep.subr.mxu0 0.0
      %1546 = vmatpush1.msra.mxu0 0.0
      %1547 = vmatprep.subr.mxu0 0.0
      %1548 = vmatpush1.msra.mxu0 0.0
      %1549 = vmatprep.subr.mxu0 0.0
      %1550 = vmatpush1.msra.mxu0 0.0
      %1551 = vmatprep.subr.mxu0 0.0
      %1552 = vmatpush1.msra.mxu0 0.0
      %1553 = vmatprep.subr.mxu0 0.0
      %1554 = vmatpush1.msra.mxu0 0.0
      %1555 = vmatprep.subr.mxu0 0.0
      %1556 = vmatpush1.msra.mxu0 0.0
      %1557 = vmatprep.subr.mxu0 0.0
      %1558 = vmatpush1.msra.mxu0 0.0
      %1559 = vmatprep.subr.mxu0 0.0
      %1560 = vmatpush1.msra.mxu0 0.0
      %1561 = vmatprep.subr.mxu0 0.0
      %1562 = vmatpush1.msra.mxu0 0.0
      %1563 = vmatprep.subr.mxu0 0.0
      %1564 = vmatpush1.msra.mxu0 0.0
      %1565 = vmatprep.subr.mxu0 0.0
      %1566 = vmatpush1.msra.mxu0 0.0
      %1567 = vmatprep.subr.mxu0 0.0
      %1568 = vmatpush1.msra.mxu0 0.0
      %1569 = vmatprep.subr.mxu0 0.0
      %1570 = vmatpush1.msra.mxu0 0.0
      %1571 = vmatprep.subr.mxu0 0.0
      %1572 = vmatpush1.msra.mxu0 0.0
      %1573 = vmatprep.mubr.f32.mxu0 0.0
      %1574 = vmatmul.mubr.f32.gmra.mrb[0].mxu0 %v1505
      %v1575 = vpop.f32.mrb[0].mxu0
      %v1576 = vadd.f32 0.0, %v1575
      %v1577 = vpop.f32.mrb[0].mxu0
      %1578 = vdwg.mxu0
      %v1579 = vadd.f32 %v1499, %v1576
      %1581 = vset.pattern.permute.xlu0 0
      %1582 = vperm.xlu0 %1581, %v860
      %v1583 = vpop.permute.xlu0 %1582
      %v1585 = vadd.f32 %v1579, %v1583
      %v1586 = vmax.f32 %v1585, 0.0
      %vm1587 = vcmask 130048
      %1588 = vst.msk [vmem:[%s858] sm:$0xff] %vm1587, %v1586
      %v1589 = vld [vmem:[%s751] sm:$0xf]
      %v1590 = vld [vmem:[%s10] sm:$0xff]
      %v1591 = vld [vmem:[%s863] sm:$0xff]
      %1593 = vrot.lane.b32.xlu0 %v1589, 127
      %v1594 = vpop.permute.xlu0 %1593
      %v1596 = vsel %vm868, %v1591, 0
      %v1598 = vsel %vm872, %v1594, 0
      %1600 = vmatprep.subr.mxu0 0.0
      %1601 = vmatpush1.msra.mxu0 %v1598
      %1602 = vmatprep.subr.mxu0 0.0
      %1603 = vmatpush1.msra.mxu0 0.0
      %1604 = vmatprep.subr.mxu0 0.0
      %1605 = vmatpush1.msra.mxu0 0.0
      %1606 = vmatprep.subr.mxu0 0.0
      %1607 = vmatpush1.msra.mxu0 0.0
      %1608 = vmatprep.subr.mxu0 0.0
      %1609 = vmatpush1.msra.mxu0 0.0
      %1610 = vmatprep.subr.mxu0 0.0
      %1611 = vmatpush1.msra.mxu0 0.0
      %1612 = vmatprep.subr.mxu0 0.0
      %1613 = vmatpush1.msra.mxu0 0.0
      %1614 = vmatprep.subr.mxu0 0.0
      %1615 = vmatpush1.msra.mxu0 0.0
      %1616 = vmatprep.subr.mxu0 0.0
      %1617 = vmatpush1.msra.mxu0 0.0
      %1618 = vmatprep.subr.mxu0 0.0
      %1619 = vmatpush1.msra.mxu0 0.0
      %1620 = vmatprep.subr.mxu0 0.0
      %1621 = vmatpush1.msra.mxu0 0.0
      %1622 = vmatprep.subr.mxu0 0.0
      %1623 = vmatpush1.msra.mxu0 0.0
      %1624 = vmatprep.subr.mxu0 0.0
      %1625 = vmatpush1.msra.mxu0 0.0
      %1626 = vmatprep.subr.mxu0 0.0
      %1627 = vmatpush1.msra.mxu0 0.0
      %1628 = vmatprep.subr.mxu0 0.0
      %1629 = vmatpush1.msra.mxu0 0.0
      %1630 = vmatprep.subr.mxu0 0.0
      %1631 = vmatpush1.msra.mxu0 0.0
      %1632 = vmatprep.subr.mxu0 0.0
      %1633 = vmatpush1.msra.mxu0 0.0
      %1634 = vmatprep.subr.mxu0 0.0
      %1635 = vmatpush1.msra.mxu0 0.0
      %1636 = vmatprep.subr.mxu0 0.0
      %1637 = vmatpush1.msra.mxu0 0.0
      %1638 = vmatprep.subr.mxu0 0.0
      %1639 = vmatpush1.msra.mxu0 0.0
      %1640 = vmatprep.subr.mxu0 0.0
      %1641 = vmatpush1.msra.mxu0 0.0
      %1642 = vmatprep.subr.mxu0 0.0
      %1643 = vmatpush1.msra.mxu0 0.0
      %1644 = vmatprep.subr.mxu0 0.0
      %1645 = vmatpush1.msra.mxu0 0.0
      %1646 = vmatprep.subr.mxu0 0.0
      %1647 = vmatpush1.msra.mxu0 0.0
      %1648 = vmatprep.subr.mxu0 0.0
      %1649 = vmatpush1.msra.mxu0 0.0
      %1650 = vmatprep.subr.mxu0 0.0
      %1651 = vmatpush1.msra.mxu0 0.0
      %1652 = vmatprep.subr.mxu0 0.0
      %1653 = vmatpush1.msra.mxu0 0.0
      %1654 = vmatprep.subr.mxu0 0.0
      %1655 = vmatpush1.msra.mxu0 0.0
      %1656 = vmatprep.subr.mxu0 0.0
      %1657 = vmatpush1.msra.mxu0 0.0
      %1658 = vmatprep.subr.mxu0 0.0
      %1659 = vmatpush1.msra.mxu0 0.0
      %1660 = vmatprep.subr.mxu0 0.0
      %1661 = vmatpush1.msra.mxu0 0.0
      %1662 = vmatprep.subr.mxu0 0.0
      %1663 = vmatpush1.msra.mxu0 0.0
      %1664 = vmatprep.mubr.f32.mxu0 0.0
      %1665 = vmatmul.mubr.f32.gmra.mrb[0].mxu0 %v1596
      %v1666 = vpop.f32.mrb[0].mxu0
      %v1667 = vadd.f32 0.0, %v1666
      %v1668 = vpop.f32.mrb[0].mxu0
      %1669 = vdwg.mxu0
      %v1671 = vsel %vm868, %v1590, 0
      %v1673 = vsel %vm872, %v1589, 0
      %1675 = vmatprep.subr.mxu0 0.0
      %1676 = vmatpush1.msra.mxu0 %v1673
      %1677 = vmatprep.subr.mxu0 0.0
      %1678 = vmatpush1.msra.mxu0 0.0
      %1679 = vmatprep.subr.mxu0 0.0
      %1680 = vmatpush1.msra.mxu0 0.0
      %1681 = vmatprep.subr.mxu0 0.0
      %1682 = vmatpush1.msra.mxu0 0.0
      %1683 = vmatprep.subr.mxu0 0.0
      %1684 = vmatpush1.msra.mxu0 0.0
      %1685 = vmatprep.subr.mxu0 0.0
      %1686 = vmatpush1.msra.mxu0 0.0
      %1687 = vmatprep.subr.mxu0 0.0
      %1688 = vmatpush1.msra.mxu0 0.0
      %1689 = vmatprep.subr.mxu0 0.0
      %1690 = vmatpush1.msra.mxu0 0.0
      %1691 = vmatprep.subr.mxu0 0.0
      %1692 = vmatpush1.msra.mxu0 0.0
      %1693 = vmatprep.subr.mxu0 0.0
      %1694 = vmatpush1.msra.mxu0 0.0
      %1695 = vmatprep.subr.mxu0 0.0
      %1696 = vmatpush1.msra.mxu0 0.0
      %1697 = vmatprep.subr.mxu0 0.0
      %1698 = vmatpush1.msra.mxu0 0.0
      %1699 = vmatprep.subr.mxu0 0.0
      %1700 = vmatpush1.msra.mxu0 0.0
      %1701 = vmatprep.subr.mxu0 0.0
      %1702 = vmatpush1.msra.mxu0 0.0
      %1703 = vmatprep.subr.mxu0 0.0
      %1704 = vmatpush1.msra.mxu0 0.0
      %1705 = vmatprep.subr.mxu0 0.0
      %1706 = vmatpush1.msra.mxu0 0.0
      %1707 = vmatprep.subr.mxu0 0.0
      %1708 = vmatpush1.msra.mxu0 0.0
      %1709 = vmatprep.subr.mxu0 0.0
      %1710 = vmatpush1.msra.mxu0 0.0
      %1711 = vmatprep.subr.mxu0 0.0
      %1712 = vmatpush1.msra.mxu0 0.0
      %1713 = vmatprep.subr.mxu0 0.0
      %1714 = vmatpush1.msra.mxu0 0.0
      %1715 = vmatprep.subr.mxu0 0.0
      %1716 = vmatpush1.msra.mxu0 0.0
      %1717 = vmatprep.subr.mxu0 0.0
      %1718 = vmatpush1.msra.mxu0 0.0
      %1719 = vmatprep.subr.mxu0 0.0
      %1720 = vmatpush1.msra.mxu0 0.0
      %1721 = vmatprep.subr.mxu0 0.0
      %1722 = vmatpush1.msra.mxu0 0.0
      %1723 = vmatprep.subr.mxu0 0.0
      %1724 = vmatpush1.msra.mxu0 0.0
      %1725 = vmatprep.subr.mxu0 0.0
      %1726 = vmatpush1.msra.mxu0 0.0
      %1727 = vmatprep.subr.mxu0 0.0
      %1728 = vmatpush1.msra.mxu0 0.0
      %1729 = vmatprep.subr.mxu0 0.0
      %1730 = vmatpush1.msra.mxu0 0.0
      %1731 = vmatprep.subr.mxu0 0.0
      %1732 = vmatpush1.msra.mxu0 0.0
      %1733 = vmatprep.subr.mxu0 0.0
      %1734 = vmatpush1.msra.mxu0 0.0
      %1735 = vmatprep.subr.mxu0 0.0
      %1736 = vmatpush1.msra.mxu0 0.0
      %1737 = vmatprep.subr.mxu0 0.0
      %1738 = vmatpush1.msra.mxu0 0.0
      %1739 = vmatprep.mubr.f32.mxu0 0.0
      %1740 = vmatmul.mubr.f32.gmra.mrb[0].mxu0 %v1671
      %v1741 = vpop.f32.mrb[0].mxu0
      %v1742 = vadd.f32 %v1667, %v1741
      %v1743 = vpop.f32.mrb[0].mxu0
      %1744 = vdwg.mxu0
      %v1745 = vld [vmem:[%s1020] sm:$0xff]
      %1746 = vrot.lane.b32.xlu0 %v1589, 126
      %v1747 = vpop.permute.xlu0 %1746
      %v1749 = vsel %vm868, %v1745, 0
      %v1751 = vsel %vm872, %v1747, 0
      %1753 = vmatprep.subr.mxu0 0.0
      %1754 = vmatpush1.msra.mxu0 %v1751
      %1755 = vmatprep.subr.mxu0 0.0
      %1756 = vmatpush1.msra.mxu0 0.0
      %1757 = vmatprep.subr.mxu0 0.0
      %1758 = vmatpush1.msra.mxu0 0.0
      %1759 = vmatprep.subr.mxu0 0.0
      %1760 = vmatpush1.msra.mxu0 0.0
      %1761 = vmatprep.subr.mxu0 0.0
      %1762 = vmatpush1.msra.mxu0 0.0
      %1763 = vmatprep.subr.mxu0 0.0
      %1764 = vmatpush1.msra.mxu0 0.0
      %1765 = vmatprep.subr.mxu0 0.0
      %1766 = vmatpush1.msra.mxu0 0.0
      %1767 = vmatprep.subr.mxu0 0.0
      %1768 = vmatpush1.msra.mxu0 0.0
      %1769 = vmatprep.subr.mxu0 0.0
      %1770 = vmatpush1.msra.mxu0 0.0
      %1771 = vmatprep.subr.mxu0 0.0
      %1772 = vmatpush1.msra.mxu0 0.0
      %1773 = vmatprep.subr.mxu0 0.0
      %1774 = vmatpush1.msra.mxu0 0.0
      %1775 = vmatprep.subr.mxu0 0.0
      %1776 = vmatpush1.msra.mxu0 0.0
      %1777 = vmatprep.subr.mxu0 0.0
      %1778 = vmatpush1.msra.mxu0 0.0
      %1779 = vmatprep.subr.mxu0 0.0
      %1780 = vmatpush1.msra.mxu0 0.0
      %1781 = vmatprep.subr.mxu0 0.0
      %1782 = vmatpush1.msra.mxu0 0.0
      %1783 = vmatprep.subr.mxu0 0.0
      %1784 = vmatpush1.msra.mxu0 0.0
      %1785 = vmatprep.subr.mxu0 0.0
      %1786 = vmatpush1.msra.mxu0 0.0
      %1787 = vmatprep.subr.mxu0 0.0
      %1788 = vmatpush1.msra.mxu0 0.0
      %1789 = vmatprep.subr.mxu0 0.0
      %1790 = vmatpush1.msra.mxu0 0.0
      %1791 = vmatprep.subr.mxu0 0.0
      %1792 = vmatpush1.msra.mxu0 0.0
      %1793 = vmatprep.subr.mxu0 0.0
      %1794 = vmatpush1.msra.mxu0 0.0
      %1795 = vmatprep.subr.mxu0 0.0
      %1796 = vmatpush1.msra.mxu0 0.0
      %1797 = vmatprep.subr.mxu0 0.0
      %1798 = vmatpush1.msra.mxu0 0.0
      %1799 = vmatprep.subr.mxu0 0.0
      %1800 = vmatpush1.msra.mxu0 0.0
      %1801 = vmatprep.subr.mxu0 0.0
      %1802 = vmatpush1.msra.mxu0 0.0
      %1803 = vmatprep.subr.mxu0 0.0
      %1804 = vmatpush1.msra.mxu0 0.0
      %1805 = vmatprep.subr.mxu0 0.0
      %1806 = vmatpush1.msra.mxu0 0.0
      %1807 = vmatprep.subr.mxu0 0.0
      %1808 = vmatpush1.msra.mxu0 0.0
      %1809 = vmatprep.subr.mxu0 0.0
      %1810 = vmatpush1.msra.mxu0 0.0
      %1811 = vmatprep.subr.mxu0 0.0
      %1812 = vmatpush1.msra.mxu0 0.0
      %1813 = vmatprep.subr.mxu0 0.0
      %1814 = vmatpush1.msra.mxu0 0.0
      %1815 = vmatprep.subr.mxu0 0.0
      %1816 = vmatpush1.msra.mxu0 0.0
      %1817 = vmatprep.mubr.f32.mxu0 0.0
      %1818 = vmatmul.mubr.f32.gmra.mrb[0].mxu0 %v1749
      %v1819 = vpop.f32.mrb[0].mxu0
      %v1820 = vadd.f32 0.0, %v1819
      %v1821 = vpop.f32.mrb[0].mxu0
      %1822 = vdwg.mxu0
      %v1823 = vadd.f32 %v1742, %v1820
      %v1824 = vld [vmem:[%s763] sm:$0xf]
      %v1825 = vld [vmem:[%s1101] sm:$0xff]
      %v1827 = vsel %vm868, %v1825, 0
      %v1830 = vsel %vm872, %v1824, 0
      %1832 = vmatprep.subr.mxu0 0.0
      %1833 = vmatpush1.msra.mxu0 %v1830
      %1834 = vmatprep.subr.mxu0 0.0
      %1835 = vmatpush1.msra.mxu0 0.0
      %1836 = vmatprep.subr.mxu0 0.0
      %1837 = vmatpush1.msra.mxu0 0.0
      %1838 = vmatprep.subr.mxu0 0.0
      %1839 = vmatpush1.msra.mxu0 0.0
      %1840 = vmatprep.subr.mxu0 0.0
      %1841 = vmatpush1.msra.mxu0 0.0
      %1842 = vmatprep.subr.mxu0 0.0
      %1843 = vmatpush1.msra.mxu0 0.0
      %1844 = vmatprep.subr.mxu0 0.0
      %1845 = vmatpush1.msra.mxu0 0.0
      %1846 = vmatprep.subr.mxu0 0.0
      %1847 = vmatpush1.msra.mxu0 0.0
      %1848 = vmatprep.subr.mxu0 0.0
      %1849 = vmatpush1.msra.mxu0 0.0
      %1850 = vmatprep.subr.mxu0 0.0
      %1851 = vmatpush1.msra.mxu0 0.0
      %1852 = vmatprep.subr.mxu0 0.0
      %1853 = vmatpush1.msra.mxu0 0.0
      %1854 = vmatprep.subr.mxu0 0.0
      %1855 = vmatpush1.msra.mxu0 0.0
      %1856 = vmatprep.subr.mxu0 0.0
      %1857 = vmatpush1.msra.mxu0 0.0
      %1858 = vmatprep.subr.mxu0 0.0
      %1859 = vmatpush1.msra.mxu0 0.0
      %1860 = vmatprep.subr.mxu0 0.0
      %1861 = vmatpush1.msra.mxu0 0.0
      %1862 = vmatprep.subr.mxu0 0.0
      %1863 = vmatpush1.msra.mxu0 0.0
      %1864 = vmatprep.subr.mxu0 0.0
      %1865 = vmatpush1.msra.mxu0 0.0
      %1866 = vmatprep.subr.mxu0 0.0
      %1867 = vmatpush1.msra.mxu0 0.0
      %1868 = vmatprep.subr.mxu0 0.0
      %1869 = vmatpush1.msra.mxu0 0.0
      %1870 = vmatprep.subr.mxu0 0.0
      %1871 = vmatpush1.msra.mxu0 0.0
      %1872 = vmatprep.subr.mxu0 0.0
      %1873 = vmatpush1.msra.mxu0 0.0
      %1874 = vmatprep.subr.mxu0 0.0
      %1875 = vmatpush1.msra.mxu0 0.0
      %1876 = vmatprep.subr.mxu0 0.0
      %1877 = vmatpush1.msra.mxu0 0.0
      %1878 = vmatprep.subr.mxu0 0.0
      %1879 = vmatpush1.msra.mxu0 0.0
      %1880 = vmatprep.subr.mxu0 0.0
      %1881 = vmatpush1.msra.mxu0 0.0
      %1882 = vmatprep.subr.mxu0 0.0
      %1883 = vmatpush1.msra.mxu0 0.0
      %1884 = vmatprep.subr.mxu0 0.0
      %1885 = vmatpush1.msra.mxu0 0.0
      %1886 = vmatprep.subr.mxu0 0.0
      %1887 = vmatpush1.msra.mxu0 0.0
      %1888 = vmatprep.subr.mxu0 0.0
      %1889 = vmatpush1.msra.mxu0 0.0
      %1890 = vmatprep.subr.mxu0 0.0
      %1891 = vmatpush1.msra.mxu0 0.0
      %1892 = vmatprep.subr.mxu0 0.0
      %1893 = vmatpush1.msra.mxu0 0.0
      %1894 = vmatprep.subr.mxu0 0.0
      %1895 = vmatpush1.msra.mxu0 0.0
      %1896 = vmatprep.mubr.f32.mxu0 0.0
      %1897 = vmatmul.mubr.f32.gmra.mrb[0].mxu0 %v1827
      %v1898 = vpop.f32.mrb[0].mxu0
      %v1899 = vadd.f32 0.0, %v1898
      %v1900 = vpop.f32.mrb[0].mxu0
      %1901 = vdwg.mxu0
      %v1902 = vadd.f32 %v1823, %v1899
      %v1903 = vld [vmem:[%s1180] sm:$0xff]
      %1904 = vrot.lane.b32.xlu0 %v1824, 127
      %v1905 = vpop.permute.xlu0 %1904
      %v1907 = vsel %vm868, %v1903, 0
      %v1909 = vsel %vm872, %v1905, 0
      %1911 = vmatprep.subr.mxu0 0.0
      %1912 = vmatpush1.msra.mxu0 %v1909
      %1913 = vmatprep.subr.mxu0 0.0
      %1914 = vmatpush1.msra.mxu0 0.0
      %1915 = vmatprep.subr.mxu0 0.0
      %1916 = vmatpush1.msra.mxu0 0.0
      %1917 = vmatprep.subr.mxu0 0.0
      %1918 = vmatpush1.msra.mxu0 0.0
      %1919 = vmatprep.subr.mxu0 0.0
      %1920 = vmatpush1.msra.mxu0 0.0
      %1921 = vmatprep.subr.mxu0 0.0
      %1922 = vmatpush1.msra.mxu0 0.0
      %1923 = vmatprep.subr.mxu0 0.0
      %1924 = vmatpush1.msra.mxu0 0.0
      %1925 = vmatprep.subr.mxu0 0.0
      %1926 = vmatpush1.msra.mxu0 0.0
      %1927 = vmatprep.subr.mxu0 0.0
      %1928 = vmatpush1.msra.mxu0 0.0
      %1929 = vmatprep.subr.mxu0 0.0
      %1930 = vmatpush1.msra.mxu0 0.0
      %1931 = vmatprep.subr.mxu0 0.0
      %1932 = vmatpush1.msra.mxu0 0.0
      %1933 = vmatprep.subr.mxu0 0.0
      %1934 = vmatpush1.msra.mxu0 0.0
      %1935 = vmatprep.subr.mxu0 0.0
      %1936 = vmatpush1.msra.mxu0 0.0
      %1937 = vmatprep.subr.mxu0 0.0
      %1938 = vmatpush1.msra.mxu0 0.0
      %1939 = vmatprep.subr.mxu0 0.0
      %1940 = vmatpush1.msra.mxu0 0.0
      %1941 = vmatprep.subr.mxu0 0.0
      %1942 = vmatpush1.msra.mxu0 0.0
      %1943 = vmatprep.subr.mxu0 0.0
      %1944 = vmatpush1.msra.mxu0 0.0
      %1945 = vmatprep.subr.mxu0 0.0
      %1946 = vmatpush1.msra.mxu0 0.0
      %1947 = vmatprep.subr.mxu0 0.0
      %1948 = vmatpush1.msra.mxu0 0.0
      %1949 = vmatprep.subr.mxu0 0.0
      %1950 = vmatpush1.msra.mxu0 0.0
      %1951 = vmatprep.subr.mxu0 0.0
      %1952 = vmatpush1.msra.mxu0 0.0
      %1953 = vmatprep.subr.mxu0 0.0
      %1954 = vmatpush1.msra.mxu0 0.0
      %1955 = vmatprep.subr.mxu0 0.0
      %1956 = vmatpush1.msra.mxu0 0.0
      %1957 = vmatprep.subr.mxu0 0.0
      %1958 = vmatpush1.msra.mxu0 0.0
      %1959 = vmatprep.subr.mxu0 0.0
      %1960 = vmatpush1.msra.mxu0 0.0
      %1961 = vmatprep.subr.mxu0 0.0
      %1962 = vmatpush1.msra.mxu0 0.0
      %1963 = vmatprep.subr.mxu0 0.0
      %1964 = vmatpush1.msra.mxu0 0.0
      %1965 = vmatprep.subr.mxu0 0.0
      %1966 = vmatpush1.msra.mxu0 0.0
      %1967 = vmatprep.subr.mxu0 0.0
      %1968 = vmatpush1.msra.mxu0 0.0
      %1969 = vmatprep.subr.mxu0 0.0
      %1970 = vmatpush1.msra.mxu0 0.0
      %1971 = vmatprep.subr.mxu0 0.0
      %1972 = vmatpush1.msra.mxu0 0.0
      %1973 = vmatprep.subr.mxu0 0.0
      %1974 = vmatpush1.msra.mxu0 0.0
      %1975 = vmatprep.mubr.f32.mxu0 0.0
      %1976 = vmatmul.mubr.f32.gmra.mrb[0].mxu0 %v1907
      %v1977 = vpop.f32.mrb[0].mxu0
      %v1978 = vadd.f32 0.0, %v1977
      %v1979 = vpop.f32.mrb[0].mxu0
      %1980 = vdwg.mxu0
      %v1981 = vadd.f32 %v1902, %v1978
      %v1982 = vld [vmem:[%s1260] sm:$0xff]
      %1983 = vrot.lane.b32.xlu0 %v1824, 126
      %v1984 = vpop.permute.xlu0 %1983
      %v1986 = vsel %vm868, %v1982, 0
      %v1988 = vsel %vm872, %v1984, 0
      %1990 = vmatprep.subr.mxu0 0.0
      %1991 = vmatpush1.msra.mxu0 %v1988
      %1992 = vmatprep.subr.mxu0 0.0
      %1993 = vmatpush1.msra.mxu0 0.0
      %1994 = vmatprep.subr.mxu0 0.0
      %1995 = vmatpush1.msra.mxu0 0.0
      %1996 = vmatprep.subr.mxu0 0.0
      %1997 = vmatpush1.msra.mxu0 0.0
      %1998 = vmatprep.subr.mxu0 0.0
      %1999 = vmatpush1.msra.mxu0 0.0
      %2000 = vmatprep.subr.mxu0 0.0
      %2001 = vmatpush1.msra.mxu0 0.0
      %2002 = vmatprep.subr.mxu0 0.0
      %2003 = vmatpush1.msra.mxu0 0.0
      %2004 = vmatprep.subr.mxu0 0.0
      %2005 = vmatpush1.msra.mxu0 0.0
      %2006 = vmatprep.subr.mxu0 0.0
      %2007 = vmatpush1.msra.mxu0 0.0
      %2008 = vmatprep.subr.mxu0 0.0
      %2009 = vmatpush1.msra.mxu0 0.0
      %2010 = vmatprep.subr.mxu0 0.0
      %2011 = vmatpush1.msra.mxu0 0.0
      %2012 = vmatprep.subr.mxu0 0.0
      %2013 = vmatpush1.msra.mxu0 0.0
      %2014 = vmatprep.subr.mxu0 0.0
      %2015 = vmatpush1.msra.mxu0 0.0
      %2016 = vmatprep.subr.mxu0 0.0
      %2017 = vmatpush1.msra.mxu0 0.0
      %2018 = vmatprep.subr.mxu0 0.0
      %2019 = vmatpush1.msra.mxu0 0.0
      %2020 = vmatprep.subr.mxu0 0.0
      %2021 = vmatpush1.msra.mxu0 0.0
      %2022 = vmatprep.subr.mxu0 0.0
      %2023 = vmatpush1.msra.mxu0 0.0
      %2024 = vmatprep.subr.mxu0 0.0
      %2025 = vmatpush1.msra.mxu0 0.0
      %2026 = vmatprep.subr.mxu0 0.0
      %2027 = vmatpush1.msra.mxu0 0.0
      %2028 = vmatprep.subr.mxu0 0.0
      %2029 = vmatpush1.msra.mxu0 0.0
      %2030 = vmatprep.subr.mxu0 0.0
      %2031 = vmatpush1.msra.mxu0 0.0
      %2032 = vmatprep.subr.mxu0 0.0
      %2033 = vmatpush1.msra.mxu0 0.0
      %2034 = vmatprep.subr.mxu0 0.0
      %2035 = vmatpush1.msra.mxu0 0.0
      %2036 = vmatprep.subr.mxu0 0.0
      %2037 = vmatpush1.msra.mxu0 0.0
      %2038 = vmatprep.subr.mxu0 0.0
      %2039 = vmatpush1.msra.mxu0 0.0
      %2040 = vmatprep.subr.mxu0 0.0
      %2041 = vmatpush1.msra.mxu0 0.0
      %2042 = vmatprep.subr.mxu0 0.0
      %2043 = vmatpush1.msra.mxu0 0.0
      %2044 = vmatprep.subr.mxu0 0.0
      %2045 = vmatpush1.msra.mxu0 0.0
      %2046 = vmatprep.subr.mxu0 0.0
      %2047 = vmatpush1.msra.mxu0 0.0
      %2048 = vmatprep.subr.mxu0 0.0
      %2049 = vmatpush1.msra.mxu0 0.0
      %2050 = vmatprep.subr.mxu0 0.0
      %2051 = vmatpush1.msra.mxu0 0.0
      %2052 = vmatprep.subr.mxu0 0.0
      %2053 = vmatpush1.msra.mxu0 0.0
      %2054 = vmatprep.mubr.f32.mxu0 0.0
      %2055 = vmatmul.mubr.f32.gmra.mrb[0].mxu0 %v1986
      %v2056 = vpop.f32.mrb[0].mxu0
      %v2057 = vadd.f32 0.0, %v2056
      %v2058 = vpop.f32.mrb[0].mxu0
      %2059 = vdwg.mxu0
      %v2060 = vadd.f32 %v1981, %v2057
      %v2061 = vld [vmem:[%s775] sm:$0xf]
      %v2062 = vld [vmem:[%s1341] sm:$0xff]
      %v2064 = vsel %vm868, %v2062, 0
      %v2067 = vsel %vm872, %v2061, 0
      %2069 = vmatprep.subr.mxu0 0.0
      %2070 = vmatpush1.msra.mxu0 %v2067
      %2071 = vmatprep.subr.mxu0 0.0
      %2072 = vmatpush1.msra.mxu0 0.0
      %2073 = vmatprep.subr.mxu0 0.0
      %2074 = vmatpush1.msra.mxu0 0.0
      %2075 = vmatprep.subr.mxu0 0.0
      %2076 = vmatpush1.msra.mxu0 0.0
      %2077 = vmatprep.subr.mxu0 0.0
      %2078 = vmatpush1.msra.mxu0 0.0
      %2079 = vmatprep.subr.mxu0 0.0
      %2080 = vmatpush1.msra.mxu0 0.0
      %2081 = vmatprep.subr.mxu0 0.0
      %2082 = vmatpush1.msra.mxu0 0.0
      %2083 = vmatprep.subr.mxu0 0.0
      %2084 = vmatpush1.msra.mxu0 0.0
      %2085 = vmatprep.subr.mxu0 0.0
      %2086 = vmatpush1.msra.mxu0 0.0
      %2087 = vmatprep.subr.mxu0 0.0
      %2088 = vmatpush1.msra.mxu0 0.0
      %2089 = vmatprep.subr.mxu0 0.0
      %2090 = vmatpush1.msra.mxu0 0.0
      %2091 = vmatprep.subr.mxu0 0.0
      %2092 = vmatpush1.msra.mxu0 0.0
      %2093 = vmatprep.subr.mxu0 0.0
      %2094 = vmatpush1.msra.mxu0 0.0
      %2095 = vmatprep.subr.mxu0 0.0
      %2096 = vmatpush1.msra.mxu0 0.0
      %2097 = vmatprep.subr.mxu0 0.0
      %2098 = vmatpush1.msra.mxu0 0.0
      %2099 = vmatprep.subr.mxu0 0.0
      %2100 = vmatpush1.msra.mxu0 0.0
      %2101 = vmatprep.subr.mxu0 0.0
      %2102 = vmatpush1.msra.mxu0 0.0
      %2103 = vmatprep.subr.mxu0 0.0
      %2104 = vmatpush1.msra.mxu0 0.0
      %2105 = vmatprep.subr.mxu0 0.0
      %2106 = vmatpush1.msra.mxu0 0.0
      %2107 = vmatprep.subr.mxu0 0.0
      %2108 = vmatpush1.msra.mxu0 0.0
      %2109 = vmatprep.subr.mxu0 0.0
      %2110 = vmatpush1.msra.mxu0 0.0
      %2111 = vmatprep.subr.mxu0 0.0
      %2112 = vmatpush1.msra.mxu0 0.0
      %2113 = vmatprep.subr.mxu0 0.0
      %2114 = vmatpush1.msra.mxu0 0.0
      %2115 = vmatprep.subr.mxu0 0.0
      %2116 = vmatpush1.msra.mxu0 0.0
      %2117 = vmatprep.subr.mxu0 0.0
      %2118 = vmatpush1.msra.mxu0 0.0
      %2119 = vmatprep.subr.mxu0 0.0
      %2120 = vmatpush1.msra.mxu0 0.0
      %2121 = vmatprep.subr.mxu0 0.0
      %2122 = vmatpush1.msra.mxu0 0.0
      %2123 = vmatprep.subr.mxu0 0.0
      %2124 = vmatpush1.msra.mxu0 0.0
      %2125 = vmatprep.subr.mxu0 0.0
      %2126 = vmatpush1.msra.mxu0 0.0
      %2127 = vmatprep.subr.mxu0 0.0
      %2128 = vmatpush1.msra.mxu0 0.0
      %2129 = vmatprep.subr.mxu0 0.0
      %2130 = vmatpush1.msra.mxu0 0.0
      %2131 = vmatprep.subr.mxu0 0.0
      %2132 = vmatpush1.msra.mxu0 0.0
      %2133 = vmatprep.mubr.f32.mxu0 0.0
      %2134 = vmatmul.mubr.f32.gmra.mrb[0].mxu0 %v2064
      %v2135 = vpop.f32.mrb[0].mxu0
      %v2136 = vadd.f32 0.0, %v2135
      %v2137 = vpop.f32.mrb[0].mxu0
      %2138 = vdwg.mxu0
      %v2139 = vadd.f32 %v2060, %v2136
      %v2140 = vld [vmem:[%s1420] sm:$0xff]
      %2141 = vrot.lane.b32.xlu0 %v2061, 127
      %v2142 = vpop.permute.xlu0 %2141
      %v2144 = vsel %vm868, %v2140, 0
      %v2146 = vsel %vm872, %v2142, 0
      %2148 = vmatprep.subr.mxu0 0.0
      %2149 = vmatpush1.msra.mxu0 %v2146
      %2150 = vmatprep.subr.mxu0 0.0
      %2151 = vmatpush1.msra.mxu0 0.0
      %2152 = vmatprep.subr.mxu0 0.0
      %2153 = vmatpush1.msra.mxu0 0.0
      %2154 = vmatprep.subr.mxu0 0.0
      %2155 = vmatpush1.msra.mxu0 0.0
      %2156 = vmatprep.subr.mxu0 0.0
      %2157 = vmatpush1.msra.mxu0 0.0
      %2158 = vmatprep.subr.mxu0 0.0
      %2159 = vmatpush1.msra.mxu0 0.0
      %2160 = vmatprep.subr.mxu0 0.0
      %2161 = vmatpush1.msra.mxu0 0.0
      %2162 = vmatprep.subr.mxu0 0.0
      %2163 = vmatpush1.msra.mxu0 0.0
      %2164 = vmatprep.subr.mxu0 0.0
      %2165 = vmatpush1.msra.mxu0 0.0
      %2166 = vmatprep.subr.mxu0 0.0
      %2167 = vmatpush1.msra.mxu0 0.0
      %2168 = vmatprep.subr.mxu0 0.0
      %2169 = vmatpush1.msra.mxu0 0.0
      %2170 = vmatprep.subr.mxu0 0.0
      %2171 = vmatpush1.msra.mxu0 0.0
      %2172 = vmatprep.subr.mxu0 0.0
      %2173 = vmatpush1.msra.mxu0 0.0
      %2174 = vmatprep.subr.mxu0 0.0
      %2175 = vmatpush1.msra.mxu0 0.0
      %2176 = vmatprep.subr.mxu0 0.0
      %2177 = vmatpush1.msra.mxu0 0.0
      %2178 = vmatprep.subr.mxu0 0.0
      %2179 = vmatpush1.msra.mxu0 0.0
      %2180 = vmatprep.subr.mxu0 0.0
      %2181 = vmatpush1.msra.mxu0 0.0
      %2182 = vmatprep.subr.mxu0 0.0
      %2183 = vmatpush1.msra.mxu0 0.0
      %2184 = vmatprep.subr.mxu0 0.0
      %2185 = vmatpush1.msra.mxu0 0.0
      %2186 = vmatprep.subr.mxu0 0.0
      %2187 = vmatpush1.msra.mxu0 0.0
      %2188 = vmatprep.subr.mxu0 0.0
      %2189 = vmatpush1.msra.mxu0 0.0
      %2190 = vmatprep.subr.mxu0 0.0
      %2191 = vmatpush1.msra.mxu0 0.0
      %2192 = vmatprep.subr.mxu0 0.0
      %2193 = vmatpush1.msra.mxu0 0.0
      %2194 = vmatprep.subr.mxu0 0.0
      %2195 = vmatpush1.msra.mxu0 0.0
      %2196 = vmatprep.subr.mxu0 0.0
      %2197 = vmatpush1.msra.mxu0 0.0
      %2198 = vmatprep.subr.mxu0 0.0
      %2199 = vmatpush1.msra.mxu0 0.0
      %2200 = vmatprep.subr.mxu0 0.0
      %2201 = vmatpush1.msra.mxu0 0.0
      %2202 = vmatprep.subr.mxu0 0.0
      %2203 = vmatpush1.msra.mxu0 0.0
      %2204 = vmatprep.subr.mxu0 0.0
      %2205 = vmatpush1.msra.mxu0 0.0
      %2206 = vmatprep.subr.mxu0 0.0
      %2207 = vmatpush1.msra.mxu0 0.0
      %2208 = vmatprep.subr.mxu0 0.0
      %2209 = vmatpush1.msra.mxu0 0.0
      %2210 = vmatprep.subr.mxu0 0.0
      %2211 = vmatpush1.msra.mxu0 0.0
      %2212 = vmatprep.mubr.f32.mxu0 0.0
      %2213 = vmatmul.mubr.f32.gmra.mrb[0].mxu0 %v2144
      %v2214 = vpop.f32.mrb[0].mxu0
      %v2215 = vadd.f32 0.0, %v2214
      %v2216 = vpop.f32.mrb[0].mxu0
      %2217 = vdwg.mxu0
      %v2218 = vadd.f32 %v2139, %v2215
      %v2219 = vld [vmem:[%s1500] sm:$0xff]
      %2220 = vrot.lane.b32.xlu0 %v2061, 126
      %v2221 = vpop.permute.xlu0 %2220
      %v2223 = vsel %vm868, %v2219, 0
      %v2225 = vsel %vm872, %v2221, 0
      %2227 = vmatprep.subr.mxu0 0.0
      %2228 = vmatpush1.msra.mxu0 %v2225
      %2229 = vmatprep.subr.mxu0 0.0
      %2230 = vmatpush1.msra.mxu0 0.0
      %2231 = vmatprep.subr.mxu0 0.0
      %2232 = vmatpush1.msra.mxu0 0.0
      %2233 = vmatprep.subr.mxu0 0.0
      %2234 = vmatpush1.msra.mxu0 0.0
      %2235 = vmatprep.subr.mxu0 0.0
      %2236 = vmatpush1.msra.mxu0 0.0
      %2237 = vmatprep.subr.mxu0 0.0
      %2238 = vmatpush1.msra.mxu0 0.0
      %2239 = vmatprep.subr.mxu0 0.0
      %2240 = vmatpush1.msra.mxu0 0.0
      %2241 = vmatprep.subr.mxu0 0.0
      %2242 = vmatpush1.msra.mxu0 0.0
      %2243 = vmatprep.subr.mxu0 0.0
      %2244 = vmatpush1.msra.mxu0 0.0
      %2245 = vmatprep.subr.mxu0 0.0
      %2246 = vmatpush1.msra.mxu0 0.0
      %2247 = vmatprep.subr.mxu0 0.0
      %2248 = vmatpush1.msra.mxu0 0.0
      %2249 = vmatprep.subr.mxu0 0.0
      %2250 = vmatpush1.msra.mxu0 0.0
      %2251 = vmatprep.subr.mxu0 0.0
      %2252 = vmatpush1.msra.mxu0 0.0
      %2253 = vmatprep.subr.mxu0 0.0
      %2254 = vmatpush1.msra.mxu0 0.0
      %2255 = vmatprep.subr.mxu0 0.0
      %2256 = vmatpush1.msra.mxu0 0.0
      %2257 = vmatprep.subr.mxu0 0.0
      %2258 = vmatpush1.msra.mxu0 0.0
      %2259 = vmatprep.subr.mxu0 0.0
      %2260 = vmatpush1.msra.mxu0 0.0
      %2261 = vmatprep.subr.mxu0 0.0
      %2262 = vmatpush1.msra.mxu0 0.0
      %2263 = vmatprep.subr.mxu0 0.0
      %2264 = vmatpush1.msra.mxu0 0.0
      %2265 = vmatprep.subr.mxu0 0.0
      %2266 = vmatpush1.msra.mxu0 0.0
      %2267 = vmatprep.subr.mxu0 0.0
      %2268 = vmatpush1.msra.mxu0 0.0
      %2269 = vmatprep.subr.mxu0 0.0
      %2270 = vmatpush1.msra.mxu0 0.0
      %2271 = vmatprep.subr.mxu0 0.0
      %2272 = vmatpush1.msra.mxu0 0.0
      %2273 = vmatprep.subr.mxu0 0.0
      %2274 = vmatpush1.msra.mxu0 0.0
      %2275 = vmatprep.subr.mxu0 0.0
      %2276 = vmatpush1.msra.mxu0 0.0
      %2277 = vmatprep.subr.mxu0 0.0
      %2278 = vmatpush1.msra.mxu0 0.0
      %2279 = vmatprep.subr.mxu0 0.0
      %2280 = vmatpush1.msra.mxu0 0.0
      %2281 = vmatprep.subr.mxu0 0.0
      %2282 = vmatpush1.msra.mxu0 0.0
      %2283 = vmatprep.subr.mxu0 0.0
      %2284 = vmatpush1.msra.mxu0 0.0
      %2285 = vmatprep.subr.mxu0 0.0
      %2286 = vmatpush1.msra.mxu0 0.0
      %2287 = vmatprep.subr.mxu0 0.0
      %2288 = vmatpush1.msra.mxu0 0.0
      %2289 = vmatprep.subr.mxu0 0.0
      %2290 = vmatpush1.msra.mxu0 0.0
      %2291 = vmatprep.mubr.f32.mxu0 0.0
      %2292 = vmatmul.mubr.f32.gmra.mrb[0].mxu0 %v2223
      %v2293 = vpop.f32.mrb[0].mxu0
      %v2294 = vadd.f32 0.0, %v2293
      %v2295 = vpop.f32.mrb[0].mxu0
      %2296 = vdwg.mxu0
      %v2297 = vadd.f32 %v2218, %v2294
      %v2298 = vadd.f32 %v2297, %v1583
      %v2299 = vmax.f32 %v2298, 0.0
      %s2300 = scalar_lea.vmem %s858, 8
      %2301 = vst.msk [vmem:[%s2300] sm:$0xff] %vm1587, %v2299
      %v2302 = vld [vmem:[%s763] sm:$0xf]
      %v2303 = vld [vmem:[%s10] sm:$0xff]
      %v2304 = vld [vmem:[%s863] sm:$0xff]
      %2306 = vrot.lane.b32.xlu0 %v2302, 127
      %v2307 = vpop.permute.xlu0 %2306
      %v2309 = vsel %vm868, %v2304, 0
      %v2311 = vsel %vm872, %v2307, 0
      %2313 = vmatprep.subr.mxu0 0.0
      %2314 = vmatpush1.msra.mxu0 %v2311
      %2315 = vmatprep.subr.mxu0 0.0
      %2316 = vmatpush1.msra.mxu0 0.0
      %2317 = vmatprep.subr.mxu0 0.0
      %2318 = vmatpush1.msra.mxu0 0.0
      %2319 = vmatprep.subr.mxu0 0.0
      %2320 = vmatpush1.msra.mxu0 0.0
      %2321 = vmatprep.subr.mxu0 0.0
      %2322 = vmatpush1.msra.mxu0 0.0
      %2323 = vmatprep.subr.mxu0 0.0
      %2324 = vmatpush1.msra.mxu0 0.0
      %2325 = vmatprep.subr.mxu0 0.0
      %2326 = vmatpush1.msra.mxu0 0.0
      %2327 = vmatprep.subr.mxu0 0.0
      %2328 = vmatpush1.msra.mxu0 0.0
      %2329 = vmatprep.subr.mxu0 0.0
      %2330 = vmatpush1.msra.mxu0 0.0
      %2331 = vmatprep.subr.mxu0 0.0
      %2332 = vmatpush1.msra.mxu0 0.0
      %2333 = vmatprep.subr.mxu0 0.0
      %2334 = vmatpush1.msra.mxu0 0.0
      %2335 = vmatprep.subr.mxu0 0.0
      %2336 = vmatpush1.msra.mxu0 0.0
      %2337 = vmatprep.subr.mxu0 0.0
      %2338 = vmatpush1.msra.mxu0 0.0
      %2339 = vmatprep.subr.mxu0 0.0
      %2340 = vmatpush1.msra.mxu0 0.0
      %2341 = vmatprep.subr.mxu0 0.0
      %2342 = vmatpush1.msra.mxu0 0.0
      %2343 = vmatprep.subr.mxu0 0.0
      %2344 = vmatpush1.msra.mxu0 0.0
      %2345 = vmatprep.subr.mxu0 0.0
      %2346 = vmatpush1.msra.mxu0 0.0
      %2347 = vmatprep.subr.mxu0 0.0
      %2348 = vmatpush1.msra.mxu0 0.0
      %2349 = vmatprep.subr.mxu0 0.0
      %2350 = vmatpush1.msra.mxu0 0.0
      %2351 = vmatprep.subr.mxu0 0.0
      %2352 = vmatpush1.msra.mxu0 0.0
      %2353 = vmatprep.subr.mxu0 0.0
      %2354 = vmatpush1.msra.mxu0 0.0
      %2355 = vmatprep.subr.mxu0 0.0
      %2356 = vmatpush1.msra.mxu0 0.0
      %2357 = vmatprep.subr.mxu0 0.0
      %2358 = vmatpush1.msra.mxu0 0.0
      %2359 = vmatprep.subr.mxu0 0.0
      %2360 = vmatpush1.msra.mxu0 0.0
      %2361 = vmatprep.subr.mxu0 0.0
      %2362 = vmatpush1.msra.mxu0 0.0
      %2363 = vmatprep.subr.mxu0 0.0
      %2364 = vmatpush1.msra.mxu0 0.0
      %2365 = vmatprep.subr.mxu0 0.0
      %2366 = vmatpush1.msra.mxu0 0.0
      %2367 = vmatprep.subr.mxu0 0.0
      %2368 = vmatpush1.msra.mxu0 0.0
      %2369 = vmatprep.subr.mxu0 0.0
      %2370 = vmatpush1.msra.mxu0 0.0
      %2371 = vmatprep.subr.mxu0 0.0
      %2372 = vmatpush1.msra.mxu0 0.0
      %2373 = vmatprep.subr.mxu0 0.0
      %2374 = vmatpush1.msra.mxu0 0.0
      %2375 = vmatprep.subr.mxu0 0.0
      %2376 = vmatpush1.msra.mxu0 0.0
      %2377 = vmatprep.mubr.f32.mxu0 0.0
      %2378 = vmatmul.mubr.f32.gmra.mrb[0].mxu0 %v2309
      %v2379 = vpop.f32.mrb[0].mxu0
      %v2380 = vadd.f32 0.0, %v2379
      %v2381 = vpop.f32.mrb[0].mxu0
      %2382 = vdwg.mxu0
      %v2384 = vsel %vm868, %v2303, 0
      %v2386 = vsel %vm872, %v2302, 0
      %2388 = vmatprep.subr.mxu0 0.0
      %2389 = vmatpush1.msra.mxu0 %v2386
      %2390 = vmatprep.subr.mxu0 0.0
      %2391 = vmatpush1.msra.mxu0 0.0
      %2392 = vmatprep.subr.mxu0 0.0
      %2393 = vmatpush1.msra.mxu0 0.0
      %2394 = vmatprep.subr.mxu0 0.0
      %2395 = vmatpush1.msra.mxu0 0.0
      %2396 = vmatprep.subr.mxu0 0.0
      %2397 = vmatpush1.msra.mxu0 0.0
      %2398 = vmatprep.subr.mxu0 0.0
      %2399 = vmatpush1.msra.mxu0 0.0
      %2400 = vmatprep.subr.mxu0 0.0
      %2401 = vmatpush1.msra.mxu0 0.0
      %2402 = vmatprep.subr.mxu0 0.0
      %2403 = vmatpush1.msra.mxu0 0.0
      %2404 = vmatprep.subr.mxu0 0.0
      %2405 = vmatpush1.msra.mxu0 0.0
      %2406 = vmatprep.subr.mxu0 0.0
      %2407 = vmatpush1.msra.mxu0 0.0
      %2408 = vmatprep.subr.mxu0 0.0
      %2409 = vmatpush1.msra.mxu0 0.0
      %2410 = vmatprep.subr.mxu0 0.0
      %2411 = vmatpush1.msra.mxu0 0.0
      %2412 = vmatprep.subr.mxu0 0.0
      %2413 = vmatpush1.msra.mxu0 0.0
      %2414 = vmatprep.subr.mxu0 0.0
      %2415 = vmatpush1.msra.mxu0 0.0
      %2416 = vmatprep.subr.mxu0 0.0
      %2417 = vmatpush1.msra.mxu0 0.0
      %2418 = vmatprep.subr.mxu0 0.0
      %2419 = vmatpush1.msra.mxu0 0.0
      %2420 = vmatprep.subr.mxu0 0.0
      %2421 = vmatpush1.msra.mxu0 0.0
      %2422 = vmatprep.subr.mxu0 0.0
      %2423 = vmatpush1.msra.mxu0 0.0
      %2424 = vmatprep.subr.mxu0 0.0
      %2425 = vmatpush1.msra.mxu0 0.0
      %2426 = vmatprep.subr.mxu0 0.0
      %2427 = vmatpush1.msra.mxu0 0.0
      %2428 = vmatprep.subr.mxu0 0.0
      %2429 = vmatpush1.msra.mxu0 0.0
      %2430 = vmatprep.subr.mxu0 0.0
      %2431 = vmatpush1.msra.mxu0 0.0
      %2432 = vmatprep.subr.mxu0 0.0
      %2433 = vmatpush1.msra.mxu0 0.0
      %2434 = vmatprep.subr.mxu0 0.0
      %2435 = vmatpush1.msra.mxu0 0.0
      %2436 = vmatprep.subr.mxu0 0.0
      %2437 = vmatpush1.msra.mxu0 0.0
      %2438 = vmatprep.subr.mxu0 0.0
      %2439 = vmatpush1.msra.mxu0 0.0
      %2440 = vmatprep.subr.mxu0 0.0
      %2441 = vmatpush1.msra.mxu0 0.0
      %2442 = vmatprep.subr.mxu0 0.0
      %2443 = vmatpush1.msra.mxu0 0.0
      %2444 = vmatprep.subr.mxu0 0.0
      %2445 = vmatpush1.msra.mxu0 0.0
      %2446 = vmatprep.subr.mxu0 0.0
      %2447 = vmatpush1.msra.mxu0 0.0
      %2448 = vmatprep.subr.mxu0 0.0
      %2449 = vmatpush1.msra.mxu0 0.0
      %2450 = vmatprep.subr.mxu0 0.0
      %2451 = vmatpush1.msra.mxu0 0.0
      %2452 = vmatprep.mubr.f32.mxu0 0.0
      %2453 = vmatmul.mubr.f32.gmra.mrb[0].mxu0 %v2384
      %v2454 = vpop.f32.mrb[0].mxu0
      %v2455 = vadd.f32 %v2380, %v2454
      %v2456 = vpop.f32.mrb[0].mxu0
      %2457 = vdwg.mxu0
      %v2458 = vld [vmem:[%s1020] sm:$0xff]
      %2459 = vrot.lane.b32.xlu0 %v2302, 126
      %v2460 = vpop.permute.xlu0 %2459
      %v2462 = vsel %vm868, %v2458, 0
      %v2464 = vsel %vm872, %v2460, 0
      %2466 = vmatprep.subr.mxu0 0.0
      %2467 = vmatpush1.msra.mxu0 %v2464
      %2468 = vmatprep.subr.mxu0 0.0
      %2469 = vmatpush1.msra.mxu0 0.0
      %2470 = vmatprep.subr.mxu0 0.0
      %2471 = vmatpush1.msra.mxu0 0.0
      %2472 = vmatprep.subr.mxu0 0.0
      %2473 = vmatpush1.msra.mxu0 0.0
      %2474 = vmatprep.subr.mxu0 0.0
      %2475 = vmatpush1.msra.mxu0 0.0
      %2476 = vmatprep.subr.mxu0 0.0
      %2477 = vmatpush1.msra.mxu0 0.0
      %2478 = vmatprep.subr.mxu0 0.0
      %2479 = vmatpush1.msra.mxu0 0.0
      %2480 = vmatprep.subr.mxu0 0.0
      %2481 = vmatpush1.msra.mxu0 0.0
      %2482 = vmatprep.subr.mxu0 0.0
      %2483 = vmatpush1.msra.mxu0 0.0
      %2484 = vmatprep.subr.mxu0 0.0
      %2485 = vmatpush1.msra.mxu0 0.0
      %2486 = vmatprep.subr.mxu0 0.0
      %2487 = vmatpush1.msra.mxu0 0.0
      %2488 = vmatprep.subr.mxu0 0.0
      %2489 = vmatpush1.msra.mxu0 0.0
      %2490 = vmatprep.subr.mxu0 0.0
      %2491 = vmatpush1.msra.mxu0 0.0
      %2492 = vmatprep.subr.mxu0 0.0
      %2493 = vmatpush1.msra.mxu0 0.0
      %2494 = vmatprep.subr.mxu0 0.0
      %2495 = vmatpush1.msra.mxu0 0.0
      %2496 = vmatprep.subr.mxu0 0.0
      %2497 = vmatpush1.msra.mxu0 0.0
      %2498 = vmatprep.subr.mxu0 0.0
      %2499 = vmatpush1.msra.mxu0 0.0
      %2500 = vmatprep.subr.mxu0 0.0
      %2501 = vmatpush1.msra.mxu0 0.0
      %2502 = vmatprep.subr.mxu0 0.0
      %2503 = vmatpush1.msra.mxu0 0.0
      %2504 = vmatprep.subr.mxu0 0.0
      %2505 = vmatpush1.msra.mxu0 0.0
      %2506 = vmatprep.subr.mxu0 0.0
      %2507 = vmatpush1.msra.mxu0 0.0
      %2508 = vmatprep.subr.mxu0 0.0
      %2509 = vmatpush1.msra.mxu0 0.0
      %2510 = vmatprep.subr.mxu0 0.0
      %2511 = vmatpush1.msra.mxu0 0.0
      %2512 = vmatprep.subr.mxu0 0.0
      %2513 = vmatpush1.msra.mxu0 0.0
      %2514 = vmatprep.subr.mxu0 0.0
      %2515 = vmatpush1.msra.mxu0 0.0
      %2516 = vmatprep.subr.mxu0 0.0
      %2517 = vmatpush1.msra.mxu0 0.0
      %2518 = vmatprep.subr.mxu0 0.0
      %2519 = vmatpush1.msra.mxu0 0.0
      %2520 = vmatprep.subr.mxu0 0.0
      %2521 = vmatpush1.msra.mxu0 0.0
      %2522 = vmatprep.subr.mxu0 0.0
      %2523 = vmatpush1.msra.mxu0 0.0
      %2524 = vmatprep.subr.mxu0 0.0
      %2525 = vmatpush1.msra.mxu0 0.0
      %2526 = vmatprep.subr.mxu0 0.0
      %2527 = vmatpush1.msra.mxu0 0.0
      %2528 = vmatprep.subr.mxu0 0.0
      %2529 = vmatpush1.msra.mxu0 0.0
      %2530 = vmatprep.mubr.f32.mxu0 0.0
      %2531 = vmatmul.mubr.f32.gmra.mrb[0].mxu0 %v2462
      %v2532 = vpop.f32.mrb[0].mxu0
      %v2533 = vadd.f32 0.0, %v2532
      %v2534 = vpop.f32.mrb[0].mxu0
      %2535 = vdwg.mxu0
      %v2536 = vadd.f32 %v2455, %v2533
      %v2537 = vld [vmem:[%s775] sm:$0xf]
      %v2538 = vld [vmem:[%s1101] sm:$0xff]
      %v2540 = vsel %vm868, %v2538, 0
      %v2543 = vsel %vm872, %v2537, 0
      %2545 = vmatprep.subr.mxu0 0.0
      %2546 = vmatpush1.msra.mxu0 %v2543
      %2547 = vmatprep.subr.mxu0 0.0
      %2548 = vmatpush1.msra.mxu0 0.0
      %2549 = vmatprep.subr.mxu0 0.0
      %2550 = vmatpush1.msra.mxu0 0.0
      %2551 = vmatprep.subr.mxu0 0.0
      %2552 = vmatpush1.msra.mxu0 0.0
      %2553 = vmatprep.subr.mxu0 0.0
      %2554 = vmatpush1.msra.mxu0 0.0
      %2555 = vmatprep.subr.mxu0 0.0
      %2556 = vmatpush1.msra.mxu0 0.0
      %2557 = vmatprep.subr.mxu0 0.0
      %2558 = vmatpush1.msra.mxu0 0.0
      %2559 = vmatprep.subr.mxu0 0.0
      %2560 = vmatpush1.msra.mxu0 0.0
      %2561 = vmatprep.subr.mxu0 0.0
      %2562 = vmatpush1.msra.mxu0 0.0
      %2563 = vmatprep.subr.mxu0 0.0
      %2564 = vmatpush1.msra.mxu0 0.0
      %2565 = vmatprep.subr.mxu0 0.0
      %2566 = vmatpush1.msra.mxu0 0.0
      %2567 = vmatprep.subr.mxu0 0.0
      %2568 = vmatpush1.msra.mxu0 0.0
      %2569 = vmatprep.subr.mxu0 0.0
      %2570 = vmatpush1.msra.mxu0 0.0
      %2571 = vmatprep.subr.mxu0 0.0
      %2572 = vmatpush1.msra.mxu0 0.0
      %2573 = vmatprep.subr.mxu0 0.0
      %2574 = vmatpush1.msra.mxu0 0.0
      %2575 = vmatprep.subr.mxu0 0.0
      %2576 = vmatpush1.msra.mxu0 0.0
      %2577 = vmatprep.subr.mxu0 0.0
      %2578 = vmatpush1.msra.mxu0 0.0
      %2579 = vmatprep.subr.mxu0 0.0
      %2580 = vmatpush1.msra.mxu0 0.0
      %2581 = vmatprep.subr.mxu0 0.0
      %2582 = vmatpush1.msra.mxu0 0.0
      %2583 = vmatprep.subr.mxu0 0.0
      %2584 = vmatpush1.msra.mxu0 0.0
      %2585 = vmatprep.subr.mxu0 0.0
      %2586 = vmatpush1.msra.mxu0 0.0
      %2587 = vmatprep.subr.mxu0 0.0
      %2588 = vmatpush1.msra.mxu0 0.0
      %2589 = vmatprep.subr.mxu0 0.0
      %2590 = vmatpush1.msra.mxu0 0.0
      %2591 = vmatprep.subr.mxu0 0.0
      %2592 = vmatpush1.msra.mxu0 0.0
      %2593 = vmatprep.subr.mxu0 0.0
      %2594 = vmatpush1.msra.mxu0 0.0
      %2595 = vmatprep.subr.mxu0 0.0
      %2596 = vmatpush1.msra.mxu0 0.0
      %2597 = vmatprep.subr.mxu0 0.0
      %2598 = vmatpush1.msra.mxu0 0.0
      %2599 = vmatprep.subr.mxu0 0.0
      %2600 = vmatpush1.msra.mxu0 0.0
      %2601 = vmatprep.subr.mxu0 0.0
      %2602 = vmatpush1.msra.mxu0 0.0
      %2603 = vmatprep.subr.mxu0 0.0
      %2604 = vmatpush1.msra.mxu0 0.0
      %2605 = vmatprep.subr.mxu0 0.0
      %2606 = vmatpush1.msra.mxu0 0.0
      %2607 = vmatprep.subr.mxu0 0.0
      %2608 = vmatpush1.msra.mxu0 0.0
      %2609 = vmatprep.mubr.f32.mxu0 0.0
      %2610 = vmatmul.mubr.f32.gmra.mrb[0].mxu0 %v2540
      %v2611 = vpop.f32.mrb[0].mxu0
      %v2612 = vadd.f32 0.0, %v2611
      %v2613 = vpop.f32.mrb[0].mxu0
      %2614 = vdwg.mxu0
      %v2615 = vadd.f32 %v2536, %v2612
      %v2616 = vld [vmem:[%s1180] sm:$0xff]
      %2617 = vrot.lane.b32.xlu0 %v2537, 127
      %v2618 = vpop.permute.xlu0 %2617
      %v2620 = vsel %vm868, %v2616, 0
      %v2622 = vsel %vm872, %v2618, 0
      %2624 = vmatprep.subr.mxu0 0.0
      %2625 = vmatpush1.msra.mxu0 %v2622
      %2626 = vmatprep.subr.mxu0 0.0
      %2627 = vmatpush1.msra.mxu0 0.0
      %2628 = vmatprep.subr.mxu0 0.0
      %2629 = vmatpush1.msra.mxu0 0.0
      %2630 = vmatprep.subr.mxu0 0.0
      %2631 = vmatpush1.msra.mxu0 0.0
      %2632 = vmatprep.subr.mxu0 0.0
      %2633 = vmatpush1.msra.mxu0 0.0
      %2634 = vmatprep.subr.mxu0 0.0
      %2635 = vmatpush1.msra.mxu0 0.0
      %2636 = vmatprep.subr.mxu0 0.0
      %2637 = vmatpush1.msra.mxu0 0.0
      %2638 = vmatprep.subr.mxu0 0.0
      %2639 = vmatpush1.msra.mxu0 0.0
      %2640 = vmatprep.subr.mxu0 0.0
      %2641 = vmatpush1.msra.mxu0 0.0
      %2642 = vmatprep.subr.mxu0 0.0
      %2643 = vmatpush1.msra.mxu0 0.0
      %2644 = vmatprep.subr.mxu0 0.0
      %2645 = vmatpush1.msra.mxu0 0.0
      %2646 = vmatprep.subr.mxu0 0.0
      %2647 = vmatpush1.msra.mxu0 0.0
      %2648 = vmatprep.subr.mxu0 0.0
      %2649 = vmatpush1.msra.mxu0 0.0
      %2650 = vmatprep.subr.mxu0 0.0
      %2651 = vmatpush1.msra.mxu0 0.0
      %2652 = vmatprep.subr.mxu0 0.0
      %2653 = vmatpush1.msra.mxu0 0.0
      %2654 = vmatprep.subr.mxu0 0.0
      %2655 = vmatpush1.msra.mxu0 0.0
      %2656 = vmatprep.subr.mxu0 0.0
      %2657 = vmatpush1.msra.mxu0 0.0
      %2658 = vmatprep.subr.mxu0 0.0
      %2659 = vmatpush1.msra.mxu0 0.0
      %2660 = vmatprep.subr.mxu0 0.0
      %2661 = vmatpush1.msra.mxu0 0.0
      %2662 = vmatprep.subr.mxu0 0.0
      %2663 = vmatpush1.msra.mxu0 0.0
      %2664 = vmatprep.subr.mxu0 0.0
      %2665 = vmatpush1.msra.mxu0 0.0
      %2666 = vmatprep.subr.mxu0 0.0
      %2667 = vmatpush1.msra.mxu0 0.0
      %2668 = vmatprep.subr.mxu0 0.0
      %2669 = vmatpush1.msra.mxu0 0.0
      %2670 = vmatprep.subr.mxu0 0.0
      %2671 = vmatpush1.msra.mxu0 0.0
      %2672 = vmatprep.subr.mxu0 0.0
      %2673 = vmatpush1.msra.mxu0 0.0
      %2674 = vmatprep.subr.mxu0 0.0
      %2675 = vmatpush1.msra.mxu0 0.0
      %2676 = vmatprep.subr.mxu0 0.0
      %2677 = vmatpush1.msra.mxu0 0.0
      %2678 = vmatprep.subr.mxu0 0.0
      %2679 = vmatpush1.msra.mxu0 0.0
      %2680 = vmatprep.subr.mxu0 0.0
      %2681 = vmatpush1.msra.mxu0 0.0
      %2682 = vmatprep.subr.mxu0 0.0
      %2683 = vmatpush1.msra.mxu0 0.0
      %2684 = vmatprep.subr.mxu0 0.0
      %2685 = vmatpush1.msra.mxu0 0.0
      %2686 = vmatprep.subr.mxu0 0.0
      %2687 = vmatpush1.msra.mxu0 0.0
      %2688 = vmatprep.mubr.f32.mxu0 0.0
      %2689 = vmatmul.mubr.f32.gmra.mrb[0].mxu0 %v2620
      %v2690 = vpop.f32.mrb[0].mxu0
      %v2691 = vadd.f32 0.0, %v2690
      %v2692 = vpop.f32.mrb[0].mxu0
      %2693 = vdwg.mxu0
      %v2694 = vadd.f32 %v2615, %v2691
      %v2695 = vld [vmem:[%s1260] sm:$0xff]
      %2696 = vrot.lane.b32.xlu0 %v2537, 126
      %v2697 = vpop.permute.xlu0 %2696
      %v2699 = vsel %vm868, %v2695, 0
      %v2701 = vsel %vm872, %v2697, 0
      %2703 = vmatprep.subr.mxu0 0.0
      %2704 = vmatpush1.msra.mxu0 %v2701
      %2705 = vmatprep.subr.mxu0 0.0
      %2706 = vmatpush1.msra.mxu0 0.0
      %2707 = vmatprep.subr.mxu0 0.0
      %2708 = vmatpush1.msra.mxu0 0.0
      %2709 = vmatprep.subr.mxu0 0.0
      %2710 = vmatpush1.msra.mxu0 0.0
      %2711 = vmatprep.subr.mxu0 0.0
      %2712 = vmatpush1.msra.mxu0 0.0
      %2713 = vmatprep.subr.mxu0 0.0
      %2714 = vmatpush1.msra.mxu0 0.0
      %2715 = vmatprep.subr.mxu0 0.0
      %2716 = vmatpush1.msra.mxu0 0.0
      %2717 = vmatprep.subr.mxu0 0.0
      %2718 = vmatpush1.msra.mxu0 0.0
      %2719 = vmatprep.subr.mxu0 0.0
      %2720 = vmatpush1.msra.mxu0 0.0
      %2721 = vmatprep.subr.mxu0 0.0
      %2722 = vmatpush1.msra.mxu0 0.0
      %2723 = vmatprep.subr.mxu0 0.0
      %2724 = vmatpush1.msra.mxu0 0.0
      %2725 = vmatprep.subr.mxu0 0.0
      %2726 = vmatpush1.msra.mxu0 0.0
      %2727 = vmatprep.subr.mxu0 0.0
      %2728 = vmatpush1.msra.mxu0 0.0
      %2729 = vmatprep.subr.mxu0 0.0
      %2730 = vmatpush1.msra.mxu0 0.0
      %2731 = vmatprep.subr.mxu0 0.0
      %2732 = vmatpush1.msra.mxu0 0.0
      %2733 = vmatprep.subr.mxu0 0.0
      %2734 = vmatpush1.msra.mxu0 0.0
      %2735 = vmatprep.subr.mxu0 0.0
      %2736 = vmatpush1.msra.mxu0 0.0
      %2737 = vmatprep.subr.mxu0 0.0
      %2738 = vmatpush1.msra.mxu0 0.0
      %2739 = vmatprep.subr.mxu0 0.0
      %2740 = vmatpush1.msra.mxu0 0.0
      %2741 = vmatprep.subr.mxu0 0.0
      %2742 = vmatpush1.msra.mxu0 0.0
      %2743 = vmatprep.subr.mxu0 0.0
      %2744 = vmatpush1.msra.mxu0 0.0
      %2745 = vmatprep.subr.mxu0 0.0
      %2746 = vmatpush1.msra.mxu0 0.0
      %2747 = vmatprep.subr.mxu0 0.0
      %2748 = vmatpush1.msra.mxu0 0.0
      %2749 = vmatprep.subr.mxu0 0.0
      %2750 = vmatpush1.msra.mxu0 0.0
      %2751 = vmatprep.subr.mxu0 0.0
      %2752 = vmatpush1.msra.mxu0 0.0
      %2753 = vmatprep.subr.mxu0 0.0
      %2754 = vmatpush1.msra.mxu0 0.0
      %2755 = vmatprep.subr.mxu0 0.0
      %2756 = vmatpush1.msra.mxu0 0.0
      %2757 = vmatprep.subr.mxu0 0.0
      %2758 = vmatpush1.msra.mxu0 0.0
      %2759 = vmatprep.subr.mxu0 0.0
      %2760 = vmatpush1.msra.mxu0 0.0
      %2761 = vmatprep.subr.mxu0 0.0
      %2762 = vmatpush1.msra.mxu0 0.0
      %2763 = vmatprep.subr.mxu0 0.0
      %2764 = vmatpush1.msra.mxu0 0.0
      %2765 = vmatprep.subr.mxu0 0.0
      %2766 = vmatpush1.msra.mxu0 0.0
      %2767 = vmatprep.mubr.f32.mxu0 0.0
      %2768 = vmatmul.mubr.f32.gmra.mrb[0].mxu0 %v2699
      %v2769 = vpop.f32.mrb[0].mxu0
      %v2770 = vadd.f32 0.0, %v2769
      %v2771 = vpop.f32.mrb[0].mxu0
      %2772 = vdwg.mxu0
      %v2773 = vadd.f32 %v2694, %v2770
      %v2774 = vld [vmem:[%s787] sm:$0xf]
      %v2775 = vld [vmem:[%s1341] sm:$0xff]
      %v2777 = vsel %vm868, %v2775, 0
      %v2780 = vsel %vm872, %v2774, 0
      %2782 = vmatprep.subr.mxu0 0.0
      %2783 = vmatpush1.msra.mxu0 %v2780
      %2784 = vmatprep.subr.mxu0 0.0
      %2785 = vmatpush1.msra.mxu0 0.0
      %2786 = vmatprep.subr.mxu0 0.0
      %2787 = vmatpush1.msra.mxu0 0.0
      %2788 = vmatprep.subr.mxu0 0.0
      %2789 = vmatpush1.msra.mxu0 0.0
      %2790 = vmatprep.subr.mxu0 0.0
      %2791 = vmatpush1.msra.mxu0 0.0
      %2792 = vmatprep.subr.mxu0 0.0
      %2793 = vmatpush1.msra.mxu0 0.0
      %2794 = vmatprep.subr.mxu0 0.0
      %2795 = vmatpush1.msra.mxu0 0.0
      %2796 = vmatprep.subr.mxu0 0.0
      %2797 = vmatpush1.msra.mxu0 0.0
      %2798 = vmatprep.subr.mxu0 0.0
      %2799 = vmatpush1.msra.mxu0 0.0
      %2800 = vmatprep.subr.mxu0 0.0
      %2801 = vmatpush1.msra.mxu0 0.0
      %2802 = vmatprep.subr.mxu0 0.0
      %2803 = vmatpush1.msra.mxu0 0.0
      %2804 = vmatprep.subr.mxu0 0.0
      %2805 = vmatpush1.msra.mxu0 0.0
      %2806 = vmatprep.subr.mxu0 0.0
      %2807 = vmatpush1.msra.mxu0 0.0
      %2808 = vmatprep.subr.mxu0 0.0
      %2809 = vmatpush1.msra.mxu0 0.0
      %2810 = vmatprep.subr.mxu0 0.0
      %2811 = vmatpush1.msra.mxu0 0.0
      %2812 = vmatprep.subr.mxu0 0.0
      %2813 = vmatpush1.msra.mxu0 0.0
      %2814 = vmatprep.subr.mxu0 0.0
      %2815 = vmatpush1.msra.mxu0 0.0
      %2816 = vmatprep.subr.mxu0 0.0
      %2817 = vmatpush1.msra.mxu0 0.0
      %2818 = vmatprep.subr.mxu0 0.0
      %2819 = vmatpush1.msra.mxu0 0.0
      %2820 = vmatprep.subr.mxu0 0.0
      %2821 = vmatpush1.msra.mxu0 0.0
      %2822 = vmatprep.subr.mxu0 0.0
      %2823 = vmatpush1.msra.mxu0 0.0
      %2824 = vmatprep.subr.mxu0 0.0
      %2825 = vmatpush1.msra.mxu0 0.0
      %2826 = vmatprep.subr.mxu0 0.0
      %2827 = vmatpush1.msra.mxu0 0.0
      %2828 = vmatprep.subr.mxu0 0.0
      %2829 = vmatpush1.msra.mxu0 0.0
      %2830 = vmatprep.subr.mxu0 0.0
      %2831 = vmatpush1.msra.mxu0 0.0
      %2832 = vmatprep.subr.mxu0 0.0
      %2833 = vmatpush1.msra.mxu0 0.0
      %2834 = vmatprep.subr.mxu0 0.0
      %2835 = vmatpush1.msra.mxu0 0.0
      %2836 = vmatprep.subr.mxu0 0.0
      %2837 = vmatpush1.msra.mxu0 0.0
      %2838 = vmatprep.subr.mxu0 0.0
      %2839 = vmatpush1.msra.mxu0 0.0
      %2840 = vmatprep.subr.mxu0 0.0
      %2841 = vmatpush1.msra.mxu0 0.0
      %2842 = vmatprep.subr.mxu0 0.0
      %2843 = vmatpush1.msra.mxu0 0.0
      %2844 = vmatprep.subr.mxu0 0.0
      %2845 = vmatpush1.msra.mxu0 0.0
      %2846 = vmatprep.mubr.f32.mxu0 0.0
      %2847 = vmatmul.mubr.f32.gmra.mrb[0].mxu0 %v2777
      %v2848 = vpop.f32.mrb[0].mxu0
      %v2849 = vadd.f32 0.0, %v2848
      %v2850 = vpop.f32.mrb[0].mxu0
      %2851 = vdwg.mxu0
      %v2852 = vadd.f32 %v2773, %v2849
      %v2853 = vld [vmem:[%s1420] sm:$0xff]
      %2854 = vrot.lane.b32.xlu0 %v2774, 127
      %v2855 = vpop.permute.xlu0 %2854
      %v2857 = vsel %vm868, %v2853, 0
      %v2859 = vsel %vm872, %v2855, 0
      %2861 = vmatprep.subr.mxu0 0.0
      %2862 = vmatpush1.msra.mxu0 %v2859
      %2863 = vmatprep.subr.mxu0 0.0
      %2864 = vmatpush1.msra.mxu0 0.0
      %2865 = vmatprep.subr.mxu0 0.0
      %2866 = vmatpush1.msra.mxu0 0.0
      %2867 = vmatprep.subr.mxu0 0.0
      %2868 = vmatpush1.msra.mxu0 0.0
      %2869 = vmatprep.subr.mxu0 0.0
      %2870 = vmatpush1.msra.mxu0 0.0
      %2871 = vmatprep.subr.mxu0 0.0
      %2872 = vmatpush1.msra.mxu0 0.0
      %2873 = vmatprep.subr.mxu0 0.0
      %2874 = vmatpush1.msra.mxu0 0.0
      %2875 = vmatprep.subr.mxu0 0.0
      %2876 = vmatpush1.msra.mxu0 0.0
      %2877 = vmatprep.subr.mxu0 0.0
      %2878 = vmatpush1.msra.mxu0 0.0
      %2879 = vmatprep.subr.mxu0 0.0
      %2880 = vmatpush1.msra.mxu0 0.0
      %2881 = vmatprep.subr.mxu0 0.0
      %2882 = vmatpush1.msra.mxu0 0.0
      %2883 = vmatprep.subr.mxu0 0.0
      %2884 = vmatpush1.msra.mxu0 0.0
      %2885 = vmatprep.subr.mxu0 0.0
      %2886 = vmatpush1.msra.mxu0 0.0
      %2887 = vmatprep.subr.mxu0 0.0
      %2888 = vmatpush1.msra.mxu0 0.0
      %2889 = vmatprep.subr.mxu0 0.0
      %2890 = vmatpush1.msra.mxu0 0.0
      %2891 = vmatprep.subr.mxu0 0.0
      %2892 = vmatpush1.msra.mxu0 0.0
      %2893 = vmatprep.subr.mxu0 0.0
      %2894 = vmatpush1.msra.mxu0 0.0
      %2895 = vmatprep.subr.mxu0 0.0
      %2896 = vmatpush1.msra.mxu0 0.0
      %2897 = vmatprep.subr.mxu0 0.0
      %2898 = vmatpush1.msra.mxu0 0.0
      %2899 = vmatprep.subr.mxu0 0.0
      %2900 = vmatpush1.msra.mxu0 0.0
      %2901 = vmatprep.subr.mxu0 0.0
      %2902 = vmatpush1.msra.mxu0 0.0
      %2903 = vmatprep.subr.mxu0 0.0
      %2904 = vmatpush1.msra.mxu0 0.0
      %2905 = vmatprep.subr.mxu0 0.0
      %2906 = vmatpush1.msra.mxu0 0.0
      %2907 = vmatprep.subr.mxu0 0.0
      %2908 = vmatpush1.msra.mxu0 0.0
      %2909 = vmatprep.subr.mxu0 0.0
      %2910 = vmatpush1.msra.mxu0 0.0
      %2911 = vmatprep.subr.mxu0 0.0
      %2912 = vmatpush1.msra.mxu0 0.0
      %2913 = vmatprep.subr.mxu0 0.0
      %2914 = vmatpush1.msra.mxu0 0.0
      %2915 = vmatprep.subr.mxu0 0.0
      %2916 = vmatpush1.msra.mxu0 0.0
      %2917 = vmatprep.subr.mxu0 0.0
      %2918 = vmatpush1.msra.mxu0 0.0
      %2919 = vmatprep.subr.mxu0 0.0
      %2920 = vmatpush1.msra.mxu0 0.0
      %2921 = vmatprep.subr.mxu0 0.0
      %2922 = vmatpush1.msra.mxu0 0.0
      %2923 = vmatprep.subr.mxu0 0.0
      %2924 = vmatpush1.msra.mxu0 0.0
      %2925 = vmatprep.mubr.f32.mxu0 0.0
      %2926 = vmatmul.mubr.f32.gmra.mrb[0].mxu0 %v2857
      %v2927 = vpop.f32.mrb[0].mxu0
      %v2928 = vadd.f32 0.0, %v2927
      %v2929 = vpop.f32.mrb[0].mxu0
      %2930 = vdwg.mxu0
      %v2931 = vadd.f32 %v2852, %v2928
      %v2932 = vld [vmem:[%s1500] sm:$0xff]
      %2933 = vrot.lane.b32.xlu0 %v2774, 126
      %v2934 = vpop.permute.xlu0 %2933
      %v2936 = vsel %vm868, %v2932, 0
      %v2938 = vsel %vm872, %v2934, 0
      %2940 = vmatprep.subr.mxu0 0.0
      %2941 = vmatpush1.msra.mxu0 %v2938
      %2942 = vmatprep.subr.mxu0 0.0
      %2943 = vmatpush1.msra.mxu0 0.0
      %2944 = vmatprep.subr.mxu0 0.0
      %2945 = vmatpush1.msra.mxu0 0.0
      %2946 = vmatprep.subr.mxu0 0.0
      %2947 = vmatpush1.msra.mxu0 0.0
      %2948 = vmatprep.subr.mxu0 0.0
      %2949 = vmatpush1.msra.mxu0 0.0
      %2950 = vmatprep.subr.mxu0 0.0
      %2951 = vmatpush1.msra.mxu0 0.0
      %2952 = vmatprep.subr.mxu0 0.0
      %2953 = vmatpush1.msra.mxu0 0.0
      %2954 = vmatprep.subr.mxu0 0.0
      %2955 = vmatpush1.msra.mxu0 0.0
      %2956 = vmatprep.subr.mxu0 0.0
      %2957 = vmatpush1.msra.mxu0 0.0
      %2958 = vmatprep.subr.mxu0 0.0
      %2959 = vmatpush1.msra.mxu0 0.0
      %2960 = vmatprep.subr.mxu0 0.0
      %2961 = vmatpush1.msra.mxu0 0.0
      %2962 = vmatprep.subr.mxu0 0.0
      %2963 = vmatpush1.msra.mxu0 0.0
      %2964 = vmatprep.subr.mxu0 0.0
      %2965 = vmatpush1.msra.mxu0 0.0
      %2966 = vmatprep.subr.mxu0 0.0
      %2967 = vmatpush1.msra.mxu0 0.0
      %2968 = vmatprep.subr.mxu0 0.0
      %2969 = vmatpush1.msra.mxu0 0.0
      %2970 = vmatprep.subr.mxu0 0.0
      %2971 = vmatpush1.msra.mxu0 0.0
      %2972 = vmatprep.subr.mxu0 0.0
      %2973 = vmatpush1.msra.mxu0 0.0
      %2974 = vmatprep.subr.mxu0 0.0
      %2975 = vmatpush1.msra.mxu0 0.0
      %2976 = vmatprep.subr.mxu0 0.0
      %2977 = vmatpush1.msra.mxu0 0.0
      %2978 = vmatprep.subr.mxu0 0.0
      %2979 = vmatpush1.msra.mxu0 0.0
      %2980 = vmatprep.subr.mxu0 0.0
      %2981 = vmatpush1.msra.mxu0 0.0
      %2982 = vmatprep.subr.mxu0 0.0
      %2983 = vmatpush1.msra.mxu0 0.0
      %2984 = vmatprep.subr.mxu0 0.0
      %2985 = vmatpush1.msra.mxu0 0.0
      %2986 = vmatprep.subr.mxu0 0.0
      %2987 = vmatpush1.msra.mxu0 0.0
      %2988 = vmatprep.subr.mxu0 0.0
      %2989 = vmatpush1.msra.mxu0 0.0
      %2990 = vmatprep.subr.mxu0 0.0
      %2991 = vmatpush1.msra.mxu0 0.0
      %2992 = vmatprep.subr.mxu0 0.0
      %2993 = vmatpush1.msra.mxu0 0.0
      %2994 = vmatprep.subr.mxu0 0.0
      %2995 = vmatpush1.msra.mxu0 0.0
      %2996 = vmatprep.subr.mxu0 0.0
      %2997 = vmatpush1.msra.mxu0 0.0
      %2998 = vmatprep.subr.mxu0 0.0
      %2999 = vmatpush1.msra.mxu0 0.0
      %3000 = vmatprep.subr.mxu0 0.0
      %3001 = vmatpush1.msra.mxu0 0.0
      %3002 = vmatprep.subr.mxu0 0.0
      %3003 = vmatpush1.msra.mxu0 0.0
      %3004 = vmatprep.mubr.f32.mxu0 0.0
      %3005 = vmatmul.mubr.f32.gmra.mrb[0].mxu0 %v2936
      %v3006 = vpop.f32.mrb[0].mxu0
      %v3007 = vadd.f32 0.0, %v3006
      %v3008 = vpop.f32.mrb[0].mxu0
      %3009 = vdwg.mxu0
      %v3010 = vadd.f32 %v2931, %v3007
      %v3011 = vadd.f32 %v3010, %v1583
      %v3012 = vmax.f32 %v3011, 0.0
      %s3013 = scalar_lea.vmem %s858, 16
      %3014 = vst.msk [vmem:[%s3013] sm:$0xff] %vm1587, %v3012
      %v3015 = vld [vmem:[%s775] sm:$0xf]
      %v3016 = vld [vmem:[%s10] sm:$0xff]
      %v3017 = vld [vmem:[%s863] sm:$0xff]
      %3019 = vrot.lane.b32.xlu0 %v3015, 127
      %v3020 = vpop.permute.xlu0 %3019
      %v3022 = vsel %vm868, %v3017, 0
      %v3024 = vsel %vm872, %v3020, 0
      %3026 = vmatprep.subr.mxu0 0.0
      %3027 = vmatpush1.msra.mxu0 %v3024
      %3028 = vmatprep.subr.mxu0 0.0
      %3029 = vmatpush1.msra.mxu0 0.0
      %3030 = vmatprep.subr.mxu0 0.0
      %3031 = vmatpush1.msra.mxu0 0.0
      %3032 = vmatprep.subr.mxu0 0.0
      %3033 = vmatpush1.msra.mxu0 0.0
      %3034 = vmatprep.subr.mxu0 0.0
      %3035 = vmatpush1.msra.mxu0 0.0
      %3036 = vmatprep.subr.mxu0 0.0
      %3037 = vmatpush1.msra.mxu0 0.0
      %3038 = vmatprep.subr.mxu0 0.0
      %3039 = vmatpush1.msra.mxu0 0.0
      %3040 = vmatprep.subr.mxu0 0.0
      %3041 = vmatpush1.msra.mxu0 0.0
      %3042 = vmatprep.subr.mxu0 0.0
      %3043 = vmatpush1.msra.mxu0 0.0
      %3044 = vmatprep.subr.mxu0 0.0
      %3045 = vmatpush1.msra.mxu0 0.0
      %3046 = vmatprep.subr.mxu0 0.0
      %3047 = vmatpush1.msra.mxu0 0.0
      %3048 = vmatprep.subr.mxu0 0.0
      %3049 = vmatpush1.msra.mxu0 0.0
      %3050 = vmatprep.subr.mxu0 0.0
      %3051 = vmatpush1.msra.mxu0 0.0
      %3052 = vmatprep.subr.mxu0 0.0
      %3053 = vmatpush1.msra.mxu0 0.0
      %3054 = vmatprep.subr.mxu0 0.0
      %3055 = vmatpush1.msra.mxu0 0.0
      %3056 = vmatprep.subr.mxu0 0.0
      %3057 = vmatpush1.msra.mxu0 0.0
      %3058 = vmatprep.subr.mxu0 0.0
      %3059 = vmatpush1.msra.mxu0 0.0
      %3060 = vmatprep.subr.mxu0 0.0
      %3061 = vmatpush1.msra.mxu0 0.0
      %3062 = vmatprep.subr.mxu0 0.0
      %3063 = vmatpush1.msra.mxu0 0.0
      %3064 = vmatprep.subr.mxu0 0.0
      %3065 = vmatpush1.msra.mxu0 0.0
      %3066 = vmatprep.subr.mxu0 0.0
      %3067 = vmatpush1.msra.mxu0 0.0
      %3068 = vmatprep.subr.mxu0 0.0
      %3069 = vmatpush1.msra.mxu0 0.0
      %3070 = vmatprep.subr.mxu0 0.0
      %3071 = vmatpush1.msra.mxu0 0.0
      %3072 = vmatprep.subr.mxu0 0.0
      %3073 = vmatpush1.msra.mxu0 0.0
      %3074 = vmatprep.subr.mxu0 0.0
      %3075 = vmatpush1.msra.mxu0 0.0
      %3076 = vmatprep.subr.mxu0 0.0
      %3077 = vmatpush1.msra.mxu0 0.0
      %3078 = vmatprep.subr.mxu0 0.0
      %3079 = vmatpush1.msra.mxu0 0.0
      %3080 = vmatprep.subr.mxu0 0.0
      %3081 = vmatpush1.msra.mxu0 0.0
      %3082 = vmatprep.subr.mxu0 0.0
      %3083 = vmatpush1.msra.mxu0 0.0
      %3084 = vmatprep.subr.mxu0 0.0
      %3085 = vmatpush1.msra.mxu0 0.0
      %3086 = vmatprep.subr.mxu0 0.0
      %3087 = vmatpush1.msra.mxu0 0.0
      %3088 = vmatprep.subr.mxu0 0.0
      %3089 = vmatpush1.msra.mxu0 0.0
      %3090 = vmatprep.mubr.f32.mxu0 0.0
      %3091 = vmatmul.mubr.f32.gmra.mrb[0].mxu0 %v3022
      %v3092 = vpop.f32.mrb[0].mxu0
      %v3093 = vadd.f32 0.0, %v3092
      %v3094 = vpop.f32.mrb[0].mxu0
      %3095 = vdwg.mxu0
      %v3097 = vsel %vm868, %v3016, 0
      %v3099 = vsel %vm872, %v3015, 0
      %3101 = vmatprep.subr.mxu0 0.0
      %3102 = vmatpush1.msra.mxu0 %v3099
      %3103 = vmatprep.subr.mxu0 0.0
      %3104 = vmatpush1.msra.mxu0 0.0
      %3105 = vmatprep.subr.mxu0 0.0
      %3106 = vmatpush1.msra.mxu0 0.0
      %3107 = vmatprep.subr.mxu0 0.0
      %3108 = vmatpush1.msra.mxu0 0.0
      %3109 = vmatprep.subr.mxu0 0.0
      %3110 = vmatpush1.msra.mxu0 0.0
      %3111 = vmatprep.subr.mxu0 0.0
      %3112 = vmatpush1.msra.mxu0 0.0
      %3113 = vmatprep.subr.mxu0 0.0
      %3114 = vmatpush1.msra.mxu0 0.0
      %3115 = vmatprep.subr.mxu0 0.0
      %3116 = vmatpush1.msra.mxu0 0.0
      %3117 = vmatprep.subr.mxu0 0.0
      %3118 = vmatpush1.msra.mxu0 0.0
      %3119 = vmatprep.subr.mxu0 0.0
      %3120 = vmatpush1.msra.mxu0 0.0
      %3121 = vmatprep.subr.mxu0 0.0
      %3122 = vmatpush1.msra.mxu0 0.0
      %3123 = vmatprep.subr.mxu0 0.0
      %3124 = vmatpush1.msra.mxu0 0.0
      %3125 = vmatprep.subr.mxu0 0.0
      %3126 = vmatpush1.msra.mxu0 0.0
      %3127 = vmatprep.subr.mxu0 0.0
      %3128 = vmatpush1.msra.mxu0 0.0
      %3129 = vmatprep.subr.mxu0 0.0
      %3130 = vmatpush1.msra.mxu0 0.0
      %3131 = vmatprep.subr.mxu0 0.0
      %3132 = vmatpush1.msra.mxu0 0.0
      %3133 = vmatprep.subr.mxu0 0.0
      %3134 = vmatpush1.msra.mxu0 0.0
      %3135 = vmatprep.subr.mxu0 0.0
      %3136 = vmatpush1.msra.mxu0 0.0
      %3137 = vmatprep.subr.mxu0 0.0
      %3138 = vmatpush1.msra.mxu0 0.0
      %3139 = vmatprep.subr.mxu0 0.0
      %3140 = vmatpush1.msra.mxu0 0.0
      %3141 = vmatprep.subr.mxu0 0.0
      %3142 = vmatpush1.msra.mxu0 0.0
      %3143 = vmatprep.subr.mxu0 0.0
      %3144 = vmatpush1.msra.mxu0 0.0
      %3145 = vmatprep.subr.mxu0 0.0
      %3146 = vmatpush1.msra.mxu0 0.0
      %3147 = vmatprep.subr.mxu0 0.0
      %3148 = vmatpush1.msra.mxu0 0.0
      %3149 = vmatprep.subr.mxu0 0.0
      %3150 = vmatpush1.msra.mxu0 0.0
      %3151 = vmatprep.subr.mxu0 0.0
      %3152 = vmatpush1.msra.mxu0 0.0
      %3153 = vmatprep.subr.mxu0 0.0
      %3154 = vmatpush1.msra.mxu0 0.0
      %3155 = vmatprep.subr.mxu0 0.0
      %3156 = vmatpush1.msra.mxu0 0.0
      %3157 = vmatprep.subr.mxu0 0.0
      %3158 = vmatpush1.msra.mxu0 0.0
      %3159 = vmatprep.subr.mxu0 0.0
      %3160 = vmatpush1.msra.mxu0 0.0
      %3161 = vmatprep.subr.mxu0 0.0
      %3162 = vmatpush1.msra.mxu0 0.0
      %3163 = vmatprep.subr.mxu0 0.0
      %3164 = vmatpush1.msra.mxu0 0.0
      %3165 = vmatprep.mubr.f32.mxu0 0.0
      %3166 = vmatmul.mubr.f32.gmra.mrb[0].mxu0 %v3097
      %v3167 = vpop.f32.mrb[0].mxu0
      %v3168 = vadd.f32 %v3093, %v3167
      %v3169 = vpop.f32.mrb[0].mxu0
      %3170 = vdwg.mxu0
      %v3171 = vld [vmem:[%s1020] sm:$0xff]
      %3172 = vrot.lane.b32.xlu0 %v3015, 126
      %v3173 = vpop.permute.xlu0 %3172
      %v3175 = vsel %vm868, %v3171, 0
      %v3177 = vsel %vm872, %v3173, 0
      %3179 = vmatprep.subr.mxu0 0.0
      %3180 = vmatpush1.msra.mxu0 %v3177
      %3181 = vmatprep.subr.mxu0 0.0
      %3182 = vmatpush1.msra.mxu0 0.0
      %3183 = vmatprep.subr.mxu0 0.0
      %3184 = vmatpush1.msra.mxu0 0.0
      %3185 = vmatprep.subr.mxu0 0.0
      %3186 = vmatpush1.msra.mxu0 0.0
      %3187 = vmatprep.subr.mxu0 0.0
      %3188 = vmatpush1.msra.mxu0 0.0
      %3189 = vmatprep.subr.mxu0 0.0
      %3190 = vmatpush1.msra.mxu0 0.0
      %3191 = vmatprep.subr.mxu0 0.0
      %3192 = vmatpush1.msra.mxu0 0.0
      %3193 = vmatprep.subr.mxu0 0.0
      %3194 = vmatpush1.msra.mxu0 0.0
      %3195 = vmatprep.subr.mxu0 0.0
      %3196 = vmatpush1.msra.mxu0 0.0
      %3197 = vmatprep.subr.mxu0 0.0
      %3198 = vmatpush1.msra.mxu0 0.0
      %3199 = vmatprep.subr.mxu0 0.0
      %3200 = vmatpush1.msra.mxu0 0.0
      %3201 = vmatprep.subr.mxu0 0.0
      %3202 = vmatpush1.msra.mxu0 0.0
      %3203 = vmatprep.subr.mxu0 0.0
      %3204 = vmatpush1.msra.mxu0 0.0
      %3205 = vmatprep.subr.mxu0 0.0
      %3206 = vmatpush1.msra.mxu0 0.0
      %3207 = vmatprep.subr.mxu0 0.0
      %3208 = vmatpush1.msra.mxu0 0.0
      %3209 = vmatprep.subr.mxu0 0.0
      %3210 = vmatpush1.msra.mxu0 0.0
      %3211 = vmatprep.subr.mxu0 0.0
      %3212 = vmatpush1.msra.mxu0 0.0
      %3213 = vmatprep.subr.mxu0 0.0
      %3214 = vmatpush1.msra.mxu0 0.0
      %3215 = vmatprep.subr.mxu0 0.0
      %3216 = vmatpush1.msra.mxu0 0.0
      %3217 = vmatprep.subr.mxu0 0.0
      %3218 = vmatpush1.msra.mxu0 0.0
      %3219 = vmatprep.subr.mxu0 0.0
      %3220 = vmatpush1.msra.mxu0 0.0
      %3221 = vmatprep.subr.mxu0 0.0
      %3222 = vmatpush1.msra.mxu0 0.0
      %3223 = vmatprep.subr.mxu0 0.0
      %3224 = vmatpush1.msra.mxu0 0.0
      %3225 = vmatprep.subr.mxu0 0.0
      %3226 = vmatpush1.msra.mxu0 0.0
      %3227 = vmatprep.subr.mxu0 0.0
      %3228 = vmatpush1.msra.mxu0 0.0
      %3229 = vmatprep.subr.mxu0 0.0
      %3230 = vmatpush1.msra.mxu0 0.0
      %3231 = vmatprep.subr.mxu0 0.0
      %3232 = vmatpush1.msra.mxu0 0.0
      %3233 = vmatprep.subr.mxu0 0.0
      %3234 = vmatpush1.msra.mxu0 0.0
      %3235 = vmatprep.subr.mxu0 0.0
      %3236 = vmatpush1.msra.mxu0 0.0
      %3237 = vmatprep.subr.mxu0 0.0
      %3238 = vmatpush1.msra.mxu0 0.0
      %3239 = vmatprep.subr.mxu0 0.0
      %3240 = vmatpush1.msra.mxu0 0.0
      %3241 = vmatprep.subr.mxu0 0.0
      %3242 = vmatpush1.msra.mxu0 0.0
      %3243 = vmatprep.mubr.f32.mxu0 0.0
      %3244 = vmatmul.mubr.f32.gmra.mrb[0].mxu0 %v3175
      %v3245 = vpop.f32.mrb[0].mxu0
      %v3246 = vadd.f32 0.0, %v3245
      %v3247 = vpop.f32.mrb[0].mxu0
      %3248 = vdwg.mxu0
      %v3249 = vadd.f32 %v3168, %v3246
      %v3250 = vld [vmem:[%s787] sm:$0xf]
      %v3251 = vld [vmem:[%s1101] sm:$0xff]
      %v3253 = vsel %vm868, %v3251, 0
      %v3256 = vsel %vm872, %v3250, 0
      %3258 = vmatprep.subr.mxu0 0.0
      %3259 = vmatpush1.msra.mxu0 %v3256
      %3260 = vmatprep.subr.mxu0 0.0
      %3261 = vmatpush1.msra.mxu0 0.0
      %3262 = vmatprep.subr.mxu0 0.0
      %3263 = vmatpush1.msra.mxu0 0.0
      %3264 = vmatprep.subr.mxu0 0.0
      %3265 = vmatpush1.msra.mxu0 0.0
      %3266 = vmatprep.subr.mxu0 0.0
      %3267 = vmatpush1.msra.mxu0 0.0
      %3268 = vmatprep.subr.mxu0 0.0
      %3269 = vmatpush1.msra.mxu0 0.0
      %3270 = vmatprep.subr.mxu0 0.0
      %3271 = vmatpush1.msra.mxu0 0.0
      %3272 = vmatprep.subr.mxu0 0.0
      %3273 = vmatpush1.msra.mxu0 0.0
      %3274 = vmatprep.subr.mxu0 0.0
      %3275 = vmatpush1.msra.mxu0 0.0
      %3276 = vmatprep.subr.mxu0 0.0
      %3277 = vmatpush1.msra.mxu0 0.0
      %3278 = vmatprep.subr.mxu0 0.0
      %3279 = vmatpush1.msra.mxu0 0.0
      %3280 = vmatprep.subr.mxu0 0.0
      %3281 = vmatpush1.msra.mxu0 0.0
      %3282 = vmatprep.subr.mxu0 0.0
      %3283 = vmatpush1.msra.mxu0 0.0
      %3284 = vmatprep.subr.mxu0 0.0
      %3285 = vmatpush1.msra.mxu0 0.0
      %3286 = vmatprep.subr.mxu0 0.0
      %3287 = vmatpush1.msra.mxu0 0.0
      %3288 = vmatprep.subr.mxu0 0.0
      %3289 = vmatpush1.msra.mxu0 0.0
      %3290 = vmatprep.subr.mxu0 0.0
      %3291 = vmatpush1.msra.mxu0 0.0
      %3292 = vmatprep.subr.mxu0 0.0
      %3293 = vmatpush1.msra.mxu0 0.0
      %3294 = vmatprep.subr.mxu0 0.0
      %3295 = vmatpush1.msra.mxu0 0.0
      %3296 = vmatprep.subr.mxu0 0.0
      %3297 = vmatpush1.msra.mxu0 0.0
      %3298 = vmatprep.subr.mxu0 0.0
      %3299 = vmatpush1.msra.mxu0 0.0
      %3300 = vmatprep.subr.mxu0 0.0
      %3301 = vmatpush1.msra.mxu0 0.0
      %3302 = vmatprep.subr.mxu0 0.0
      %3303 = vmatpush1.msra.mxu0 0.0
      %3304 = vmatprep.subr.mxu0 0.0
      %3305 = vmatpush1.msra.mxu0 0.0
      %3306 = vmatprep.subr.mxu0 0.0
      %3307 = vmatpush1.msra.mxu0 0.0
      %3308 = vmatprep.subr.mxu0 0.0
      %3309 = vmatpush1.msra.mxu0 0.0
      %3310 = vmatprep.subr.mxu0 0.0
      %3311 = vmatpush1.msra.mxu0 0.0
      %3312 = vmatprep.subr.mxu0 0.0
      %3313 = vmatpush1.msra.mxu0 0.0
      %3314 = vmatprep.subr.mxu0 0.0
      %3315 = vmatpush1.msra.mxu0 0.0
      %3316 = vmatprep.subr.mxu0 0.0
      %3317 = vmatpush1.msra.mxu0 0.0
      %3318 = vmatprep.subr.mxu0 0.0
      %3319 = vmatpush1.msra.mxu0 0.0
      %3320 = vmatprep.subr.mxu0 0.0
      %3321 = vmatpush1.msra.mxu0 0.0
      %3322 = vmatprep.mubr.f32.mxu0 0.0
      %3323 = vmatmul.mubr.f32.gmra.mrb[0].mxu0 %v3253
      %v3324 = vpop.f32.mrb[0].mxu0
      %v3325 = vadd.f32 0.0, %v3324
      %v3326 = vpop.f32.mrb[0].mxu0
      %3327 = vdwg.mxu0
      %v3328 = vadd.f32 %v3249, %v3325
      %v3329 = vld [vmem:[%s1180] sm:$0xff]
      %3330 = vrot.lane.b32.xlu0 %v3250, 127
      %v3331 = vpop.permute.xlu0 %3330
      %v3333 = vsel %vm868, %v3329, 0
      %v3335 = vsel %vm872, %v3331, 0
      %3337 = vmatprep.subr.mxu0 0.0
      %3338 = vmatpush1.msra.mxu0 %v3335
      %3339 = vmatprep.subr.mxu0 0.0
      %3340 = vmatpush1.msra.mxu0 0.0
      %3341 = vmatprep.subr.mxu0 0.0
      %3342 = vmatpush1.msra.mxu0 0.0
      %3343 = vmatprep.subr.mxu0 0.0
      %3344 = vmatpush1.msra.mxu0 0.0
      %3345 = vmatprep.subr.mxu0 0.0
      %3346 = vmatpush1.msra.mxu0 0.0
      %3347 = vmatprep.subr.mxu0 0.0
      %3348 = vmatpush1.msra.mxu0 0.0
      %3349 = vmatprep.subr.mxu0 0.0
      %3350 = vmatpush1.msra.mxu0 0.0
      %3351 = vmatprep.subr.mxu0 0.0
      %3352 = vmatpush1.msra.mxu0 0.0
      %3353 = vmatprep.subr.mxu0 0.0
      %3354 = vmatpush1.msra.mxu0 0.0
      %3355 = vmatprep.subr.mxu0 0.0
      %3356 = vmatpush1.msra.mxu0 0.0
      %3357 = vmatprep.subr.mxu0 0.0
      %3358 = vmatpush1.msra.mxu0 0.0
      %3359 = vmatprep.subr.mxu0 0.0
      %3360 = vmatpush1.msra.mxu0 0.0
      %3361 = vmatprep.subr.mxu0 0.0
      %3362 = vmatpush1.msra.mxu0 0.0
      %3363 = vmatprep.subr.mxu0 0.0
      %3364 = vmatpush1.msra.mxu0 0.0
      %3365 = vmatprep.subr.mxu0 0.0
      %3366 = vmatpush1.msra.mxu0 0.0
      %3367 = vmatprep.subr.mxu0 0.0
      %3368 = vmatpush1.msra.mxu0 0.0
      %3369 = vmatprep.subr.mxu0 0.0
      %3370 = vmatpush1.msra.mxu0 0.0
      %3371 = vmatprep.subr.mxu0 0.0
      %3372 = vmatpush1.msra.mxu0 0.0
      %3373 = vmatprep.subr.mxu0 0.0
      %3374 = vmatpush1.msra.mxu0 0.0
      %3375 = vmatprep.subr.mxu0 0.0
      %3376 = vmatpush1.msra.mxu0 0.0
      %3377 = vmatprep.subr.mxu0 0.0
      %3378 = vmatpush1.msra.mxu0 0.0
      %3379 = vmatprep.subr.mxu0 0.0
      %3380 = vmatpush1.msra.mxu0 0.0
      %3381 = vmatprep.subr.mxu0 0.0
      %3382 = vmatpush1.msra.mxu0 0.0
      %3383 = vmatprep.subr.mxu0 0.0
      %3384 = vmatpush1.msra.mxu0 0.0
      %3385 = vmatprep.subr.mxu0 0.0
      %3386 = vmatpush1.msra.mxu0 0.0
      %3387 = vmatprep.subr.mxu0 0.0
      %3388 = vmatpush1.msra.mxu0 0.0
      %3389 = vmatprep.subr.mxu0 0.0
      %3390 = vmatpush1.msra.mxu0 0.0
      %3391 = vmatprep.subr.mxu0 0.0
      %3392 = vmatpush1.msra.mxu0 0.0
      %3393 = vmatprep.subr.mxu0 0.0
      %3394 = vmatpush1.msra.mxu0 0.0
      %3395 = vmatprep.subr.mxu0 0.0
      %3396 = vmatpush1.msra.mxu0 0.0
      %3397 = vmatprep.subr.mxu0 0.0
      %3398 = vmatpush1.msra.mxu0 0.0
      %3399 = vmatprep.subr.mxu0 0.0
      %3400 = vmatpush1.msra.mxu0 0.0
      %3401 = vmatprep.mubr.f32.mxu0 0.0
      %3402 = vmatmul.mubr.f32.gmra.mrb[0].mxu0 %v3333
      %v3403 = vpop.f32.mrb[0].mxu0
      %v3404 = vadd.f32 0.0, %v3403
      %v3405 = vpop.f32.mrb[0].mxu0
      %3406 = vdwg.mxu0
      %v3407 = vadd.f32 %v3328, %v3404
      %v3408 = vld [vmem:[%s1260] sm:$0xff]
      %3409 = vrot.lane.b32.xlu0 %v3250, 126
      %v3410 = vpop.permute.xlu0 %3409
      %v3412 = vsel %vm868, %v3408, 0
      %v3414 = vsel %vm872, %v3410, 0
      %3416 = vmatprep.subr.mxu0 0.0
      %3417 = vmatpush1.msra.mxu0 %v3414
      %3418 = vmatprep.subr.mxu0 0.0
      %3419 = vmatpush1.msra.mxu0 0.0
      %3420 = vmatprep.subr.mxu0 0.0
      %3421 = vmatpush1.msra.mxu0 0.0
      %3422 = vmatprep.subr.mxu0 0.0
      %3423 = vmatpush1.msra.mxu0 0.0
      %3424 = vmatprep.subr.mxu0 0.0
      %3425 = vmatpush1.msra.mxu0 0.0
      %3426 = vmatprep.subr.mxu0 0.0
      %3427 = vmatpush1.msra.mxu0 0.0
      %3428 = vmatprep.subr.mxu0 0.0
      %3429 = vmatpush1.msra.mxu0 0.0
      %3430 = vmatprep.subr.mxu0 0.0
      %3431 = vmatpush1.msra.mxu0 0.0
      %3432 = vmatprep.subr.mxu0 0.0
      %3433 = vmatpush1.msra.mxu0 0.0
      %3434 = vmatprep.subr.mxu0 0.0
      %3435 = vmatpush1.msra.mxu0 0.0
      %3436 = vmatprep.subr.mxu0 0.0
      %3437 = vmatpush1.msra.mxu0 0.0
      %3438 = vmatprep.subr.mxu0 0.0
      %3439 = vmatpush1.msra.mxu0 0.0
      %3440 = vmatprep.subr.mxu0 0.0
      %3441 = vmatpush1.msra.mxu0 0.0
      %3442 = vmatprep.subr.mxu0 0.0
      %3443 = vmatpush1.msra.mxu0 0.0
      %3444 = vmatprep.subr.mxu0 0.0
      %3445 = vmatpush1.msra.mxu0 0.0
      %3446 = vmatprep.subr.mxu0 0.0
      %3447 = vmatpush1.msra.mxu0 0.0
      %3448 = vmatprep.subr.mxu0 0.0
      %3449 = vmatpush1.msra.mxu0 0.0
      %3450 = vmatprep.subr.mxu0 0.0
      %3451 = vmatpush1.msra.mxu0 0.0
      %3452 = vmatprep.subr.mxu0 0.0
      %3453 = vmatpush1.msra.mxu0 0.0
      %3454 = vmatprep.subr.mxu0 0.0
      %3455 = vmatpush1.msra.mxu0 0.0
      %3456 = vmatprep.subr.mxu0 0.0
      %3457 = vmatpush1.msra.mxu0 0.0
      %3458 = vmatprep.subr.mxu0 0.0
      %3459 = vmatpush1.msra.mxu0 0.0
      %3460 = vmatprep.subr.mxu0 0.0
      %3461 = vmatpush1.msra.mxu0 0.0
      %3462 = vmatprep.subr.mxu0 0.0
      %3463 = vmatpush1.msra.mxu0 0.0
      %3464 = vmatprep.subr.mxu0 0.0
      %3465 = vmatpush1.msra.mxu0 0.0
      %3466 = vmatprep.subr.mxu0 0.0
      %3467 = vmatpush1.msra.mxu0 0.0
      %3468 = vmatprep.subr.mxu0 0.0
      %3469 = vmatpush1.msra.mxu0 0.0
      %3470 = vmatprep.subr.mxu0 0.0
      %3471 = vmatpush1.msra.mxu0 0.0
      %3472 = vmatprep.subr.mxu0 0.0
      %3473 = vmatpush1.msra.mxu0 0.0
      %3474 = vmatprep.subr.mxu0 0.0
      %3475 = vmatpush1.msra.mxu0 0.0
      %3476 = vmatprep.subr.mxu0 0.0
      %3477 = vmatpush1.msra.mxu0 0.0
      %3478 = vmatprep.subr.mxu0 0.0
      %3479 = vmatpush1.msra.mxu0 0.0
      %3480 = vmatprep.mubr.f32.mxu0 0.0
      %3481 = vmatmul.mubr.f32.gmra.mrb[0].mxu0 %v3412
      %v3482 = vpop.f32.mrb[0].mxu0
      %v3483 = vadd.f32 0.0, %v3482
      %v3484 = vpop.f32.mrb[0].mxu0
      %3485 = vdwg.mxu0
      %v3486 = vadd.f32 %v3407, %v3483
      %v3487 = vld [vmem:[%s799] sm:$0xf]
      %v3488 = vld [vmem:[%s1341] sm:$0xff]
      %v3490 = vsel %vm868, %v3488, 0
      %v3493 = vsel %vm872, %v3487, 0
      %3495 = vmatprep.subr.mxu0 0.0
      %3496 = vmatpush1.msra.mxu0 %v3493
      %3497 = vmatprep.subr.mxu0 0.0
      %3498 = vmatpush1.msra.mxu0 0.0
      %3499 = vmatprep.subr.mxu0 0.0
      %3500 = vmatpush1.msra.mxu0 0.0
      %3501 = vmatprep.subr.mxu0 0.0
      %3502 = vmatpush1.msra.mxu0 0.0
      %3503 = vmatprep.subr.mxu0 0.0
      %3504 = vmatpush1.msra.mxu0 0.0
      %3505 = vmatprep.subr.mxu0 0.0
      %3506 = vmatpush1.msra.mxu0 0.0
      %3507 = vmatprep.subr.mxu0 0.0
      %3508 = vmatpush1.msra.mxu0 0.0
      %3509 = vmatprep.subr.mxu0 0.0
      %3510 = vmatpush1.msra.mxu0 0.0
      %3511 = vmatprep.subr.mxu0 0.0
      %3512 = vmatpush1.msra.mxu0 0.0
      %3513 = vmatprep.subr.mxu0 0.0
      %3514 = vmatpush1.msra.mxu0 0.0
      %3515 = vmatprep.subr.mxu0 0.0
      %3516 = vmatpush1.msra.mxu0 0.0
      %3517 = vmatprep.subr.mxu0 0.0
      %3518 = vmatpush1.msra.mxu0 0.0
      %3519 = vmatprep.subr.mxu0 0.0
      %3520 = vmatpush1.msra.mxu0 0.0
      %3521 = vmatprep.subr.mxu0 0.0
      %3522 = vmatpush1.msra.mxu0 0.0
      %3523 = vmatprep.subr.mxu0 0.0
      %3524 = vmatpush1.msra.mxu0 0.0
      %3525 = vmatprep.subr.mxu0 0.0
      %3526 = vmatpush1.msra.mxu0 0.0
      %3527 = vmatprep.subr.mxu0 0.0
      %3528 = vmatpush1.msra.mxu0 0.0
      %3529 = vmatprep.subr.mxu0 0.0
      %3530 = vmatpush1.msra.mxu0 0.0
      %3531 = vmatprep.subr.mxu0 0.0
      %3532 = vmatpush1.msra.mxu0 0.0
      %3533 = vmatprep.subr.mxu0 0.0
      %3534 = vmatpush1.msra.mxu0 0.0
      %3535 = vmatprep.subr.mxu0 0.0
      %3536 = vmatpush1.msra.mxu0 0.0
      %3537 = vmatprep.subr.mxu0 0.0
      %3538 = vmatpush1.msra.mxu0 0.0
      %3539 = vmatprep.subr.mxu0 0.0
      %3540 = vmatpush1.msra.mxu0 0.0
      %3541 = vmatprep.subr.mxu0 0.0
      %3542 = vmatpush1.msra.mxu0 0.0
      %3543 = vmatprep.subr.mxu0 0.0
      %3544 = vmatpush1.msra.mxu0 0.0
      %3545 = vmatprep.subr.mxu0 0.0
      %3546 = vmatpush1.msra.mxu0 0.0
      %3547 = vmatprep.subr.mxu0 0.0
      %3548 = vmatpush1.msra.mxu0 0.0
      %3549 = vmatprep.subr.mxu0 0.0
      %3550 = vmatpush1.msra.mxu0 0.0
      %3551 = vmatprep.subr.mxu0 0.0
      %3552 = vmatpush1.msra.mxu0 0.0
      %3553 = vmatprep.subr.mxu0 0.0
      %3554 = vmatpush1.msra.mxu0 0.0
      %3555 = vmatprep.subr.mxu0 0.0
      %3556 = vmatpush1.msra.mxu0 0.0
      %3557 = vmatprep.subr.mxu0 0.0
      %3558 = vmatpush1.msra.mxu0 0.0
      %3559 = vmatprep.mubr.f32.mxu0 0.0
      %3560 = vmatmul.mubr.f32.gmra.mrb[0].mxu0 %v3490
      %v3561 = vpop.f32.mrb[0].mxu0
      %v3562 = vadd.f32 0.0, %v3561
      %v3563 = vpop.f32.mrb[0].mxu0
      %3564 = vdwg.mxu0
      %v3565 = vadd.f32 %v3486, %v3562
      %v3566 = vld [vmem:[%s1420] sm:$0xff]
      %3567 = vrot.lane.b32.xlu0 %v3487, 127
      %v3568 = vpop.permute.xlu0 %3567
      %v3570 = vsel %vm868, %v3566, 0
      %v3572 = vsel %vm872, %v3568, 0
      %3574 = vmatprep.subr.mxu0 0.0
      %3575 = vmatpush1.msra.mxu0 %v3572
      %3576 = vmatprep.subr.mxu0 0.0
      %3577 = vmatpush1.msra.mxu0 0.0
      %3578 = vmatprep.subr.mxu0 0.0
      %3579 = vmatpush1.msra.mxu0 0.0
      %3580 = vmatprep.subr.mxu0 0.0
      %3581 = vmatpush1.msra.mxu0 0.0
      %3582 = vmatprep.subr.mxu0 0.0
      %3583 = vmatpush1.msra.mxu0 0.0
      %3584 = vmatprep.subr.mxu0 0.0
      %3585 = vmatpush1.msra.mxu0 0.0
      %3586 = vmatprep.subr.mxu0 0.0
      %3587 = vmatpush1.msra.mxu0 0.0
      %3588 = vmatprep.subr.mxu0 0.0
      %3589 = vmatpush1.msra.mxu0 0.0
      %3590 = vmatprep.subr.mxu0 0.0
      %3591 = vmatpush1.msra.mxu0 0.0
      %3592 = vmatprep.subr.mxu0 0.0
      %3593 = vmatpush1.msra.mxu0 0.0
      %3594 = vmatprep.subr.mxu0 0.0
      %3595 = vmatpush1.msra.mxu0 0.0
      %3596 = vmatprep.subr.mxu0 0.0
      %3597 = vmatpush1.msra.mxu0 0.0
      %3598 = vmatprep.subr.mxu0 0.0
      %3599 = vmatpush1.msra.mxu0 0.0
      %3600 = vmatprep.subr.mxu0 0.0
      %3601 = vmatpush1.msra.mxu0 0.0
      %3602 = vmatprep.subr.mxu0 0.0
      %3603 = vmatpush1.msra.mxu0 0.0
      %3604 = vmatprep.subr.mxu0 0.0
      %3605 = vmatpush1.msra.mxu0 0.0
      %3606 = vmatprep.subr.mxu0 0.0
      %3607 = vmatpush1.msra.mxu0 0.0
      %3608 = vmatprep.subr.mxu0 0.0
      %3609 = vmatpush1.msra.mxu0 0.0
      %3610 = vmatprep.subr.mxu0 0.0
      %3611 = vmatpush1.msra.mxu0 0.0
      %3612 = vmatprep.subr.mxu0 0.0
      %3613 = vmatpush1.msra.mxu0 0.0
      %3614 = vmatprep.subr.mxu0 0.0
      %3615 = vmatpush1.msra.mxu0 0.0
      %3616 = vmatprep.subr.mxu0 0.0
      %3617 = vmatpush1.msra.mxu0 0.0
      %3618 = vmatprep.subr.mxu0 0.0
      %3619 = vmatpush1.msra.mxu0 0.0
      %3620 = vmatprep.subr.mxu0 0.0
      %3621 = vmatpush1.msra.mxu0 0.0
      %3622 = vmatprep.subr.mxu0 0.0
      %3623 = vmatpush1.msra.mxu0 0.0
      %3624 = vmatprep.subr.mxu0 0.0
      %3625 = vmatpush1.msra.mxu0 0.0
      %3626 = vmatprep.subr.mxu0 0.0
      %3627 = vmatpush1.msra.mxu0 0.0
      %3628 = vmatprep.subr.mxu0 0.0
      %3629 = vmatpush1.msra.mxu0 0.0
      %3630 = vmatprep.subr.mxu0 0.0
      %3631 = vmatpush1.msra.mxu0 0.0
      %3632 = vmatprep.subr.mxu0 0.0
      %3633 = vmatpush1.msra.mxu0 0.0
      %3634 = vmatprep.subr.mxu0 0.0
      %3635 = vmatpush1.msra.mxu0 0.0
      %3636 = vmatprep.subr.mxu0 0.0
      %3637 = vmatpush1.msra.mxu0 0.0
      %3638 = vmatprep.mubr.f32.mxu0 0.0
      %3639 = vmatmul.mubr.f32.gmra.mrb[0].mxu0 %v3570
      %v3640 = vpop.f32.mrb[0].mxu0
      %v3641 = vadd.f32 0.0, %v3640
      %v3642 = vpop.f32.mrb[0].mxu0
      %3643 = vdwg.mxu0
      %v3644 = vadd.f32 %v3565, %v3641
      %v3645 = vld [vmem:[%s1500] sm:$0xff]
      %3646 = vrot.lane.b32.xlu0 %v3487, 126
      %v3647 = vpop.permute.xlu0 %3646
      %v3649 = vsel %vm868, %v3645, 0
      %v3651 = vsel %vm872, %v3647, 0
      %3653 = vmatprep.subr.mxu0 0.0
      %3654 = vmatpush1.msra.mxu0 %v3651
      %3655 = vmatprep.subr.mxu0 0.0
      %3656 = vmatpush1.msra.mxu0 0.0
      %3657 = vmatprep.subr.mxu0 0.0
      %3658 = vmatpush1.msra.mxu0 0.0
      %3659 = vmatprep.subr.mxu0 0.0
      %3660 = vmatpush1.msra.mxu0 0.0
      %3661 = vmatprep.subr.mxu0 0.0
      %3662 = vmatpush1.msra.mxu0 0.0
      %3663 = vmatprep.subr.mxu0 0.0
      %3664 = vmatpush1.msra.mxu0 0.0
      %3665 = vmatprep.subr.mxu0 0.0
      %3666 = vmatpush1.msra.mxu0 0.0
      %3667 = vmatprep.subr.mxu0 0.0
      %3668 = vmatpush1.msra.mxu0 0.0
      %3669 = vmatprep.subr.mxu0 0.0
      %3670 = vmatpush1.msra.mxu0 0.0
      %3671 = vmatprep.subr.mxu0 0.0
      %3672 = vmatpush1.msra.mxu0 0.0
      %3673 = vmatprep.subr.mxu0 0.0
      %3674 = vmatpush1.msra.mxu0 0.0
      %3675 = vmatprep.subr.mxu0 0.0
      %3676 = vmatpush1.msra.mxu0 0.0
      %3677 = vmatprep.subr.mxu0 0.0
      %3678 = vmatpush1.msra.mxu0 0.0
      %3679 = vmatprep.subr.mxu0 0.0
      %3680 = vmatpush1.msra.mxu0 0.0
      %3681 = vmatprep.subr.mxu0 0.0
      %3682 = vmatpush1.msra.mxu0 0.0
      %3683 = vmatprep.subr.mxu0 0.0
      %3684 = vmatpush1.msra.mxu0 0.0
      %3685 = vmatprep.subr.mxu0 0.0
      %3686 = vmatpush1.msra.mxu0 0.0
      %3687 = vmatprep.subr.mxu0 0.0
      %3688 = vmatpush1.msra.mxu0 0.0
      %3689 = vmatprep.subr.mxu0 0.0
      %3690 = vmatpush1.msra.mxu0 0.0
      %3691 = vmatprep.subr.mxu0 0.0
      %3692 = vmatpush1.msra.mxu0 0.0
      %3693 = vmatprep.subr.mxu0 0.0
      %3694 = vmatpush1.msra.mxu0 0.0
      %3695 = vmatprep.subr.mxu0 0.0
      %3696 = vmatpush1.msra.mxu0 0.0
      %3697 = vmatprep.subr.mxu0 0.0
      %3698 = vmatpush1.msra.mxu0 0.0
      %3699 = vmatprep.subr.mxu0 0.0
      %3700 = vmatpush1.msra.mxu0 0.0
      %3701 = vmatprep.subr.mxu0 0.0
      %3702 = vmatpush1.msra.mxu0 0.0
      %3703 = vmatprep.subr.mxu0 0.0
      %3704 = vmatpush1.msra.mxu0 0.0
      %3705 = vmatprep.subr.mxu0 0.0
      %3706 = vmatpush1.msra.mxu0 0.0
      %3707 = vmatprep.subr.mxu0 0.0
      %3708 = vmatpush1.msra.mxu0 0.0
      %3709 = vmatprep.subr.mxu0 0.0
      %3710 = vmatpush1.msra.mxu0 0.0
      %3711 = vmatprep.subr.mxu0 0.0
      %3712 = vmatpush1.msra.mxu0 0.0
      %3713 = vmatprep.subr.mxu0 0.0
      %3714 = vmatpush1.msra.mxu0 0.0
      %3715 = vmatprep.subr.mxu0 0.0
      %3716 = vmatpush1.msra.mxu0 0.0
      %3717 = vmatprep.mubr.f32.mxu0 0.0
      %3718 = vmatmul.mubr.f32.gmra.mrb[0].mxu0 %v3649
      %v3719 = vpop.f32.mrb[0].mxu0
      %v3720 = vadd.f32 0.0, %v3719
      %v3721 = vpop.f32.mrb[0].mxu0
      %3722 = vdwg.mxu0
      %v3723 = vadd.f32 %v3644, %v3720
      %v3724 = vadd.f32 %v3723, %v1583
      %v3725 = vmax.f32 %v3724, 0.0
      %s3726 = scalar_lea.vmem %s858, 24
      %3727 = vst.msk [vmem:[%s3726] sm:$0xff] %vm1587, %v3725
      %v3728 = vld [vmem:[%s787] sm:$0xf]
      %v3729 = vld [vmem:[%s10] sm:$0xff]
      %v3730 = vld [vmem:[%s863] sm:$0xff]
      %3732 = vrot.lane.b32.xlu0 %v3728, 127
      %v3733 = vpop.permute.xlu0 %3732
      %v3735 = vsel %vm868, %v3730, 0
      %v3737 = vsel %vm872, %v3733, 0
      %3739 = vmatprep.subr.mxu0 0.0
      %3740 = vmatpush1.msra.mxu0 %v3737
      %3741 = vmatprep.subr.mxu0 0.0
      %3742 = vmatpush1.msra.mxu0 0.0
      %3743 = vmatprep.subr.mxu0 0.0
      %3744 = vmatpush1.msra.mxu0 0.0
      %3745 = vmatprep.subr.mxu0 0.0
      %3746 = vmatpush1.msra.mxu0 0.0
      %3747 = vmatprep.subr.mxu0 0.0
      %3748 = vmatpush1.msra.mxu0 0.0
      %3749 = vmatprep.subr.mxu0 0.0
      %3750 = vmatpush1.msra.mxu0 0.0
      %3751 = vmatprep.subr.mxu0 0.0
      %3752 = vmatpush1.msra.mxu0 0.0
      %3753 = vmatprep.subr.mxu0 0.0
      %3754 = vmatpush1.msra.mxu0 0.0
      %3755 = vmatprep.subr.mxu0 0.0
      %3756 = vmatpush1.msra.mxu0 0.0
      %3757 = vmatprep.subr.mxu0 0.0
      %3758 = vmatpush1.msra.mxu0 0.0
      %3759 = vmatprep.subr.mxu0 0.0
      %3760 = vmatpush1.msra.mxu0 0.0
      %3761 = vmatprep.subr.mxu0 0.0
      %3762 = vmatpush1.msra.mxu0 0.0
      %3763 = vmatprep.subr.mxu0 0.0
      %3764 = vmatpush1.msra.mxu0 0.0
      %3765 = vmatprep.subr.mxu0 0.0
      %3766 = vmatpush1.msra.mxu0 0.0
      %3767 = vmatprep.subr.mxu0 0.0
      %3768 = vmatpush1.msra.mxu0 0.0
      %3769 = vmatprep.subr.mxu0 0.0
      %3770 = vmatpush1.msra.mxu0 0.0
      %3771 = vmatprep.subr.mxu0 0.0
      %3772 = vmatpush1.msra.mxu0 0.0
      %3773 = vmatprep.subr.mxu0 0.0
      %3774 = vmatpush1.msra.mxu0 0.0
      %3775 = vmatprep.subr.mxu0 0.0
      %3776 = vmatpush1.msra.mxu0 0.0
      %3777 = vmatprep.subr.mxu0 0.0
      %3778 = vmatpush1.msra.mxu0 0.0
      %3779 = vmatprep.subr.mxu0 0.0
      %3780 = vmatpush1.msra.mxu0 0.0
      %3781 = vmatprep.subr.mxu0 0.0
      %3782 = vmatpush1.msra.mxu0 0.0
      %3783 = vmatprep.subr.mxu0 0.0
      %3784 = vmatpush1.msra.mxu0 0.0
      %3785 = vmatprep.subr.mxu0 0.0
      %3786 = vmatpush1.msra.mxu0 0.0
      %3787 = vmatprep.subr.mxu0 0.0
      %3788 = vmatpush1.msra.mxu0 0.0
      %3789 = vmatprep.subr.mxu0 0.0
      %3790 = vmatpush1.msra.mxu0 0.0
      %3791 = vmatprep.subr.mxu0 0.0
      %3792 = vmatpush1.msra.mxu0 0.0
      %3793 = vmatprep.subr.mxu0 0.0
      %3794 = vmatpush1.msra.mxu0 0.0
      %3795 = vmatprep.subr.mxu0 0.0
      %3796 = vmatpush1.msra.mxu0 0.0
      %3797 = vmatprep.subr.mxu0 0.0
      %3798 = vmatpush1.msra.mxu0 0.0
      %3799 = vmatprep.subr.mxu0 0.0
      %3800 = vmatpush1.msra.mxu0 0.0
      %3801 = vmatprep.subr.mxu0 0.0
      %3802 = vmatpush1.msra.mxu0 0.0
      %3803 = vmatprep.mubr.f32.mxu0 0.0
      %3804 = vmatmul.mubr.f32.gmra.mrb[0].mxu0 %v3735
      %v3805 = vpop.f32.mrb[0].mxu0
      %v3806 = vadd.f32 0.0, %v3805
      %v3807 = vpop.f32.mrb[0].mxu0
      %3808 = vdwg.mxu0
      %v3810 = vsel %vm868, %v3729, 0
      %v3812 = vsel %vm872, %v3728, 0
      %3814 = vmatprep.subr.mxu0 0.0
      %3815 = vmatpush1.msra.mxu0 %v3812
      %3816 = vmatprep.subr.mxu0 0.0
      %3817 = vmatpush1.msra.mxu0 0.0
      %3818 = vmatprep.subr.mxu0 0.0
      %3819 = vmatpush1.msra.mxu0 0.0
      %3820 = vmatprep.subr.mxu0 0.0
      %3821 = vmatpush1.msra.mxu0 0.0
      %3822 = vmatprep.subr.mxu0 0.0
      %3823 = vmatpush1.msra.mxu0 0.0
      %3824 = vmatprep.subr.mxu0 0.0
      %3825 = vmatpush1.msra.mxu0 0.0
      %3826 = vmatprep.subr.mxu0 0.0
      %3827 = vmatpush1.msra.mxu0 0.0
      %3828 = vmatprep.subr.mxu0 0.0
      %3829 = vmatpush1.msra.mxu0 0.0
      %3830 = vmatprep.subr.mxu0 0.0
      %3831 = vmatpush1.msra.mxu0 0.0
      %3832 = vmatprep.subr.mxu0 0.0
      %3833 = vmatpush1.msra.mxu0 0.0
      %3834 = vmatprep.subr.mxu0 0.0
      %3835 = vmatpush1.msra.mxu0 0.0
      %3836 = vmatprep.subr.mxu0 0.0
      %3837 = vmatpush1.msra.mxu0 0.0
      %3838 = vmatprep.subr.mxu0 0.0
      %3839 = vmatpush1.msra.mxu0 0.0
      %3840 = vmatprep.subr.mxu0 0.0
      %3841 = vmatpush1.msra.mxu0 0.0
      %3842 = vmatprep.subr.mxu0 0.0
      %3843 = vmatpush1.msra.mxu0 0.0
      %3844 = vmatprep.subr.mxu0 0.0
      %3845 = vmatpush1.msra.mxu0 0.0
      %3846 = vmatprep.subr.mxu0 0.0
      %3847 = vmatpush1.msra.mxu0 0.0
      %3848 = vmatprep.subr.mxu0 0.0
      %3849 = vmatpush1.msra.mxu0 0.0
      %3850 = vmatprep.subr.mxu0 0.0
      %3851 = vmatpush1.msra.mxu0 0.0
      %3852 = vmatprep.subr.mxu0 0.0
      %3853 = vmatpush1.msra.mxu0 0.0
      %3854 = vmatprep.subr.mxu0 0.0
      %3855 = vmatpush1.msra.mxu0 0.0
      %3856 = vmatprep.subr.mxu0 0.0
      %3857 = vmatpush1.msra.mxu0 0.0
      %3858 = vmatprep.subr.mxu0 0.0
      %3859 = vmatpush1.msra.mxu0 0.0
      %3860 = vmatprep.subr.mxu0 0.0
      %3861 = vmatpush1.msra.mxu0 0.0
      %3862 = vmatprep.subr.mxu0 0.0
      %3863 = vmatpush1.msra.mxu0 0.0
      %3864 = vmatprep.subr.mxu0 0.0
      %3865 = vmatpush1.msra.mxu0 0.0
      %3866 = vmatprep.subr.mxu0 0.0
      %3867 = vmatpush1.msra.mxu0 0.0
      %3868 = vmatprep.subr.mxu0 0.0
      %3869 = vmatpush1.msra.mxu0 0.0
      %3870 = vmatprep.subr.mxu0 0.0
      %3871 = vmatpush1.msra.mxu0 0.0
      %3872 = vmatprep.subr.mxu0 0.0
      %3873 = vmatpush1.msra.mxu0 0.0
      %3874 = vmatprep.subr.mxu0 0.0
      %3875 = vmatpush1.msra.mxu0 0.0
      %3876 = vmatprep.subr.mxu0 0.0
      %3877 = vmatpush1.msra.mxu0 0.0
      %3878 = vmatprep.mubr.f32.mxu0 0.0
      %3879 = vmatmul.mubr.f32.gmra.mrb[0].mxu0 %v3810
      %v3880 = vpop.f32.mrb[0].mxu0
      %v3881 = vadd.f32 %v3806, %v3880
      %v3882 = vpop.f32.mrb[0].mxu0
      %3883 = vdwg.mxu0
      %v3884 = vld [vmem:[%s1020] sm:$0xff]
      %3885 = vrot.lane.b32.xlu0 %v3728, 126
      %v3886 = vpop.permute.xlu0 %3885
      %v3888 = vsel %vm868, %v3884, 0
      %v3890 = vsel %vm872, %v3886, 0
      %3892 = vmatprep.subr.mxu0 0.0
      %3893 = vmatpush1.msra.mxu0 %v3890
      %3894 = vmatprep.subr.mxu0 0.0
      %3895 = vmatpush1.msra.mxu0 0.0
      %3896 = vmatprep.subr.mxu0 0.0
      %3897 = vmatpush1.msra.mxu0 0.0
      %3898 = vmatprep.subr.mxu0 0.0
      %3899 = vmatpush1.msra.mxu0 0.0
      %3900 = vmatprep.subr.mxu0 0.0
      %3901 = vmatpush1.msra.mxu0 0.0
      %3902 = vmatprep.subr.mxu0 0.0
      %3903 = vmatpush1.msra.mxu0 0.0
      %3904 = vmatprep.subr.mxu0 0.0
      %3905 = vmatpush1.msra.mxu0 0.0
      %3906 = vmatprep.subr.mxu0 0.0
      %3907 = vmatpush1.msra.mxu0 0.0
      %3908 = vmatprep.subr.mxu0 0.0
      %3909 = vmatpush1.msra.mxu0 0.0
      %3910 = vmatprep.subr.mxu0 0.0
      %3911 = vmatpush1.msra.mxu0 0.0
      %3912 = vmatprep.subr.mxu0 0.0
      %3913 = vmatpush1.msra.mxu0 0.0
      %3914 = vmatprep.subr.mxu0 0.0
      %3915 = vmatpush1.msra.mxu0 0.0
      %3916 = vmatprep.subr.mxu0 0.0
      %3917 = vmatpush1.msra.mxu0 0.0
      %3918 = vmatprep.subr.mxu0 0.0
      %3919 = vmatpush1.msra.mxu0 0.0
      %3920 = vmatprep.subr.mxu0 0.0
      %3921 = vmatpush1.msra.mxu0 0.0
      %3922 = vmatprep.subr.mxu0 0.0
      %3923 = vmatpush1.msra.mxu0 0.0
      %3924 = vmatprep.subr.mxu0 0.0
      %3925 = vmatpush1.msra.mxu0 0.0
      %3926 = vmatprep.subr.mxu0 0.0
      %3927 = vmatpush1.msra.mxu0 0.0
      %3928 = vmatprep.subr.mxu0 0.0
      %3929 = vmatpush1.msra.mxu0 0.0
      %3930 = vmatprep.subr.mxu0 0.0
      %3931 = vmatpush1.msra.mxu0 0.0
      %3932 = vmatprep.subr.mxu0 0.0
      %3933 = vmatpush1.msra.mxu0 0.0
      %3934 = vmatprep.subr.mxu0 0.0
      %3935 = vmatpush1.msra.mxu0 0.0
      %3936 = vmatprep.subr.mxu0 0.0
      %3937 = vmatpush1.msra.mxu0 0.0
      %3938 = vmatprep.subr.mxu0 0.0
      %3939 = vmatpush1.msra.mxu0 0.0
      %3940 = vmatprep.subr.mxu0 0.0
      %3941 = vmatpush1.msra.mxu0 0.0
      %3942 = vmatprep.subr.mxu0 0.0
      %3943 = vmatpush1.msra.mxu0 0.0
      %3944 = vmatprep.subr.mxu0 0.0
      %3945 = vmatpush1.msra.mxu0 0.0
      %3946 = vmatprep.subr.mxu0 0.0
      %3947 = vmatpush1.msra.mxu0 0.0
      %3948 = vmatprep.subr.mxu0 0.0
      %3949 = vmatpush1.msra.mxu0 0.0
      %3950 = vmatprep.subr.mxu0 0.0
      %3951 = vmatpush1.msra.mxu0 0.0
      %3952 = vmatprep.subr.mxu0 0.0
      %3953 = vmatpush1.msra.mxu0 0.0
      %3954 = vmatprep.subr.mxu0 0.0
      %3955 = vmatpush1.msra.mxu0 0.0
      %3956 = vmatprep.mubr.f32.mxu0 0.0
      %3957 = vmatmul.mubr.f32.gmra.mrb[0].mxu0 %v3888
      %v3958 = vpop.f32.mrb[0].mxu0
      %v3959 = vadd.f32 0.0, %v3958
      %v3960 = vpop.f32.mrb[0].mxu0
      %3961 = vdwg.mxu0
      %v3962 = vadd.f32 %v3881, %v3959
      %v3963 = vld [vmem:[%s799] sm:$0xf]
      %v3964 = vld [vmem:[%s1101] sm:$0xff]
      %v3966 = vsel %vm868, %v3964, 0
      %v3969 = vsel %vm872, %v3963, 0
      %3971 = vmatprep.subr.mxu0 0.0
      %3972 = vmatpush1.msra.mxu0 %v3969
      %3973 = vmatprep.subr.mxu0 0.0
      %3974 = vmatpush1.msra.mxu0 0.0
      %3975 = vmatprep.subr.mxu0 0.0
      %3976 = vmatpush1.msra.mxu0 0.0
      %3977 = vmatprep.subr.mxu0 0.0
      %3978 = vmatpush1.msra.mxu0 0.0
      %3979 = vmatprep.subr.mxu0 0.0
      %3980 = vmatpush1.msra.mxu0 0.0
      %3981 = vmatprep.subr.mxu0 0.0
      %3982 = vmatpush1.msra.mxu0 0.0
      %3983 = vmatprep.subr.mxu0 0.0
      %3984 = vmatpush1.msra.mxu0 0.0
      %3985 = vmatprep.subr.mxu0 0.0
      %3986 = vmatpush1.msra.mxu0 0.0
      %3987 = vmatprep.subr.mxu0 0.0
      %3988 = vmatpush1.msra.mxu0 0.0
      %3989 = vmatprep.subr.mxu0 0.0
      %3990 = vmatpush1.msra.mxu0 0.0
      %3991 = vmatprep.subr.mxu0 0.0
      %3992 = vmatpush1.msra.mxu0 0.0
      %3993 = vmatprep.subr.mxu0 0.0
      %3994 = vmatpush1.msra.mxu0 0.0
      %3995 = vmatprep.subr.mxu0 0.0
      %3996 = vmatpush1.msra.mxu0 0.0
      %3997 = vmatprep.subr.mxu0 0.0
      %3998 = vmatpush1.msra.mxu0 0.0
      %3999 = vmatprep.subr.mxu0 0.0
      %4000 = vmatpush1.msra.mxu0 0.0
      %4001 = vmatprep.subr.mxu0 0.0
      %4002 = vmatpush1.msra.mxu0 0.0
      %4003 = vmatprep.subr.mxu0 0.0
      %4004 = vmatpush1.msra.mxu0 0.0
      %4005 = vmatprep.subr.mxu0 0.0
      %4006 = vmatpush1.msra.mxu0 0.0
      %4007 = vmatprep.subr.mxu0 0.0
      %4008 = vmatpush1.msra.mxu0 0.0
      %4009 = vmatprep.subr.mxu0 0.0
      %4010 = vmatpush1.msra.mxu0 0.0
      %4011 = vmatprep.subr.mxu0 0.0
      %4012 = vmatpush1.msra.mxu0 0.0
      %4013 = vmatprep.subr.mxu0 0.0
      %4014 = vmatpush1.msra.mxu0 0.0
      %4015 = vmatprep.subr.mxu0 0.0
      %4016 = vmatpush1.msra.mxu0 0.0
      %4017 = vmatprep.subr.mxu0 0.0
      %4018 = vmatpush1.msra.mxu0 0.0
      %4019 = vmatprep.subr.mxu0 0.0
      %4020 = vmatpush1.msra.mxu0 0.0
      %4021 = vmatprep.subr.mxu0 0.0
      %4022 = vmatpush1.msra.mxu0 0.0
      %4023 = vmatprep.subr.mxu0 0.0
      %4024 = vmatpush1.msra.mxu0 0.0
      %4025 = vmatprep.subr.mxu0 0.0
      %4026 = vmatpush1.msra.mxu0 0.0
      %4027 = vmatprep.subr.mxu0 0.0
      %4028 = vmatpush1.msra.mxu0 0.0
      %4029 = vmatprep.subr.mxu0 0.0
      %4030 = vmatpush1.msra.mxu0 0.0
      %4031 = vmatprep.subr.mxu0 0.0
      %4032 = vmatpush1.msra.mxu0 0.0
      %4033 = vmatprep.subr.mxu0 0.0
      %4034 = vmatpush1.msra.mxu0 0.0
      %4035 = vmatprep.mubr.f32.mxu0 0.0
      %4036 = vmatmul.mubr.f32.gmra.mrb[0].mxu0 %v3966
      %v4037 = vpop.f32.mrb[0].mxu0
      %v4038 = vadd.f32 0.0, %v4037
      %v4039 = vpop.f32.mrb[0].mxu0
      %4040 = vdwg.mxu0
      %v4041 = vadd.f32 %v3962, %v4038
      %v4042 = vld [vmem:[%s1180] sm:$0xff]
      %4043 = vrot.lane.b32.xlu0 %v3963, 127
      %v4044 = vpop.permute.xlu0 %4043
      %v4046 = vsel %vm868, %v4042, 0
      %v4048 = vsel %vm872, %v4044, 0
      %4050 = vmatprep.subr.mxu0 0.0
      %4051 = vmatpush1.msra.mxu0 %v4048
      %4052 = vmatprep.subr.mxu0 0.0
      %4053 = vmatpush1.msra.mxu0 0.0
      %4054 = vmatprep.subr.mxu0 0.0
      %4055 = vmatpush1.msra.mxu0 0.0
      %4056 = vmatprep.subr.mxu0 0.0
      %4057 = vmatpush1.msra.mxu0 0.0
      %4058 = vmatprep.subr.mxu0 0.0
      %4059 = vmatpush1.msra.mxu0 0.0
      %4060 = vmatprep.subr.mxu0 0.0
      %4061 = vmatpush1.msra.mxu0 0.0
      %4062 = vmatprep.subr.mxu0 0.0
      %4063 = vmatpush1.msra.mxu0 0.0
      %4064 = vmatprep.subr.mxu0 0.0
      %4065 = vmatpush1.msra.mxu0 0.0
      %4066 = vmatprep.subr.mxu0 0.0
      %4067 = vmatpush1.msra.mxu0 0.0
      %4068 = vmatprep.subr.mxu0 0.0
      %4069 = vmatpush1.msra.mxu0 0.0
      %4070 = vmatprep.subr.mxu0 0.0
      %4071 = vmatpush1.msra.mxu0 0.0
      %4072 = vmatprep.subr.mxu0 0.0
      %4073 = vmatpush1.msra.mxu0 0.0
      %4074 = vmatprep.subr.mxu0 0.0
      %4075 = vmatpush1.msra.mxu0 0.0
      %4076 = vmatprep.subr.mxu0 0.0
      %4077 = vmatpush1.msra.mxu0 0.0
      %4078 = vmatprep.subr.mxu0 0.0
      %4079 = vmatpush1.msra.mxu0 0.0
      %4080 = vmatprep.subr.mxu0 0.0
      %4081 = vmatpush1.msra.mxu0 0.0
      %4082 = vmatprep.subr.mxu0 0.0
      %4083 = vmatpush1.msra.mxu0 0.0
      %4084 = vmatprep.subr.mxu0 0.0
      %4085 = vmatpush1.msra.mxu0 0.0
      %4086 = vmatprep.subr.mxu0 0.0
      %4087 = vmatpush1.msra.mxu0 0.0
      %4088 = vmatprep.subr.mxu0 0.0
      %4089 = vmatpush1.msra.mxu0 0.0
      %4090 = vmatprep.subr.mxu0 0.0
      %4091 = vmatpush1.msra.mxu0 0.0
      %4092 = vmatprep.subr.mxu0 0.0
      %4093 = vmatpush1.msra.mxu0 0.0
      %4094 = vmatprep.subr.mxu0 0.0
      %4095 = vmatpush1.msra.mxu0 0.0
      %4096 = vmatprep.subr.mxu0 0.0
      %4097 = vmatpush1.msra.mxu0 0.0
      %4098 = vmatprep.subr.mxu0 0.0
      %4099 = vmatpush1.msra.mxu0 0.0
      %4100 = vmatprep.subr.mxu0 0.0
      %4101 = vmatpush1.msra.mxu0 0.0
      %4102 = vmatprep.subr.mxu0 0.0
      %4103 = vmatpush1.msra.mxu0 0.0
      %4104 = vmatprep.subr.mxu0 0.0
      %4105 = vmatpush1.msra.mxu0 0.0
      %4106 = vmatprep.subr.mxu0 0.0
      %4107 = vmatpush1.msra.mxu0 0.0
      %4108 = vmatprep.subr.mxu0 0.0
      %4109 = vmatpush1.msra.mxu0 0.0
      %4110 = vmatprep.subr.mxu0 0.0
      %4111 = vmatpush1.msra.mxu0 0.0
      %4112 = vmatprep.subr.mxu0 0.0
      %4113 = vmatpush1.msra.mxu0 0.0
      %4114 = vmatprep.mubr.f32.mxu0 0.0
      %4115 = vmatmul.mubr.f32.gmra.mrb[0].mxu0 %v4046
      %v4116 = vpop.f32.mrb[0].mxu0
      %v4117 = vadd.f32 0.0, %v4116
      %v4118 = vpop.f32.mrb[0].mxu0
      %4119 = vdwg.mxu0
      %v4120 = vadd.f32 %v4041, %v4117
      %v4121 = vld [vmem:[%s1260] sm:$0xff]
      %4122 = vrot.lane.b32.xlu0 %v3963, 126
      %v4123 = vpop.permute.xlu0 %4122
      %v4125 = vsel %vm868, %v4121, 0
      %v4127 = vsel %vm872, %v4123, 0
      %4129 = vmatprep.subr.mxu0 0.0
      %4130 = vmatpush1.msra.mxu0 %v4127
      %4131 = vmatprep.subr.mxu0 0.0
      %4132 = vmatpush1.msra.mxu0 0.0
      %4133 = vmatprep.subr.mxu0 0.0
      %4134 = vmatpush1.msra.mxu0 0.0
      %4135 = vmatprep.subr.mxu0 0.0
      %4136 = vmatpush1.msra.mxu0 0.0
      %4137 = vmatprep.subr.mxu0 0.0
      %4138 = vmatpush1.msra.mxu0 0.0
      %4139 = vmatprep.subr.mxu0 0.0
      %4140 = vmatpush1.msra.mxu0 0.0
      %4141 = vmatprep.subr.mxu0 0.0
      %4142 = vmatpush1.msra.mxu0 0.0
      %4143 = vmatprep.subr.mxu0 0.0
      %4144 = vmatpush1.msra.mxu0 0.0
      %4145 = vmatprep.subr.mxu0 0.0
      %4146 = vmatpush1.msra.mxu0 0.0
      %4147 = vmatprep.subr.mxu0 0.0
      %4148 = vmatpush1.msra.mxu0 0.0
      %4149 = vmatprep.subr.mxu0 0.0
      %4150 = vmatpush1.msra.mxu0 0.0
      %4151 = vmatprep.subr.mxu0 0.0
      %4152 = vmatpush1.msra.mxu0 0.0
      %4153 = vmatprep.subr.mxu0 0.0
      %4154 = vmatpush1.msra.mxu0 0.0
      %4155 = vmatprep.subr.mxu0 0.0
      %4156 = vmatpush1.msra.mxu0 0.0
      %4157 = vmatprep.subr.mxu0 0.0
      %4158 = vmatpush1.msra.mxu0 0.0
      %4159 = vmatprep.subr.mxu0 0.0
      %4160 = vmatpush1.msra.mxu0 0.0
      %4161 = vmatprep.subr.mxu0 0.0
      %4162 = vmatpush1.msra.mxu0 0.0
      %4163 = vmatprep.subr.mxu0 0.0
      %4164 = vmatpush1.msra.mxu0 0.0
      %4165 = vmatprep.subr.mxu0 0.0
      %4166 = vmatpush1.msra.mxu0 0.0
      %4167 = vmatprep.subr.mxu0 0.0
      %4168 = vmatpush1.msra.mxu0 0.0
      %4169 = vmatprep.subr.mxu0 0.0
      %4170 = vmatpush1.msra.mxu0 0.0
      %4171 = vmatprep.subr.mxu0 0.0
      %4172 = vmatpush1.msra.mxu0 0.0
      %4173 = vmatprep.subr.mxu0 0.0
      %4174 = vmatpush1.msra.mxu0 0.0
      %4175 = vmatprep.subr.mxu0 0.0
      %4176 = vmatpush1.msra.mxu0 0.0
      %4177 = vmatprep.subr.mxu0 0.0
      %4178 = vmatpush1.msra.mxu0 0.0
      %4179 = vmatprep.subr.mxu0 0.0
      %4180 = vmatpush1.msra.mxu0 0.0
      %4181 = vmatprep.subr.mxu0 0.0
      %4182 = vmatpush1.msra.mxu0 0.0
      %4183 = vmatprep.subr.mxu0 0.0
      %4184 = vmatpush1.msra.mxu0 0.0
      %4185 = vmatprep.subr.mxu0 0.0
      %4186 = vmatpush1.msra.mxu0 0.0
      %4187 = vmatprep.subr.mxu0 0.0
      %4188 = vmatpush1.msra.mxu0 0.0
      %4189 = vmatprep.subr.mxu0 0.0
      %4190 = vmatpush1.msra.mxu0 0.0
      %4191 = vmatprep.subr.mxu0 0.0
      %4192 = vmatpush1.msra.mxu0 0.0
      %4193 = vmatprep.mubr.f32.mxu0 0.0
      %4194 = vmatmul.mubr.f32.gmra.mrb[0].mxu0 %v4125
      %v4195 = vpop.f32.mrb[0].mxu0
      %v4196 = vadd.f32 0.0, %v4195
      %v4197 = vpop.f32.mrb[0].mxu0
      %4198 = vdwg.mxu0
      %v4199 = vadd.f32 %v4120, %v4196
      %v4200 = vld [vmem:[%s811] sm:$0xf]
      %v4201 = vld [vmem:[%s1341] sm:$0xff]
      %v4203 = vsel %vm868, %v4201, 0
      %v4206 = vsel %vm872, %v4200, 0
      %4208 = vmatprep.subr.mxu0 0.0
      %4209 = vmatpush1.msra.mxu0 %v4206
      %4210 = vmatprep.subr.mxu0 0.0
      %4211 = vmatpush1.msra.mxu0 0.0
      %4212 = vmatprep.subr.mxu0 0.0
      %4213 = vmatpush1.msra.mxu0 0.0
      %4214 = vmatprep.subr.mxu0 0.0
      %4215 = vmatpush1.msra.mxu0 0.0
      %4216 = vmatprep.subr.mxu0 0.0
      %4217 = vmatpush1.msra.mxu0 0.0
      %4218 = vmatprep.subr.mxu0 0.0
      %4219 = vmatpush1.msra.mxu0 0.0
      %4220 = vmatprep.subr.mxu0 0.0
      %4221 = vmatpush1.msra.mxu0 0.0
      %4222 = vmatprep.subr.mxu0 0.0
      %4223 = vmatpush1.msra.mxu0 0.0
      %4224 = vmatprep.subr.mxu0 0.0
      %4225 = vmatpush1.msra.mxu0 0.0
      %4226 = vmatprep.subr.mxu0 0.0
      %4227 = vmatpush1.msra.mxu0 0.0
      %4228 = vmatprep.subr.mxu0 0.0
      %4229 = vmatpush1.msra.mxu0 0.0
      %4230 = vmatprep.subr.mxu0 0.0
      %4231 = vmatpush1.msra.mxu0 0.0
      %4232 = vmatprep.subr.mxu0 0.0
      %4233 = vmatpush1.msra.mxu0 0.0
      %4234 = vmatprep.subr.mxu0 0.0
      %4235 = vmatpush1.msra.mxu0 0.0
      %4236 = vmatprep.subr.mxu0 0.0
      %4237 = vmatpush1.msra.mxu0 0.0
      %4238 = vmatprep.subr.mxu0 0.0
      %4239 = vmatpush1.msra.mxu0 0.0
      %4240 = vmatprep.subr.mxu0 0.0
      %4241 = vmatpush1.msra.mxu0 0.0
      %4242 = vmatprep.subr.mxu0 0.0
      %4243 = vmatpush1.msra.mxu0 0.0
      %4244 = vmatprep.subr.mxu0 0.0
      %4245 = vmatpush1.msra.mxu0 0.0
      %4246 = vmatprep.subr.mxu0 0.0
      %4247 = vmatpush1.msra.mxu0 0.0
      %4248 = vmatprep.subr.mxu0 0.0
      %4249 = vmatpush1.msra.mxu0 0.0
      %4250 = vmatprep.subr.mxu0 0.0
      %4251 = vmatpush1.msra.mxu0 0.0
      %4252 = vmatprep.subr.mxu0 0.0
      %4253 = vmatpush1.msra.mxu0 0.0
      %4254 = vmatprep.subr.mxu0 0.0
      %4255 = vmatpush1.msra.mxu0 0.0
      %4256 = vmatprep.subr.mxu0 0.0
      %4257 = vmatpush1.msra.mxu0 0.0
      %4258 = vmatprep.subr.mxu0 0.0
      %4259 = vmatpush1.msra.mxu0 0.0
      %4260 = vmatprep.subr.mxu0 0.0
      %4261 = vmatpush1.msra.mxu0 0.0
      %4262 = vmatprep.subr.mxu0 0.0
      %4263 = vmatpush1.msra.mxu0 0.0
      %4264 = vmatprep.subr.mxu0 0.0
      %4265 = vmatpush1.msra.mxu0 0.0
      %4266 = vmatprep.subr.mxu0 0.0
      %4267 = vmatpush1.msra.mxu0 0.0
      %4268 = vmatprep.subr.mxu0 0.0
      %4269 = vmatpush1.msra.mxu0 0.0
      %4270 = vmatprep.subr.mxu0 0.0
      %4271 = vmatpush1.msra.mxu0 0.0
      %4272 = vmatprep.mubr.f32.mxu0 0.0
      %4273 = vmatmul.mubr.f32.gmra.mrb[0].mxu0 %v4203
      %v4274 = vpop.f32.mrb[0].mxu0
      %v4275 = vadd.f32 0.0, %v4274
      %v4276 = vpop.f32.mrb[0].mxu0
      %4277 = vdwg.mxu0
      %v4278 = vadd.f32 %v4199, %v4275
      %v4279 = vld [vmem:[%s1420] sm:$0xff]
      %4280 = vrot.lane.b32.xlu0 %v4200, 127
      %v4281 = vpop.permute.xlu0 %4280
      %v4283 = vsel %vm868, %v4279, 0
      %v4285 = vsel %vm872, %v4281, 0
      %4287 = vmatprep.subr.mxu0 0.0
      %4288 = vmatpush1.msra.mxu0 %v4285
      %4289 = vmatprep.subr.mxu0 0.0
      %4290 = vmatpush1.msra.mxu0 0.0
      %4291 = vmatprep.subr.mxu0 0.0
      %4292 = vmatpush1.msra.mxu0 0.0
      %4293 = vmatprep.subr.mxu0 0.0
      %4294 = vmatpush1.msra.mxu0 0.0
      %4295 = vmatprep.subr.mxu0 0.0
      %4296 = vmatpush1.msra.mxu0 0.0
      %4297 = vmatprep.subr.mxu0 0.0
      %4298 = vmatpush1.msra.mxu0 0.0
      %4299 = vmatprep.subr.mxu0 0.0
      %4300 = vmatpush1.msra.mxu0 0.0
      %4301 = vmatprep.subr.mxu0 0.0
      %4302 = vmatpush1.msra.mxu0 0.0
      %4303 = vmatprep.subr.mxu0 0.0
      %4304 = vmatpush1.msra.mxu0 0.0
      %4305 = vmatprep.subr.mxu0 0.0
      %4306 = vmatpush1.msra.mxu0 0.0
      %4307 = vmatprep.subr.mxu0 0.0
      %4308 = vmatpush1.msra.mxu0 0.0
      %4309 = vmatprep.subr.mxu0 0.0
      %4310 = vmatpush1.msra.mxu0 0.0
      %4311 = vmatprep.subr.mxu0 0.0
      %4312 = vmatpush1.msra.mxu0 0.0
      %4313 = vmatprep.subr.mxu0 0.0
      %4314 = vmatpush1.msra.mxu0 0.0
      %4315 = vmatprep.subr.mxu0 0.0
      %4316 = vmatpush1.msra.mxu0 0.0
      %4317 = vmatprep.subr.mxu0 0.0
      %4318 = vmatpush1.msra.mxu0 0.0
      %4319 = vmatprep.subr.mxu0 0.0
      %4320 = vmatpush1.msra.mxu0 0.0
      %4321 = vmatprep.subr.mxu0 0.0
      %4322 = vmatpush1.msra.mxu0 0.0
      %4323 = vmatprep.subr.mxu0 0.0
      %4324 = vmatpush1.msra.mxu0 0.0
      %4325 = vmatprep.subr.mxu0 0.0
      %4326 = vmatpush1.msra.mxu0 0.0
      %4327 = vmatprep.subr.mxu0 0.0
      %4328 = vmatpush1.msra.mxu0 0.0
      %4329 = vmatprep.subr.mxu0 0.0
      %4330 = vmatpush1.msra.mxu0 0.0
      %4331 = vmatprep.subr.mxu0 0.0
      %4332 = vmatpush1.msra.mxu0 0.0
      %4333 = vmatprep.subr.mxu0 0.0
      %4334 = vmatpush1.msra.mxu0 0.0
      %4335 = vmatprep.subr.mxu0 0.0
      %4336 = vmatpush1.msra.mxu0 0.0
      %4337 = vmatprep.subr.mxu0 0.0
      %4338 = vmatpush1.msra.mxu0 0.0
      %4339 = vmatprep.subr.mxu0 0.0
      %4340 = vmatpush1.msra.mxu0 0.0
      %4341 = vmatprep.subr.mxu0 0.0
      %4342 = vmatpush1.msra.mxu0 0.0
      %4343 = vmatprep.subr.mxu0 0.0
      %4344 = vmatpush1.msra.mxu0 0.0
      %4345 = vmatprep.subr.mxu0 0.0
      %4346 = vmatpush1.msra.mxu0 0.0
      %4347 = vmatprep.subr.mxu0 0.0
      %4348 = vmatpush1.msra.mxu0 0.0
      %4349 = vmatprep.subr.mxu0 0.0
      %4350 = vmatpush1.msra.mxu0 0.0
      %4351 = vmatprep.mubr.f32.mxu0 0.0
      %4352 = vmatmul.mubr.f32.gmra.mrb[0].mxu0 %v4283
      %v4353 = vpop.f32.mrb[0].mxu0
      %v4354 = vadd.f32 0.0, %v4353
      %v4355 = vpop.f32.mrb[0].mxu0
      %4356 = vdwg.mxu0
      %v4357 = vadd.f32 %v4278, %v4354
      %v4358 = vld [vmem:[%s1500] sm:$0xff]
      %4359 = vrot.lane.b32.xlu0 %v4200, 126
      %v4360 = vpop.permute.xlu0 %4359
      %v4362 = vsel %vm868, %v4358, 0
      %v4364 = vsel %vm872, %v4360, 0
      %4366 = vmatprep.subr.mxu0 0.0
      %4367 = vmatpush1.msra.mxu0 %v4364
      %4368 = vmatprep.subr.mxu0 0.0
      %4369 = vmatpush1.msra.mxu0 0.0
      %4370 = vmatprep.subr.mxu0 0.0
      %4371 = vmatpush1.msra.mxu0 0.0
      %4372 = vmatprep.subr.mxu0 0.0
      %4373 = vmatpush1.msra.mxu0 0.0
      %4374 = vmatprep.subr.mxu0 0.0
      %4375 = vmatpush1.msra.mxu0 0.0
      %4376 = vmatprep.subr.mxu0 0.0
      %4377 = vmatpush1.msra.mxu0 0.0
      %4378 = vmatprep.subr.mxu0 0.0
      %4379 = vmatpush1.msra.mxu0 0.0
      %4380 = vmatprep.subr.mxu0 0.0
      %4381 = vmatpush1.msra.mxu0 0.0
      %4382 = vmatprep.subr.mxu0 0.0
      %4383 = vmatpush1.msra.mxu0 0.0
      %4384 = vmatprep.subr.mxu0 0.0
      %4385 = vmatpush1.msra.mxu0 0.0
      %4386 = vmatprep.subr.mxu0 0.0
      %4387 = vmatpush1.msra.mxu0 0.0
      %4388 = vmatprep.subr.mxu0 0.0
      %4389 = vmatpush1.msra.mxu0 0.0
      %4390 = vmatprep.subr.mxu0 0.0
      %4391 = vmatpush1.msra.mxu0 0.0
      %4392 = vmatprep.subr.mxu0 0.0
      %4393 = vmatpush1.msra.mxu0 0.0
      %4394 = vmatprep.subr.mxu0 0.0
      %4395 = vmatpush1.msra.mxu0 0.0
      %4396 = vmatprep.subr.mxu0 0.0
      %4397 = vmatpush1.msra.mxu0 0.0
      %4398 = vmatprep.subr.mxu0 0.0
      %4399 = vmatpush1.msra.mxu0 0.0
      %4400 = vmatprep.subr.mxu0 0.0
      %4401 = vmatpush1.msra.mxu0 0.0
      %4402 = vmatprep.subr.mxu0 0.0
      %4403 = vmatpush1.msra.mxu0 0.0
      %4404 = vmatprep.subr.mxu0 0.0
      %4405 = vmatpush1.msra.mxu0 0.0
      %4406 = vmatprep.subr.mxu0 0.0
      %4407 = vmatpush1.msra.mxu0 0.0
      %4408 = vmatprep.subr.mxu0 0.0
      %4409 = vmatpush1.msra.mxu0 0.0
      %4410 = vmatprep.subr.mxu0 0.0
      %4411 = vmatpush1.msra.mxu0 0.0
      %4412 = vmatprep.subr.mxu0 0.0
      %4413 = vmatpush1.msra.mxu0 0.0
      %4414 = vmatprep.subr.mxu0 0.0
      %4415 = vmatpush1.msra.mxu0 0.0
      %4416 = vmatprep.subr.mxu0 0.0
      %4417 = vmatpush1.msra.mxu0 0.0
      %4418 = vmatprep.subr.mxu0 0.0
      %4419 = vmatpush1.msra.mxu0 0.0
      %4420 = vmatprep.subr.mxu0 0.0
      %4421 = vmatpush1.msra.mxu0 0.0
      %4422 = vmatprep.subr.mxu0 0.0
      %4423 = vmatpush1.msra.mxu0 0.0
      %4424 = vmatprep.subr.mxu0 0.0
      %4425 = vmatpush1.msra.mxu0 0.0
      %4426 = vmatprep.subr.mxu0 0.0
      %4427 = vmatpush1.msra.mxu0 0.0
      %4428 = vmatprep.subr.mxu0 0.0
      %4429 = vmatpush1.msra.mxu0 0.0
      %4430 = vmatprep.mubr.f32.mxu0 0.0
      %4431 = vmatmul.mubr.f32.gmra.mrb[0].mxu0 %v4362
      %v4432 = vpop.f32.mrb[0].mxu0
      %v4433 = vadd.f32 0.0, %v4432
      %v4434 = vpop.f32.mrb[0].mxu0
      %4435 = vdwg.mxu0
      %v4436 = vadd.f32 %v4357, %v4433
      %v4437 = vadd.f32 %v4436, %v1583
      %v4438 = vmax.f32 %v4437, 0.0
      %s4439 = scalar_lea.vmem %s858, 32
      %4440 = vst.msk [vmem:[%s4439] sm:$0xff] %vm1587, %v4438
      %v4441 = vld [vmem:[%s799] sm:$0xf]
      %v4442 = vld [vmem:[%s10] sm:$0xff]
      %v4443 = vld [vmem:[%s863] sm:$0xff]
      %4445 = vrot.lane.b32.xlu0 %v4441, 127
      %v4446 = vpop.permute.xlu0 %4445
      %v4448 = vsel %vm868, %v4443, 0
      %v4450 = vsel %vm872, %v4446, 0
      %4452 = vmatprep.subr.mxu0 0.0
      %4453 = vmatpush1.msra.mxu0 %v4450
      %4454 = vmatprep.subr.mxu0 0.0
      %4455 = vmatpush1.msra.mxu0 0.0
      %4456 = vmatprep.subr.mxu0 0.0
      %4457 = vmatpush1.msra.mxu0 0.0
      %4458 = vmatprep.subr.mxu0 0.0
      %4459 = vmatpush1.msra.mxu0 0.0
      %4460 = vmatprep.subr.mxu0 0.0
      %4461 = vmatpush1.msra.mxu0 0.0
      %4462 = vmatprep.subr.mxu0 0.0
      %4463 = vmatpush1.msra.mxu0 0.0
      %4464 = vmatprep.subr.mxu0 0.0
      %4465 = vmatpush1.msra.mxu0 0.0
      %4466 = vmatprep.subr.mxu0 0.0
      %4467 = vmatpush1.msra.mxu0 0.0
      %4468 = vmatprep.subr.mxu0 0.0
      %4469 = vmatpush1.msra.mxu0 0.0
      %4470 = vmatprep.subr.mxu0 0.0
      %4471 = vmatpush1.msra.mxu0 0.0
      %4472 = vmatprep.subr.mxu0 0.0
      %4473 = vmatpush1.msra.mxu0 0.0
      %4474 = vmatprep.subr.mxu0 0.0
      %4475 = vmatpush1.msra.mxu0 0.0
      %4476 = vmatprep.subr.mxu0 0.0
      %4477 = vmatpush1.msra.mxu0 0.0
      %4478 = vmatprep.subr.mxu0 0.0
      %4479 = vmatpush1.msra.mxu0 0.0
      %4480 = vmatprep.subr.mxu0 0.0
      %4481 = vmatpush1.msra.mxu0 0.0
      %4482 = vmatprep.subr.mxu0 0.0
      %4483 = vmatpush1.msra.mxu0 0.0
      %4484 = vmatprep.subr.mxu0 0.0
      %4485 = vmatpush1.msra.mxu0 0.0
      %4486 = vmatprep.subr.mxu0 0.0
      %4487 = vmatpush1.msra.mxu0 0.0
      %4488 = vmatprep.subr.mxu0 0.0
      %4489 = vmatpush1.msra.mxu0 0.0
      %4490 = vmatprep.subr.mxu0 0.0
      %4491 = vmatpush1.msra.mxu0 0.0
      %4492 = vmatprep.subr.mxu0 0.0
      %4493 = vmatpush1.msra.mxu0 0.0
      %4494 = vmatprep.subr.mxu0 0.0
      %4495 = vmatpush1.msra.mxu0 0.0
      %4496 = vmatprep.subr.mxu0 0.0
      %4497 = vmatpush1.msra.mxu0 0.0
      %4498 = vmatprep.subr.mxu0 0.0
      %4499 = vmatpush1.msra.mxu0 0.0
      %4500 = vmatprep.subr.mxu0 0.0
      %4501 = vmatpush1.msra.mxu0 0.0
      %4502 = vmatprep.subr.mxu0 0.0
      %4503 = vmatpush1.msra.mxu0 0.0
      %4504 = vmatprep.subr.mxu0 0.0
      %4505 = vmatpush1.msra.mxu0 0.0
      %4506 = vmatprep.subr.mxu0 0.0
      %4507 = vmatpush1.msra.mxu0 0.0
      %4508 = vmatprep.subr.mxu0 0.0
      %4509 = vmatpush1.msra.mxu0 0.0
      %4510 = vmatprep.subr.mxu0 0.0
      %4511 = vmatpush1.msra.mxu0 0.0
      %4512 = vmatprep.subr.mxu0 0.0
      %4513 = vmatpush1.msra.mxu0 0.0
      %4514 = vmatprep.subr.mxu0 0.0
      %4515 = vmatpush1.msra.mxu0 0.0
      %4516 = vmatprep.mubr.f32.mxu0 0.0
      %4517 = vmatmul.mubr.f32.gmra.mrb[0].mxu0 %v4448
      %v4518 = vpop.f32.mrb[0].mxu0
      %v4519 = vadd.f32 0.0, %v4518
      %v4520 = vpop.f32.mrb[0].mxu0
      %4521 = vdwg.mxu0
      %v4523 = vsel %vm868, %v4442, 0
      %v4525 = vsel %vm872, %v4441, 0
      %4527 = vmatprep.subr.mxu0 0.0
      %4528 = vmatpush1.msra.mxu0 %v4525
      %4529 = vmatprep.subr.mxu0 0.0
      %4530 = vmatpush1.msra.mxu0 0.0
      %4531 = vmatprep.subr.mxu0 0.0
      %4532 = vmatpush1.msra.mxu0 0.0
      %4533 = vmatprep.subr.mxu0 0.0
      %4534 = vmatpush1.msra.mxu0 0.0
      %4535 = vmatprep.subr.mxu0 0.0
      %4536 = vmatpush1.msra.mxu0 0.0
      %4537 = vmatprep.subr.mxu0 0.0
      %4538 = vmatpush1.msra.mxu0 0.0
      %4539 = vmatprep.subr.mxu0 0.0
      %4540 = vmatpush1.msra.mxu0 0.0
      %4541 = vmatprep.subr.mxu0 0.0
      %4542 = vmatpush1.msra.mxu0 0.0
      %4543 = vmatprep.subr.mxu0 0.0
      %4544 = vmatpush1.msra.mxu0 0.0
      %4545 = vmatprep.subr.mxu0 0.0
      %4546 = vmatpush1.msra.mxu0 0.0
      %4547 = vmatprep.subr.mxu0 0.0
      %4548 = vmatpush1.msra.mxu0 0.0
      %4549 = vmatprep.subr.mxu0 0.0
      %4550 = vmatpush1.msra.mxu0 0.0
      %4551 = vmatprep.subr.mxu0 0.0
      %4552 = vmatpush1.msra.mxu0 0.0
      %4553 = vmatprep.subr.mxu0 0.0
      %4554 = vmatpush1.msra.mxu0 0.0
      %4555 = vmatprep.subr.mxu0 0.0
      %4556 = vmatpush1.msra.mxu0 0.0
      %4557 = vmatprep.subr.mxu0 0.0
      %4558 = vmatpush1.msra.mxu0 0.0
      %4559 = vmatprep.subr.mxu0 0.0
      %4560 = vmatpush1.msra.mxu0 0.0
      %4561 = vmatprep.subr.mxu0 0.0
      %4562 = vmatpush1.msra.mxu0 0.0
      %4563 = vmatprep.subr.mxu0 0.0
      %4564 = vmatpush1.msra.mxu0 0.0
      %4565 = vmatprep.subr.mxu0 0.0
      %4566 = vmatpush1.msra.mxu0 0.0
      %4567 = vmatprep.subr.mxu0 0.0
      %4568 = vmatpush1.msra.mxu0 0.0
      %4569 = vmatprep.subr.mxu0 0.0
      %4570 = vmatpush1.msra.mxu0 0.0
      %4571 = vmatprep.subr.mxu0 0.0
      %4572 = vmatpush1.msra.mxu0 0.0
      %4573 = vmatprep.subr.mxu0 0.0
      %4574 = vmatpush1.msra.mxu0 0.0
      %4575 = vmatprep.subr.mxu0 0.0
      %4576 = vmatpush1.msra.mxu0 0.0
      %4577 = vmatprep.subr.mxu0 0.0
      %4578 = vmatpush1.msra.mxu0 0.0
      %4579 = vmatprep.subr.mxu0 0.0
      %4580 = vmatpush1.msra.mxu0 0.0
      %4581 = vmatprep.subr.mxu0 0.0
      %4582 = vmatpush1.msra.mxu0 0.0
      %4583 = vmatprep.subr.mxu0 0.0
      %4584 = vmatpush1.msra.mxu0 0.0
      %4585 = vmatprep.subr.mxu0 0.0
      %4586 = vmatpush1.msra.mxu0 0.0
      %4587 = vmatprep.subr.mxu0 0.0
      %4588 = vmatpush1.msra.mxu0 0.0
      %4589 = vmatprep.subr.mxu0 0.0
      %4590 = vmatpush1.msra.mxu0 0.0
      %4591 = vmatprep.mubr.f32.mxu0 0.0
      %4592 = vmatmul.mubr.f32.gmra.mrb[0].mxu0 %v4523
      %v4593 = vpop.f32.mrb[0].mxu0
      %v4594 = vadd.f32 %v4519, %v4593
      %v4595 = vpop.f32.mrb[0].mxu0
      %4596 = vdwg.mxu0
      %v4597 = vld [vmem:[%s1020] sm:$0xff]
      %4598 = vrot.lane.b32.xlu0 %v4441, 126
      %v4599 = vpop.permute.xlu0 %4598
      %v4601 = vsel %vm868, %v4597, 0
      %v4603 = vsel %vm872, %v4599, 0
      %4605 = vmatprep.subr.mxu0 0.0
      %4606 = vmatpush1.msra.mxu0 %v4603
      %4607 = vmatprep.subr.mxu0 0.0
      %4608 = vmatpush1.msra.mxu0 0.0
      %4609 = vmatprep.subr.mxu0 0.0
      %4610 = vmatpush1.msra.mxu0 0.0
      %4611 = vmatprep.subr.mxu0 0.0
      %4612 = vmatpush1.msra.mxu0 0.0
      %4613 = vmatprep.subr.mxu0 0.0
      %4614 = vmatpush1.msra.mxu0 0.0
      %4615 = vmatprep.subr.mxu0 0.0
      %4616 = vmatpush1.msra.mxu0 0.0
      %4617 = vmatprep.subr.mxu0 0.0
      %4618 = vmatpush1.msra.mxu0 0.0
      %4619 = vmatprep.subr.mxu0 0.0
      %4620 = vmatpush1.msra.mxu0 0.0
      %4621 = vmatprep.subr.mxu0 0.0
      %4622 = vmatpush1.msra.mxu0 0.0
      %4623 = vmatprep.subr.mxu0 0.0
      %4624 = vmatpush1.msra.mxu0 0.0
      %4625 = vmatprep.subr.mxu0 0.0
      %4626 = vmatpush1.msra.mxu0 0.0
      %4627 = vmatprep.subr.mxu0 0.0
      %4628 = vmatpush1.msra.mxu0 0.0
      %4629 = vmatprep.subr.mxu0 0.0
      %4630 = vmatpush1.msra.mxu0 0.0
      %4631 = vmatprep.subr.mxu0 0.0
      %4632 = vmatpush1.msra.mxu0 0.0
      %4633 = vmatprep.subr.mxu0 0.0
      %4634 = vmatpush1.msra.mxu0 0.0
      %4635 = vmatprep.subr.mxu0 0.0
      %4636 = vmatpush1.msra.mxu0 0.0
      %4637 = vmatprep.subr.mxu0 0.0
      %4638 = vmatpush1.msra.mxu0 0.0
      %4639 = vmatprep.subr.mxu0 0.0
      %4640 = vmatpush1.msra.mxu0 0.0
      %4641 = vmatprep.subr.mxu0 0.0
      %4642 = vmatpush1.msra.mxu0 0.0
      %4643 = vmatprep.subr.mxu0 0.0
      %4644 = vmatpush1.msra.mxu0 0.0
      %4645 = vmatprep.subr.mxu0 0.0
      %4646 = vmatpush1.msra.mxu0 0.0
      %4647 = vmatprep.subr.mxu0 0.0
      %4648 = vmatpush1.msra.mxu0 0.0
      %4649 = vmatprep.subr.mxu0 0.0
      %4650 = vmatpush1.msra.mxu0 0.0
      %4651 = vmatprep.subr.mxu0 0.0
      %4652 = vmatpush1.msra.mxu0 0.0
      %4653 = vmatprep.subr.mxu0 0.0
      %4654 = vmatpush1.msra.mxu0 0.0
      %4655 = vmatprep.subr.mxu0 0.0
      %4656 = vmatpush1.msra.mxu0 0.0
      %4657 = vmatprep.subr.mxu0 0.0
      %4658 = vmatpush1.msra.mxu0 0.0
      %4659 = vmatprep.subr.mxu0 0.0
      %4660 = vmatpush1.msra.mxu0 0.0
      %4661 = vmatprep.subr.mxu0 0.0
      %4662 = vmatpush1.msra.mxu0 0.0
      %4663 = vmatprep.subr.mxu0 0.0
      %4664 = vmatpush1.msra.mxu0 0.0
      %4665 = vmatprep.subr.mxu0 0.0
      %4666 = vmatpush1.msra.mxu0 0.0
      %4667 = vmatprep.subr.mxu0 0.0
      %4668 = vmatpush1.msra.mxu0 0.0
      %4669 = vmatprep.mubr.f32.mxu0 0.0
      %4670 = vmatmul.mubr.f32.gmra.mrb[0].mxu0 %v4601
      %v4671 = vpop.f32.mrb[0].mxu0
      %v4672 = vadd.f32 0.0, %v4671
      %v4673 = vpop.f32.mrb[0].mxu0
      %4674 = vdwg.mxu0
      %v4675 = vadd.f32 %v4594, %v4672
      %v4676 = vld [vmem:[%s811] sm:$0xf]
      %v4677 = vld [vmem:[%s1101] sm:$0xff]
      %v4679 = vsel %vm868, %v4677, 0
      %v4682 = vsel %vm872, %v4676, 0
      %4684 = vmatprep.subr.mxu0 0.0
      %4685 = vmatpush1.msra.mxu0 %v4682
      %4686 = vmatprep.subr.mxu0 0.0
      %4687 = vmatpush1.msra.mxu0 0.0
      %4688 = vmatprep.subr.mxu0 0.0
      %4689 = vmatpush1.msra.mxu0 0.0
      %4690 = vmatprep.subr.mxu0 0.0
      %4691 = vmatpush1.msra.mxu0 0.0
      %4692 = vmatprep.subr.mxu0 0.0
      %4693 = vmatpush1.msra.mxu0 0.0
      %4694 = vmatprep.subr.mxu0 0.0
      %4695 = vmatpush1.msra.mxu0 0.0
      %4696 = vmatprep.subr.mxu0 0.0
      %4697 = vmatpush1.msra.mxu0 0.0
      %4698 = vmatprep.subr.mxu0 0.0
      %4699 = vmatpush1.msra.mxu0 0.0
      %4700 = vmatprep.subr.mxu0 0.0
      %4701 = vmatpush1.msra.mxu0 0.0
      %4702 = vmatprep.subr.mxu0 0.0
      %4703 = vmatpush1.msra.mxu0 0.0
      %4704 = vmatprep.subr.mxu0 0.0
      %4705 = vmatpush1.msra.mxu0 0.0
      %4706 = vmatprep.subr.mxu0 0.0
      %4707 = vmatpush1.msra.mxu0 0.0
      %4708 = vmatprep.subr.mxu0 0.0
      %4709 = vmatpush1.msra.mxu0 0.0
      %4710 = vmatprep.subr.mxu0 0.0
      %4711 = vmatpush1.msra.mxu0 0.0
      %4712 = vmatprep.subr.mxu0 0.0
      %4713 = vmatpush1.msra.mxu0 0.0
      %4714 = vmatprep.subr.mxu0 0.0
      %4715 = vmatpush1.msra.mxu0 0.0
      %4716 = vmatprep.subr.mxu0 0.0
      %4717 = vmatpush1.msra.mxu0 0.0
      %4718 = vmatprep.subr.mxu0 0.0
      %4719 = vmatpush1.msra.mxu0 0.0
      %4720 = vmatprep.subr.mxu0 0.0
      %4721 = vmatpush1.msra.mxu0 0.0
      %4722 = vmatprep.subr.mxu0 0.0
      %4723 = vmatpush1.msra.mxu0 0.0
      %4724 = vmatprep.subr.mxu0 0.0
      %4725 = vmatpush1.msra.mxu0 0.0
      %4726 = vmatprep.subr.mxu0 0.0
      %4727 = vmatpush1.msra.mxu0 0.0
      %4728 = vmatprep.subr.mxu0 0.0
      %4729 = vmatpush1.msra.mxu0 0.0
      %4730 = vmatprep.subr.mxu0 0.0
      %4731 = vmatpush1.msra.mxu0 0.0
      %4732 = vmatprep.subr.mxu0 0.0
      %4733 = vmatpush1.msra.mxu0 0.0
      %4734 = vmatprep.subr.mxu0 0.0
      %4735 = vmatpush1.msra.mxu0 0.0
      %4736 = vmatprep.subr.mxu0 0.0
      %4737 = vmatpush1.msra.mxu0 0.0
      %4738 = vmatprep.subr.mxu0 0.0
      %4739 = vmatpush1.msra.mxu0 0.0
      %4740 = vmatprep.subr.mxu0 0.0
      %4741 = vmatpush1.msra.mxu0 0.0
      %4742 = vmatprep.subr.mxu0 0.0
      %4743 = vmatpush1.msra.mxu0 0.0
      %4744 = vmatprep.subr.mxu0 0.0
      %4745 = vmatpush1.msra.mxu0 0.0
      %4746 = vmatprep.subr.mxu0 0.0
      %4747 = vmatpush1.msra.mxu0 0.0
      %4748 = vmatprep.mubr.f32.mxu0 0.0
      %4749 = vmatmul.mubr.f32.gmra.mrb[0].mxu0 %v4679
      %v4750 = vpop.f32.mrb[0].mxu0
      %v4751 = vadd.f32 0.0, %v4750
      %v4752 = vpop.f32.mrb[0].mxu0
      %4753 = vdwg.mxu0
      %v4754 = vadd.f32 %v4675, %v4751
      %v4755 = vld [vmem:[%s1180] sm:$0xff]
      %4756 = vrot.lane.b32.xlu0 %v4676, 127
      %v4757 = vpop.permute.xlu0 %4756
      %v4759 = vsel %vm868, %v4755, 0
      %v4761 = vsel %vm872, %v4757, 0
      %4763 = vmatprep.subr.mxu0 0.0
      %4764 = vmatpush1.msra.mxu0 %v4761
      %4765 = vmatprep.subr.mxu0 0.0
      %4766 = vmatpush1.msra.mxu0 0.0
      %4767 = vmatprep.subr.mxu0 0.0
      %4768 = vmatpush1.msra.mxu0 0.0
      %4769 = vmatprep.subr.mxu0 0.0
      %4770 = vmatpush1.msra.mxu0 0.0
      %4771 = vmatprep.subr.mxu0 0.0
      %4772 = vmatpush1.msra.mxu0 0.0
      %4773 = vmatprep.subr.mxu0 0.0
      %4774 = vmatpush1.msra.mxu0 0.0
      %4775 = vmatprep.subr.mxu0 0.0
      %4776 = vmatpush1.msra.mxu0 0.0
      %4777 = vmatprep.subr.mxu0 0.0
      %4778 = vmatpush1.msra.mxu0 0.0
      %4779 = vmatprep.subr.mxu0 0.0
      %4780 = vmatpush1.msra.mxu0 0.0
      %4781 = vmatprep.subr.mxu0 0.0
      %4782 = vmatpush1.msra.mxu0 0.0
      %4783 = vmatprep.subr.mxu0 0.0
      %4784 = vmatpush1.msra.mxu0 0.0
      %4785 = vmatprep.subr.mxu0 0.0
      %4786 = vmatpush1.msra.mxu0 0.0
      %4787 = vmatprep.subr.mxu0 0.0
      %4788 = vmatpush1.msra.mxu0 0.0
      %4789 = vmatprep.subr.mxu0 0.0
      %4790 = vmatpush1.msra.mxu0 0.0
      %4791 = vmatprep.subr.mxu0 0.0
      %4792 = vmatpush1.msra.mxu0 0.0
      %4793 = vmatprep.subr.mxu0 0.0
      %4794 = vmatpush1.msra.mxu0 0.0
      %4795 = vmatprep.subr.mxu0 0.0
      %4796 = vmatpush1.msra.mxu0 0.0
      %4797 = vmatprep.subr.mxu0 0.0
      %4798 = vmatpush1.msra.mxu0 0.0
      %4799 = vmatprep.subr.mxu0 0.0
      %4800 = vmatpush1.msra.mxu0 0.0
      %4801 = vmatprep.subr.mxu0 0.0
      %4802 = vmatpush1.msra.mxu0 0.0
      %4803 = vmatprep.subr.mxu0 0.0
      %4804 = vmatpush1.msra.mxu0 0.0
      %4805 = vmatprep.subr.mxu0 0.0
      %4806 = vmatpush1.msra.mxu0 0.0
      %4807 = vmatprep.subr.mxu0 0.0
      %4808 = vmatpush1.msra.mxu0 0.0
      %4809 = vmatprep.subr.mxu0 0.0
      %4810 = vmatpush1.msra.mxu0 0.0
      %4811 = vmatprep.subr.mxu0 0.0
      %4812 = vmatpush1.msra.mxu0 0.0
      %4813 = vmatprep.subr.mxu0 0.0
      %4814 = vmatpush1.msra.mxu0 0.0
      %4815 = vmatprep.subr.mxu0 0.0
      %4816 = vmatpush1.msra.mxu0 0.0
      %4817 = vmatprep.subr.mxu0 0.0
      %4818 = vmatpush1.msra.mxu0 0.0
      %4819 = vmatprep.subr.mxu0 0.0
      %4820 = vmatpush1.msra.mxu0 0.0
      %4821 = vmatprep.subr.mxu0 0.0
      %4822 = vmatpush1.msra.mxu0 0.0
      %4823 = vmatprep.subr.mxu0 0.0
      %4824 = vmatpush1.msra.mxu0 0.0
      %4825 = vmatprep.subr.mxu0 0.0
      %4826 = vmatpush1.msra.mxu0 0.0
      %4827 = vmatprep.mubr.f32.mxu0 0.0
      %4828 = vmatmul.mubr.f32.gmra.mrb[0].mxu0 %v4759
      %v4829 = vpop.f32.mrb[0].mxu0
      %v4830 = vadd.f32 0.0, %v4829
      %v4831 = vpop.f32.mrb[0].mxu0
      %4832 = vdwg.mxu0
      %v4833 = vadd.f32 %v4754, %v4830
      %v4834 = vld [vmem:[%s1260] sm:$0xff]
      %4835 = vrot.lane.b32.xlu0 %v4676, 126
      %v4836 = vpop.permute.xlu0 %4835
      %v4838 = vsel %vm868, %v4834, 0
      %v4840 = vsel %vm872, %v4836, 0
      %4842 = vmatprep.subr.mxu0 0.0
      %4843 = vmatpush1.msra.mxu0 %v4840
      %4844 = vmatprep.subr.mxu0 0.0
      %4845 = vmatpush1.msra.mxu0 0.0
      %4846 = vmatprep.subr.mxu0 0.0
      %4847 = vmatpush1.msra.mxu0 0.0
      %4848 = vmatprep.subr.mxu0 0.0
      %4849 = vmatpush1.msra.mxu0 0.0
      %4850 = vmatprep.subr.mxu0 0.0
      %4851 = vmatpush1.msra.mxu0 0.0
      %4852 = vmatprep.subr.mxu0 0.0
      %4853 = vmatpush1.msra.mxu0 0.0
      %4854 = vmatprep.subr.mxu0 0.0
      %4855 = vmatpush1.msra.mxu0 0.0
      %4856 = vmatprep.subr.mxu0 0.0
      %4857 = vmatpush1.msra.mxu0 0.0
      %4858 = vmatprep.subr.mxu0 0.0
      %4859 = vmatpush1.msra.mxu0 0.0
      %4860 = vmatprep.subr.mxu0 0.0
      %4861 = vmatpush1.msra.mxu0 0.0
      %4862 = vmatprep.subr.mxu0 0.0
      %4863 = vmatpush1.msra.mxu0 0.0
      %4864 = vmatprep.subr.mxu0 0.0
      %4865 = vmatpush1.msra.mxu0 0.0
      %4866 = vmatprep.subr.mxu0 0.0
      %4867 = vmatpush1.msra.mxu0 0.0
      %4868 = vmatprep.subr.mxu0 0.0
      %4869 = vmatpush1.msra.mxu0 0.0
      %4870 = vmatprep.subr.mxu0 0.0
      %4871 = vmatpush1.msra.mxu0 0.0
      %4872 = vmatprep.subr.mxu0 0.0
      %4873 = vmatpush1.msra.mxu0 0.0
      %4874 = vmatprep.subr.mxu0 0.0
      %4875 = vmatpush1.msra.mxu0 0.0
      %4876 = vmatprep.subr.mxu0 0.0
      %4877 = vmatpush1.msra.mxu0 0.0
      %4878 = vmatprep.subr.mxu0 0.0
      %4879 = vmatpush1.msra.mxu0 0.0
      %4880 = vmatprep.subr.mxu0 0.0
      %4881 = vmatpush1.msra.mxu0 0.0
      %4882 = vmatprep.subr.mxu0 0.0
      %4883 = vmatpush1.msra.mxu0 0.0
      %4884 = vmatprep.subr.mxu0 0.0
      %4885 = vmatpush1.msra.mxu0 0.0
      %4886 = vmatprep.subr.mxu0 0.0
      %4887 = vmatpush1.msra.mxu0 0.0
      %4888 = vmatprep.subr.mxu0 0.0
      %4889 = vmatpush1.msra.mxu0 0.0
      %4890 = vmatprep.subr.mxu0 0.0
      %4891 = vmatpush1.msra.mxu0 0.0
      %4892 = vmatprep.subr.mxu0 0.0
      %4893 = vmatpush1.msra.mxu0 0.0
      %4894 = vmatprep.subr.mxu0 0.0
      %4895 = vmatpush1.msra.mxu0 0.0
      %4896 = vmatprep.subr.mxu0 0.0
      %4897 = vmatpush1.msra.mxu0 0.0
      %4898 = vmatprep.subr.mxu0 0.0
      %4899 = vmatpush1.msra.mxu0 0.0
      %4900 = vmatprep.subr.mxu0 0.0
      %4901 = vmatpush1.msra.mxu0 0.0
      %4902 = vmatprep.subr.mxu0 0.0
      %4903 = vmatpush1.msra.mxu0 0.0
      %4904 = vmatprep.subr.mxu0 0.0
      %4905 = vmatpush1.msra.mxu0 0.0
      %4906 = vmatprep.mubr.f32.mxu0 0.0
      %4907 = vmatmul.mubr.f32.gmra.mrb[0].mxu0 %v4838
      %v4908 = vpop.f32.mrb[0].mxu0
      %v4909 = vadd.f32 0.0, %v4908
      %v4910 = vpop.f32.mrb[0].mxu0
      %4911 = vdwg.mxu0
      %v4912 = vadd.f32 %v4833, %v4909
      %v4913 = vld [vmem:[%s823] sm:$0xf]
      %v4914 = vld [vmem:[%s1341] sm:$0xff]
      %v4916 = vsel %vm868, %v4914, 0
      %v4919 = vsel %vm872, %v4913, 0
      %4921 = vmatprep.subr.mxu0 0.0
      %4922 = vmatpush1.msra.mxu0 %v4919
      %4923 = vmatprep.subr.mxu0 0.0
      %4924 = vmatpush1.msra.mxu0 0.0
      %4925 = vmatprep.subr.mxu0 0.0
      %4926 = vmatpush1.msra.mxu0 0.0
      %4927 = vmatprep.subr.mxu0 0.0
      %4928 = vmatpush1.msra.mxu0 0.0
      %4929 = vmatprep.subr.mxu0 0.0
      %4930 = vmatpush1.msra.mxu0 0.0
      %4931 = vmatprep.subr.mxu0 0.0
      %4932 = vmatpush1.msra.mxu0 0.0
      %4933 = vmatprep.subr.mxu0 0.0
      %4934 = vmatpush1.msra.mxu0 0.0
      %4935 = vmatprep.subr.mxu0 0.0
      %4936 = vmatpush1.msra.mxu0 0.0
      %4937 = vmatprep.subr.mxu0 0.0
      %4938 = vmatpush1.msra.mxu0 0.0
      %4939 = vmatprep.subr.mxu0 0.0
      %4940 = vmatpush1.msra.mxu0 0.0
      %4941 = vmatprep.subr.mxu0 0.0
      %4942 = vmatpush1.msra.mxu0 0.0
      %4943 = vmatprep.subr.mxu0 0.0
      %4944 = vmatpush1.msra.mxu0 0.0
      %4945 = vmatprep.subr.mxu0 0.0
      %4946 = vmatpush1.msra.mxu0 0.0
      %4947 = vmatprep.subr.mxu0 0.0
      %4948 = vmatpush1.msra.mxu0 0.0
      %4949 = vmatprep.subr.mxu0 0.0
      %4950 = vmatpush1.msra.mxu0 0.0
      %4951 = vmatprep.subr.mxu0 0.0
      %4952 = vmatpush1.msra.mxu0 0.0
      %4953 = vmatprep.subr.mxu0 0.0
      %4954 = vmatpush1.msra.mxu0 0.0
      %4955 = vmatprep.subr.mxu0 0.0
      %4956 = vmatpush1.msra.mxu0 0.0
      %4957 = vmatprep.subr.mxu0 0.0
      %4958 = vmatpush1.msra.mxu0 0.0
      %4959 = vmatprep.subr.mxu0 0.0
      %4960 = vmatpush1.msra.mxu0 0.0
      %4961 = vmatprep.subr.mxu0 0.0
      %4962 = vmatpush1.msra.mxu0 0.0
      %4963 = vmatprep.subr.mxu0 0.0
      %4964 = vmatpush1.msra.mxu0 0.0
      %4965 = vmatprep.subr.mxu0 0.0
      %4966 = vmatpush1.msra.mxu0 0.0
      %4967 = vmatprep.subr.mxu0 0.0
      %4968 = vmatpush1.msra.mxu0 0.0
      %4969 = vmatprep.subr.mxu0 0.0
      %4970 = vmatpush1.msra.mxu0 0.0
      %4971 = vmatprep.subr.mxu0 0.0
      %4972 = vmatpush1.msra.mxu0 0.0
      %4973 = vmatprep.subr.mxu0 0.0
      %4974 = vmatpush1.msra.mxu0 0.0
      %4975 = vmatprep.subr.mxu0 0.0
      %4976 = vmatpush1.msra.mxu0 0.0
      %4977 = vmatprep.subr.mxu0 0.0
      %4978 = vmatpush1.msra.mxu0 0.0
      %4979 = vmatprep.subr.mxu0 0.0
      %4980 = vmatpush1.msra.mxu0 0.0
      %4981 = vmatprep.subr.mxu0 0.0
      %4982 = vmatpush1.msra.mxu0 0.0
      %4983 = vmatprep.subr.mxu0 0.0
      %4984 = vmatpush1.msra.mxu0 0.0
      %4985 = vmatprep.mubr.f32.mxu0 0.0
      %4986 = vmatmul.mubr.f32.gmra.mrb[0].mxu0 %v4916
      %v4987 = vpop.f32.mrb[0].mxu0
      %v4988 = vadd.f32 0.0, %v4987
      %v4989 = vpop.f32.mrb[0].mxu0
      %4990 = vdwg.mxu0
      %v4991 = vadd.f32 %v4912, %v4988
      %v4992 = vld [vmem:[%s1420] sm:$0xff]
      %4993 = vrot.lane.b32.xlu0 %v4913, 127
      %v4994 = vpop.permute.xlu0 %4993
      %v4996 = vsel %vm868, %v4992, 0
      %v4998 = vsel %vm872, %v4994, 0
      %5000 = vmatprep.subr.mxu0 0.0
      %5001 = vmatpush1.msra.mxu0 %v4998
      %5002 = vmatprep.subr.mxu0 0.0
      %5003 = vmatpush1.msra.mxu0 0.0
      %5004 = vmatprep.subr.mxu0 0.0
      %5005 = vmatpush1.msra.mxu0 0.0
      %5006 = vmatprep.subr.mxu0 0.0
      %5007 = vmatpush1.msra.mxu0 0.0
      %5008 = vmatprep.subr.mxu0 0.0
      %5009 = vmatpush1.msra.mxu0 0.0
      %5010 = vmatprep.subr.mxu0 0.0
      %5011 = vmatpush1.msra.mxu0 0.0
      %5012 = vmatprep.subr.mxu0 0.0
      %5013 = vmatpush1.msra.mxu0 0.0
      %5014 = vmatprep.subr.mxu0 0.0
      %5015 = vmatpush1.msra.mxu0 0.0
      %5016 = vmatprep.subr.mxu0 0.0
      %5017 = vmatpush1.msra.mxu0 0.0
      %5018 = vmatprep.subr.mxu0 0.0
      %5019 = vmatpush1.msra.mxu0 0.0
      %5020 = vmatprep.subr.mxu0 0.0
      %5021 = vmatpush1.msra.mxu0 0.0
      %5022 = vmatprep.subr.mxu0 0.0
      %5023 = vmatpush1.msra.mxu0 0.0
      %5024 = vmatprep.subr.mxu0 0.0
      %5025 = vmatpush1.msra.mxu0 0.0
      %5026 = vmatprep.subr.mxu0 0.0
      %5027 = vmatpush1.msra.mxu0 0.0
      %5028 = vmatprep.subr.mxu0 0.0
      %5029 = vmatpush1.msra.mxu0 0.0
      %5030 = vmatprep.subr.mxu0 0.0
      %5031 = vmatpush1.msra.mxu0 0.0
      %5032 = vmatprep.subr.mxu0 0.0
      %5033 = vmatpush1.msra.mxu0 0.0
      %5034 = vmatprep.subr.mxu0 0.0
      %5035 = vmatpush1.msra.mxu0 0.0
      %5036 = vmatprep.subr.mxu0 0.0
      %5037 = vmatpush1.msra.mxu0 0.0
      %5038 = vmatprep.subr.mxu0 0.0
      %5039 = vmatpush1.msra.mxu0 0.0
      %5040 = vmatprep.subr.mxu0 0.0
      %5041 = vmatpush1.msra.mxu0 0.0
      %5042 = vmatprep.subr.mxu0 0.0
      %5043 = vmatpush1.msra.mxu0 0.0
      %5044 = vmatprep.subr.mxu0 0.0
      %5045 = vmatpush1.msra.mxu0 0.0
      %5046 = vmatprep.subr.mxu0 0.0
      %5047 = vmatpush1.msra.mxu0 0.0
      %5048 = vmatprep.subr.mxu0 0.0
      %5049 = vmatpush1.msra.mxu0 0.0
      %5050 = vmatprep.subr.mxu0 0.0
      %5051 = vmatpush1.msra.mxu0 0.0
      %5052 = vmatprep.subr.mxu0 0.0
      %5053 = vmatpush1.msra.mxu0 0.0
      %5054 = vmatprep.subr.mxu0 0.0
      %5055 = vmatpush1.msra.mxu0 0.0
      %5056 = vmatprep.subr.mxu0 0.0
      %5057 = vmatpush1.msra.mxu0 0.0
      %5058 = vmatprep.subr.mxu0 0.0
      %5059 = vmatpush1.msra.mxu0 0.0
      %5060 = vmatprep.subr.mxu0 0.0
      %5061 = vmatpush1.msra.mxu0 0.0
      %5062 = vmatprep.subr.mxu0 0.0
      %5063 = vmatpush1.msra.mxu0 0.0
      %5064 = vmatprep.mubr.f32.mxu0 0.0
      %5065 = vmatmul.mubr.f32.gmra.mrb[0].mxu0 %v4996
      %v5066 = vpop.f32.mrb[0].mxu0
      %v5067 = vadd.f32 0.0, %v5066
      %v5068 = vpop.f32.mrb[0].mxu0
      %5069 = vdwg.mxu0
      %v5070 = vadd.f32 %v4991, %v5067
      %v5071 = vld [vmem:[%s1500] sm:$0xff]
      %5072 = vrot.lane.b32.xlu0 %v4913, 126
      %v5073 = vpop.permute.xlu0 %5072
      %v5075 = vsel %vm868, %v5071, 0
      %v5077 = vsel %vm872, %v5073, 0
      %5079 = vmatprep.subr.mxu0 0.0
      %5080 = vmatpush1.msra.mxu0 %v5077
      %5081 = vmatprep.subr.mxu0 0.0
      %5082 = vmatpush1.msra.mxu0 0.0
      %5083 = vmatprep.subr.mxu0 0.0
      %5084 = vmatpush1.msra.mxu0 0.0
      %5085 = vmatprep.subr.mxu0 0.0
      %5086 = vmatpush1.msra.mxu0 0.0
      %5087 = vmatprep.subr.mxu0 0.0
      %5088 = vmatpush1.msra.mxu0 0.0
      %5089 = vmatprep.subr.mxu0 0.0
      %5090 = vmatpush1.msra.mxu0 0.0
      %5091 = vmatprep.subr.mxu0 0.0
      %5092 = vmatpush1.msra.mxu0 0.0
      %5093 = vmatprep.subr.mxu0 0.0
      %5094 = vmatpush1.msra.mxu0 0.0
      %5095 = vmatprep.subr.mxu0 0.0
      %5096 = vmatpush1.msra.mxu0 0.0
      %5097 = vmatprep.subr.mxu0 0.0
      %5098 = vmatpush1.msra.mxu0 0.0
      %5099 = vmatprep.subr.mxu0 0.0
      %5100 = vmatpush1.msra.mxu0 0.0
      %5101 = vmatprep.subr.mxu0 0.0
      %5102 = vmatpush1.msra.mxu0 0.0
      %5103 = vmatprep.subr.mxu0 0.0
      %5104 = vmatpush1.msra.mxu0 0.0
      %5105 = vmatprep.subr.mxu0 0.0
      %5106 = vmatpush1.msra.mxu0 0.0
      %5107 = vmatprep.subr.mxu0 0.0
      %5108 = vmatpush1.msra.mxu0 0.0
      %5109 = vmatprep.subr.mxu0 0.0
      %5110 = vmatpush1.msra.mxu0 0.0
      %5111 = vmatprep.subr.mxu0 0.0
      %5112 = vmatpush1.msra.mxu0 0.0
      %5113 = vmatprep.subr.mxu0 0.0
      %5114 = vmatpush1.msra.mxu0 0.0
      %5115 = vmatprep.subr.mxu0 0.0
      %5116 = vmatpush1.msra.mxu0 0.0
      %5117 = vmatprep.subr.mxu0 0.0
      %5118 = vmatpush1.msra.mxu0 0.0
      %5119 = vmatprep.subr.mxu0 0.0
      %5120 = vmatpush1.msra.mxu0 0.0
      %5121 = vmatprep.subr.mxu0 0.0
      %5122 = vmatpush1.msra.mxu0 0.0
      %5123 = vmatprep.subr.mxu0 0.0
      %5124 = vmatpush1.msra.mxu0 0.0
      %5125 = vmatprep.subr.mxu0 0.0
      %5126 = vmatpush1.msra.mxu0 0.0
      %5127 = vmatprep.subr.mxu0 0.0
      %5128 = vmatpush1.msra.mxu0 0.0
      %5129 = vmatprep.subr.mxu0 0.0
      %5130 = vmatpush1.msra.mxu0 0.0
      %5131 = vmatprep.subr.mxu0 0.0
      %5132 = vmatpush1.msra.mxu0 0.0
      %5133 = vmatprep.subr.mxu0 0.0
      %5134 = vmatpush1.msra.mxu0 0.0
      %5135 = vmatprep.subr.mxu0 0.0
      %5136 = vmatpush1.msra.mxu0 0.0
      %5137 = vmatprep.subr.mxu0 0.0
      %5138 = vmatpush1.msra.mxu0 0.0
      %5139 = vmatprep.subr.mxu0 0.0
      %5140 = vmatpush1.msra.mxu0 0.0
      %5141 = vmatprep.subr.mxu0 0.0
      %5142 = vmatpush1.msra.mxu0 0.0
      %5143 = vmatprep.mubr.f32.mxu0 0.0
      %5144 = vmatmul.mubr.f32.gmra.mrb[0].mxu0 %v5075
      %v5145 = vpop.f32.mrb[0].mxu0
      %v5146 = vadd.f32 0.0, %v5145
      %v5147 = vpop.f32.mrb[0].mxu0
      %5148 = vdwg.mxu0
      %v5149 = vadd.f32 %v5070, %v5146
      %v5150 = vadd.f32 %v5149, %v1583
      %v5151 = vmax.f32 %v5150, 0.0
      %s5152 = scalar_lea.vmem %s858, 40
      %5153 = vst.msk [vmem:[%s5152] sm:$0xff] %vm1587, %v5151
      %v5154 = vld [vmem:[%s811] sm:$0xf]
      %v5155 = vld [vmem:[%s10] sm:$0xff]
      %v5156 = vld [vmem:[%s863] sm:$0xff]
      %5158 = vrot.lane.b32.xlu0 %v5154, 127
      %v5159 = vpop.permute.xlu0 %5158
      %v5161 = vsel %vm868, %v5156, 0
      %v5163 = vsel %vm872, %v5159, 0
      %5165 = vmatprep.subr.mxu0 0.0
      %5166 = vmatpush1.msra.mxu0 %v5163
      %5167 = vmatprep.subr.mxu0 0.0
      %5168 = vmatpush1.msra.mxu0 0.0
      %5169 = vmatprep.subr.mxu0 0.0
      %5170 = vmatpush1.msra.mxu0 0.0
      %5171 = vmatprep.subr.mxu0 0.0
      %5172 = vmatpush1.msra.mxu0 0.0
      %5173 = vmatprep.subr.mxu0 0.0
      %5174 = vmatpush1.msra.mxu0 0.0
      %5175 = vmatprep.subr.mxu0 0.0
      %5176 = vmatpush1.msra.mxu0 0.0
      %5177 = vmatprep.subr.mxu0 0.0
      %5178 = vmatpush1.msra.mxu0 0.0
      %5179 = vmatprep.subr.mxu0 0.0
      %5180 = vmatpush1.msra.mxu0 0.0
      %5181 = vmatprep.subr.mxu0 0.0
      %5182 = vmatpush1.msra.mxu0 0.0
      %5183 = vmatprep.subr.mxu0 0.0
      %5184 = vmatpush1.msra.mxu0 0.0
      %5185 = vmatprep.subr.mxu0 0.0
      %5186 = vmatpush1.msra.mxu0 0.0
      %5187 = vmatprep.subr.mxu0 0.0
      %5188 = vmatpush1.msra.mxu0 0.0
      %5189 = vmatprep.subr.mxu0 0.0
      %5190 = vmatpush1.msra.mxu0 0.0
      %5191 = vmatprep.subr.mxu0 0.0
      %5192 = vmatpush1.msra.mxu0 0.0
      %5193 = vmatprep.subr.mxu0 0.0
      %5194 = vmatpush1.msra.mxu0 0.0
      %5195 = vmatprep.subr.mxu0 0.0
      %5196 = vmatpush1.msra.mxu0 0.0
      %5197 = vmatprep.subr.mxu0 0.0
      %5198 = vmatpush1.msra.mxu0 0.0
      %5199 = vmatprep.subr.mxu0 0.0
      %5200 = vmatpush1.msra.mxu0 0.0
      %5201 = vmatprep.subr.mxu0 0.0
      %5202 = vmatpush1.msra.mxu0 0.0
      %5203 = vmatprep.subr.mxu0 0.0
      %5204 = vmatpush1.msra.mxu0 0.0
      %5205 = vmatprep.subr.mxu0 0.0
      %5206 = vmatpush1.msra.mxu0 0.0
      %5207 = vmatprep.subr.mxu0 0.0
      %5208 = vmatpush1.msra.mxu0 0.0
      %5209 = vmatprep.subr.mxu0 0.0
      %5210 = vmatpush1.msra.mxu0 0.0
      %5211 = vmatprep.subr.mxu0 0.0
      %5212 = vmatpush1.msra.mxu0 0.0
      %5213 = vmatprep.subr.mxu0 0.0
      %5214 = vmatpush1.msra.mxu0 0.0
      %5215 = vmatprep.subr.mxu0 0.0
      %5216 = vmatpush1.msra.mxu0 0.0
      %5217 = vmatprep.subr.mxu0 0.0
      %5218 = vmatpush1.msra.mxu0 0.0
      %5219 = vmatprep.subr.mxu0 0.0
      %5220 = vmatpush1.msra.mxu0 0.0
      %5221 = vmatprep.subr.mxu0 0.0
      %5222 = vmatpush1.msra.mxu0 0.0
      %5223 = vmatprep.subr.mxu0 0.0
      %5224 = vmatpush1.msra.mxu0 0.0
      %5225 = vmatprep.subr.mxu0 0.0
      %5226 = vmatpush1.msra.mxu0 0.0
      %5227 = vmatprep.subr.mxu0 0.0
      %5228 = vmatpush1.msra.mxu0 0.0
      %5229 = vmatprep.mubr.f32.mxu0 0.0
      %5230 = vmatmul.mubr.f32.gmra.mrb[0].mxu0 %v5161
      %v5231 = vpop.f32.mrb[0].mxu0
      %v5232 = vadd.f32 0.0, %v5231
      %v5233 = vpop.f32.mrb[0].mxu0
      %5234 = vdwg.mxu0
      %v5236 = vsel %vm868, %v5155, 0
      %v5238 = vsel %vm872, %v5154, 0
      %5240 = vmatprep.subr.mxu0 0.0
      %5241 = vmatpush1.msra.mxu0 %v5238
      %5242 = vmatprep.subr.mxu0 0.0
      %5243 = vmatpush1.msra.mxu0 0.0
      %5244 = vmatprep.subr.mxu0 0.0
      %5245 = vmatpush1.msra.mxu0 0.0
      %5246 = vmatprep.subr.mxu0 0.0
      %5247 = vmatpush1.msra.mxu0 0.0
      %5248 = vmatprep.subr.mxu0 0.0
      %5249 = vmatpush1.msra.mxu0 0.0
      %5250 = vmatprep.subr.mxu0 0.0
      %5251 = vmatpush1.msra.mxu0 0.0
      %5252 = vmatprep.subr.mxu0 0.0
      %5253 = vmatpush1.msra.mxu0 0.0
      %5254 = vmatprep.subr.mxu0 0.0
      %5255 = vmatpush1.msra.mxu0 0.0
      %5256 = vmatprep.subr.mxu0 0.0
      %5257 = vmatpush1.msra.mxu0 0.0
      %5258 = vmatprep.subr.mxu0 0.0
      %5259 = vmatpush1.msra.mxu0 0.0
      %5260 = vmatprep.subr.mxu0 0.0
      %5261 = vmatpush1.msra.mxu0 0.0
      %5262 = vmatprep.subr.mxu0 0.0
      %5263 = vmatpush1.msra.mxu0 0.0
      %5264 = vmatprep.subr.mxu0 0.0
      %5265 = vmatpush1.msra.mxu0 0.0
      %5266 = vmatprep.subr.mxu0 0.0
      %5267 = vmatpush1.msra.mxu0 0.0
      %5268 = vmatprep.subr.mxu0 0.0
      %5269 = vmatpush1.msra.mxu0 0.0
      %5270 = vmatprep.subr.mxu0 0.0
      %5271 = vmatpush1.msra.mxu0 0.0
      %5272 = vmatprep.subr.mxu0 0.0
      %5273 = vmatpush1.msra.mxu0 0.0
      %5274 = vmatprep.subr.mxu0 0.0
      %5275 = vmatpush1.msra.mxu0 0.0
      %5276 = vmatprep.subr.mxu0 0.0
      %5277 = vmatpush1.msra.mxu0 0.0
      %5278 = vmatprep.subr.mxu0 0.0
      %5279 = vmatpush1.msra.mxu0 0.0
      %5280 = vmatprep.subr.mxu0 0.0
      %5281 = vmatpush1.msra.mxu0 0.0
      %5282 = vmatprep.subr.mxu0 0.0
      %5283 = vmatpush1.msra.mxu0 0.0
      %5284 = vmatprep.subr.mxu0 0.0
      %5285 = vmatpush1.msra.mxu0 0.0
      %5286 = vmatprep.subr.mxu0 0.0
      %5287 = vmatpush1.msra.mxu0 0.0
      %5288 = vmatprep.subr.mxu0 0.0
      %5289 = vmatpush1.msra.mxu0 0.0
      %5290 = vmatprep.subr.mxu0 0.0
      %5291 = vmatpush1.msra.mxu0 0.0
      %5292 = vmatprep.subr.mxu0 0.0
      %5293 = vmatpush1.msra.mxu0 0.0
      %5294 = vmatprep.subr.mxu0 0.0
      %5295 = vmatpush1.msra.mxu0 0.0
      %5296 = vmatprep.subr.mxu0 0.0
      %5297 = vmatpush1.msra.mxu0 0.0
      %5298 = vmatprep.subr.mxu0 0.0
      %5299 = vmatpush1.msra.mxu0 0.0
      %5300 = vmatprep.subr.mxu0 0.0
      %5301 = vmatpush1.msra.mxu0 0.0
      %5302 = vmatprep.subr.mxu0 0.0
      %5303 = vmatpush1.msra.mxu0 0.0
      %5304 = vmatprep.mubr.f32.mxu0 0.0
      %5305 = vmatmul.mubr.f32.gmra.mrb[0].mxu0 %v5236
      %v5306 = vpop.f32.mrb[0].mxu0
      %v5307 = vadd.f32 %v5232, %v5306
      %v5308 = vpop.f32.mrb[0].mxu0
      %5309 = vdwg.mxu0
      %v5310 = vld [vmem:[%s1020] sm:$0xff]
      %5311 = vrot.lane.b32.xlu0 %v5154, 126
      %v5312 = vpop.permute.xlu0 %5311
      %v5314 = vsel %vm868, %v5310, 0
      %v5316 = vsel %vm872, %v5312, 0
      %5318 = vmatprep.subr.mxu0 0.0
      %5319 = vmatpush1.msra.mxu0 %v5316
      %5320 = vmatprep.subr.mxu0 0.0
      %5321 = vmatpush1.msra.mxu0 0.0
      %5322 = vmatprep.subr.mxu0 0.0
      %5323 = vmatpush1.msra.mxu0 0.0
      %5324 = vmatprep.subr.mxu0 0.0
      %5325 = vmatpush1.msra.mxu0 0.0
      %5326 = vmatprep.subr.mxu0 0.0
      %5327 = vmatpush1.msra.mxu0 0.0
      %5328 = vmatprep.subr.mxu0 0.0
      %5329 = vmatpush1.msra.mxu0 0.0
      %5330 = vmatprep.subr.mxu0 0.0
      %5331 = vmatpush1.msra.mxu0 0.0
      %5332 = vmatprep.subr.mxu0 0.0
      %5333 = vmatpush1.msra.mxu0 0.0
      %5334 = vmatprep.subr.mxu0 0.0
      %5335 = vmatpush1.msra.mxu0 0.0
      %5336 = vmatprep.subr.mxu0 0.0
      %5337 = vmatpush1.msra.mxu0 0.0
      %5338 = vmatprep.subr.mxu0 0.0
      %5339 = vmatpush1.msra.mxu0 0.0
      %5340 = vmatprep.subr.mxu0 0.0
      %5341 = vmatpush1.msra.mxu0 0.0
      %5342 = vmatprep.subr.mxu0 0.0
      %5343 = vmatpush1.msra.mxu0 0.0
      %5344 = vmatprep.subr.mxu0 0.0
      %5345 = vmatpush1.msra.mxu0 0.0
      %5346 = vmatprep.subr.mxu0 0.0
      %5347 = vmatpush1.msra.mxu0 0.0
      %5348 = vmatprep.subr.mxu0 0.0
      %5349 = vmatpush1.msra.mxu0 0.0
      %5350 = vmatprep.subr.mxu0 0.0
      %5351 = vmatpush1.msra.mxu0 0.0
      %5352 = vmatprep.subr.mxu0 0.0
      %5353 = vmatpush1.msra.mxu0 0.0
      %5354 = vmatprep.subr.mxu0 0.0
      %5355 = vmatpush1.msra.mxu0 0.0
      %5356 = vmatprep.subr.mxu0 0.0
      %5357 = vmatpush1.msra.mxu0 0.0
      %5358 = vmatprep.subr.mxu0 0.0
      %5359 = vmatpush1.msra.mxu0 0.0
      %5360 = vmatprep.subr.mxu0 0.0
      %5361 = vmatpush1.msra.mxu0 0.0
      %5362 = vmatprep.subr.mxu0 0.0
      %5363 = vmatpush1.msra.mxu0 0.0
      %5364 = vmatprep.subr.mxu0 0.0
      %5365 = vmatpush1.msra.mxu0 0.0
      %5366 = vmatprep.subr.mxu0 0.0
      %5367 = vmatpush1.msra.mxu0 0.0
      %5368 = vmatprep.subr.mxu0 0.0
      %5369 = vmatpush1.msra.mxu0 0.0
      %5370 = vmatprep.subr.mxu0 0.0
      %5371 = vmatpush1.msra.mxu0 0.0
      %5372 = vmatprep.subr.mxu0 0.0
      %5373 = vmatpush1.msra.mxu0 0.0
      %5374 = vmatprep.subr.mxu0 0.0
      %5375 = vmatpush1.msra.mxu0 0.0
      %5376 = vmatprep.subr.mxu0 0.0
      %5377 = vmatpush1.msra.mxu0 0.0
      %5378 = vmatprep.subr.mxu0 0.0
      %5379 = vmatpush1.msra.mxu0 0.0
      %5380 = vmatprep.subr.mxu0 0.0
      %5381 = vmatpush1.msra.mxu0 0.0
      %5382 = vmatprep.mubr.f32.mxu0 0.0
      %5383 = vmatmul.mubr.f32.gmra.mrb[0].mxu0 %v5314
      %v5384 = vpop.f32.mrb[0].mxu0
      %v5385 = vadd.f32 0.0, %v5384
      %v5386 = vpop.f32.mrb[0].mxu0
      %5387 = vdwg.mxu0
      %v5388 = vadd.f32 %v5307, %v5385
      %v5389 = vld [vmem:[%s823] sm:$0xf]
      %v5390 = vld [vmem:[%s1101] sm:$0xff]
      %v5392 = vsel %vm868, %v5390, 0
      %v5395 = vsel %vm872, %v5389, 0
      %5397 = vmatprep.subr.mxu0 0.0
      %5398 = vmatpush1.msra.mxu0 %v5395
      %5399 = vmatprep.subr.mxu0 0.0
      %5400 = vmatpush1.msra.mxu0 0.0
      %5401 = vmatprep.subr.mxu0 0.0
      %5402 = vmatpush1.msra.mxu0 0.0
      %5403 = vmatprep.subr.mxu0 0.0
      %5404 = vmatpush1.msra.mxu0 0.0
      %5405 = vmatprep.subr.mxu0 0.0
      %5406 = vmatpush1.msra.mxu0 0.0
      %5407 = vmatprep.subr.mxu0 0.0
      %5408 = vmatpush1.msra.mxu0 0.0
      %5409 = vmatprep.subr.mxu0 0.0
      %5410 = vmatpush1.msra.mxu0 0.0
      %5411 = vmatprep.subr.mxu0 0.0
      %5412 = vmatpush1.msra.mxu0 0.0
      %5413 = vmatprep.subr.mxu0 0.0
      %5414 = vmatpush1.msra.mxu0 0.0
      %5415 = vmatprep.subr.mxu0 0.0
      %5416 = vmatpush1.msra.mxu0 0.0
      %5417 = vmatprep.subr.mxu0 0.0
      %5418 = vmatpush1.msra.mxu0 0.0
      %5419 = vmatprep.subr.mxu0 0.0
      %5420 = vmatpush1.msra.mxu0 0.0
      %5421 = vmatprep.subr.mxu0 0.0
      %5422 = vmatpush1.msra.mxu0 0.0
      %5423 = vmatprep.subr.mxu0 0.0
      %5424 = vmatpush1.msra.mxu0 0.0
      %5425 = vmatprep.subr.mxu0 0.0
      %5426 = vmatpush1.msra.mxu0 0.0
      %5427 = vmatprep.subr.mxu0 0.0
      %5428 = vmatpush1.msra.mxu0 0.0
      %5429 = vmatprep.subr.mxu0 0.0
      %5430 = vmatpush1.msra.mxu0 0.0
      %5431 = vmatprep.subr.mxu0 0.0
      %5432 = vmatpush1.msra.mxu0 0.0
      %5433 = vmatprep.subr.mxu0 0.0
      %5434 = vmatpush1.msra.mxu0 0.0
      %5435 = vmatprep.subr.mxu0 0.0
      %5436 = vmatpush1.msra.mxu0 0.0
      %5437 = vmatprep.subr.mxu0 0.0
      %5438 = vmatpush1.msra.mxu0 0.0
      %5439 = vmatprep.subr.mxu0 0.0
      %5440 = vmatpush1.msra.mxu0 0.0
      %5441 = vmatprep.subr.mxu0 0.0
      %5442 = vmatpush1.msra.mxu0 0.0
      %5443 = vmatprep.subr.mxu0 0.0
      %5444 = vmatpush1.msra.mxu0 0.0
      %5445 = vmatprep.subr.mxu0 0.0
      %5446 = vmatpush1.msra.mxu0 0.0
      %5447 = vmatprep.subr.mxu0 0.0
      %5448 = vmatpush1.msra.mxu0 0.0
      %5449 = vmatprep.subr.mxu0 0.0
      %5450 = vmatpush1.msra.mxu0 0.0
      %5451 = vmatprep.subr.mxu0 0.0
      %5452 = vmatpush1.msra.mxu0 0.0
      %5453 = vmatprep.subr.mxu0 0.0
      %5454 = vmatpush1.msra.mxu0 0.0
      %5455 = vmatprep.subr.mxu0 0.0
      %5456 = vmatpush1.msra.mxu0 0.0
      %5457 = vmatprep.subr.mxu0 0.0
      %5458 = vmatpush1.msra.mxu0 0.0
      %5459 = vmatprep.subr.mxu0 0.0
      %5460 = vmatpush1.msra.mxu0 0.0
      %5461 = vmatprep.mubr.f32.mxu0 0.0
      %5462 = vmatmul.mubr.f32.gmra.mrb[0].mxu0 %v5392
      %v5463 = vpop.f32.mrb[0].mxu0
      %v5464 = vadd.f32 0.0, %v5463
      %v5465 = vpop.f32.mrb[0].mxu0
      %5466 = vdwg.mxu0
      %v5467 = vadd.f32 %v5388, %v5464
      %v5468 = vld [vmem:[%s1180] sm:$0xff]
      %5469 = vrot.lane.b32.xlu0 %v5389, 127
      %v5470 = vpop.permute.xlu0 %5469
      %v5472 = vsel %vm868, %v5468, 0
      %v5474 = vsel %vm872, %v5470, 0
      %5476 = vmatprep.subr.mxu0 0.0
      %5477 = vmatpush1.msra.mxu0 %v5474
      %5478 = vmatprep.subr.mxu0 0.0
      %5479 = vmatpush1.msra.mxu0 0.0
      %5480 = vmatprep.subr.mxu0 0.0
      %5481 = vmatpush1.msra.mxu0 0.0
      %5482 = vmatprep.subr.mxu0 0.0
      %5483 = vmatpush1.msra.mxu0 0.0
      %5484 = vmatprep.subr.mxu0 0.0
      %5485 = vmatpush1.msra.mxu0 0.0
      %5486 = vmatprep.subr.mxu0 0.0
      %5487 = vmatpush1.msra.mxu0 0.0
      %5488 = vmatprep.subr.mxu0 0.0
      %5489 = vmatpush1.msra.mxu0 0.0
      %5490 = vmatprep.subr.mxu0 0.0
      %5491 = vmatpush1.msra.mxu0 0.0
      %5492 = vmatprep.subr.mxu0 0.0
      %5493 = vmatpush1.msra.mxu0 0.0
      %5494 = vmatprep.subr.mxu0 0.0
      %5495 = vmatpush1.msra.mxu0 0.0
      %5496 = vmatprep.subr.mxu0 0.0
      %5497 = vmatpush1.msra.mxu0 0.0
      %5498 = vmatprep.subr.mxu0 0.0
      %5499 = vmatpush1.msra.mxu0 0.0
      %5500 = vmatprep.subr.mxu0 0.0
      %5501 = vmatpush1.msra.mxu0 0.0
      %5502 = vmatprep.subr.mxu0 0.0
      %5503 = vmatpush1.msra.mxu0 0.0
      %5504 = vmatprep.subr.mxu0 0.0
      %5505 = vmatpush1.msra.mxu0 0.0
      %5506 = vmatprep.subr.mxu0 0.0
      %5507 = vmatpush1.msra.mxu0 0.0
      %5508 = vmatprep.subr.mxu0 0.0
      %5509 = vmatpush1.msra.mxu0 0.0
      %5510 = vmatprep.subr.mxu0 0.0
      %5511 = vmatpush1.msra.mxu0 0.0
      %5512 = vmatprep.subr.mxu0 0.0
      %5513 = vmatpush1.msra.mxu0 0.0
      %5514 = vmatprep.subr.mxu0 0.0
      %5515 = vmatpush1.msra.mxu0 0.0
      %5516 = vmatprep.subr.mxu0 0.0
      %5517 = vmatpush1.msra.mxu0 0.0
      %5518 = vmatprep.subr.mxu0 0.0
      %5519 = vmatpush1.msra.mxu0 0.0
      %5520 = vmatprep.subr.mxu0 0.0
      %5521 = vmatpush1.msra.mxu0 0.0
      %5522 = vmatprep.subr.mxu0 0.0
      %5523 = vmatpush1.msra.mxu0 0.0
      %5524 = vmatprep.subr.mxu0 0.0
      %5525 = vmatpush1.msra.mxu0 0.0
      %5526 = vmatprep.subr.mxu0 0.0
      %5527 = vmatpush1.msra.mxu0 0.0
      %5528 = vmatprep.subr.mxu0 0.0
      %5529 = vmatpush1.msra.mxu0 0.0
      %5530 = vmatprep.subr.mxu0 0.0
      %5531 = vmatpush1.msra.mxu0 0.0
      %5532 = vmatprep.subr.mxu0 0.0
      %5533 = vmatpush1.msra.mxu0 0.0
      %5534 = vmatprep.subr.mxu0 0.0
      %5535 = vmatpush1.msra.mxu0 0.0
      %5536 = vmatprep.subr.mxu0 0.0
      %5537 = vmatpush1.msra.mxu0 0.0
      %5538 = vmatprep.subr.mxu0 0.0
      %5539 = vmatpush1.msra.mxu0 0.0
      %5540 = vmatprep.mubr.f32.mxu0 0.0
      %5541 = vmatmul.mubr.f32.gmra.mrb[0].mxu0 %v5472
      %v5542 = vpop.f32.mrb[0].mxu0
      %v5543 = vadd.f32 0.0, %v5542
      %v5544 = vpop.f32.mrb[0].mxu0
      %5545 = vdwg.mxu0
      %v5546 = vadd.f32 %v5467, %v5543
      %v5547 = vld [vmem:[%s1260] sm:$0xff]
      %5548 = vrot.lane.b32.xlu0 %v5389, 126
      %v5549 = vpop.permute.xlu0 %5548
      %v5551 = vsel %vm868, %v5547, 0
      %v5553 = vsel %vm872, %v5549, 0
      %5555 = vmatprep.subr.mxu0 0.0
      %5556 = vmatpush1.msra.mxu0 %v5553
      %5557 = vmatprep.subr.mxu0 0.0
      %5558 = vmatpush1.msra.mxu0 0.0
      %5559 = vmatprep.subr.mxu0 0.0
      %5560 = vmatpush1.msra.mxu0 0.0
      %5561 = vmatprep.subr.mxu0 0.0
      %5562 = vmatpush1.msra.mxu0 0.0
      %5563 = vmatprep.subr.mxu0 0.0
      %5564 = vmatpush1.msra.mxu0 0.0
      %5565 = vmatprep.subr.mxu0 0.0
      %5566 = vmatpush1.msra.mxu0 0.0
      %5567 = vmatprep.subr.mxu0 0.0
      %5568 = vmatpush1.msra.mxu0 0.0
      %5569 = vmatprep.subr.mxu0 0.0
      %5570 = vmatpush1.msra.mxu0 0.0
      %5571 = vmatprep.subr.mxu0 0.0
      %5572 = vmatpush1.msra.mxu0 0.0
      %5573 = vmatprep.subr.mxu0 0.0
      %5574 = vmatpush1.msra.mxu0 0.0
      %5575 = vmatprep.subr.mxu0 0.0
      %5576 = vmatpush1.msra.mxu0 0.0
      %5577 = vmatprep.subr.mxu0 0.0
      %5578 = vmatpush1.msra.mxu0 0.0
      %5579 = vmatprep.subr.mxu0 0.0
      %5580 = vmatpush1.msra.mxu0 0.0
      %5581 = vmatprep.subr.mxu0 0.0
      %5582 = vmatpush1.msra.mxu0 0.0
      %5583 = vmatprep.subr.mxu0 0.0
      %5584 = vmatpush1.msra.mxu0 0.0
      %5585 = vmatprep.subr.mxu0 0.0
      %5586 = vmatpush1.msra.mxu0 0.0
      %5587 = vmatprep.subr.mxu0 0.0
      %5588 = vmatpush1.msra.mxu0 0.0
      %5589 = vmatprep.subr.mxu0 0.0
      %5590 = vmatpush1.msra.mxu0 0.0
      %5591 = vmatprep.subr.mxu0 0.0
      %5592 = vmatpush1.msra.mxu0 0.0
      %5593 = vmatprep.subr.mxu0 0.0
      %5594 = vmatpush1.msra.mxu0 0.0
      %5595 = vmatprep.subr.mxu0 0.0
      %5596 = vmatpush1.msra.mxu0 0.0
      %5597 = vmatprep.subr.mxu0 0.0
      %5598 = vmatpush1.msra.mxu0 0.0
      %5599 = vmatprep.subr.mxu0 0.0
      %5600 = vmatpush1.msra.mxu0 0.0
      %5601 = vmatprep.subr.mxu0 0.0
      %5602 = vmatpush1.msra.mxu0 0.0
      %5603 = vmatprep.subr.mxu0 0.0
      %5604 = vmatpush1.msra.mxu0 0.0
      %5605 = vmatprep.subr.mxu0 0.0
      %5606 = vmatpush1.msra.mxu0 0.0
      %5607 = vmatprep.subr.mxu0 0.0
      %5608 = vmatpush1.msra.mxu0 0.0
      %5609 = vmatprep.subr.mxu0 0.0
      %5610 = vmatpush1.msra.mxu0 0.0
      %5611 = vmatprep.subr.mxu0 0.0
      %5612 = vmatpush1.msra.mxu0 0.0
      %5613 = vmatprep.subr.mxu0 0.0
      %5614 = vmatpush1.msra.mxu0 0.0
      %5615 = vmatprep.subr.mxu0 0.0
      %5616 = vmatpush1.msra.mxu0 0.0
      %5617 = vmatprep.subr.mxu0 0.0
      %5618 = vmatpush1.msra.mxu0 0.0
      %5619 = vmatprep.mubr.f32.mxu0 0.0
      %5620 = vmatmul.mubr.f32.gmra.mrb[0].mxu0 %v5551
      %v5621 = vpop.f32.mrb[0].mxu0
      %v5622 = vadd.f32 0.0, %v5621
      %v5623 = vpop.f32.mrb[0].mxu0
      %5624 = vdwg.mxu0
      %v5625 = vadd.f32 %v5546, %v5622
      %v5626 = vld [vmem:[%s835] sm:$0xf]
      %v5627 = vld [vmem:[%s1341] sm:$0xff]
      %v5629 = vsel %vm868, %v5627, 0
      %v5632 = vsel %vm872, %v5626, 0
      %5634 = vmatprep.subr.mxu0 0.0
      %5635 = vmatpush1.msra.mxu0 %v5632
      %5636 = vmatprep.subr.mxu0 0.0
      %5637 = vmatpush1.msra.mxu0 0.0
      %5638 = vmatprep.subr.mxu0 0.0
      %5639 = vmatpush1.msra.mxu0 0.0
      %5640 = vmatprep.subr.mxu0 0.0
      %5641 = vmatpush1.msra.mxu0 0.0
      %5642 = vmatprep.subr.mxu0 0.0
      %5643 = vmatpush1.msra.mxu0 0.0
      %5644 = vmatprep.subr.mxu0 0.0
      %5645 = vmatpush1.msra.mxu0 0.0
      %5646 = vmatprep.subr.mxu0 0.0
      %5647 = vmatpush1.msra.mxu0 0.0
      %5648 = vmatprep.subr.mxu0 0.0
      %5649 = vmatpush1.msra.mxu0 0.0
      %5650 = vmatprep.subr.mxu0 0.0
      %5651 = vmatpush1.msra.mxu0 0.0
      %5652 = vmatprep.subr.mxu0 0.0
      %5653 = vmatpush1.msra.mxu0 0.0
      %5654 = vmatprep.subr.mxu0 0.0
      %5655 = vmatpush1.msra.mxu0 0.0
      %5656 = vmatprep.subr.mxu0 0.0
      %5657 = vmatpush1.msra.mxu0 0.0
      %5658 = vmatprep.subr.mxu0 0.0
      %5659 = vmatpush1.msra.mxu0 0.0
      %5660 = vmatprep.subr.mxu0 0.0
      %5661 = vmatpush1.msra.mxu0 0.0
      %5662 = vmatprep.subr.mxu0 0.0
      %5663 = vmatpush1.msra.mxu0 0.0
      %5664 = vmatprep.subr.mxu0 0.0
      %5665 = vmatpush1.msra.mxu0 0.0
      %5666 = vmatprep.subr.mxu0 0.0
      %5667 = vmatpush1.msra.mxu0 0.0
      %5668 = vmatprep.subr.mxu0 0.0
      %5669 = vmatpush1.msra.mxu0 0.0
      %5670 = vmatprep.subr.mxu0 0.0
      %5671 = vmatpush1.msra.mxu0 0.0
      %5672 = vmatprep.subr.mxu0 0.0
      %5673 = vmatpush1.msra.mxu0 0.0
      %5674 = vmatprep.subr.mxu0 0.0
      %5675 = vmatpush1.msra.mxu0 0.0
      %5676 = vmatprep.subr.mxu0 0.0
      %5677 = vmatpush1.msra.mxu0 0.0
      %5678 = vmatprep.subr.mxu0 0.0
      %5679 = vmatpush1.msra.mxu0 0.0
      %5680 = vmatprep.subr.mxu0 0.0
      %5681 = vmatpush1.msra.mxu0 0.0
      %5682 = vmatprep.subr.mxu0 0.0
      %5683 = vmatpush1.msra.mxu0 0.0
      %5684 = vmatprep.subr.mxu0 0.0
      %5685 = vmatpush1.msra.mxu0 0.0
      %5686 = vmatprep.subr.mxu0 0.0
      %5687 = vmatpush1.msra.mxu0 0.0
      %5688 = vmatprep.subr.mxu0 0.0
      %5689 = vmatpush1.msra.mxu0 0.0
      %5690 = vmatprep.subr.mxu0 0.0
      %5691 = vmatpush1.msra.mxu0 0.0
      %5692 = vmatprep.subr.mxu0 0.0
      %5693 = vmatpush1.msra.mxu0 0.0
      %5694 = vmatprep.subr.mxu0 0.0
      %5695 = vmatpush1.msra.mxu0 0.0
      %5696 = vmatprep.subr.mxu0 0.0
      %5697 = vmatpush1.msra.mxu0 0.0
      %5698 = vmatprep.mubr.f32.mxu0 0.0
      %5699 = vmatmul.mubr.f32.gmra.mrb[0].mxu0 %v5629
      %v5700 = vpop.f32.mrb[0].mxu0
      %v5701 = vadd.f32 0.0, %v5700
      %v5702 = vpop.f32.mrb[0].mxu0
      %5703 = vdwg.mxu0
      %v5704 = vadd.f32 %v5625, %v5701
      %v5705 = vld [vmem:[%s1420] sm:$0xff]
      %5706 = vrot.lane.b32.xlu0 %v5626, 127
      %v5707 = vpop.permute.xlu0 %5706
      %v5709 = vsel %vm868, %v5705, 0
      %v5711 = vsel %vm872, %v5707, 0
      %5713 = vmatprep.subr.mxu0 0.0
      %5714 = vmatpush1.msra.mxu0 %v5711
      %5715 = vmatprep.subr.mxu0 0.0
      %5716 = vmatpush1.msra.mxu0 0.0
      %5717 = vmatprep.subr.mxu0 0.0
      %5718 = vmatpush1.msra.mxu0 0.0
      %5719 = vmatprep.subr.mxu0 0.0
      %5720 = vmatpush1.msra.mxu0 0.0
      %5721 = vmatprep.subr.mxu0 0.0
      %5722 = vmatpush1.msra.mxu0 0.0
      %5723 = vmatprep.subr.mxu0 0.0
      %5724 = vmatpush1.msra.mxu0 0.0
      %5725 = vmatprep.subr.mxu0 0.0
      %5726 = vmatpush1.msra.mxu0 0.0
      %5727 = vmatprep.subr.mxu0 0.0
      %5728 = vmatpush1.msra.mxu0 0.0
      %5729 = vmatprep.subr.mxu0 0.0
      %5730 = vmatpush1.msra.mxu0 0.0
      %5731 = vmatprep.subr.mxu0 0.0
      %5732 = vmatpush1.msra.mxu0 0.0
      %5733 = vmatprep.subr.mxu0 0.0
      %5734 = vmatpush1.msra.mxu0 0.0
      %5735 = vmatprep.subr.mxu0 0.0
      %5736 = vmatpush1.msra.mxu0 0.0
      %5737 = vmatprep.subr.mxu0 0.0
      %5738 = vmatpush1.msra.mxu0 0.0
      %5739 = vmatprep.subr.mxu0 0.0
      %5740 = vmatpush1.msra.mxu0 0.0
      %5741 = vmatprep.subr.mxu0 0.0
      %5742 = vmatpush1.msra.mxu0 0.0
      %5743 = vmatprep.subr.mxu0 0.0
      %5744 = vmatpush1.msra.mxu0 0.0
      %5745 = vmatprep.subr.mxu0 0.0
      %5746 = vmatpush1.msra.mxu0 0.0
      %5747 = vmatprep.subr.mxu0 0.0
      %5748 = vmatpush1.msra.mxu0 0.0
      %5749 = vmatprep.subr.mxu0 0.0
      %5750 = vmatpush1.msra.mxu0 0.0
      %5751 = vmatprep.subr.mxu0 0.0
      %5752 = vmatpush1.msra.mxu0 0.0
      %5753 = vmatprep.subr.mxu0 0.0
      %5754 = vmatpush1.msra.mxu0 0.0
      %5755 = vmatprep.subr.mxu0 0.0
      %5756 = vmatpush1.msra.mxu0 0.0
      %5757 = vmatprep.subr.mxu0 0.0
      %5758 = vmatpush1.msra.mxu0 0.0
      %5759 = vmatprep.subr.mxu0 0.0
      %5760 = vmatpush1.msra.mxu0 0.0
      %5761 = vmatprep.subr.mxu0 0.0
      %5762 = vmatpush1.msra.mxu0 0.0
      %5763 = vmatprep.subr.mxu0 0.0
      %5764 = vmatpush1.msra.mxu0 0.0
      %5765 = vmatprep.subr.mxu0 0.0
      %5766 = vmatpush1.msra.mxu0 0.0
      %5767 = vmatprep.subr.mxu0 0.0
      %5768 = vmatpush1.msra.mxu0 0.0
      %5769 = vmatprep.subr.mxu0 0.0
      %5770 = vmatpush1.msra.mxu0 0.0
      %5771 = vmatprep.subr.mxu0 0.0
      %5772 = vmatpush1.msra.mxu0 0.0
      %5773 = vmatprep.subr.mxu0 0.0
      %5774 = vmatpush1.msra.mxu0 0.0
      %5775 = vmatprep.subr.mxu0 0.0
      %5776 = vmatpush1.msra.mxu0 0.0
      %5777 = vmatprep.mubr.f32.mxu0 0.0
      %5778 = vmatmul.mubr.f32.gmra.mrb[0].mxu0 %v5709
      %v5779 = vpop.f32.mrb[0].mxu0
      %v5780 = vadd.f32 0.0, %v5779
      %v5781 = vpop.f32.mrb[0].mxu0
      %5782 = vdwg.mxu0
      %v5783 = vadd.f32 %v5704, %v5780
      %v5784 = vld [vmem:[%s1500] sm:$0xff]
      %5785 = vrot.lane.b32.xlu0 %v5626, 126
      %v5786 = vpop.permute.xlu0 %5785
      %v5788 = vsel %vm868, %v5784, 0
      %v5790 = vsel %vm872, %v5786, 0
      %5792 = vmatprep.subr.mxu0 0.0
      %5793 = vmatpush1.msra.mxu0 %v5790
      %5794 = vmatprep.subr.mxu0 0.0
      %5795 = vmatpush1.msra.mxu0 0.0
      %5796 = vmatprep.subr.mxu0 0.0
      %5797 = vmatpush1.msra.mxu0 0.0
      %5798 = vmatprep.subr.mxu0 0.0
      %5799 = vmatpush1.msra.mxu0 0.0
      %5800 = vmatprep.subr.mxu0 0.0
      %5801 = vmatpush1.msra.mxu0 0.0
      %5802 = vmatprep.subr.mxu0 0.0
      %5803 = vmatpush1.msra.mxu0 0.0
      %5804 = vmatprep.subr.mxu0 0.0
      %5805 = vmatpush1.msra.mxu0 0.0
      %5806 = vmatprep.subr.mxu0 0.0
      %5807 = vmatpush1.msra.mxu0 0.0
      %5808 = vmatprep.subr.mxu0 0.0
      %5809 = vmatpush1.msra.mxu0 0.0
      %5810 = vmatprep.subr.mxu0 0.0
      %5811 = vmatpush1.msra.mxu0 0.0
      %5812 = vmatprep.subr.mxu0 0.0
      %5813 = vmatpush1.msra.mxu0 0.0
      %5814 = vmatprep.subr.mxu0 0.0
      %5815 = vmatpush1.msra.mxu0 0.0
      %5816 = vmatprep.subr.mxu0 0.0
      %5817 = vmatpush1.msra.mxu0 0.0
      %5818 = vmatprep.subr.mxu0 0.0
      %5819 = vmatpush1.msra.mxu0 0.0
      %5820 = vmatprep.subr.mxu0 0.0
      %5821 = vmatpush1.msra.mxu0 0.0
      %5822 = vmatprep.subr.mxu0 0.0
      %5823 = vmatpush1.msra.mxu0 0.0
      %5824 = vmatprep.subr.mxu0 0.0
      %5825 = vmatpush1.msra.mxu0 0.0
      %5826 = vmatprep.subr.mxu0 0.0
      %5827 = vmatpush1.msra.mxu0 0.0
      %5828 = vmatprep.subr.mxu0 0.0
      %5829 = vmatpush1.msra.mxu0 0.0
      %5830 = vmatprep.subr.mxu0 0.0
      %5831 = vmatpush1.msra.mxu0 0.0
      %5832 = vmatprep.subr.mxu0 0.0
      %5833 = vmatpush1.msra.mxu0 0.0
      %5834 = vmatprep.subr.mxu0 0.0
      %5835 = vmatpush1.msra.mxu0 0.0
      %5836 = vmatprep.subr.mxu0 0.0
      %5837 = vmatpush1.msra.mxu0 0.0
      %5838 = vmatprep.subr.mxu0 0.0
      %5839 = vmatpush1.msra.mxu0 0.0
      %5840 = vmatprep.subr.mxu0 0.0
      %5841 = vmatpush1.msra.mxu0 0.0
      %5842 = vmatprep.subr.mxu0 0.0
      %5843 = vmatpush1.msra.mxu0 0.0
      %5844 = vmatprep.subr.mxu0 0.0
      %5845 = vmatpush1.msra.mxu0 0.0
      %5846 = vmatprep.subr.mxu0 0.0
      %5847 = vmatpush1.msra.mxu0 0.0
      %5848 = vmatprep.subr.mxu0 0.0
      %5849 = vmatpush1.msra.mxu0 0.0
      %5850 = vmatprep.subr.mxu0 0.0
      %5851 = vmatpush1.msra.mxu0 0.0
      %5852 = vmatprep.subr.mxu0 0.0
      %5853 = vmatpush1.msra.mxu0 0.0
      %5854 = vmatprep.subr.mxu0 0.0
      %5855 = vmatpush1.msra.mxu0 0.0
      %5856 = vmatprep.mubr.f32.mxu0 0.0
      %5857 = vmatmul.mubr.f32.gmra.mrb[0].mxu0 %v5788
      %v5858 = vpop.f32.mrb[0].mxu0
      %v5859 = vadd.f32 0.0, %v5858
      %v5860 = vpop.f32.mrb[0].mxu0
      %5861 = vdwg.mxu0
      %v5862 = vadd.f32 %v5783, %v5859
      %v5863 = vadd.f32 %v5862, %v1583
      %v5864 = vmax.f32 %v5863, 0.0
      %s5865 = scalar_lea.vmem %s858, 48
      %5866 = vst.msk [vmem:[%s5865] sm:$0xff] %vm1587, %v5864
      %v5867 = vld [vmem:[%s823] sm:$0xf]
      %v5868 = vld [vmem:[%s10] sm:$0xff]
      %v5869 = vld [vmem:[%s863] sm:$0xff]
      %5871 = vrot.lane.b32.xlu0 %v5867, 127
      %v5872 = vpop.permute.xlu0 %5871
      %v5874 = vsel %vm868, %v5869, 0
      %v5876 = vsel %vm872, %v5872, 0
      %5878 = vmatprep.subr.mxu0 0.0
      %5879 = vmatpush1.msra.mxu0 %v5876
      %5880 = vmatprep.subr.mxu0 0.0
      %5881 = vmatpush1.msra.mxu0 0.0
      %5882 = vmatprep.subr.mxu0 0.0
      %5883 = vmatpush1.msra.mxu0 0.0
      %5884 = vmatprep.subr.mxu0 0.0
      %5885 = vmatpush1.msra.mxu0 0.0
      %5886 = vmatprep.subr.mxu0 0.0
      %5887 = vmatpush1.msra.mxu0 0.0
      %5888 = vmatprep.subr.mxu0 0.0
      %5889 = vmatpush1.msra.mxu0 0.0
      %5890 = vmatprep.subr.mxu0 0.0
      %5891 = vmatpush1.msra.mxu0 0.0
      %5892 = vmatprep.subr.mxu0 0.0
      %5893 = vmatpush1.msra.mxu0 0.0
      %5894 = vmatprep.subr.mxu0 0.0
      %5895 = vmatpush1.msra.mxu0 0.0
      %5896 = vmatprep.subr.mxu0 0.0
      %5897 = vmatpush1.msra.mxu0 0.0
      %5898 = vmatprep.subr.mxu0 0.0
      %5899 = vmatpush1.msra.mxu0 0.0
      %5900 = vmatprep.subr.mxu0 0.0
      %5901 = vmatpush1.msra.mxu0 0.0
      %5902 = vmatprep.subr.mxu0 0.0
      %5903 = vmatpush1.msra.mxu0 0.0
      %5904 = vmatprep.subr.mxu0 0.0
      %5905 = vmatpush1.msra.mxu0 0.0
      %5906 = vmatprep.subr.mxu0 0.0
      %5907 = vmatpush1.msra.mxu0 0.0
      %5908 = vmatprep.subr.mxu0 0.0
      %5909 = vmatpush1.msra.mxu0 0.0
      %5910 = vmatprep.subr.mxu0 0.0
      %5911 = vmatpush1.msra.mxu0 0.0
      %5912 = vmatprep.subr.mxu0 0.0
      %5913 = vmatpush1.msra.mxu0 0.0
      %5914 = vmatprep.subr.mxu0 0.0
      %5915 = vmatpush1.msra.mxu0 0.0
      %5916 = vmatprep.subr.mxu0 0.0
      %5917 = vmatpush1.msra.mxu0 0.0
      %5918 = vmatprep.subr.mxu0 0.0
      %5919 = vmatpush1.msra.mxu0 0.0
      %5920 = vmatprep.subr.mxu0 0.0
      %5921 = vmatpush1.msra.mxu0 0.0
      %5922 = vmatprep.subr.mxu0 0.0
      %5923 = vmatpush1.msra.mxu0 0.0
      %5924 = vmatprep.subr.mxu0 0.0
      %5925 = vmatpush1.msra.mxu0 0.0
      %5926 = vmatprep.subr.mxu0 0.0
      %5927 = vmatpush1.msra.mxu0 0.0
      %5928 = vmatprep.subr.mxu0 0.0
      %5929 = vmatpush1.msra.mxu0 0.0
      %5930 = vmatprep.subr.mxu0 0.0
      %5931 = vmatpush1.msra.mxu0 0.0
      %5932 = vmatprep.subr.mxu0 0.0
      %5933 = vmatpush1.msra.mxu0 0.0
      %5934 = vmatprep.subr.mxu0 0.0
      %5935 = vmatpush1.msra.mxu0 0.0
      %5936 = vmatprep.subr.mxu0 0.0
      %5937 = vmatpush1.msra.mxu0 0.0
      %5938 = vmatprep.subr.mxu0 0.0
      %5939 = vmatpush1.msra.mxu0 0.0
      %5940 = vmatprep.subr.mxu0 0.0
      %5941 = vmatpush1.msra.mxu0 0.0
      %5942 = vmatprep.mubr.f32.mxu0 0.0
      %5943 = vmatmul.mubr.f32.gmra.mrb[0].mxu0 %v5874
      %v5944 = vpop.f32.mrb[0].mxu0
      %v5945 = vadd.f32 0.0, %v5944
      %v5946 = vpop.f32.mrb[0].mxu0
      %5947 = vdwg.mxu0
      %v5949 = vsel %vm868, %v5868, 0
      %v5951 = vsel %vm872, %v5867, 0
      %5953 = vmatprep.subr.mxu0 0.0
      %5954 = vmatpush1.msra.mxu0 %v5951
      %5955 = vmatprep.subr.mxu0 0.0
      %5956 = vmatpush1.msra.mxu0 0.0
      %5957 = vmatprep.subr.mxu0 0.0
      %5958 = vmatpush1.msra.mxu0 0.0
      %5959 = vmatprep.subr.mxu0 0.0
      %5960 = vmatpush1.msra.mxu0 0.0
      %5961 = vmatprep.subr.mxu0 0.0
      %5962 = vmatpush1.msra.mxu0 0.0
      %5963 = vmatprep.subr.mxu0 0.0
      %5964 = vmatpush1.msra.mxu0 0.0
      %5965 = vmatprep.subr.mxu0 0.0
      %5966 = vmatpush1.msra.mxu0 0.0
      %5967 = vmatprep.subr.mxu0 0.0
      %5968 = vmatpush1.msra.mxu0 0.0
      %5969 = vmatprep.subr.mxu0 0.0
      %5970 = vmatpush1.msra.mxu0 0.0
      %5971 = vmatprep.subr.mxu0 0.0
      %5972 = vmatpush1.msra.mxu0 0.0
      %5973 = vmatprep.subr.mxu0 0.0
      %5974 = vmatpush1.msra.mxu0 0.0
      %5975 = vmatprep.subr.mxu0 0.0
      %5976 = vmatpush1.msra.mxu0 0.0
      %5977 = vmatprep.subr.mxu0 0.0
      %5978 = vmatpush1.msra.mxu0 0.0
      %5979 = vmatprep.subr.mxu0 0.0
      %5980 = vmatpush1.msra.mxu0 0.0
      %5981 = vmatprep.subr.mxu0 0.0
      %5982 = vmatpush1.msra.mxu0 0.0
      %5983 = vmatprep.subr.mxu0 0.0
      %5984 = vmatpush1.msra.mxu0 0.0
      %5985 = vmatprep.subr.mxu0 0.0
      %5986 = vmatpush1.msra.mxu0 0.0
      %5987 = vmatprep.subr.mxu0 0.0
      %5988 = vmatpush1.msra.mxu0 0.0
      %5989 = vmatprep.subr.mxu0 0.0
      %5990 = vmatpush1.msra.mxu0 0.0
      %5991 = vmatprep.subr.mxu0 0.0
      %5992 = vmatpush1.msra.mxu0 0.0
      %5993 = vmatprep.subr.mxu0 0.0
      %5994 = vmatpush1.msra.mxu0 0.0
      %5995 = vmatprep.subr.mxu0 0.0
      %5996 = vmatpush1.msra.mxu0 0.0
      %5997 = vmatprep.subr.mxu0 0.0
      %5998 = vmatpush1.msra.mxu0 0.0
      %5999 = vmatprep.subr.mxu0 0.0
      %6000 = vmatpush1.msra.mxu0 0.0
      %6001 = vmatprep.subr.mxu0 0.0
      %6002 = vmatpush1.msra.mxu0 0.0
      %6003 = vmatprep.subr.mxu0 0.0
      %6004 = vmatpush1.msra.mxu0 0.0
      %6005 = vmatprep.subr.mxu0 0.0
      %6006 = vmatpush1.msra.mxu0 0.0
      %6007 = vmatprep.subr.mxu0 0.0
      %6008 = vmatpush1.msra.mxu0 0.0
      %6009 = vmatprep.subr.mxu0 0.0
      %6010 = vmatpush1.msra.mxu0 0.0
      %6011 = vmatprep.subr.mxu0 0.0
      %6012 = vmatpush1.msra.mxu0 0.0
      %6013 = vmatprep.subr.mxu0 0.0
      %6014 = vmatpush1.msra.mxu0 0.0
      %6015 = vmatprep.subr.mxu0 0.0
      %6016 = vmatpush1.msra.mxu0 0.0
      %6017 = vmatprep.mubr.f32.mxu0 0.0
      %6018 = vmatmul.mubr.f32.gmra.mrb[0].mxu0 %v5949
      %v6019 = vpop.f32.mrb[0].mxu0
      %v6020 = vadd.f32 %v5945, %v6019
      %v6021 = vpop.f32.mrb[0].mxu0
      %6022 = vdwg.mxu0
      %v6023 = vld [vmem:[%s1020] sm:$0xff]
      %6024 = vrot.lane.b32.xlu0 %v5867, 126
      %v6025 = vpop.permute.xlu0 %6024
      %v6027 = vsel %vm868, %v6023, 0
      %v6029 = vsel %vm872, %v6025, 0
      %6031 = vmatprep.subr.mxu0 0.0
      %6032 = vmatpush1.msra.mxu0 %v6029
      %6033 = vmatprep.subr.mxu0 0.0
      %6034 = vmatpush1.msra.mxu0 0.0
      %6035 = vmatprep.subr.mxu0 0.0
      %6036 = vmatpush1.msra.mxu0 0.0
      %6037 = vmatprep.subr.mxu0 0.0
      %6038 = vmatpush1.msra.mxu0 0.0
      %6039 = vmatprep.subr.mxu0 0.0
      %6040 = vmatpush1.msra.mxu0 0.0
      %6041 = vmatprep.subr.mxu0 0.0
      %6042 = vmatpush1.msra.mxu0 0.0
      %6043 = vmatprep.subr.mxu0 0.0
      %6044 = vmatpush1.msra.mxu0 0.0
      %6045 = vmatprep.subr.mxu0 0.0
      %6046 = vmatpush1.msra.mxu0 0.0
      %6047 = vmatprep.subr.mxu0 0.0
      %6048 = vmatpush1.msra.mxu0 0.0
      %6049 = vmatprep.subr.mxu0 0.0
      %6050 = vmatpush1.msra.mxu0 0.0
      %6051 = vmatprep.subr.mxu0 0.0
      %6052 = vmatpush1.msra.mxu0 0.0
      %6053 = vmatprep.subr.mxu0 0.0
      %6054 = vmatpush1.msra.mxu0 0.0
      %6055 = vmatprep.subr.mxu0 0.0
      %6056 = vmatpush1.msra.mxu0 0.0
      %6057 = vmatprep.subr.mxu0 0.0
      %6058 = vmatpush1.msra.mxu0 0.0
      %6059 = vmatprep.subr.mxu0 0.0
      %6060 = vmatpush1.msra.mxu0 0.0
      %6061 = vmatprep.subr.mxu0 0.0
      %6062 = vmatpush1.msra.mxu0 0.0
      %6063 = vmatprep.subr.mxu0 0.0
      %6064 = vmatpush1.msra.mxu0 0.0
      %6065 = vmatprep.subr.mxu0 0.0
      %6066 = vmatpush1.msra.mxu0 0.0
      %6067 = vmatprep.subr.mxu0 0.0
      %6068 = vmatpush1.msra.mxu0 0.0
      %6069 = vmatprep.subr.mxu0 0.0
      %6070 = vmatpush1.msra.mxu0 0.0
      %6071 = vmatprep.subr.mxu0 0.0
      %6072 = vmatpush1.msra.mxu0 0.0
      %6073 = vmatprep.subr.mxu0 0.0
      %6074 = vmatpush1.msra.mxu0 0.0
      %6075 = vmatprep.subr.mxu0 0.0
      %6076 = vmatpush1.msra.mxu0 0.0
      %6077 = vmatprep.subr.mxu0 0.0
      %6078 = vmatpush1.msra.mxu0 0.0
      %6079 = vmatprep.subr.mxu0 0.0
      %6080 = vmatpush1.msra.mxu0 0.0
      %6081 = vmatprep.subr.mxu0 0.0
      %6082 = vmatpush1.msra.mxu0 0.0
      %6083 = vmatprep.subr.mxu0 0.0
      %6084 = vmatpush1.msra.mxu0 0.0
      %6085 = vmatprep.subr.mxu0 0.0
      %6086 = vmatpush1.msra.mxu0 0.0
      %6087 = vmatprep.subr.mxu0 0.0
      %6088 = vmatpush1.msra.mxu0 0.0
      %6089 = vmatprep.subr.mxu0 0.0
      %6090 = vmatpush1.msra.mxu0 0.0
      %6091 = vmatprep.subr.mxu0 0.0
      %6092 = vmatpush1.msra.mxu0 0.0
      %6093 = vmatprep.subr.mxu0 0.0
      %6094 = vmatpush1.msra.mxu0 0.0
      %6095 = vmatprep.mubr.f32.mxu0 0.0
      %6096 = vmatmul.mubr.f32.gmra.mrb[0].mxu0 %v6027
      %v6097 = vpop.f32.mrb[0].mxu0
      %v6098 = vadd.f32 0.0, %v6097
      %v6099 = vpop.f32.mrb[0].mxu0
      %6100 = vdwg.mxu0
      %v6101 = vadd.f32 %v6020, %v6098
      %v6102 = vld [vmem:[%s835] sm:$0xf]
      %v6103 = vld [vmem:[%s1101] sm:$0xff]
      %v6105 = vsel %vm868, %v6103, 0
      %v6108 = vsel %vm872, %v6102, 0
      %6110 = vmatprep.subr.mxu0 0.0
      %6111 = vmatpush1.msra.mxu0 %v6108
      %6112 = vmatprep.subr.mxu0 0.0
      %6113 = vmatpush1.msra.mxu0 0.0
      %6114 = vmatprep.subr.mxu0 0.0
      %6115 = vmatpush1.msra.mxu0 0.0
      %6116 = vmatprep.subr.mxu0 0.0
      %6117 = vmatpush1.msra.mxu0 0.0
      %6118 = vmatprep.subr.mxu0 0.0
      %6119 = vmatpush1.msra.mxu0 0.0
      %6120 = vmatprep.subr.mxu0 0.0
      %6121 = vmatpush1.msra.mxu0 0.0
      %6122 = vmatprep.subr.mxu0 0.0
      %6123 = vmatpush1.msra.mxu0 0.0
      %6124 = vmatprep.subr.mxu0 0.0
      %6125 = vmatpush1.msra.mxu0 0.0
      %6126 = vmatprep.subr.mxu0 0.0
      %6127 = vmatpush1.msra.mxu0 0.0
      %6128 = vmatprep.subr.mxu0 0.0
      %6129 = vmatpush1.msra.mxu0 0.0
      %6130 = vmatprep.subr.mxu0 0.0
      %6131 = vmatpush1.msra.mxu0 0.0
      %6132 = vmatprep.subr.mxu0 0.0
      %6133 = vmatpush1.msra.mxu0 0.0
      %6134 = vmatprep.subr.mxu0 0.0
      %6135 = vmatpush1.msra.mxu0 0.0
      %6136 = vmatprep.subr.mxu0 0.0
      %6137 = vmatpush1.msra.mxu0 0.0
      %6138 = vmatprep.subr.mxu0 0.0
      %6139 = vmatpush1.msra.mxu0 0.0
      %6140 = vmatprep.subr.mxu0 0.0
      %6141 = vmatpush1.msra.mxu0 0.0
      %6142 = vmatprep.subr.mxu0 0.0
      %6143 = vmatpush1.msra.mxu0 0.0
      %6144 = vmatprep.subr.mxu0 0.0
      %6145 = vmatpush1.msra.mxu0 0.0
      %6146 = vmatprep.subr.mxu0 0.0
      %6147 = vmatpush1.msra.mxu0 0.0
      %6148 = vmatprep.subr.mxu0 0.0
      %6149 = vmatpush1.msra.mxu0 0.0
      %6150 = vmatprep.subr.mxu0 0.0
      %6151 = vmatpush1.msra.mxu0 0.0
      %6152 = vmatprep.subr.mxu0 0.0
      %6153 = vmatpush1.msra.mxu0 0.0
      %6154 = vmatprep.subr.mxu0 0.0
      %6155 = vmatpush1.msra.mxu0 0.0
      %6156 = vmatprep.subr.mxu0 0.0
      %6157 = vmatpush1.msra.mxu0 0.0
      %6158 = vmatprep.subr.mxu0 0.0
      %6159 = vmatpush1.msra.mxu0 0.0
      %6160 = vmatprep.subr.mxu0 0.0
      %6161 = vmatpush1.msra.mxu0 0.0
      %6162 = vmatprep.subr.mxu0 0.0
      %6163 = vmatpush1.msra.mxu0 0.0
      %6164 = vmatprep.subr.mxu0 0.0
      %6165 = vmatpush1.msra.mxu0 0.0
      %6166 = vmatprep.subr.mxu0 0.0
      %6167 = vmatpush1.msra.mxu0 0.0
      %6168 = vmatprep.subr.mxu0 0.0
      %6169 = vmatpush1.msra.mxu0 0.0
      %6170 = vmatprep.subr.mxu0 0.0
      %6171 = vmatpush1.msra.mxu0 0.0
      %6172 = vmatprep.subr.mxu0 0.0
      %6173 = vmatpush1.msra.mxu0 0.0
      %6174 = vmatprep.mubr.f32.mxu0 0.0
      %6175 = vmatmul.mubr.f32.gmra.mrb[0].mxu0 %v6105
      %v6176 = vpop.f32.mrb[0].mxu0
      %v6177 = vadd.f32 0.0, %v6176
      %v6178 = vpop.f32.mrb[0].mxu0
      %6179 = vdwg.mxu0
      %v6180 = vadd.f32 %v6101, %v6177
      %v6181 = vld [vmem:[%s1180] sm:$0xff]
      %6182 = vrot.lane.b32.xlu0 %v6102, 127
      %v6183 = vpop.permute.xlu0 %6182
      %v6185 = vsel %vm868, %v6181, 0
      %v6187 = vsel %vm872, %v6183, 0
      %6189 = vmatprep.subr.mxu0 0.0
      %6190 = vmatpush1.msra.mxu0 %v6187
      %6191 = vmatprep.subr.mxu0 0.0
      %6192 = vmatpush1.msra.mxu0 0.0
      %6193 = vmatprep.subr.mxu0 0.0
      %6194 = vmatpush1.msra.mxu0 0.0
      %6195 = vmatprep.subr.mxu0 0.0
      %6196 = vmatpush1.msra.mxu0 0.0
      %6197 = vmatprep.subr.mxu0 0.0
      %6198 = vmatpush1.msra.mxu0 0.0
      %6199 = vmatprep.subr.mxu0 0.0
      %6200 = vmatpush1.msra.mxu0 0.0
      %6201 = vmatprep.subr.mxu0 0.0
      %6202 = vmatpush1.msra.mxu0 0.0
      %6203 = vmatprep.subr.mxu0 0.0
      %6204 = vmatpush1.msra.mxu0 0.0
      %6205 = vmatprep.subr.mxu0 0.0
      %6206 = vmatpush1.msra.mxu0 0.0
      %6207 = vmatprep.subr.mxu0 0.0
      %6208 = vmatpush1.msra.mxu0 0.0
      %6209 = vmatprep.subr.mxu0 0.0
      %6210 = vmatpush1.msra.mxu0 0.0
      %6211 = vmatprep.subr.mxu0 0.0
      %6212 = vmatpush1.msra.mxu0 0.0
      %6213 = vmatprep.subr.mxu0 0.0
      %6214 = vmatpush1.msra.mxu0 0.0
      %6215 = vmatprep.subr.mxu0 0.0
      %6216 = vmatpush1.msra.mxu0 0.0
      %6217 = vmatprep.subr.mxu0 0.0
      %6218 = vmatpush1.msra.mxu0 0.0
      %6219 = vmatprep.subr.mxu0 0.0
      %6220 = vmatpush1.msra.mxu0 0.0
      %6221 = vmatprep.subr.mxu0 0.0
      %6222 = vmatpush1.msra.mxu0 0.0
      %6223 = vmatprep.subr.mxu0 0.0
      %6224 = vmatpush1.msra.mxu0 0.0
      %6225 = vmatprep.subr.mxu0 0.0
      %6226 = vmatpush1.msra.mxu0 0.0
      %6227 = vmatprep.subr.mxu0 0.0
      %6228 = vmatpush1.msra.mxu0 0.0
      %6229 = vmatprep.subr.mxu0 0.0
      %6230 = vmatpush1.msra.mxu0 0.0
      %6231 = vmatprep.subr.mxu0 0.0
      %6232 = vmatpush1.msra.mxu0 0.0
      %6233 = vmatprep.subr.mxu0 0.0
      %6234 = vmatpush1.msra.mxu0 0.0
      %6235 = vmatprep.subr.mxu0 0.0
      %6236 = vmatpush1.msra.mxu0 0.0
      %6237 = vmatprep.subr.mxu0 0.0
      %6238 = vmatpush1.msra.mxu0 0.0
      %6239 = vmatprep.subr.mxu0 0.0
      %6240 = vmatpush1.msra.mxu0 0.0
      %6241 = vmatprep.subr.mxu0 0.0
      %6242 = vmatpush1.msra.mxu0 0.0
      %6243 = vmatprep.subr.mxu0 0.0
      %6244 = vmatpush1.msra.mxu0 0.0
      %6245 = vmatprep.subr.mxu0 0.0
      %6246 = vmatpush1.msra.mxu0 0.0
      %6247 = vmatprep.subr.mxu0 0.0
      %6248 = vmatpush1.msra.mxu0 0.0
      %6249 = vmatprep.subr.mxu0 0.0
      %6250 = vmatpush1.msra.mxu0 0.0
      %6251 = vmatprep.subr.mxu0 0.0
      %6252 = vmatpush1.msra.mxu0 0.0
      %6253 = vmatprep.mubr.f32.mxu0 0.0
      %6254 = vmatmul.mubr.f32.gmra.mrb[0].mxu0 %v6185
      %v6255 = vpop.f32.mrb[0].mxu0
      %v6256 = vadd.f32 0.0, %v6255
      %v6257 = vpop.f32.mrb[0].mxu0
      %6258 = vdwg.mxu0
      %v6259 = vadd.f32 %v6180, %v6256
      %v6260 = vld [vmem:[%s1260] sm:$0xff]
      %6261 = vrot.lane.b32.xlu0 %v6102, 126
      %v6262 = vpop.permute.xlu0 %6261
      %v6264 = vsel %vm868, %v6260, 0
      %v6266 = vsel %vm872, %v6262, 0
      %6268 = vmatprep.subr.mxu0 0.0
      %6269 = vmatpush1.msra.mxu0 %v6266
      %6270 = vmatprep.subr.mxu0 0.0
      %6271 = vmatpush1.msra.mxu0 0.0
      %6272 = vmatprep.subr.mxu0 0.0
      %6273 = vmatpush1.msra.mxu0 0.0
      %6274 = vmatprep.subr.mxu0 0.0
      %6275 = vmatpush1.msra.mxu0 0.0
      %6276 = vmatprep.subr.mxu0 0.0
      %6277 = vmatpush1.msra.mxu0 0.0
      %6278 = vmatprep.subr.mxu0 0.0
      %6279 = vmatpush1.msra.mxu0 0.0
      %6280 = vmatprep.subr.mxu0 0.0
      %6281 = vmatpush1.msra.mxu0 0.0
      %6282 = vmatprep.subr.mxu0 0.0
      %6283 = vmatpush1.msra.mxu0 0.0
      %6284 = vmatprep.subr.mxu0 0.0
      %6285 = vmatpush1.msra.mxu0 0.0
      %6286 = vmatprep.subr.mxu0 0.0
      %6287 = vmatpush1.msra.mxu0 0.0
      %6288 = vmatprep.subr.mxu0 0.0
      %6289 = vmatpush1.msra.mxu0 0.0
      %6290 = vmatprep.subr.mxu0 0.0
      %6291 = vmatpush1.msra.mxu0 0.0
      %6292 = vmatprep.subr.mxu0 0.0
      %6293 = vmatpush1.msra.mxu0 0.0
      %6294 = vmatprep.subr.mxu0 0.0
      %6295 = vmatpush1.msra.mxu0 0.0
      %6296 = vmatprep.subr.mxu0 0.0
      %6297 = vmatpush1.msra.mxu0 0.0
      %6298 = vmatprep.subr.mxu0 0.0
      %6299 = vmatpush1.msra.mxu0 0.0
      %6300 = vmatprep.subr.mxu0 0.0
      %6301 = vmatpush1.msra.mxu0 0.0
      %6302 = vmatprep.subr.mxu0 0.0
      %6303 = vmatpush1.msra.mxu0 0.0
      %6304 = vmatprep.subr.mxu0 0.0
      %6305 = vmatpush1.msra.mxu0 0.0
      %6306 = vmatprep.subr.mxu0 0.0
      %6307 = vmatpush1.msra.mxu0 0.0
      %6308 = vmatprep.subr.mxu0 0.0
      %6309 = vmatpush1.msra.mxu0 0.0
      %6310 = vmatprep.subr.mxu0 0.0
      %6311 = vmatpush1.msra.mxu0 0.0
      %6312 = vmatprep.subr.mxu0 0.0
      %6313 = vmatpush1.msra.mxu0 0.0
      %6314 = vmatprep.subr.mxu0 0.0
      %6315 = vmatpush1.msra.mxu0 0.0
      %6316 = vmatprep.subr.mxu0 0.0
      %6317 = vmatpush1.msra.mxu0 0.0
      %6318 = vmatprep.subr.mxu0 0.0
      %6319 = vmatpush1.msra.mxu0 0.0
      %6320 = vmatprep.subr.mxu0 0.0
      %6321 = vmatpush1.msra.mxu0 0.0
      %6322 = vmatprep.subr.mxu0 0.0
      %6323 = vmatpush1.msra.mxu0 0.0
      %6324 = vmatprep.subr.mxu0 0.0
      %6325 = vmatpush1.msra.mxu0 0.0
      %6326 = vmatprep.subr.mxu0 0.0
      %6327 = vmatpush1.msra.mxu0 0.0
      %6328 = vmatprep.subr.mxu0 0.0
      %6329 = vmatpush1.msra.mxu0 0.0
      %6330 = vmatprep.subr.mxu0 0.0
      %6331 = vmatpush1.msra.mxu0 0.0
      %6332 = vmatprep.mubr.f32.mxu0 0.0
      %6333 = vmatmul.mubr.f32.gmra.mrb[0].mxu0 %v6264
      %v6334 = vpop.f32.mrb[0].mxu0
      %v6335 = vadd.f32 0.0, %v6334
      %v6336 = vpop.f32.mrb[0].mxu0
      %6337 = vdwg.mxu0
      %v6338 = vadd.f32 %v6259, %v6335
      %v6339 = vld [vmem:[%s847] sm:$0xf]
      %v6340 = vld [vmem:[%s1341] sm:$0xff]
      %v6342 = vsel %vm868, %v6340, 0
      %v6345 = vsel %vm872, %v6339, 0
      %6347 = vmatprep.subr.mxu0 0.0
      %6348 = vmatpush1.msra.mxu0 %v6345
      %6349 = vmatprep.subr.mxu0 0.0
      %6350 = vmatpush1.msra.mxu0 0.0
      %6351 = vmatprep.subr.mxu0 0.0
      %6352 = vmatpush1.msra.mxu0 0.0
      %6353 = vmatprep.subr.mxu0 0.0
      %6354 = vmatpush1.msra.mxu0 0.0
      %6355 = vmatprep.subr.mxu0 0.0
      %6356 = vmatpush1.msra.mxu0 0.0
      %6357 = vmatprep.subr.mxu0 0.0
      %6358 = vmatpush1.msra.mxu0 0.0
      %6359 = vmatprep.subr.mxu0 0.0
      %6360 = vmatpush1.msra.mxu0 0.0
      %6361 = vmatprep.subr.mxu0 0.0
      %6362 = vmatpush1.msra.mxu0 0.0
      %6363 = vmatprep.subr.mxu0 0.0
      %6364 = vmatpush1.msra.mxu0 0.0
      %6365 = vmatprep.subr.mxu0 0.0
      %6366 = vmatpush1.msra.mxu0 0.0
      %6367 = vmatprep.subr.mxu0 0.0
      %6368 = vmatpush1.msra.mxu0 0.0
      %6369 = vmatprep.subr.mxu0 0.0
      %6370 = vmatpush1.msra.mxu0 0.0
      %6371 = vmatprep.subr.mxu0 0.0
      %6372 = vmatpush1.msra.mxu0 0.0
      %6373 = vmatprep.subr.mxu0 0.0
      %6374 = vmatpush1.msra.mxu0 0.0
      %6375 = vmatprep.subr.mxu0 0.0
      %6376 = vmatpush1.msra.mxu0 0.0
      %6377 = vmatprep.subr.mxu0 0.0
      %6378 = vmatpush1.msra.mxu0 0.0
      %6379 = vmatprep.subr.mxu0 0.0
      %6380 = vmatpush1.msra.mxu0 0.0
      %6381 = vmatprep.subr.mxu0 0.0
      %6382 = vmatpush1.msra.mxu0 0.0
      %6383 = vmatprep.subr.mxu0 0.0
      %6384 = vmatpush1.msra.mxu0 0.0
      %6385 = vmatprep.subr.mxu0 0.0
      %6386 = vmatpush1.msra.mxu0 0.0
      %6387 = vmatprep.subr.mxu0 0.0
      %6388 = vmatpush1.msra.mxu0 0.0
      %6389 = vmatprep.subr.mxu0 0.0
      %6390 = vmatpush1.msra.mxu0 0.0
      %6391 = vmatprep.subr.mxu0 0.0
      %6392 = vmatpush1.msra.mxu0 0.0
      %6393 = vmatprep.subr.mxu0 0.0
      %6394 = vmatpush1.msra.mxu0 0.0
      %6395 = vmatprep.subr.mxu0 0.0
      %6396 = vmatpush1.msra.mxu0 0.0
      %6397 = vmatprep.subr.mxu0 0.0
      %6398 = vmatpush1.msra.mxu0 0.0
      %6399 = vmatprep.subr.mxu0 0.0
      %6400 = vmatpush1.msra.mxu0 0.0
      %6401 = vmatprep.subr.mxu0 0.0
      %6402 = vmatpush1.msra.mxu0 0.0
      %6403 = vmatprep.subr.mxu0 0.0
      %6404 = vmatpush1.msra.mxu0 0.0
      %6405 = vmatprep.subr.mxu0 0.0
      %6406 = vmatpush1.msra.mxu0 0.0
      %6407 = vmatprep.subr.mxu0 0.0
      %6408 = vmatpush1.msra.mxu0 0.0
      %6409 = vmatprep.subr.mxu0 0.0
      %6410 = vmatpush1.msra.mxu0 0.0
      %6411 = vmatprep.mubr.f32.mxu0 0.0
      %6412 = vmatmul.mubr.f32.gmra.mrb[0].mxu0 %v6342
      %v6413 = vpop.f32.mrb[0].mxu0
      %v6414 = vadd.f32 0.0, %v6413
      %v6415 = vpop.f32.mrb[0].mxu0
      %6416 = vdwg.mxu0
      %v6417 = vadd.f32 %v6338, %v6414
      %v6418 = vld [vmem:[%s1420] sm:$0xff]
      %6419 = vrot.lane.b32.xlu0 %v6339, 127
      %v6420 = vpop.permute.xlu0 %6419
      %v6422 = vsel %vm868, %v6418, 0
      %v6424 = vsel %vm872, %v6420, 0
      %6426 = vmatprep.subr.mxu0 0.0
      %6427 = vmatpush1.msra.mxu0 %v6424
      %6428 = vmatprep.subr.mxu0 0.0
      %6429 = vmatpush1.msra.mxu0 0.0
      %6430 = vmatprep.subr.mxu0 0.0
      %6431 = vmatpush1.msra.mxu0 0.0
      %6432 = vmatprep.subr.mxu0 0.0
      %6433 = vmatpush1.msra.mxu0 0.0
      %6434 = vmatprep.subr.mxu0 0.0
      %6435 = vmatpush1.msra.mxu0 0.0
      %6436 = vmatprep.subr.mxu0 0.0
      %6437 = vmatpush1.msra.mxu0 0.0
      %6438 = vmatprep.subr.mxu0 0.0
      %6439 = vmatpush1.msra.mxu0 0.0
      %6440 = vmatprep.subr.mxu0 0.0
      %6441 = vmatpush1.msra.mxu0 0.0
      %6442 = vmatprep.subr.mxu0 0.0
      %6443 = vmatpush1.msra.mxu0 0.0
      %6444 = vmatprep.subr.mxu0 0.0
      %6445 = vmatpush1.msra.mxu0 0.0
      %6446 = vmatprep.subr.mxu0 0.0
      %6447 = vmatpush1.msra.mxu0 0.0
      %6448 = vmatprep.subr.mxu0 0.0
      %6449 = vmatpush1.msra.mxu0 0.0
      %6450 = vmatprep.subr.mxu0 0.0
      %6451 = vmatpush1.msra.mxu0 0.0
      %6452 = vmatprep.subr.mxu0 0.0
      %6453 = vmatpush1.msra.mxu0 0.0
      %6454 = vmatprep.subr.mxu0 0.0
      %6455 = vmatpush1.msra.mxu0 0.0
      %6456 = vmatprep.subr.mxu0 0.0
      %6457 = vmatpush1.msra.mxu0 0.0
      %6458 = vmatprep.subr.mxu0 0.0
      %6459 = vmatpush1.msra.mxu0 0.0
      %6460 = vmatprep.subr.mxu0 0.0
      %6461 = vmatpush1.msra.mxu0 0.0
      %6462 = vmatprep.subr.mxu0 0.0
      %6463 = vmatpush1.msra.mxu0 0.0
      %6464 = vmatprep.subr.mxu0 0.0
      %6465 = vmatpush1.msra.mxu0 0.0
      %6466 = vmatprep.subr.mxu0 0.0
      %6467 = vmatpush1.msra.mxu0 0.0
      %6468 = vmatprep.subr.mxu0 0.0
      %6469 = vmatpush1.msra.mxu0 0.0
      %6470 = vmatprep.subr.mxu0 0.0
      %6471 = vmatpush1.msra.mxu0 0.0
      %6472 = vmatprep.subr.mxu0 0.0
      %6473 = vmatpush1.msra.mxu0 0.0
      %6474 = vmatprep.subr.mxu0 0.0
      %6475 = vmatpush1.msra.mxu0 0.0
      %6476 = vmatprep.subr.mxu0 0.0
      %6477 = vmatpush1.msra.mxu0 0.0
      %6478 = vmatprep.subr.mxu0 0.0
      %6479 = vmatpush1.msra.mxu0 0.0
      %6480 = vmatprep.subr.mxu0 0.0
      %6481 = vmatpush1.msra.mxu0 0.0
      %6482 = vmatprep.subr.mxu0 0.0
      %6483 = vmatpush1.msra.mxu0 0.0
      %6484 = vmatprep.subr.mxu0 0.0
      %6485 = vmatpush1.msra.mxu0 0.0
      %6486 = vmatprep.subr.mxu0 0.0
      %6487 = vmatpush1.msra.mxu0 0.0
      %6488 = vmatprep.subr.mxu0 0.0
      %6489 = vmatpush1.msra.mxu0 0.0
      %6490 = vmatprep.mubr.f32.mxu0 0.0
      %6491 = vmatmul.mubr.f32.gmra.mrb[0].mxu0 %v6422
      %v6492 = vpop.f32.mrb[0].mxu0
      %v6493 = vadd.f32 0.0, %v6492
      %v6494 = vpop.f32.mrb[0].mxu0
      %6495 = vdwg.mxu0
      %v6496 = vadd.f32 %v6417, %v6493
      %v6497 = vld [vmem:[%s1500] sm:$0xff]
      %6498 = vrot.lane.b32.xlu0 %v6339, 126
      %v6499 = vpop.permute.xlu0 %6498
      %v6501 = vsel %vm868, %v6497, 0
      %v6503 = vsel %vm872, %v6499, 0
      %6505 = vmatprep.subr.mxu0 0.0
      %6506 = vmatpush1.msra.mxu0 %v6503
      %6507 = vmatprep.subr.mxu0 0.0
      %6508 = vmatpush1.msra.mxu0 0.0
      %6509 = vmatprep.subr.mxu0 0.0
      %6510 = vmatpush1.msra.mxu0 0.0
      %6511 = vmatprep.subr.mxu0 0.0
      %6512 = vmatpush1.msra.mxu0 0.0
      %6513 = vmatprep.subr.mxu0 0.0
      %6514 = vmatpush1.msra.mxu0 0.0
      %6515 = vmatprep.subr.mxu0 0.0
      %6516 = vmatpush1.msra.mxu0 0.0
      %6517 = vmatprep.subr.mxu0 0.0
      %6518 = vmatpush1.msra.mxu0 0.0
      %6519 = vmatprep.subr.mxu0 0.0
      %6520 = vmatpush1.msra.mxu0 0.0
      %6521 = vmatprep.subr.mxu0 0.0
      %6522 = vmatpush1.msra.mxu0 0.0
      %6523 = vmatprep.subr.mxu0 0.0
      %6524 = vmatpush1.msra.mxu0 0.0
      %6525 = vmatprep.subr.mxu0 0.0
      %6526 = vmatpush1.msra.mxu0 0.0
      %6527 = vmatprep.subr.mxu0 0.0
      %6528 = vmatpush1.msra.mxu0 0.0
      %6529 = vmatprep.subr.mxu0 0.0
      %6530 = vmatpush1.msra.mxu0 0.0
      %6531 = vmatprep.subr.mxu0 0.0
      %6532 = vmatpush1.msra.mxu0 0.0
      %6533 = vmatprep.subr.mxu0 0.0
      %6534 = vmatpush1.msra.mxu0 0.0
      %6535 = vmatprep.subr.mxu0 0.0
      %6536 = vmatpush1.msra.mxu0 0.0
      %6537 = vmatprep.subr.mxu0 0.0
      %6538 = vmatpush1.msra.mxu0 0.0
      %6539 = vmatprep.subr.mxu0 0.0
      %6540 = vmatpush1.msra.mxu0 0.0
      %6541 = vmatprep.subr.mxu0 0.0
      %6542 = vmatpush1.msra.mxu0 0.0
      %6543 = vmatprep.subr.mxu0 0.0
      %6544 = vmatpush1.msra.mxu0 0.0
      %6545 = vmatprep.subr.mxu0 0.0
      %6546 = vmatpush1.msra.mxu0 0.0
      %6547 = vmatprep.subr.mxu0 0.0
      %6548 = vmatpush1.msra.mxu0 0.0
      %6549 = vmatprep.subr.mxu0 0.0
      %6550 = vmatpush1.msra.mxu0 0.0
      %6551 = vmatprep.subr.mxu0 0.0
      %6552 = vmatpush1.msra.mxu0 0.0
      %6553 = vmatprep.subr.mxu0 0.0
      %6554 = vmatpush1.msra.mxu0 0.0
      %6555 = vmatprep.subr.mxu0 0.0
      %6556 = vmatpush1.msra.mxu0 0.0
      %6557 = vmatprep.subr.mxu0 0.0
      %6558 = vmatpush1.msra.mxu0 0.0
      %6559 = vmatprep.subr.mxu0 0.0
      %6560 = vmatpush1.msra.mxu0 0.0
      %6561 = vmatprep.subr.mxu0 0.0
      %6562 = vmatpush1.msra.mxu0 0.0
      %6563 = vmatprep.subr.mxu0 0.0
      %6564 = vmatpush1.msra.mxu0 0.0
      %6565 = vmatprep.subr.mxu0 0.0
      %6566 = vmatpush1.msra.mxu0 0.0
      %6567 = vmatprep.subr.mxu0 0.0
      %6568 = vmatpush1.msra.mxu0 0.0
      %6569 = vmatprep.mubr.f32.mxu0 0.0
      %6570 = vmatmul.mubr.f32.gmra.mrb[0].mxu0 %v6501
      %v6571 = vpop.f32.mrb[0].mxu0
      %v6572 = vadd.f32 0.0, %v6571
      %v6573 = vpop.f32.mrb[0].mxu0
      %6574 = vdwg.mxu0
      %v6575 = vadd.f32 %v6496, %v6572
      %v6576 = vadd.f32 %v6575, %v1583
      %v6577 = vmax.f32 %v6576, 0.0
      %s6578 = scalar_lea.vmem %s858, 56
      %6579 = vst.msk [vmem:[%s6578] sm:$0xff] %vm1587, %v6577
      %s6580 = smul.u32 8, %s28
      %p6581 = scmp.lt.s32.totalorder %s27, 1
      %s6582 = scalar_select %p6581, %s27, 1
      %p6583 = scmp.lt.s32.totalorder %s6580, 15
      %s6584 = scalar_select %p6583, %s6580, 15
      %s6585 = smul.addr %s6582, 16
      %s6586 = sadd.s32 %s6584, %s6585
      %s6587 = smul.addr %s6586, 8
      %s6588 = scalar_lea.vmem %s12, %s6587
      // Predicated region
      $region69: #{conv2d_block_forward.1} parent=67 // pred_check
        %p6589 = pneg %p415
      $region70: #{conv2d_block_forward.1} parent=67 // pred_check_branch
        %6591 = sbr.rel (%p6589) target = $region72
      $region71: #{conv2d_block_forward.1} parent=67 // pred_region
        %s6592 = smul.u32 8, %s28
      $region72: #{conv2d_block_forward.1} parent=67 // pred_fallthru
        _
    $region68: #{conv2d_block_forward.1} parent=5 // pred_fallthru
      _
    %p6593 = scmp.le.s32.totalorder 2, %s18
    // Predicated region
    $region73: #{conv2d_block_forward.1} parent=5 // pred_check
      %p6594 = pneg %p6593
    $region74: #{conv2d_block_forward.1} parent=5 // pred_check_branch
      %6596 = sbr.rel (%p6594) target = $region76
    $region75: #{conv2d_block_forward.1} parent=5 // pred_region
      %s6597 = ssub.s32 %s18, 2
      // Predicated region
      $region77: #{conv2d_block_forward.1} parent=75 // pred_check
        %p6598 = pneg %p421
      $region78: #{conv2d_block_forward.1} parent=75 // pred_check_branch
        %6600 = sbr.rel (%p6598) target = $region80
      $region79: #{conv2d_block_forward.1} parent=75 // pred_region
        %s6601 = smul.u32 8, %s30
        %p6602 = scmp.lt.s32.totalorder %s29, 1
        %s6603 = scalar_select %p6602, %s29, 1
        %p6604 = scmp.lt.s32.totalorder %s6601, 15
        %s6605 = scalar_select %p6604, %s6601, 15
        %s6606 = smul.addr %s6603, 16
        %s6607 = sadd.s32 %s6605, %s6606
        %s6608 = smul.addr %s6607, 8
        %s6609 = scalar_lea.vmem %s12, %s6608
      $region80: #{conv2d_block_forward.1} parent=75 // pred_fallthru
        _
    $region76: #{conv2d_block_forward.1} parent=5 // pred_fallthru
      _
  $region6: #{conv2d_block_forward.1} parent=0 // loop_footer
    %s22 = sadd.s32 1, %s18
  $region7: #{conv2d_block_forward.1} parent=0 // loop_footer_branch
    %17 = sbr.rel target = $region3
  $region8: #{conv2d_block_forward.1} parent=0 // loop_exit
    _

</llo_original>
